<compile_context>
chip_gen: v5e
topology: v5e:2x2
jax: 0.10.0
libtpu: 0.0.40
codegen_flags: <defaults>
</compile_context>

<pallas_src>
import jax
import jax.numpy as jnp
from jax.experimental import pallas as pl
from jax.experimental.pallas import tpu as pltpu

LN_EPS = 1e-5


def _layer_norm(y, gamma, beta):
    # Two-pass mean / biased variance, matching torch.nn.LayerNorm.
    mu = jnp.mean(y, axis=-1, keepdims=True)
    d = y - mu
    var = jnp.mean(d * d, axis=-1, keepdims=True)
    return d * jax.lax.rsqrt(var + LN_EPS) * gamma + beta


def _make_kernel(num_heads: int):
    def kernel(
        xq_ref,                     # (1, tq, D) f32   query tile of x
        xkv_ref,                    # (1, tk, D) f32   key/value tile of x
        wq_ref, bq_ref,             # (D, D) bf16 (1/sqrt(hd) folded), (1, D) f32
        wkv_ref, bkv_ref,           # (D, 2D) bf16, (1, 2D) f32
        wo_ref, bo_ref,             # (D, D) bf16 (= Wo.T), (1, D) f32
        g1_ref, be1_ref,            # (1, D) f32
        wr1_ref, wl1_ref, b1_ref,   # (D, K) bf16, (K, F) bf16, (1, F) f32
        wr2_ref, wl2_ref, b2_ref,   # (F, K) bf16, (K, D) bf16, (1, D) f32
        g2_ref, be2_ref,            # (1, D) f32
        o_ref,                      # (1, tq, D) f32
        q_sc,                       # (tq, D) bf16  cached (pre-scaled) queries
        m_sc, l_sc,                 # (H, tq, 1) f32 online-softmax stats
        acc_sc,                     # (tq, D) f32   heads concatenated by column
    ):
        ki = pl.program_id(2)
        nk = pl.num_programs(2)

        tq, D = q_sc.shape
        hd = D // num_heads

        # ---- new query tile: project q once, reset online-softmax state ----
        @pl.when(ki == 0)
        def _():
            xq_bf = xq_ref[0].astype(jnp.bfloat16)
            q = jnp.dot(xq_bf, wq_ref[...],
                        preferred_element_type=jnp.float32) + bq_ref[...]
            q_sc[...] = q.astype(jnp.bfloat16)          # scaling folded into Wq/bq
            m_sc[...] = jnp.full_like(m_sc, -jnp.inf)
            l_sc[...] = jnp.zeros_like(l_sc)
            acc_sc[...] = jnp.zeros_like(acc_sc)

        # ---- stream this key/value block: fused K/V projection ----
        xkv_bf = xkv_ref[0].astype(jnp.bfloat16)
        kv = jnp.dot(xkv_bf, wkv_ref[...],
                     preferred_element_type=jnp.float32) + bkv_ref[...]
        kv_bf = kv.astype(jnp.bfloat16)                 # single cast; f32 dies here

        nt = (((1,), (1,)), ((), ()))                   # q @ k.T
        # Static unroll over heads (fine for small H; head slices are 128-lane
        # aligned when head_dim is a multiple of 128).
        # TODO(synk): for H >= 8 switch to lax.fori_loop + pl.ds(h*hd, hd)
        # slices to bound live ranges (vreg pressure).
        for h in range(num_heads):
            lo = h * hd
            qh = q_sc[:, lo:lo + hd]                    # (tq, hd) bf16
            kh = kv_bf[:, lo:lo + hd]                   # (tk, hd) bf16
            vh = kv_bf[:, D + lo:D + lo + hd]           # (tk, hd) bf16

            s = jax.lax.dot_general(qh, kh, nt,
                                    preferred_element_type=jnp.float32)   # (tq,tk)
            m_prev = m_sc[h]                            # (tq, 1)
            m_new = jnp.maximum(m_prev, jnp.max(s, axis=-1, keepdims=True))
            alpha = jnp.exp(m_prev - m_new)
            p = jnp.exp(s - m_new)
            l_sc[h] = alpha * l_sc[h] + jnp.sum(p, axis=-1, keepdims=True)
            pv = jnp.dot(p.astype(jnp.bfloat16), vh,
                         preferred_element_type=jnp.float32)              # (tq,hd)
            acc_sc[:, lo:lo + hd] = alpha * acc_sc[:, lo:lo + hd] + pv
            m_sc[h] = m_new

        # ---- last key block: finalize attention, residual+LN, FFN, LN ----
        @pl.when(ki == nk - 1)
        def _():
            for h in range(num_heads):
                lo = h * hd
                inv_l = pl.reciprocal(l_sc[h], approx=True)
                acc_sc[:, lo:lo + hd] = acc_sc[:, lo:lo + hd] * inv_l

            # One (tq,D)@(D,D) output projection (full MXU contraction depth).
            attn = jnp.dot(acc_sc[...].astype(jnp.bfloat16), wo_ref[...],
                           preferred_element_type=jnp.float32) + bo_ref[...]

            x = xq_ref[0]                               # (tq, D) f32 residual
            # dropout(p=0.1) is identity at inference time.
            y = _layer_norm(x + attn, g1_ref[...], be1_ref[...])

            # Decomposed FFN: fc(x) = (x @ Wr.T) @ Wl.T + b (pre-transposed).
            y_bf = y.astype(jnp.bfloat16)
            h1 = jnp.dot(y_bf, wr1_ref[...], preferred_element_type=jnp.float32)
            h1 = jnp.dot(h1.astype(jnp.bfloat16), wl1_ref[...],
                         preferred_element_type=jnp.float32) + b1_ref[...]
            h1 = jnp.maximum(h1, 0.0)                   # relu

            h2 = jnp.dot(h1.astype(jnp.bfloat16), wr2_ref[...],
                         preferred_element_type=jnp.float32)
            h2 = jnp.dot(h2.astype(jnp.bfloat16), wl2_ref[...],
                         preferred_element_type=jnp.float32) + b2_ref[...]

            z = _layer_norm(y + h2, g2_ref[...], be2_ref[...])
            o_ref[0] = z.astype(o_ref.dtype)

    return kernel


def decomposed_transformer_layer(x, kernel_params, num_heads, *, tq=128, tk=128):
    """x: (B, T, D) float32. Returns (out, attn) with attn=None (need_weights=False)."""
    B, T, D = x.shape
    tq = min(tq, T)
    tk = min(tk, T)
    assert T % tq == 0 and T % tk == 0, "T must be divisible by the tile sizes"
    nq, nk = T // tq, T // tk

    names = ["wq", "bq", "wkv", "bkv", "wo", "bo", "g1", "be1",
             "wr1", "wl1", "b1", "wr2", "wl2", "b2", "g2", "be2"]
    weights = [kernel_params[n] for n in names]

    def resident(arr):                       # full, VMEM-resident weight block
        nd = arr.ndim
        # TODO(synk): single-buffer these constant blocks (pipeline_mode=
        # pl.Buffered(1)) once confirmed supported on the installed JAX; halves
        # weight VMEM at production D/FFN sizes.
        return pl.BlockSpec(arr.shape, lambda b, qi, ki, _nd=nd: (0,) * _nd)

    in_specs = [
        pl.BlockSpec((1, tq, D), lambda b, qi, ki: (b, qi, 0)),   # query tile
        pl.BlockSpec((1, tk, D), lambda b, qi, ki: (b, ki, 0)),   # key/value tile
    ] + [resident(w) for w in weights]
    out_spec = pl.BlockSpec((1, tq, D), lambda b, qi, ki: (b, qi, 0))

    scratch = [
        pltpu.VMEM((tq, D), jnp.bfloat16),          # q_sc
        pltpu.VMEM((num_heads, tq, 1), jnp.float32),  # m_sc
        pltpu.VMEM((num_heads, tq, 1), jnp.float32),  # l_sc
        pltpu.VMEM((tq, D), jnp.float32),           # acc_sc
    ]

    out = pl.pallas_call(
        _make_kernel(num_heads),
        out_shape=jax.ShapeDtypeStruct((B, T, D), jnp.float32),
        grid_spec=pltpu.PrefetchScalarGridSpec(
            num_scalar_prefetch=0,
            grid=(B, nq, nk),                 # key-reduction axis last
            in_specs=in_specs,
            out_specs=out_spec,
            scratch_shapes=scratch,
        ),
        compiler_params=pltpu.CompilerParams(
            dimension_semantics=("parallel", "parallel", "arbitrary"),
            # Sized for v7x (64 MiB/TC physical, 32 MiB default scoped); actual
            # need at these shapes is a few MiB, so this leaves ample headroom
            # on v5e/v6e as well.
            vmem_limit_bytes=32 * 1024 * 1024,
        ),
    )(x, x, *weights)
    # TODO(synk): self_attn_mask / self_attn_padding_mask unsupported (module
    # defaults = None).
    return out, None


def init_raw_params(key, embed_dim, ffn_dim, k_ffn):
    """Synthetic parameters with the same shapes/layouts as the PyTorch module."""
    ks = jax.random.split(key, 12)
    s = 0.05
    rnd = lambda k, shape: jax.random.normal(k, shape, jnp.float32) * s

    return dict(
        # MultiheadAttention q/k/v/out projections (out_features, in_features) + bias
        wq=rnd(ks[0], (embed_dim, embed_dim)), bq=rnd(ks[1], (1, embed_dim)),
        wk=rnd(ks[2], (embed_dim, embed_dim)), bk=rnd(ks[3], (1, embed_dim)),
        wv=rnd(ks[4], (embed_dim, embed_dim)), bv=rnd(ks[5], (1, embed_dim)),
        wo=rnd(ks[6], (embed_dim, embed_dim)), bo=rnd(ks[7], (1, embed_dim)),
        # self_attn_layer_norm
        g1=jnp.ones((1, embed_dim), jnp.float32),
        be1=jnp.zeros((1, embed_dim), jnp.float32),
        # fc1 = DecomposedLinear(embed, ffn, k): weight_l (ffn,k), weight_r (k,embed)
        wl1=rnd(ks[8], (ffn_dim, k_ffn)),
        wr1=rnd(ks[9], (k_ffn, embed_dim)),
        b1=jnp.zeros((1, ffn_dim), jnp.float32),
        # fc2 = DecomposedLinear(ffn, embed, k): weight_l (embed,k), weight_r (k,ffn)
        wl2=rnd(ks[10], (embed_dim, k_ffn)),
        wr2=rnd(ks[11], (k_ffn, ffn_dim)),
        b2=jnp.zeros((1, embed_dim), jnp.float32),
        # final_layer_norm
        g2=jnp.ones((1, embed_dim), jnp.float32),
        be2=jnp.zeros((1, embed_dim), jnp.float32),
    )


def prepare_kernel_params(raw, num_heads):
    """Fold q scaling into Wq/bq, fuse K/V, pre-transpose, cast matmul weights to bf16."""
    D = raw["wq"].shape[0]
    hd = D // num_heads
    scaling = hd ** -0.5

    bf = lambda a: a.astype(jnp.bfloat16)
    f32 = lambda a: a.astype(jnp.float32)

    wkv = jnp.concatenate([raw["wk"].T, raw["wv"].T], axis=1)     # (D, 2D)
    bkv = jnp.concatenate([raw["bk"], raw["bv"]], axis=1)         # (1, 2D)

    return dict(
        wq=bf(raw["wq"].T * scaling), bq=f32(raw["bq"] * scaling),
        wkv=bf(wkv), bkv=f32(bkv),
        wo=bf(raw["wo"].T), bo=f32(raw["bo"]),
        g1=f32(raw["g1"]), be1=f32(raw["be1"]),
        wr1=bf(raw["wr1"].T), wl1=bf(raw["wl1"].T), b1=f32(raw["b1"]),
        wr2=bf(raw["wr2"].T), wl2=bf(raw["wl2"].T), b2=f32(raw["b2"]),
        g2=f32(raw["g2"]), be2=f32(raw["be2"]),
    )


if __name__ == "__main__":
    # Small but lane/sublane-dense shapes consistent with the module; T=256 with
    # 128-wide tiles exercises the flash-style (query, key) tiling (grid 2x2x2).
    B, T, D = 2, 256, 256       # batch, seq, embedding_dim
    H = 2                       # num_attention_heads -> head_dim = 128 (MXU-dense)
    FFN = 512                   # ffn_embedding_dim
    K_FFN = 128                 # decomposition rank (module default; MXU-aligned)

    key = jax.random.PRNGKey(0)
    kx, kp = jax.random.split(key)
    x = jax.random.normal(kx, (B, T, D), jnp.float32)

    raw = init_raw_params(kp, D, FFN, K_FFN)
    kparams = prepare_kernel_params(raw, num_heads=H)

    out, attn = decomposed_transformer_layer(x, kparams, num_heads=H, tq=128, tk=128)
    out = jax.block_until_ready(out)

    assert out.shape == (B, T, D) and attn is None
    assert bool(jnp.all(jnp.isfinite(out)))
    print("KERNEL_OK")
</pallas_src>

<mosaic_0001>
module attributes {stable_mosaic.version = 11 : i64} {
  func.func @kernel(%arg0: i32, %arg1: i32, %arg2: i32, %arg3: memref<1x128x256xf32, #tpu.memory_space<vmem>>, %arg4: memref<1x128x256xf32, #tpu.memory_space<vmem>>, %arg5: memref<256x256xbf16, #tpu.memory_space<vmem>>, %arg6: memref<1x256xf32, #tpu.memory_space<vmem>>, %arg7: memref<256x512xbf16, #tpu.memory_space<vmem>>, %arg8: memref<1x512xf32, #tpu.memory_space<vmem>>, %arg9: memref<256x256xbf16, #tpu.memory_space<vmem>>, %arg10: memref<1x256xf32, #tpu.memory_space<vmem>>, %arg11: memref<1x256xf32, #tpu.memory_space<vmem>>, %arg12: memref<1x256xf32, #tpu.memory_space<vmem>>, %arg13: memref<256x128xbf16, #tpu.memory_space<vmem>>, %arg14: memref<128x512xbf16, #tpu.memory_space<vmem>>, %arg15: memref<1x512xf32, #tpu.memory_space<vmem>>, %arg16: memref<512x128xbf16, #tpu.memory_space<vmem>>, %arg17: memref<128x256xbf16, #tpu.memory_space<vmem>>, %arg18: memref<1x256xf32, #tpu.memory_space<vmem>>, %arg19: memref<1x256xf32, #tpu.memory_space<vmem>>, %arg20: memref<1x256xf32, #tpu.memory_space<vmem>>, %arg21: memref<1x128x256xf32, #tpu.memory_space<vmem>>, %arg22: memref<128x256xbf16, #tpu.memory_space<vmem>>, %arg23: memref<2x128x1xf32, #tpu.memory_space<vmem>>, %arg24: memref<2x128x1xf32, #tpu.memory_space<vmem>>, %arg25: memref<128x256xf32, #tpu.memory_space<vmem>>) attributes {dimension_semantics = [#tpu.dimension_semantics<parallel>, #tpu.dimension_semantics<parallel>, #tpu.dimension_semantics<arbitrary>], iteration_bounds = array<i64: 2, 2, 2>, scalar_prefetch = 0 : i64, scratch_operands = 4 : i64, tpu.core_type = #tpu.core_type<tc>, window_params = [{transform_indices = @transform_0, window_bounds = array<i64: 1, 128, 256>}, {transform_indices = @transform_1, window_bounds = array<i64: 1, 128, 256>}, {pipeline_mode = #tpu.pipeline_mode<synchronous>, transform_indices = @transform_2, window_bounds = array<i64: 256, 256>}, {pipeline_mode = #tpu.pipeline_mode<synchronous>, transform_indices = @transform_3, window_bounds = array<i64: 1, 256>}, {pipeline_mode = #tpu.pipeline_mode<synchronous>, transform_indices = @transform_4, window_bounds = array<i64: 256, 512>}, {pipeline_mode = #tpu.pipeline_mode<synchronous>, transform_indices = @transform_5, window_bounds = array<i64: 1, 512>}, {pipeline_mode = #tpu.pipeline_mode<synchronous>, transform_indices = @transform_6, window_bounds = array<i64: 256, 256>}, {pipeline_mode = #tpu.pipeline_mode<synchronous>, transform_indices = @transform_7, window_bounds = array<i64: 1, 256>}, {pipeline_mode = #tpu.pipeline_mode<synchronous>, transform_indices = @transform_8, window_bounds = array<i64: 1, 256>}, {pipeline_mode = #tpu.pipeline_mode<synchronous>, transform_indices = @transform_9, window_bounds = array<i64: 1, 256>}, {pipeline_mode = #tpu.pipeline_mode<synchronous>, transform_indices = @transform_10, window_bounds = array<i64: 256, 128>}, {pipeline_mode = #tpu.pipeline_mode<synchronous>, transform_indices = @transform_11, window_bounds = array<i64: 128, 512>}, {pipeline_mode = #tpu.pipeline_mode<synchronous>, transform_indices = @transform_12, window_bounds = array<i64: 1, 512>}, {pipeline_mode = #tpu.pipeline_mode<synchronous>, transform_indices = @transform_13, window_bounds = array<i64: 512, 128>}, {pipeline_mode = #tpu.pipeline_mode<synchronous>, transform_indices = @transform_14, window_bounds = array<i64: 128, 256>}, {pipeline_mode = #tpu.pipeline_mode<synchronous>, transform_indices = @transform_15, window_bounds = array<i64: 1, 256>}, {pipeline_mode = #tpu.pipeline_mode<synchronous>, transform_indices = @transform_16, window_bounds = array<i64: 1, 256>}, {pipeline_mode = #tpu.pipeline_mode<synchronous>, transform_indices = @transform_17, window_bounds = array<i64: 1, 256>}, {transform_indices = @transform_18, window_bounds = array<i64: 1, 128, 256>}]} {
    %c0_i32 = arith.constant 0 : i32
    %0 = arith.cmpi eq, %arg2, %c0_i32 : i32
    %1 = arith.extui %0 : i1 to i32
    %c0_i32_0 = arith.constant 0 : i32
    %2 = arith.cmpi ne, %1, %c0_i32_0 : i32
    scf.if %2 {
      %c0_50 = arith.constant 0 : index
      %c0_51 = arith.constant 0 : index
      %c0_52 = arith.constant 0 : index
      %81 = vector.load %arg3[%c0_50, %c0_51, %c0_52] : memref<1x128x256xf32, #tpu.memory_space<vmem>>, vector<1x128x256xf32>
      %82 = vector.shape_cast %81 : vector<1x128x256xf32> to vector<128x256xf32>
      %83 = arith.truncf %82 : vector<128x256xf32> to vector<128x256xbf16>
      %c0_53 = arith.constant 0 : index
      %c0_54 = arith.constant 0 : index
      %84 = vector.load %arg5[%c0_53, %c0_54] : memref<256x256xbf16, #tpu.memory_space<vmem>>, vector<256x256xbf16>
      %cst_55 = arith.constant dense<0.000000e+00> : vector<128x256xf32>
      %85 = tpu.matmul %83, %84, %cst_55 {dimension_numbers = #tpu.dot_dimension_numbers<[1], [0], [0], [1], [0, 0, 1, 1], [], []>} : vector<128x256xbf16>, vector<256x256xbf16>, vector<128x256xf32> -> vector<128x256xf32>
      %c0_56 = arith.constant 0 : index
      %c0_57 = arith.constant 0 : index
      %86 = vector.load %arg6[%c0_56, %c0_57] : memref<1x256xf32, #tpu.memory_space<vmem>>, vector<1x256xf32>
      %87 = vector.broadcast %86 : vector<1x256xf32> to vector<128x256xf32>
      %88 = arith.addf %85, %87 : vector<128x256xf32>
      %89 = arith.truncf %88 : vector<128x256xf32> to vector<128x256xbf16>
      %c0_58 = arith.constant 0 : index
      %c0_59 = arith.constant 0 : index
      %90 = vector.load %arg22[%c0_58, %c0_59] : memref<128x256xbf16, #tpu.memory_space<vmem>>, vector<128x256xbf16>
      tpu.vector_store %arg22[%c0_58, %c0_59], %89 {strides = array<i32>} : memref<128x256xbf16, #tpu.memory_space<vmem>>, vector<128x256xbf16>,
      %cst_60 = arith.constant 0xFF800000 : f32
      %91 = vector.broadcast %cst_60 : f32 to vector<2x128x1xf32>
      %c0_61 = arith.constant 0 : index
      %c0_62 = arith.constant 0 : index
      %c0_63 = arith.constant 0 : index
      %92 = vector.load %arg23[%c0_61, %c0_62, %c0_63] : memref<2x128x1xf32, #tpu.memory_space<vmem>>, vector<2x128x1xf32>
      tpu.vector_store %arg23[%c0_61, %c0_62, %c0_63], %91 {strides = array<i32>} : memref<2x128x1xf32, #tpu.memory_space<vmem>>, vector<2x128x1xf32>,
      %cst_64 = arith.constant 0.000000e+00 : f32
      %93 = vector.broadcast %cst_64 : f32 to vector<2x128x1xf32>
      %c0_65 = arith.constant 0 : index
      %c0_66 = arith.constant 0 : index
      %c0_67 = arith.constant 0 : index
      %94 = vector.load %arg24[%c0_65, %c0_66, %c0_67] : memref<2x128x1xf32, #tpu.memory_space<vmem>>, vector<2x128x1xf32>
      tpu.vector_store %arg24[%c0_65, %c0_66, %c0_67], %93 {strides = array<i32>} : memref<2x128x1xf32, #tpu.memory_space<vmem>>, vector<2x128x1xf32>,
      %cst_68 = arith.constant 0.000000e+00 : f32
      %95 = vector.broadcast %cst_68 : f32 to vector<128x256xf32>
      %c0_69 = arith.constant 0 : index
      %c0_70 = arith.constant 0 : index
      %96 = vector.load %arg25[%c0_69, %c0_70] : memref<128x256xf32, #tpu.memory_space<vmem>>, vector<128x256xf32>
      tpu.vector_store %arg25[%c0_69, %c0_70], %95 {strides = array<i32>} : memref<128x256xf32, #tpu.memory_space<vmem>>, vector<128x256xf32>,
    } else {
    }
    %c0 = arith.constant 0 : index
    %c0_1 = arith.constant 0 : index
    %c0_2 = arith.constant 0 : index
    %3 = vector.load %arg4[%c0, %c0_1, %c0_2] : memref<1x128x256xf32, #tpu.memory_space<vmem>>, vector<1x128x256xf32>
    %4 = vector.shape_cast %3 : vector<1x128x256xf32> to vector<128x256xf32>
    %5 = arith.truncf %4 : vector<128x256xf32> to vector<128x256xbf16>
    %c0_3 = arith.constant 0 : index
    %c0_4 = arith.constant 0 : index
    %6 = vector.load %arg7[%c0_3, %c0_4] : memref<256x512xbf16, #tpu.memory_space<vmem>>, vector<256x512xbf16>
    %cst = arith.constant dense<0.000000e+00> : vector<128x512xf32>
    %7 = tpu.matmul %5, %6, %cst {dimension_numbers = #tpu.dot_dimension_numbers<[1], [0], [0], [1], [0, 0, 1, 1], [], []>} : vector<128x256xbf16>, vector<256x512xbf16>, vector<128x512xf32> -> vector<128x512xf32>
    %c0_5 = arith.constant 0 : index
    %c0_6 = arith.constant 0 : index
    %8 = vector.load %arg8[%c0_5, %c0_6] : memref<1x512xf32, #tpu.memory_space<vmem>>, vector<1x512xf32>
    %9 = vector.broadcast %8 : vector<1x512xf32> to vector<128x512xf32>
    %10 = arith.addf %7, %9 : vector<128x512xf32>
    %11 = arith.truncf %10 : vector<128x512xf32> to vector<128x512xbf16>
    %c0_7 = arith.constant 0 : index
    %c0_8 = arith.constant 0 : index
    %12 = vector.load %arg22[%c0_7, %c0_8] : memref<128x256xbf16, #tpu.memory_space<vmem>>, vector<128x128xbf16>
    %13 = vector.extract_strided_slice %11 {offsets = [0, 0], sizes = [128, 128], strides = [1, 1]} : vector<128x512xbf16> to vector<128x128xbf16>
    %14 = vector.extract_strided_slice %11 {offsets = [0, 256], sizes = [128, 128], strides = [1, 1]} : vector<128x512xbf16> to vector<128x128xbf16>
    %cst_9 = arith.constant dense<0.000000e+00> : vector<128x128xf32>
    %15 = tpu.matmul %12, %13, %cst_9 {dimension_numbers = #tpu.dot_dimension_numbers<[1], [1], [0], [0], [0, 0, 1, 0], [], []>} : vector<128x128xbf16>, vector<128x128xbf16>, vector<128x128xf32> -> vector<128x128xf32>
    %c0_10 = arith.constant 0 : index
    %c0_11 = arith.constant 0 : index
    %c0_12 = arith.constant 0 : index
    %16 = vector.load %arg23[%c0_10, %c0_11, %c0_12] : memref<2x128x1xf32, #tpu.memory_space<vmem>>, vector<1x128x1xf32>
    %17 = vector.shape_cast %16 : vector<1x128x1xf32> to vector<128x1xf32>
    %cst_13 = arith.constant dense<0xFF800000> : vector<128xf32>
    %18 = vector.multi_reduction <maximumf>, %15, %cst_13 [1] : vector<128x128xf32> to vector<128xf32>
    %19 = vector.shape_cast %18 : vector<128xf32> to vector<128x1xf32>
    %20 = arith.maximumf %17, %19 : vector<128x1xf32>
    %21 = arith.subf %17, %20 : vector<128x1xf32>
    %22 = math.exp %21 : vector<128x1xf32>
    %23 = vector.broadcast %20 : vector<128x1xf32> to vector<128x128xf32>
    %24 = arith.subf %15, %23 : vector<128x128xf32>
    %25 = math.exp %24 : vector<128x128xf32>
    %c0_14 = arith.constant 0 : index
    %c0_15 = arith.constant 0 : index
    %c0_16 = arith.constant 0 : index
    %26 = vector.load %arg24[%c0_14, %c0_15, %c0_16] : memref<2x128x1xf32, #tpu.memory_space<vmem>>, vector<1x128x1xf32>
    %27 = vector.shape_cast %26 : vector<1x128x1xf32> to vector<128x1xf32>
    %28 = arith.mulf %22, %27 : vector<128x1xf32>
    %cst_17 = arith.constant dense<0.000000e+00> : vector<128xf32>
    %29 = vector.multi_reduction <add>, %25, %cst_17 [1] : vector<128x128xf32> to vector<128xf32>
    %30 = vector.shape_cast %29 : vector<128xf32> to vector<128x1xf32>
    %31 = arith.addf %28, %30 : vector<128x1xf32>
    %c0_18 = arith.constant 0 : index
    %c0_19 = arith.constant 0 : index
    %c0_20 = arith.constant 0 : index
    %32 = vector.load %arg24[%c0_18, %c0_19, %c0_20] : memref<2x128x1xf32, #tpu.memory_space<vmem>>, vector<1x128x1xf32>
    %33 = vector.shape_cast %32 : vector<1x128x1xf32> to vector<128x1xf32>
    %34 = vector.shape_cast %31 : vector<128x1xf32> to vector<1x128x1xf32>
    tpu.vector_store %arg24[%c0_18, %c0_19, %c0_20], %34 {strides = array<i32>} : memref<2x128x1xf32, #tpu.memory_space<vmem>>, vector<1x128x1xf32>,
    %35 = arith.truncf %25 : vector<128x128xf32> to vector<128x128xbf16>
    %cst_21 = arith.constant dense<0.000000e+00> : vector<128x128xf32>
    %36 = tpu.matmul %35, %14, %cst_21 {dimension_numbers = #tpu.dot_dimension_numbers<[1], [0], [0], [1], [0, 0, 1, 1], [], []>} : vector<128x128xbf16>, vector<128x128xbf16>, vector<128x128xf32> -> vector<128x128xf32>
    %c0_22 = arith.constant 0 : index
    %c0_23 = arith.constant 0 : index
    %37 = vector.load %arg25[%c0_22, %c0_23] : memref<128x256xf32, #tpu.memory_space<vmem>>, vector<128x128xf32>
    %38 = vector.broadcast %22 : vector<128x1xf32> to vector<128x128xf32>
    %39 = arith.mulf %38, %37 : vector<128x128xf32>
    %40 = arith.addf %39, %36 : vector<128x128xf32>
    %c0_24 = arith.constant 0 : index
    %c0_25 = arith.constant 0 : index
    %41 = vector.load %arg25[%c0_24, %c0_25] : memref<128x256xf32, #tpu.memory_space<vmem>>, vector<128x128xf32>
    tpu.vector_store %arg25[%c0_24, %c0_25], %40 {strides = array<i32>} : memref<128x256xf32, #tpu.memory_space<vmem>>, vector<128x128xf32>,
    %c0_26 = arith.constant 0 : index
    %c0_27 = arith.constant 0 : index
    %c0_28 = arith.constant 0 : index
    %42 = vector.load %arg23[%c0_26, %c0_27, %c0_28] : memref<2x128x1xf32, #tpu.memory_space<vmem>>, vector<1x128x1xf32>
    %43 = vector.shape_cast %42 : vector<1x128x1xf32> to vector<128x1xf32>
    %44 = vector.shape_cast %20 : vector<128x1xf32> to vector<1x128x1xf32>
    tpu.vector_store %arg23[%c0_26, %c0_27, %c0_28], %44 {strides = array<i32>} : memref<2x128x1xf32, #tpu.memory_space<vmem>>, vector<1x128x1xf32>,
    %c0_29 = arith.constant 0 : index
    %c128 = arith.constant 128 : index
    %45 = vector.load %arg22[%c0_29, %c128] : memref<128x256xbf16, #tpu.memory_space<vmem>>, vector<128x128xbf16>
    %46 = vector.extract_strided_slice %11 {offsets = [0, 128], sizes = [128, 128], strides = [1, 1]} : vector<128x512xbf16> to vector<128x128xbf16>
    %47 = vector.extract_strided_slice %11 {offsets = [0, 384], sizes = [128, 128], strides = [1, 1]} : vector<128x512xbf16> to vector<128x128xbf16>
    %cst_30 = arith.constant dense<0.000000e+00> : vector<128x128xf32>
    %48 = tpu.matmul %45, %46, %cst_30 {dimension_numbers = #tpu.dot_dimension_numbers<[1], [1], [0], [0], [0, 0, 1, 0], [], []>} : vector<128x128xbf16>, vector<128x128xbf16>, vector<128x128xf32> -> vector<128x128xf32>
    %c1 = arith.constant 1 : index
    %c0_31 = arith.constant 0 : index
    %c0_32 = arith.constant 0 : index
    %49 = vector.load %arg23[%c1, %c0_31, %c0_32] : memref<2x128x1xf32, #tpu.memory_space<vmem>>, vector<1x128x1xf32>
    %50 = vector.shape_cast %49 : vector<1x128x1xf32> to vector<128x1xf32>
    %cst_33 = arith.constant dense<0xFF800000> : vector<128xf32>
    %51 = vector.multi_reduction <maximumf>, %48, %cst_33 [1] : vector<128x128xf32> to vector<128xf32>
    %52 = vector.shape_cast %51 : vector<128xf32> to vector<128x1xf32>
    %53 = arith.maximumf %50, %52 : vector<128x1xf32>
    %54 = arith.subf %50, %53 : vector<128x1xf32>
    %55 = math.exp %54 : vector<128x1xf32>
    %56 = vector.broadcast %53 : vector<128x1xf32> to vector<128x128xf32>
    %57 = arith.subf %48, %56 : vector<128x128xf32>
    %58 = math.exp %57 : vector<128x128xf32>
    %c1_34 = arith.constant 1 : index
    %c0_35 = arith.constant 0 : index
    %c0_36 = arith.constant 0 : index
    %59 = vector.load %arg24[%c1_34, %c0_35, %c0_36] : memref<2x128x1xf32, #tpu.memory_space<vmem>>, vector<1x128x1xf32>
    %60 = vector.shape_cast %59 : vector<1x128x1xf32> to vector<128x1xf32>
    %61 = arith.mulf %55, %60 : vector<128x1xf32>
    %cst_37 = arith.constant dense<0.000000e+00> : vector<128xf32>
    %62 = vector.multi_reduction <add>, %58, %cst_37 [1] : vector<128x128xf32> to vector<128xf32>
    %63 = vector.shape_cast %62 : vector<128xf32> to vector<128x1xf32>
    %64 = arith.addf %61, %63 : vector<128x1xf32>
    %c1_38 = arith.constant 1 : index
    %c0_39 = arith.constant 0 : index
    %c0_40 = arith.constant 0 : index
    %65 = vector.load %arg24[%c1_38, %c0_39, %c0_40] : memref<2x128x1xf32, #tpu.memory_space<vmem>>, vector<1x128x1xf32>
    %66 = vector.shape_cast %65 : vector<1x128x1xf32> to vector<128x1xf32>
    %67 = vector.shape_cast %64 : vector<128x1xf32> to vector<1x128x1xf32>
    tpu.vector_store %arg24[%c1_38, %c0_39, %c0_40], %67 {strides = array<i32>} : memref<2x128x1xf32, #tpu.memory_space<vmem>>, vector<1x128x1xf32>,
    %68 = arith.truncf %58 : vector<128x128xf32> to vector<128x128xbf16>
    %cst_41 = arith.constant dense<0.000000e+00> : vector<128x128xf32>
    %69 = tpu.matmul %68, %47, %cst_41 {dimension_numbers = #tpu.dot_dimension_numbers<[1], [0], [0], [1], [0, 0, 1, 1], [], []>} : vector<128x128xbf16>, vector<128x128xbf16>, vector<128x128xf32> -> vector<128x128xf32>
    %c0_42 = arith.constant 0 : index
    %c128_43 = arith.constant 128 : index
    %70 = vector.load %arg25[%c0_42, %c128_43] : memref<128x256xf32, #tpu.memory_space<vmem>>, vector<128x128xf32>
    %71 = vector.broadcast %55 : vector<128x1xf32> to vector<128x128xf32>
    %72 = arith.mulf %71, %70 : vector<128x128xf32>
    %73 = arith.addf %72, %69 : vector<128x128xf32>
    %c0_44 = arith.constant 0 : index
    %c128_45 = arith.constant 128 : index
    %74 = vector.load %arg25[%c0_44, %c128_45] : memref<128x256xf32, #tpu.memory_space<vmem>>, vector<128x128xf32>
    tpu.vector_store %arg25[%c0_44, %c128_45], %73 {strides = array<i32>} : memref<128x256xf32, #tpu.memory_space<vmem>>, vector<128x128xf32>,
    %c1_46 = arith.constant 1 : index
    %c0_47 = arith.constant 0 : index
    %c0_48 = arith.constant 0 : index
    %75 = vector.load %arg23[%c1_46, %c0_47, %c0_48] : memref<2x128x1xf32, #tpu.memory_space<vmem>>, vector<1x128x1xf32>
    %76 = vector.shape_cast %75 : vector<1x128x1xf32> to vector<128x1xf32>
    %77 = vector.shape_cast %53 : vector<128x1xf32> to vector<1x128x1xf32>
    tpu.vector_store %arg23[%c1_46, %c0_47, %c0_48], %77 {strides = array<i32>} : memref<2x128x1xf32, #tpu.memory_space<vmem>>, vector<1x128x1xf32>,
    %c1_i32 = arith.constant 1 : i32
    %78 = arith.cmpi eq, %arg2, %c1_i32 : i32
    %79 = arith.extui %78 : i1 to i32
    %c0_i32_49 = arith.constant 0 : i32
    %80 = arith.cmpi ne, %79, %c0_i32_49 : i32
    scf.if %80 {
      %c0_50 = arith.constant 0 : index
      %c0_51 = arith.constant 0 : index
      %c0_52 = arith.constant 0 : index
      %81 = vector.load %arg24[%c0_50, %c0_51, %c0_52] : memref<2x128x1xf32, #tpu.memory_space<vmem>>, vector<1x128x1xf32>
      %82 = vector.shape_cast %81 : vector<1x128x1xf32> to vector<128x1xf32>
      %83 = tpu.reciprocal %82 {approx = true} : vector<128x1xf32> -> vector<128x1xf32>
      %c0_53 = arith.constant 0 : index
      %c0_54 = arith.constant 0 : index
      %84 = vector.load %arg25[%c0_53, %c0_54] : memref<128x256xf32, #tpu.memory_space<vmem>>, vector<128x128xf32>
      %85 = vector.broadcast %83 : vector<128x1xf32> to vector<128x128xf32>
      %86 = arith.mulf %84, %85 : vector<128x128xf32>
      %c0_55 = arith.constant 0 : index
      %c0_56 = arith.constant 0 : index
      %87 = vector.load %arg25[%c0_55, %c0_56] : memref<128x256xf32, #tpu.memory_space<vmem>>, vector<128x128xf32>
      tpu.vector_store %arg25[%c0_55, %c0_56], %86 {strides = array<i32>} : memref<128x256xf32, #tpu.memory_space<vmem>>, vector<128x128xf32>,
      %c1_57 = arith.constant 1 : index
      %c0_58 = arith.constant 0 : index
      %c0_59 = arith.constant 0 : index
      %88 = vector.load %arg24[%c1_57, %c0_58, %c0_59] : memref<2x128x1xf32, #tpu.memory_space<vmem>>, vector<1x128x1xf32>
      %89 = vector.shape_cast %88 : vector<1x128x1xf32> to vector<128x1xf32>
      %90 = tpu.reciprocal %89 {approx = true} : vector<128x1xf32> -> vector<128x1xf32>
      %c0_60 = arith.constant 0 : index
      %c128_61 = arith.constant 128 : index
      %91 = vector.load %arg25[%c0_60, %c128_61] : memref<128x256xf32, #tpu.memory_space<vmem>>, vector<128x128xf32>
      %92 = vector.broadcast %90 : vector<128x1xf32> to vector<128x128xf32>
      %93 = arith.mulf %91, %92 : vector<128x128xf32>
      %c0_62 = arith.constant 0 : index
      %c128_63 = arith.constant 128 : index
      %94 = vector.load %arg25[%c0_62, %c128_63] : memref<128x256xf32, #tpu.memory_space<vmem>>, vector<128x128xf32>
      tpu.vector_store %arg25[%c0_62, %c128_63], %93 {strides = array<i32>} : memref<128x256xf32, #tpu.memory_space<vmem>>, vector<128x128xf32>,
      %c0_64 = arith.constant 0 : index
      %c0_65 = arith.constant 0 : index
      %95 = vector.load %arg25[%c0_64, %c0_65] : memref<128x256xf32, #tpu.memory_space<vmem>>, vector<128x256xf32>
      %96 = arith.truncf %95 : vector<128x256xf32> to vector<128x256xbf16>
      %c0_66 = arith.constant 0 : index
      %c0_67 = arith.constant 0 : index
      %97 = vector.load %arg9[%c0_66, %c0_67] : memref<256x256xbf16, #tpu.memory_space<vmem>>, vector<256x256xbf16>
      %cst_68 = arith.constant dense<0.000000e+00> : vector<128x256xf32>
      %98 = tpu.matmul %96, %97, %cst_68 {dimension_numbers = #tpu.dot_dimension_numbers<[1], [0], [0], [1], [0, 0, 1, 1], [], []>} : vector<128x256xbf16>, vector<256x256xbf16>, vector<128x256xf32> -> vector<128x256xf32>
      %c0_69 = arith.constant 0 : index
      %c0_70 = arith.constant 0 : index
      %99 = vector.load %arg10[%c0_69, %c0_70] : memref<1x256xf32, #tpu.memory_space<vmem>>, vector<1x256xf32>
      %100 = vector.broadcast %99 : vector<1x256xf32> to vector<128x256xf32>
      %101 = arith.addf %98, %100 : vector<128x256xf32>
      %c0_71 = arith.constant 0 : index
      %c0_72 = arith.constant 0 : index
      %c0_73 = arith.constant 0 : index
      %102 = vector.load %arg3[%c0_71, %c0_72, %c0_73] : memref<1x128x256xf32, #tpu.memory_space<vmem>>, vector<1x128x256xf32>
      %103 = vector.shape_cast %102 : vector<1x128x256xf32> to vector<128x256xf32>
      %104 = arith.addf %103, %101 : vector<128x256xf32>
      %c0_74 = arith.constant 0 : index
      %c0_75 = arith.constant 0 : index
      %105 = vector.load %arg11[%c0_74, %c0_75] : memref<1x256xf32, #tpu.memory_space<vmem>>, vector<1x256xf32>
      %c0_76 = arith.constant 0 : index
      %c0_77 = arith.constant 0 : index
      %106 = vector.load %arg12[%c0_76, %c0_77] : memref<1x256xf32, #tpu.memory_space<vmem>>, vector<1x256xf32>
      %cst_78 = arith.constant dense<0.000000e+00> : vector<128xf32>
      %107 = vector.multi_reduction <add>, %104, %cst_78 [1] : vector<128x256xf32> to vector<128xf32>
      %108 = vector.shape_cast %107 : vector<128xf32> to vector<128x1xf32>
      %cst_79 = arith.constant 2.560000e+02 : f32
      %109 = vector.broadcast %cst_79 : f32 to vector<128x1xf32>
      %110 = arith.divf %108, %109 : vector<128x1xf32>
      %111 = vector.broadcast %110 : vector<128x1xf32> to vector<128x256xf32>
      %112 = arith.subf %104, %111 : vector<128x256xf32>
      %113 = arith.mulf %112, %112 : vector<128x256xf32>
      %cst_80 = arith.constant dense<0.000000e+00> : vector<128xf32>
      %114 = vector.multi_reduction <add>, %113, %cst_80 [1] : vector<128x256xf32> to vector<128xf32>
      %115 = vector.shape_cast %114 : vector<128xf32> to vector<128x1xf32>
      %cst_81 = arith.constant 2.560000e+02 : f32
      %116 = vector.broadcast %cst_81 : f32 to vector<128x1xf32>
      %117 = arith.divf %115, %116 : vector<128x1xf32>
      %cst_82 = arith.constant 9.99999974E-6 : f32
      %118 = vector.broadcast %cst_82 : f32 to vector<128x1xf32>
      %119 = arith.addf %117, %118 : vector<128x1xf32>
      %120 = math.rsqrt %119 : vector<128x1xf32>
      %121 = vector.broadcast %120 : vector<128x1xf32> to vector<128x256xf32>
      %122 = arith.mulf %112, %121 : vector<128x256xf32>
      %123 = vector.broadcast %105 : vector<1x256xf32> to vector<128x256xf32>
      %124 = arith.mulf %122, %123 : vector<128x256xf32>
      %125 = vector.broadcast %106 : vector<1x256xf32> to vector<128x256xf32>
      %126 = arith.addf %124, %125 : vector<128x256xf32>
      %127 = arith.truncf %126 : vector<128x256xf32> to vector<128x256xbf16>
      %c0_83 = arith.constant 0 : index
      %c0_84 = arith.constant 0 : index
      %128 = vector.load %arg13[%c0_83, %c0_84] : memref<256x128xbf16, #tpu.memory_space<vmem>>, vector<256x128xbf16>
      %cst_85 = arith.constant dense<0.000000e+00> : vector<128x128xf32>
      %129 = tpu.matmul %127, %128, %cst_85 {dimension_numbers = #tpu.dot_dimension_numbers<[1], [0], [0], [1], [0, 0, 1, 1], [], []>} : vector<128x256xbf16>, vector<256x128xbf16>, vector<128x128xf32> -> vector<128x128xf32>
      %130 = arith.truncf %129 : vector<128x128xf32> to vector<128x128xbf16>
      %c0_86 = arith.constant 0 : index
      %c0_87 = arith.constant 0 : index
      %131 = vector.load %arg14[%c0_86, %c0_87] : memref<128x512xbf16, #tpu.memory_space<vmem>>, vector<128x512xbf16>
      %cst_88 = arith.constant dense<0.000000e+00> : vector<128x512xf32>
      %132 = tpu.matmul %130, %131, %cst_88 {dimension_numbers = #tpu.dot_dimension_numbers<[1], [0], [0], [1], [0, 0, 1, 1], [], []>} : vector<128x128xbf16>, vector<128x512xbf16>, vector<128x512xf32> -> vector<128x512xf32>
      %c0_89 = arith.constant 0 : index
      %c0_90 = arith.constant 0 : index
      %133 = vector.load %arg15[%c0_89, %c0_90] : memref<1x512xf32, #tpu.memory_space<vmem>>, vector<1x512xf32>
      %134 = vector.broadcast %133 : vector<1x512xf32> to vector<128x512xf32>
      %135 = arith.addf %132, %134 : vector<128x512xf32>
      %cst_91 = arith.constant 0.000000e+00 : f32
      %136 = vector.broadcast %cst_91 : f32 to vector<128x512xf32>
      %137 = arith.maximumf %135, %136 : vector<128x512xf32>
      %138 = arith.truncf %137 : vector<128x512xf32> to vector<128x512xbf16>
      %c0_92 = arith.constant 0 : index
      %c0_93 = arith.constant 0 : index
      %139 = vector.load %arg16[%c0_92, %c0_93] : memref<512x128xbf16, #tpu.memory_space<vmem>>, vector<512x128xbf16>
      %cst_94 = arith.constant dense<0.000000e+00> : vector<128x128xf32>
      %140 = tpu.matmul %138, %139, %cst_94 {dimension_numbers = #tpu.dot_dimension_numbers<[1], [0], [0], [1], [0, 0, 1, 1], [], []>} : vector<128x512xbf16>, vector<512x128xbf16>, vector<128x128xf32> -> vector<128x128xf32>
      %141 = arith.truncf %140 : vector<128x128xf32> to vector<128x128xbf16>
      %c0_95 = arith.constant 0 : index
      %c0_96 = arith.constant 0 : index
      %142 = vector.load %arg17[%c0_95, %c0_96] : memref<128x256xbf16, #tpu.memory_space<vmem>>, vector<128x256xbf16>
      %cst_97 = arith.constant dense<0.000000e+00> : vector<128x256xf32>
      %143 = tpu.matmul %141, %142, %cst_97 {dimension_numbers = #tpu.dot_dimension_numbers<[1], [0], [0], [1], [0, 0, 1, 1], [], []>} : vector<128x128xbf16>, vector<128x256xbf16>, vector<128x256xf32> -> vector<128x256xf32>
      %c0_98 = arith.constant 0 : index
      %c0_99 = arith.constant 0 : index
      %144 = vector.load %arg18[%c0_98, %c0_99] : memref<1x256xf32, #tpu.memory_space<vmem>>, vector<1x256xf32>
      %145 = vector.broadcast %144 : vector<1x256xf32> to vector<128x256xf32>
      %146 = arith.addf %143, %145 : vector<128x256xf32>
      %147 = arith.addf %126, %146 : vector<128x256xf32>
      %c0_100 = arith.constant 0 : index
      %c0_101 = arith.constant 0 : index
      %148 = vector.load %arg19[%c0_100, %c0_101] : memref<1x256xf32, #tpu.memory_space<vmem>>, vector<1x256xf32>
      %c0_102 = arith.constant 0 : index
      %c0_103 = arith.constant 0 : index
      %149 = vector.load %arg20[%c0_102, %c0_103] : memref<1x256xf32, #tpu.memory_space<vmem>>, vector<1x256xf32>
      %cst_104 = arith.constant dense<0.000000e+00> : vector<128xf32>
      %150 = vector.multi_reduction <add>, %147, %cst_104 [1] : vector<128x256xf32> to vector<128xf32>
      %151 = vector.shape_cast %150 : vector<128xf32> to vector<128x1xf32>
      %cst_105 = arith.constant 2.560000e+02 : f32
      %152 = vector.broadcast %cst_105 : f32 to vector<128x1xf32>
      %153 = arith.divf %151, %152 : vector<128x1xf32>
      %154 = vector.broadcast %153 : vector<128x1xf32> to vector<128x256xf32>
      %155 = arith.subf %147, %154 : vector<128x256xf32>
      %156 = arith.mulf %155, %155 : vector<128x256xf32>
      %cst_106 = arith.constant dense<0.000000e+00> : vector<128xf32>
      %157 = vector.multi_reduction <add>, %156, %cst_106 [1] : vector<128x256xf32> to vector<128xf32>
      %158 = vector.shape_cast %157 : vector<128xf32> to vector<128x1xf32>
      %cst_107 = arith.constant 2.560000e+02 : f32
      %159 = vector.broadcast %cst_107 : f32 to vector<128x1xf32>
      %160 = arith.divf %158, %159 : vector<128x1xf32>
      %cst_108 = arith.constant 9.99999974E-6 : f32
      %161 = vector.broadcast %cst_108 : f32 to vector<128x1xf32>
      %162 = arith.addf %160, %161 : vector<128x1xf32>
      %163 = math.rsqrt %162 : vector<128x1xf32>
      %164 = vector.broadcast %163 : vector<128x1xf32> to vector<128x256xf32>
      %165 = arith.mulf %155, %164 : vector<128x256xf32>
      %166 = vector.broadcast %148 : vector<1x256xf32> to vector<128x256xf32>
      %167 = arith.mulf %165, %166 : vector<128x256xf32>
      %168 = vector.broadcast %149 : vector<1x256xf32> to vector<128x256xf32>
      %169 = arith.addf %167, %168 : vector<128x256xf32>
      %c0_109 = arith.constant 0 : index
      %c0_110 = arith.constant 0 : index
      %c0_111 = arith.constant 0 : index
      %170 = vector.load %arg21[%c0_109, %c0_110, %c0_111] : memref<1x128x256xf32, #tpu.memory_space<vmem>>, vector<1x128x256xf32>
      %171 = vector.shape_cast %170 : vector<1x128x256xf32> to vector<128x256xf32>
      %172 = vector.shape_cast %169 : vector<128x256xf32> to vector<1x128x256xf32>
      tpu.vector_store %arg21[%c0_109, %c0_110, %c0_111], %172 {strides = array<i32>} : memref<1x128x256xf32, #tpu.memory_space<vmem>>, vector<1x128x256xf32>,
    } else {
    }
    return
  }
  func.func @transform_0(%arg0: i32, %arg1: i32, %arg2: i32) -> (i32, i32, i32) {
    %c0_i32 = arith.constant 0 : i32
    %c0_i32_0 = arith.constant 0 : i32
    return %arg0, %arg1, %c0_i32 : i32, i32, i32
  }
  func.func @transform_1(%arg0: i32, %arg1: i32, %arg2: i32) -> (i32, i32, i32) {
    %c0_i32 = arith.constant 0 : i32
    %c0_i32_0 = arith.constant 0 : i32
    return %arg0, %arg2, %c0_i32 : i32, i32, i32
  }
  func.func @transform_2(%arg0: i32, %arg1: i32, %arg2: i32) -> (i32, i32) {
    %c0_i32 = arith.constant 0 : i32
    %c0_i32_0 = arith.constant 0 : i32
    %c0_i32_1 = arith.constant 0 : i32
    return %c0_i32, %c0_i32_0 : i32, i32
  }
  func.func @transform_3(%arg0: i32, %arg1: i32, %arg2: i32) -> (i32, i32) {
    %c0_i32 = arith.constant 0 : i32
    %c0_i32_0 = arith.constant 0 : i32
    %c0_i32_1 = arith.constant 0 : i32
    return %c0_i32, %c0_i32_0 : i32, i32
  }
  func.func @transform_4(%arg0: i32, %arg1: i32, %arg2: i32) -> (i32, i32) {
    %c0_i32 = arith.constant 0 : i32
    %c0_i32_0 = arith.constant 0 : i32
    %c0_i32_1 = arith.constant 0 : i32
    return %c0_i32, %c0_i32_0 : i32, i32
  }
  func.func @transform_5(%arg0: i32, %arg1: i32, %arg2: i32) -> (i32, i32) {
    %c0_i32 = arith.constant 0 : i32
    %c0_i32_0 = arith.constant 0 : i32
    %c0_i32_1 = arith.constant 0 : i32
    return %c0_i32, %c0_i32_0 : i32, i32
  }
  func.func @transform_6(%arg0: i32, %arg1: i32, %arg2: i32) -> (i32, i32) {
    %c0_i32 = arith.constant 0 : i32
    %c0_i32_0 = arith.constant 0 : i32
    %c0_i32_1 = arith.constant 0 : i32
    return %c0_i32, %c0_i32_0 : i32, i32
  }
  func.func @transform_7(%arg0: i32, %arg1: i32, %arg2: i32) -> (i32, i32) {
    %c0_i32 = arith.constant 0 : i32
    %c0_i32_0 = arith.constant 0 : i32
    %c0_i32_1 = arith.constant 0 : i32
    return %c0_i32, %c0_i32_0 : i32, i32
  }
  func.func @transform_8(%arg0: i32, %arg1: i32, %arg2: i32) -> (i32, i32) {
    %c0_i32 = arith.constant 0 : i32
    %c0_i32_0 = arith.constant 0 : i32
    %c0_i32_1 = arith.constant 0 : i32
    return %c0_i32, %c0_i32_0 : i32, i32
  }
  func.func @transform_9(%arg0: i32, %arg1: i32, %arg2: i32) -> (i32, i32) {
    %c0_i32 = arith.constant 0 : i32
    %c0_i32_0 = arith.constant 0 : i32
    %c0_i32_1 = arith.constant 0 : i32
    return %c0_i32, %c0_i32_0 : i32, i32
  }
  func.func @transform_10(%arg0: i32, %arg1: i32, %arg2: i32) -> (i32, i32) {
    %c0_i32 = arith.constant 0 : i32
    %c0_i32_0 = arith.constant 0 : i32
    %c0_i32_1 = arith.constant 0 : i32
    return %c0_i32, %c0_i32_0 : i32, i32
  }
  func.func @transform_11(%arg0: i32, %arg1: i32, %arg2: i32) -> (i32, i32) {
    %c0_i32 = arith.constant 0 : i32
    %c0_i32_0 = arith.constant 0 : i32
    %c0_i32_1 = arith.constant 0 : i32
    return %c0_i32, %c0_i32_0 : i32, i32
  }
  func.func @transform_12(%arg0: i32, %arg1: i32, %arg2: i32) -> (i32, i32) {
    %c0_i32 = arith.constant 0 : i32
    %c0_i32_0 = arith.constant 0 : i32
    %c0_i32_1 = arith.constant 0 : i32
    return %c0_i32, %c0_i32_0 : i32, i32
  }
  func.func @transform_13(%arg0: i32, %arg1: i32, %arg2: i32) -> (i32, i32) {
    %c0_i32 = arith.constant 0 : i32
    %c0_i32_0 = arith.constant 0 : i32
    %c0_i32_1 = arith.constant 0 : i32
    return %c0_i32, %c0_i32_0 : i32, i32
  }
  func.func @transform_14(%arg0: i32, %arg1: i32, %arg2: i32) -> (i32, i32) {
    %c0_i32 = arith.constant 0 : i32
    %c0_i32_0 = arith.constant 0 : i32
    %c0_i32_1 = arith.constant 0 : i32
    return %c0_i32, %c0_i32_0 : i32, i32
  }
  func.func @transform_15(%arg0: i32, %arg1: i32, %arg2: i32) -> (i32, i32) {
    %c0_i32 = arith.constant 0 : i32
    %c0_i32_0 = arith.constant 0 : i32
    %c0_i32_1 = arith.constant 0 : i32
    return %c0_i32, %c0_i32_0 : i32, i32
  }
  func.func @transform_16(%arg0: i32, %arg1: i32, %arg2: i32) -> (i32, i32) {
    %c0_i32 = arith.constant 0 : i32
    %c0_i32_0 = arith.constant 0 : i32
    %c0_i32_1 = arith.constant 0 : i32
    return %c0_i32, %c0_i32_0 : i32, i32
  }
  func.func @transform_17(%arg0: i32, %arg1: i32, %arg2: i32) -> (i32, i32) {
    %c0_i32 = arith.constant 0 : i32
    %c0_i32_0 = arith.constant 0 : i32
    %c0_i32_1 = arith.constant 0 : i32
    return %c0_i32, %c0_i32_0 : i32, i32
  }
  func.func @transform_18(%arg0: i32, %arg1: i32, %arg2: i32) -> (i32, i32, i32) {
    %c0_i32 = arith.constant 0 : i32
    %c0_i32_0 = arith.constant 0 : i32
    return %arg0, %arg1, %c0_i32 : i32, i32, i32
  }
}

</mosaic_0001>

<llo_original>
// kernel: tpu_custom_call.1
$region0: #{tpu_custom_call.1}
  #allocation0 [shape = 'u32[]', space=smem, size = 0x4, offset = 0x4, fixed_abs, tag = 'smem constant byte address 0x4 - core index']
  #allocation1 [shape = 'u32[72,128]{1,0:T(1,128)}', space=vmem, size = 0x9000, scoped, tag = 'internal scratch']
  #allocation2 [shape = 'bf16[128,256]{1,0:T(8,128)(2,1)}', space=vmem, size = 0x10000, scoped, tag = 'scratch operand']
  #allocation3 [shape = 'f32[2,128,1]{2,1,0:T(8,128)}', space=vmem, size = 0x20000, scoped, tag = 'scratch operand']
  #allocation4 [shape = 'f32[2,128,1]{2,1,0:T(8,128)}', space=vmem, size = 0x20000, scoped, tag = 'scratch operand']
  #allocation5 [shape = 'f32[128,256]{1,0:T(8,128)}', space=vmem, size = 0x20000, scoped, tag = 'scratch operand']
  %s0 = inlined_call_operand.hbm [shape: f32[2,256,256], index: 0, kind: input, shape index: {}]
  %s1 = inlined_call_operand.hbm [shape: f32[2,256,256], index: 1, kind: input, shape index: {}]
  %s2 = inlined_call_operand.hbm [shape: bf16[256,256], index: 2, kind: input, shape index: {}]
  %s3 = inlined_call_operand.hbm [shape: f32[1,256], index: 3, kind: input, shape index: {}]
  %s4 = inlined_call_operand.hbm [shape: bf16[256,512], index: 4, kind: input, shape index: {}]
  %s5 = inlined_call_operand.vmem [shape: f32[1,512], index: 5, kind: input, shape index: {}]
  %s6 = inlined_call_operand.hbm [shape: bf16[256,256], index: 6, kind: input, shape index: {}]
  %s7 = inlined_call_operand.hbm [shape: f32[1,256], index: 7, kind: input, shape index: {}]
  %s8 = inlined_call_operand.hbm [shape: f32[1,256], index: 8, kind: input, shape index: {}]
  %s9 = inlined_call_operand.hbm [shape: f32[1,256], index: 9, kind: input, shape index: {}]
  %s10 = inlined_call_operand.hbm [shape: bf16[256,128], index: 10, kind: input, shape index: {}]
  %s11 = inlined_call_operand.hbm [shape: bf16[128,512], index: 11, kind: input, shape index: {}]
  %s12 = inlined_call_operand.vmem [shape: f32[1,512], index: 12, kind: input, shape index: {}]
  %s13 = inlined_call_operand.hbm [shape: bf16[512,128], index: 13, kind: input, shape index: {}]
  %s14 = inlined_call_operand.hbm [shape: bf16[128,256], index: 14, kind: input, shape index: {}]
  %s15 = inlined_call_operand.vmem [shape: f32[1,256], index: 15, kind: input, shape index: {}]
  %s16 = inlined_call_operand.vmem [shape: f32[1,256], index: 16, kind: input, shape index: {}]
  %s17 = inlined_call_operand.vmem [shape: f32[1,256], index: 17, kind: input, shape index: {}]
  %s18 = inlined_call_operand.hbm [shape: f32[2,256,256], index: 18, kind: output, shape index: {}]
  %s19 = sld [smem:[#allocation0]]
  $region165: #{tpu_custom_call.1} parent=0
    _
  %s21 = ssub.s32 1, %s19
  %s22 = scalar_select 0, %s21, %s19
  $region1: #{tpu_custom_call.1} parent=0
    #allocation6 [shape = 'u8[262144]{0}', space=vmem, size = 0x40000, scoped, tag = 'input window, operand 0']
    #allocation7 [shape = 's32[2]{0}', space=sflag, size = 0x8, scoped, tag = 'scoped memory for tpu_custom_call.1']
    #allocation8 [shape = 's32[2]{0}', space=sflag, size = 0x8, scoped, tag = 'scoped memory for tpu_custom_call.1']
    #allocation9 [shape = 'u8[262144]{0}', space=vmem, size = 0x40000, scoped, tag = 'input window, operand 1']
    #allocation10 [shape = 's32[2]{0}', space=sflag, size = 0x8, scoped, tag = 'scoped memory for tpu_custom_call.1']
    #allocation11 [shape = 'u8[131072]{0}', space=vmem, size = 0x20000, scoped, tag = 'input window, operand 2, single buffered']
    #allocation12 [shape = 'u8[1024]{0}', space=vmem, size = 0x400, scoped, tag = 'input window, operand 3, single buffered']
    #allocation13 [shape = 's32[1]{0}', space=sflag, size = 0x4, scoped, tag = 'scoped memory for tpu_custom_call.1']
    #allocation14 [shape = 'u8[262144]{0}', space=vmem, size = 0x40000, scoped, tag = 'input window, operand 4, single buffered']
    #allocation15 [shape = 'u8[131072]{0}', space=vmem, size = 0x20000, scoped, tag = 'input window, operand 6, single buffered']
    #allocation16 [shape = 's32[1]{0}', space=sflag, size = 0x4, scoped, tag = 'scoped memory for tpu_custom_call.1']
    #allocation17 [shape = 'u8[1024]{0}', space=vmem, size = 0x400, scoped, tag = 'input window, operand 7, single buffered']
    #allocation18 [shape = 'u8[1024]{0}', space=vmem, size = 0x400, scoped, tag = 'input window, operand 8, single buffered']
    #allocation19 [shape = 's32[1]{0}', space=sflag, size = 0x4, scoped, tag = 'scoped memory for tpu_custom_call.1']
    #allocation20 [shape = 'u8[1024]{0}', space=vmem, size = 0x400, scoped, tag = 'input window, operand 9, single buffered']
    #allocation21 [shape = 'u8[65536]{0}', space=vmem, size = 0x10000, scoped, tag = 'input window, operand 10, single buffered']
    #allocation22 [shape = 's32[1]{0}', space=sflag, size = 0x4, scoped, tag = 'scoped memory for tpu_custom_call.1']
    #allocation23 [shape = 'u8[131072]{0}', space=vmem, size = 0x20000, scoped, tag = 'input window, operand 11, single buffered']
    #allocation24 [shape = 'u8[131072]{0}', space=vmem, size = 0x20000, scoped, tag = 'input window, operand 13, single buffered']
    #allocation25 [shape = 's32[1]{0}', space=sflag, size = 0x4, scoped, tag = 'scoped memory for tpu_custom_call.1']
    #allocation26 [shape = 'u8[65536]{0}', space=vmem, size = 0x10000, scoped, tag = 'input window, operand 14, single buffered']
    #allocation27 [shape = 'u8[262144]{0}', space=vmem, size = 0x40000, scoped, tag = 'output window, operand 0']
    %23 = vsyncpa [#allocation7], 0
    %s24 = scalar_lea.sflag [#allocation7], 1
    %25 = vsyncpa %s24, 0
    %26 = vsyncpa [#allocation10], 0
    %s27 = scalar_lea.sflag [#allocation10], 1
    %28 = vsyncpa %s27, 0
    %29 = vsyncpa [#allocation13], 0
    %30 = vsyncpa [#allocation16], 0
    %31 = vsyncpa [#allocation19], 0
    %32 = vsyncpa [#allocation22], 0
    %33 = vsyncpa [#allocation25], 0
    %34 = vsyncpa [#allocation8], 0
    %s35 = scalar_lea.sflag [#allocation8], 1
    %36 = vsyncpa %s35, 0
    loop: start=0, step=1, limit=10
    $region2: #{tpu_custom_call.1} parent=1 // loop_pre_header
      _
    $region3: #{tpu_custom_call.1} parent=1 // loop_header
      %s38 = sphi 0, %s42
      %p39 = scmp.ge.s32.totalorder %s38, 10
      %s45 = sphi 0, %s64
      %s46 = sphi 0, %s60
      %s47 = sphi 0, %s56
      %s48 = sphi 0, %s45
      %s49 = sphi 0, %s46
      %s50 = sphi 0, %s47
      %s51 = sphi 0, %s48
      %s52 = sphi 0, %s49
      %s53 = sphi 0, %s50
      %s69 = sphi 0, %s71
      %s72 = sphi 0, %s69
      %s73 = sphi 0, %s72
      %s89 = sphi 0, %s73
      %s97 = sphi 0, %s99
      %s100 = sphi 0, %s97
      %s101 = sphi 0, %s100
      %s117 = sphi 0, %s101
      %s121 = sphi 0, %s121
      %s123 = sphi 0, %s121
      %s124 = sphi 0, %s123
      %s138 = sphi 0, %s124
      %s142 = sphi 0, %s142
      %s144 = sphi 0, %s142
      %s145 = sphi 0, %s144
      %s159 = sphi 0, %s145
      %s163 = sphi 0, %s163
      %s165 = sphi 0, %s163
      %s166 = sphi 0, %s165
      %s180 = sphi 0, %s166
      %s184 = sphi 0, %s184
      %s186 = sphi 0, %s184
      %s187 = sphi 0, %s186
      %s201 = sphi 0, %s187
      %s205 = sphi 0, %s205
      %s207 = sphi 0, %s205
      %s208 = sphi 0, %s207
      %s222 = sphi 0, %s208
      %s226 = sphi 0, %s226
      %s228 = sphi 0, %s226
      %s229 = sphi 0, %s228
      %s243 = sphi 0, %s229
      %s247 = sphi 0, %s247
      %s249 = sphi 0, %s247
      %s250 = sphi 0, %s249
      %s264 = sphi 0, %s250
      %s268 = sphi 0, %s268
      %s270 = sphi 0, %s268
      %s271 = sphi 0, %s270
      %s285 = sphi 0, %s271
      %s289 = sphi 0, %s289
      %s291 = sphi 0, %s289
      %s292 = sphi 0, %s291
      %s306 = sphi 0, %s292
      %s310 = sphi 0, %s310
      %s312 = sphi 0, %s310
      %s313 = sphi 0, %s312
      %s327 = sphi 0, %s313
      %s331 = sphi 0, %s331
      %s333 = sphi 0, %s331
      %s334 = sphi 0, %s333
      %s348 = sphi 0, %s334
      %s352 = sphi 0, %s352
      %s354 = sphi 0, %s352
      %s355 = sphi 0, %s354
      %s369 = sphi 0, %s355
      %s373 = sphi 0, %s373
      %s375 = sphi 0, %s373
      %s376 = sphi 0, %s375
      %s390 = sphi 0, %s376
      %s394 = sphi 0, %s394
      %s396 = sphi 0, %s394
      %s397 = sphi 0, %s396
      %s411 = sphi 0, %s397
      %s415 = sphi 0, %s415
      %s417 = sphi 0, %s415
      %s418 = sphi 0, %s417
      %s432 = sphi 0, %s418
      %s436 = sphi 0, %s436
      %s438 = sphi 0, %s436
      %s439 = sphi 0, %s438
      %s453 = sphi 0, %s439
      %s461 = sphi 0, %s463
      %s464 = sphi 0, %s461
      %s465 = sphi 0, %s464
      %s481 = sphi 0, %s465
    $region4: #{tpu_custom_call.1} parent=1 // loop_header_branch
      %41 = sbr.rel (%p39) target = $region8
    $region5: #{tpu_custom_call.1} parent=1 // loop_body
      %s43 = ssub.s32 %s38, 1
      %s44 = ssub.s32 %s38, 2
      %s54 = sadd.s32 1, %s47
      %p55 = scmp.ge.s32.totalorder %s54, 2
      %s56 = scalar_select %p55, 0, %s54
      %s57 = sadd.s32 1, %s46
      %s58 = scalar_select %p55, %s57, %s46
      %p59 = scmp.ge.s32.totalorder %s58, 2
      %s60 = scalar_select %p59, 0, %s58
      %s61 = sadd.s32 1, %s45
      %s62 = scalar_select %p59, %s61, %s45
      %p63 = scmp.ge.s32.totalorder %s62, 2
      %s64 = scalar_select %p63, 0, %s62
      %s65 = ssub.s32 %s45, %s64
      %s66 = ssub.s32 %s46, %s60
      %s67 = sor.u32 %s65, %s66
      %p68 = scmp.eq.s32.totalorder %s67, 0
      %s70 = sadd.s32 %s69, 1
      %s71 = scalar_select %p68, %s69, %s70
      %p74 = pneg %p68
      %p75 = scmp.eq.s32.totalorder %s38, 7
      %p76 = por %p74, %p75
      %p77 = scmp.ne.s32.totalorder %s69, %s72
      %p78 = scmp.eq.s32.totalorder %s38, 0
      %p79 = por %p77, %p78
      %p80 = scmp.ne.s32.totalorder %s69, %s72
      %p81 = scmp.eq.s32.totalorder %s43, 7
      %p82 = por %p80, %p81
      %p83 = scmp.ne.s32.totalorder %s72, %s73
      %p84 = scmp.eq.s32.totalorder %s43, 0
      %p85 = por %p83, %p84
      %p86 = scmp.ne.s32.totalorder %s72, %s73
      %p87 = scmp.eq.s32.totalorder %s44, 7
      %p88 = por %p86, %p87
      %p90 = scmp.ne.s32.totalorder %s73, %s89
      %p91 = scmp.eq.s32.totalorder %s44, 0
      %p92 = por %p90, %p91
      %s93 = ssub.s32 %s45, %s64
      %s94 = ssub.s32 %s47, %s56
      %s95 = sor.u32 %s93, %s94
      %p96 = scmp.eq.s32.totalorder %s95, 0
      %s98 = sadd.s32 %s97, 1
      %s99 = scalar_select %p96, %s97, %s98
      %p102 = pneg %p96
      %p103 = scmp.eq.s32.totalorder %s38, 7
      %p104 = por %p102, %p103
      %p105 = scmp.ne.s32.totalorder %s97, %s100
      %p106 = scmp.eq.s32.totalorder %s38, 0
      %p107 = por %p105, %p106
      %p108 = scmp.ne.s32.totalorder %s97, %s100
      %p109 = scmp.eq.s32.totalorder %s43, 7
      %p110 = por %p108, %p109
      %p111 = scmp.ne.s32.totalorder %s100, %s101
      %p112 = scmp.eq.s32.totalorder %s43, 0
      %p113 = por %p111, %p112
      %p114 = scmp.ne.s32.totalorder %s100, %s101
      %p115 = scmp.eq.s32.totalorder %s44, 7
      %p116 = por %p114, %p115
      %p118 = scmp.ne.s32.totalorder %s101, %s117
      %p119 = scmp.eq.s32.totalorder %s44, 0
      %p120 = por %p118, %p119
      %s122 = sadd.s32 %s121, 1
      %p125 = scmp.eq.s32.totalorder %s38, 7
      %p126 = scmp.ne.s32.totalorder %s121, %s123
      %p127 = scmp.eq.s32.totalorder %s38, 0
      %p128 = por %p126, %p127
      %p129 = scmp.ne.s32.totalorder %s121, %s123
      %p130 = scmp.eq.s32.totalorder %s43, 7
      %p131 = por %p129, %p130
      %p132 = scmp.ne.s32.totalorder %s123, %s124
      %p133 = scmp.eq.s32.totalorder %s43, 0
      %p134 = por %p132, %p133
      %p135 = scmp.ne.s32.totalorder %s123, %s124
      %p136 = scmp.eq.s32.totalorder %s44, 7
      %p137 = por %p135, %p136
      %p139 = scmp.ne.s32.totalorder %s124, %s138
      %p140 = scmp.eq.s32.totalorder %s44, 0
      %p141 = por %p139, %p140
      %s143 = sadd.s32 %s142, 1
      %p146 = scmp.eq.s32.totalorder %s38, 7
      %p147 = scmp.ne.s32.totalorder %s142, %s144
      %p148 = scmp.eq.s32.totalorder %s38, 0
      %p149 = por %p147, %p148
      %p150 = scmp.ne.s32.totalorder %s142, %s144
      %p151 = scmp.eq.s32.totalorder %s43, 7
      %p152 = por %p150, %p151
      %p153 = scmp.ne.s32.totalorder %s144, %s145
      %p154 = scmp.eq.s32.totalorder %s43, 0
      %p155 = por %p153, %p154
      %p156 = scmp.ne.s32.totalorder %s144, %s145
      %p157 = scmp.eq.s32.totalorder %s44, 7
      %p158 = por %p156, %p157
      %p160 = scmp.ne.s32.totalorder %s145, %s159
      %p161 = scmp.eq.s32.totalorder %s44, 0
      %p162 = por %p160, %p161
      %s164 = sadd.s32 %s163, 1
      %p167 = scmp.eq.s32.totalorder %s38, 7
      %p168 = scmp.ne.s32.totalorder %s163, %s165
      %p169 = scmp.eq.s32.totalorder %s38, 0
      %p170 = por %p168, %p169
      %p171 = scmp.ne.s32.totalorder %s163, %s165
      %p172 = scmp.eq.s32.totalorder %s43, 7
      %p173 = por %p171, %p172
      %p174 = scmp.ne.s32.totalorder %s165, %s166
      %p175 = scmp.eq.s32.totalorder %s43, 0
      %p176 = por %p174, %p175
      %p177 = scmp.ne.s32.totalorder %s165, %s166
      %p178 = scmp.eq.s32.totalorder %s44, 7
      %p179 = por %p177, %p178
      %p181 = scmp.ne.s32.totalorder %s166, %s180
      %p182 = scmp.eq.s32.totalorder %s44, 0
      %p183 = por %p181, %p182
      %s185 = sadd.s32 %s184, 1
      %p188 = scmp.eq.s32.totalorder %s38, 7
      %p189 = scmp.ne.s32.totalorder %s184, %s186
      %p190 = scmp.eq.s32.totalorder %s38, 0
      %p191 = por %p189, %p190
      %p192 = scmp.ne.s32.totalorder %s184, %s186
      %p193 = scmp.eq.s32.totalorder %s43, 7
      %p194 = por %p192, %p193
      %p195 = scmp.ne.s32.totalorder %s186, %s187
      %p196 = scmp.eq.s32.totalorder %s43, 0
      %p197 = por %p195, %p196
      %p198 = scmp.ne.s32.totalorder %s186, %s187
      %p199 = scmp.eq.s32.totalorder %s44, 7
      %p200 = por %p198, %p199
      %p202 = scmp.ne.s32.totalorder %s187, %s201
      %p203 = scmp.eq.s32.totalorder %s44, 0
      %p204 = por %p202, %p203
      %s206 = sadd.s32 %s205, 1
      %p209 = scmp.eq.s32.totalorder %s38, 7
      %p210 = scmp.ne.s32.totalorder %s205, %s207
      %p211 = scmp.eq.s32.totalorder %s38, 0
      %p212 = por %p210, %p211
      %p213 = scmp.ne.s32.totalorder %s205, %s207
      %p214 = scmp.eq.s32.totalorder %s43, 7
      %p215 = por %p213, %p214
      %p216 = scmp.ne.s32.totalorder %s207, %s208
      %p217 = scmp.eq.s32.totalorder %s43, 0
      %p218 = por %p216, %p217
      %p219 = scmp.ne.s32.totalorder %s207, %s208
      %p220 = scmp.eq.s32.totalorder %s44, 7
      %p221 = por %p219, %p220
      %p223 = scmp.ne.s32.totalorder %s208, %s222
      %p224 = scmp.eq.s32.totalorder %s44, 0
      %p225 = por %p223, %p224
      %s227 = sadd.s32 %s226, 1
      %p230 = scmp.eq.s32.totalorder %s38, 7
      %p231 = scmp.ne.s32.totalorder %s226, %s228
      %p232 = scmp.eq.s32.totalorder %s38, 0
      %p233 = por %p231, %p232
      %p234 = scmp.ne.s32.totalorder %s226, %s228
      %p235 = scmp.eq.s32.totalorder %s43, 7
      %p236 = por %p234, %p235
      %p237 = scmp.ne.s32.totalorder %s228, %s229
      %p238 = scmp.eq.s32.totalorder %s43, 0
      %p239 = por %p237, %p238
      %p240 = scmp.ne.s32.totalorder %s228, %s229
      %p241 = scmp.eq.s32.totalorder %s44, 7
      %p242 = por %p240, %p241
      %p244 = scmp.ne.s32.totalorder %s229, %s243
      %p245 = scmp.eq.s32.totalorder %s44, 0
      %p246 = por %p244, %p245
      %s248 = sadd.s32 %s247, 1
      %p251 = scmp.eq.s32.totalorder %s38, 7
      %p252 = scmp.ne.s32.totalorder %s247, %s249
      %p253 = scmp.eq.s32.totalorder %s38, 0
      %p254 = por %p252, %p253
      %p255 = scmp.ne.s32.totalorder %s247, %s249
      %p256 = scmp.eq.s32.totalorder %s43, 7
      %p257 = por %p255, %p256
      %p258 = scmp.ne.s32.totalorder %s249, %s250
      %p259 = scmp.eq.s32.totalorder %s43, 0
      %p260 = por %p258, %p259
      %p261 = scmp.ne.s32.totalorder %s249, %s250
      %p262 = scmp.eq.s32.totalorder %s44, 7
      %p263 = por %p261, %p262
      %p265 = scmp.ne.s32.totalorder %s250, %s264
      %p266 = scmp.eq.s32.totalorder %s44, 0
      %p267 = por %p265, %p266
      %s269 = sadd.s32 %s268, 1
      %p272 = scmp.eq.s32.totalorder %s38, 7
      %p273 = scmp.ne.s32.totalorder %s268, %s270
      %p274 = scmp.eq.s32.totalorder %s38, 0
      %p275 = por %p273, %p274
      %p276 = scmp.ne.s32.totalorder %s268, %s270
      %p277 = scmp.eq.s32.totalorder %s43, 7
      %p278 = por %p276, %p277
      %p279 = scmp.ne.s32.totalorder %s270, %s271
      %p280 = scmp.eq.s32.totalorder %s43, 0
      %p281 = por %p279, %p280
      %p282 = scmp.ne.s32.totalorder %s270, %s271
      %p283 = scmp.eq.s32.totalorder %s44, 7
      %p284 = por %p282, %p283
      %p286 = scmp.ne.s32.totalorder %s271, %s285
      %p287 = scmp.eq.s32.totalorder %s44, 0
      %p288 = por %p286, %p287
      %s290 = sadd.s32 %s289, 1
      %p293 = scmp.eq.s32.totalorder %s38, 7
      %p294 = scmp.ne.s32.totalorder %s289, %s291
      %p295 = scmp.eq.s32.totalorder %s38, 0
      %p296 = por %p294, %p295
      %p297 = scmp.ne.s32.totalorder %s289, %s291
      %p298 = scmp.eq.s32.totalorder %s43, 7
      %p299 = por %p297, %p298
      %p300 = scmp.ne.s32.totalorder %s291, %s292
      %p301 = scmp.eq.s32.totalorder %s43, 0
      %p302 = por %p300, %p301
      %p303 = scmp.ne.s32.totalorder %s291, %s292
      %p304 = scmp.eq.s32.totalorder %s44, 7
      %p305 = por %p303, %p304
      %p307 = scmp.ne.s32.totalorder %s292, %s306
      %p308 = scmp.eq.s32.totalorder %s44, 0
      %p309 = por %p307, %p308
      %s311 = sadd.s32 %s310, 1
      %p314 = scmp.eq.s32.totalorder %s38, 7
      %p315 = scmp.ne.s32.totalorder %s310, %s312
      %p316 = scmp.eq.s32.totalorder %s38, 0
      %p317 = por %p315, %p316
      %p318 = scmp.ne.s32.totalorder %s310, %s312
      %p319 = scmp.eq.s32.totalorder %s43, 7
      %p320 = por %p318, %p319
      %p321 = scmp.ne.s32.totalorder %s312, %s313
      %p322 = scmp.eq.s32.totalorder %s43, 0
      %p323 = por %p321, %p322
      %p324 = scmp.ne.s32.totalorder %s312, %s313
      %p325 = scmp.eq.s32.totalorder %s44, 7
      %p326 = por %p324, %p325
      %p328 = scmp.ne.s32.totalorder %s313, %s327
      %p329 = scmp.eq.s32.totalorder %s44, 0
      %p330 = por %p328, %p329
      %s332 = sadd.s32 %s331, 1
      %p335 = scmp.eq.s32.totalorder %s38, 7
      %p336 = scmp.ne.s32.totalorder %s331, %s333
      %p337 = scmp.eq.s32.totalorder %s38, 0
      %p338 = por %p336, %p337
      %p339 = scmp.ne.s32.totalorder %s331, %s333
      %p340 = scmp.eq.s32.totalorder %s43, 7
      %p341 = por %p339, %p340
      %p342 = scmp.ne.s32.totalorder %s333, %s334
      %p343 = scmp.eq.s32.totalorder %s43, 0
      %p344 = por %p342, %p343
      %p345 = scmp.ne.s32.totalorder %s333, %s334
      %p346 = scmp.eq.s32.totalorder %s44, 7
      %p347 = por %p345, %p346
      %p349 = scmp.ne.s32.totalorder %s334, %s348
      %p350 = scmp.eq.s32.totalorder %s44, 0
      %p351 = por %p349, %p350
      %s353 = sadd.s32 %s352, 1
      %p356 = scmp.eq.s32.totalorder %s38, 7
      %p357 = scmp.ne.s32.totalorder %s352, %s354
      %p358 = scmp.eq.s32.totalorder %s38, 0
      %p359 = por %p357, %p358
      %p360 = scmp.ne.s32.totalorder %s352, %s354
      %p361 = scmp.eq.s32.totalorder %s43, 7
      %p362 = por %p360, %p361
      %p363 = scmp.ne.s32.totalorder %s354, %s355
      %p364 = scmp.eq.s32.totalorder %s43, 0
      %p365 = por %p363, %p364
      %p366 = scmp.ne.s32.totalorder %s354, %s355
      %p367 = scmp.eq.s32.totalorder %s44, 7
      %p368 = por %p366, %p367
      %p370 = scmp.ne.s32.totalorder %s355, %s369
      %p371 = scmp.eq.s32.totalorder %s44, 0
      %p372 = por %p370, %p371
      %s374 = sadd.s32 %s373, 1
      %p377 = scmp.eq.s32.totalorder %s38, 7
      %p378 = scmp.ne.s32.totalorder %s373, %s375
      %p379 = scmp.eq.s32.totalorder %s38, 0
      %p380 = por %p378, %p379
      %p381 = scmp.ne.s32.totalorder %s373, %s375
      %p382 = scmp.eq.s32.totalorder %s43, 7
      %p383 = por %p381, %p382
      %p384 = scmp.ne.s32.totalorder %s375, %s376
      %p385 = scmp.eq.s32.totalorder %s43, 0
      %p386 = por %p384, %p385
      %p387 = scmp.ne.s32.totalorder %s375, %s376
      %p388 = scmp.eq.s32.totalorder %s44, 7
      %p389 = por %p387, %p388
      %p391 = scmp.ne.s32.totalorder %s376, %s390
      %p392 = scmp.eq.s32.totalorder %s44, 0
      %p393 = por %p391, %p392
      %s395 = sadd.s32 %s394, 1
      %p398 = scmp.eq.s32.totalorder %s38, 7
      %p399 = scmp.ne.s32.totalorder %s394, %s396
      %p400 = scmp.eq.s32.totalorder %s38, 0
      %p401 = por %p399, %p400
      %p402 = scmp.ne.s32.totalorder %s394, %s396
      %p403 = scmp.eq.s32.totalorder %s43, 7
      %p404 = por %p402, %p403
      %p405 = scmp.ne.s32.totalorder %s396, %s397
      %p406 = scmp.eq.s32.totalorder %s43, 0
      %p407 = por %p405, %p406
      %p408 = scmp.ne.s32.totalorder %s396, %s397
      %p409 = scmp.eq.s32.totalorder %s44, 7
      %p410 = por %p408, %p409
      %p412 = scmp.ne.s32.totalorder %s397, %s411
      %p413 = scmp.eq.s32.totalorder %s44, 0
      %p414 = por %p412, %p413
      %s416 = sadd.s32 %s415, 1
      %p419 = scmp.eq.s32.totalorder %s38, 7
      %p420 = scmp.ne.s32.totalorder %s415, %s417
      %p421 = scmp.eq.s32.totalorder %s38, 0
      %p422 = por %p420, %p421
      %p423 = scmp.ne.s32.totalorder %s415, %s417
      %p424 = scmp.eq.s32.totalorder %s43, 7
      %p425 = por %p423, %p424
      %p426 = scmp.ne.s32.totalorder %s417, %s418
      %p427 = scmp.eq.s32.totalorder %s43, 0
      %p428 = por %p426, %p427
      %p429 = scmp.ne.s32.totalorder %s417, %s418
      %p430 = scmp.eq.s32.totalorder %s44, 7
      %p431 = por %p429, %p430
      %p433 = scmp.ne.s32.totalorder %s418, %s432
      %p434 = scmp.eq.s32.totalorder %s44, 0
      %p435 = por %p433, %p434
      %s437 = sadd.s32 %s436, 1
      %p440 = scmp.eq.s32.totalorder %s38, 7
      %p441 = scmp.ne.s32.totalorder %s436, %s438
      %p442 = scmp.eq.s32.totalorder %s38, 0
      %p443 = por %p441, %p442
      %p444 = scmp.ne.s32.totalorder %s436, %s438
      %p445 = scmp.eq.s32.totalorder %s43, 7
      %p446 = por %p444, %p445
      %p447 = scmp.ne.s32.totalorder %s438, %s439
      %p448 = scmp.eq.s32.totalorder %s43, 0
      %p449 = por %p447, %p448
      %p450 = scmp.ne.s32.totalorder %s438, %s439
      %p451 = scmp.eq.s32.totalorder %s44, 7
      %p452 = por %p450, %p451
      %p454 = scmp.ne.s32.totalorder %s439, %s453
      %p455 = scmp.eq.s32.totalorder %s44, 0
      %p456 = por %p454, %p455
      %s457 = ssub.s32 %s45, %s64
      %s458 = ssub.s32 %s46, %s60
      %s459 = sor.u32 %s457, %s458
      %p460 = scmp.eq.s32.totalorder %s459, 0
      %s462 = sadd.s32 %s461, 1
      %s463 = scalar_select %p460, %s461, %s462
      %p466 = pneg %p460
      %p467 = scmp.eq.s32.totalorder %s38, 7
      %p468 = por %p466, %p467
      %p469 = scmp.ne.s32.totalorder %s461, %s464
      %p470 = scmp.eq.s32.totalorder %s38, 0
      %p471 = por %p469, %p470
      %p472 = scmp.ne.s32.totalorder %s461, %s464
      %p473 = scmp.eq.s32.totalorder %s43, 7
      %p474 = por %p472, %p473
      %p475 = scmp.ne.s32.totalorder %s464, %s465
      %p476 = scmp.eq.s32.totalorder %s43, 0
      %p477 = por %p475, %p476
      %p478 = scmp.ne.s32.totalorder %s464, %s465
      %p479 = scmp.eq.s32.totalorder %s44, 7
      %p480 = por %p478, %p479
      %p482 = scmp.ne.s32.totalorder %s465, %s481
      %p483 = scmp.eq.s32.totalorder %s44, 0
      %p484 = por %p482, %p483
      %p485 = scmp.le.s32.totalorder 1, %s38
      %p486 = scmp.lt.s32.totalorder %s38, 9
      %p487 = pnand %p485, %p486
      %p488 = pneg %p487
      // Predicated region
      $region9: #{tpu_custom_call.1} parent=5 // pred_check
        _
      $region10: #{tpu_custom_call.1} parent=5 // pred_check_branch
        %490 = sbr.rel (%p487) target = $region12
      $region11: #{tpu_custom_call.1} parent=5 // pred_region
        %s491 = ssub.s32 %s38, 1
        // Predicated region
        $region13: #{tpu_custom_call.1} parent=11 // pred_check
          %p492 = pneg %p134
        $region14: #{tpu_custom_call.1} parent=11 // pred_check_branch
          %494 = sbr.rel (%p492) target = $region16
        $region15: #{tpu_custom_call.1} parent=11 // pred_region
          %496 = vsyncadd [#allocation10], 0
          %s497 = sshll.u32 %s2, 4
          %s498 = int_to_ptr.hbm [resolvable:$true] %s497
          %s499 = sshll.u32 [#allocation11], 4
          %s500 = int_to_ptr.vmem [resolvable:$true] %s499
          %505 = dma.hbm_to_vmem [thread:$0]  %s498, 4096, %s500, [#allocation10], 128, 128, 8
        $region16: #{tpu_custom_call.1} parent=11 // pred_fallthru
          _
        // Predicated region
        $region17: #{tpu_custom_call.1} parent=11 // pred_check
          %p506 = pneg %p155
        $region18: #{tpu_custom_call.1} parent=11 // pred_check_branch
          %508 = sbr.rel (%p506) target = $region20
        $region19: #{tpu_custom_call.1} parent=11 // pred_region
          %510 = vsyncadd [#allocation13], 0
          %s512 = sshll.u32 %s3, 4
          %s513 = int_to_ptr.hbm [resolvable:$true] %s512
          %s514 = sshll.u32 [#allocation12], 4
          %s515 = int_to_ptr.vmem [resolvable:$true] %s514
          %517 = dma.hbm_to_vmem [thread:$0]  %s513, 32, %s515, [#allocation13]
        $region20: #{tpu_custom_call.1} parent=11 // pred_fallthru
          _
        // Predicated region
        $region21: #{tpu_custom_call.1} parent=11 // pred_check
          %p518 = pneg %p176
        $region22: #{tpu_custom_call.1} parent=11 // pred_check_branch
          %520 = sbr.rel (%p518) target = $region24
        $region23: #{tpu_custom_call.1} parent=11 // pred_region
          %522 = vsyncadd [#allocation13], 0
          %s523 = sshll.u32 %s4, 4
          %s524 = int_to_ptr.hbm [resolvable:$true] %s523
          %s525 = sshll.u32 [#allocation14], 4
          %s526 = int_to_ptr.vmem [resolvable:$true] %s525
          %531 = dma.hbm_to_vmem [thread:$0]  %s524, 8192, %s526, [#allocation13], 256, 256, 16
        $region24: #{tpu_custom_call.1} parent=11 // pred_fallthru
          _
        // Predicated region
        $region25: #{tpu_custom_call.1} parent=11 // pred_check
          %p532 = pneg %p197
        $region26: #{tpu_custom_call.1} parent=11 // pred_check_branch
          %534 = sbr.rel (%p532) target = $region28
        $region27: #{tpu_custom_call.1} parent=11 // pred_region
          _
        $region28: #{tpu_custom_call.1} parent=11 // pred_fallthru
          _
        // Predicated region
        $region29: #{tpu_custom_call.1} parent=11 // pred_check
          %p535 = pneg %p218
        $region30: #{tpu_custom_call.1} parent=11 // pred_check_branch
          %537 = sbr.rel (%p535) target = $region32
        $region31: #{tpu_custom_call.1} parent=11 // pred_region
          %539 = vsyncadd [#allocation16], 0
          %s540 = sshll.u32 %s6, 4
          %s541 = int_to_ptr.hbm [resolvable:$true] %s540
          %s542 = sshll.u32 [#allocation15], 4
          %s543 = int_to_ptr.vmem [resolvable:$true] %s542
          %548 = dma.hbm_to_vmem [thread:$0]  %s541, 4096, %s543, [#allocation16], 128, 128, 8
        $region32: #{tpu_custom_call.1} parent=11 // pred_fallthru
          _
        // Predicated region
        $region33: #{tpu_custom_call.1} parent=11 // pred_check
          %p549 = pneg %p239
        $region34: #{tpu_custom_call.1} parent=11 // pred_check_branch
          %551 = sbr.rel (%p549) target = $region36
        $region35: #{tpu_custom_call.1} parent=11 // pred_region
          %553 = vsyncadd [#allocation16], 0
          %s555 = sshll.u32 %s7, 4
          %s556 = int_to_ptr.hbm [resolvable:$true] %s555
          %s557 = sshll.u32 [#allocation17], 4
          %s558 = int_to_ptr.vmem [resolvable:$true] %s557
          %560 = dma.hbm_to_vmem [thread:$0]  %s556, 32, %s558, [#allocation16]
        $region36: #{tpu_custom_call.1} parent=11 // pred_fallthru
          _
        // Predicated region
        $region37: #{tpu_custom_call.1} parent=11 // pred_check
          %p561 = pneg %p260
        $region38: #{tpu_custom_call.1} parent=11 // pred_check_branch
          %563 = sbr.rel (%p561) target = $region40
        $region39: #{tpu_custom_call.1} parent=11 // pred_region
          %565 = vsyncadd [#allocation19], 0
          %s567 = sshll.u32 %s8, 4
          %s568 = int_to_ptr.hbm [resolvable:$true] %s567
          %s569 = sshll.u32 [#allocation18], 4
          %s570 = int_to_ptr.vmem [resolvable:$true] %s569
          %572 = dma.hbm_to_vmem [thread:$0]  %s568, 32, %s570, [#allocation19]
        $region40: #{tpu_custom_call.1} parent=11 // pred_fallthru
          _
        // Predicated region
        $region41: #{tpu_custom_call.1} parent=11 // pred_check
          %p573 = pneg %p281
        $region42: #{tpu_custom_call.1} parent=11 // pred_check_branch
          %575 = sbr.rel (%p573) target = $region44
        $region43: #{tpu_custom_call.1} parent=11 // pred_region
          %577 = vsyncadd [#allocation19], 0
          %s579 = sshll.u32 %s9, 4
          %s580 = int_to_ptr.hbm [resolvable:$true] %s579
          %s581 = sshll.u32 [#allocation20], 4
          %s582 = int_to_ptr.vmem [resolvable:$true] %s581
          %584 = dma.hbm_to_vmem [thread:$0]  %s580, 32, %s582, [#allocation19]
        $region44: #{tpu_custom_call.1} parent=11 // pred_fallthru
          _
        // Predicated region
        $region45: #{tpu_custom_call.1} parent=11 // pred_check
          %p585 = pneg %p302
        $region46: #{tpu_custom_call.1} parent=11 // pred_check_branch
          %587 = sbr.rel (%p585) target = $region48
        $region47: #{tpu_custom_call.1} parent=11 // pred_region
          %589 = vsyncadd [#allocation22], 0
          %s590 = sshll.u32 %s10, 4
          %s591 = int_to_ptr.hbm [resolvable:$true] %s590
          %s592 = sshll.u32 [#allocation21], 4
          %s593 = int_to_ptr.vmem [resolvable:$true] %s592
          %598 = dma.hbm_to_vmem [thread:$0]  %s591, 2048, %s593, [#allocation22], 64, 64, 4
        $region48: #{tpu_custom_call.1} parent=11 // pred_fallthru
          _
        // Predicated region
        $region49: #{tpu_custom_call.1} parent=11 // pred_check
          %p599 = pneg %p323
        $region50: #{tpu_custom_call.1} parent=11 // pred_check_branch
          %601 = sbr.rel (%p599) target = $region52
        $region51: #{tpu_custom_call.1} parent=11 // pred_region
          %603 = vsyncadd [#allocation22], 0
          %s604 = sshll.u32 %s11, 4
          %s605 = int_to_ptr.hbm [resolvable:$true] %s604
          %s606 = sshll.u32 [#allocation23], 4
          %s607 = int_to_ptr.vmem [resolvable:$true] %s606
          %612 = dma.hbm_to_vmem [thread:$0]  %s605, 4096, %s607, [#allocation22], 256, 256, 16
        $region52: #{tpu_custom_call.1} parent=11 // pred_fallthru
          _
        // Predicated region
        $region53: #{tpu_custom_call.1} parent=11 // pred_check
          %p613 = pneg %p344
        $region54: #{tpu_custom_call.1} parent=11 // pred_check_branch
          %615 = sbr.rel (%p613) target = $region56
        $region55: #{tpu_custom_call.1} parent=11 // pred_region
          _
        $region56: #{tpu_custom_call.1} parent=11 // pred_fallthru
          _
        // Predicated region
        $region57: #{tpu_custom_call.1} parent=11 // pred_check
          %p616 = pneg %p365
        $region58: #{tpu_custom_call.1} parent=11 // pred_check_branch
          %618 = sbr.rel (%p616) target = $region60
        $region59: #{tpu_custom_call.1} parent=11 // pred_region
          %620 = vsyncadd [#allocation25], 0
          %s621 = sshll.u32 %s13, 4
          %s622 = int_to_ptr.hbm [resolvable:$true] %s621
          %s623 = sshll.u32 [#allocation24], 4
          %s624 = int_to_ptr.vmem [resolvable:$true] %s623
          %629 = dma.hbm_to_vmem [thread:$0]  %s622, 4096, %s624, [#allocation25], 64, 64, 4
        $region60: #{tpu_custom_call.1} parent=11 // pred_fallthru
          _
        // Predicated region
        $region61: #{tpu_custom_call.1} parent=11 // pred_check
          %p630 = pneg %p386
        $region62: #{tpu_custom_call.1} parent=11 // pred_check_branch
          %632 = sbr.rel (%p630) target = $region64
        $region63: #{tpu_custom_call.1} parent=11 // pred_region
          %634 = vsyncadd [#allocation25], 0
          %s635 = sshll.u32 %s14, 4
          %s636 = int_to_ptr.hbm [resolvable:$true] %s635
          %s637 = sshll.u32 [#allocation26], 4
          %s638 = int_to_ptr.vmem [resolvable:$true] %s637
          %643 = dma.hbm_to_vmem [thread:$0]  %s636, 2048, %s638, [#allocation25], 128, 128, 8
        $region64: #{tpu_custom_call.1} parent=11 // pred_fallthru
          _
        // Predicated region
        $region65: #{tpu_custom_call.1} parent=11 // pred_check
          %p644 = pneg %p407
        $region66: #{tpu_custom_call.1} parent=11 // pred_check_branch
          %646 = sbr.rel (%p644) target = $region68
        $region67: #{tpu_custom_call.1} parent=11 // pred_region
          _
        $region68: #{tpu_custom_call.1} parent=11 // pred_fallthru
          _
        // Predicated region
        $region69: #{tpu_custom_call.1} parent=11 // pred_check
          %p647 = pneg %p428
        $region70: #{tpu_custom_call.1} parent=11 // pred_check_branch
          %649 = sbr.rel (%p647) target = $region72
        $region71: #{tpu_custom_call.1} parent=11 // pred_region
          _
        $region72: #{tpu_custom_call.1} parent=11 // pred_fallthru
          _
        // Predicated region
        $region73: #{tpu_custom_call.1} parent=11 // pred_check
          %p650 = pneg %p449
        $region74: #{tpu_custom_call.1} parent=11 // pred_check_branch
          %652 = sbr.rel (%p650) target = $region76
        $region75: #{tpu_custom_call.1} parent=11 // pred_region
          _
        $region76: #{tpu_custom_call.1} parent=11 // pred_fallthru
          _
      $region12: #{tpu_custom_call.1} parent=5 // pred_fallthru
        _
      %p653 = scmp.lt.s32.totalorder %s38, 8
      // Predicated region
      $region77: #{tpu_custom_call.1} parent=5 // pred_check
        %p654 = pneg %p653
      $region78: #{tpu_custom_call.1} parent=5 // pred_check_branch
        %656 = sbr.rel (%p654) target = $region80
      $region79: #{tpu_custom_call.1} parent=5 // pred_region
        // Predicated region
        $region81: #{tpu_custom_call.1} parent=79 // pred_check
          %p657 = pneg %p79
        $region82: #{tpu_custom_call.1} parent=79 // pred_check_branch
          %659 = sbr.rel (%p657) target = $region84
        $region83: #{tpu_custom_call.1} parent=79 // pred_region
          %s660 = sand.u32 %s69, 1
          %s661 = scalar_lea.sflag [#allocation7], %s660
          %s662 = sand.u32 %s69, 1
          %s663 = smul.addr %s662, 256
          %s664 = scalar_lea.vmem [#allocation6], %s663
          %s665 = smul.u32 16, %s46
          %667 = vsyncadd %s661, 0
          %s668 = smul.addr %s665, 2
          %s669 = smul.addr %s45, 64
          %s670 = sadd.s32 %s668, %s669
          %s671 = smul.addr %s670, 8
          %s672 = scalar_lea.hbm %s0, %s671
          %s673 = sshll.u32 %s672, 4
          %s674 = int_to_ptr.hbm [resolvable:$true] %s673
          %s675 = sshll.u32 %s664, 4
          %s676 = int_to_ptr.vmem [resolvable:$true] %s675
          %681 = dma.hbm_to_vmem [thread:$0]  %s674, 4096, %s676, %s661, 256, 256, 16
        $region84: #{tpu_custom_call.1} parent=79 // pred_fallthru
          _
        // Predicated region
        $region85: #{tpu_custom_call.1} parent=79 // pred_check
          %p682 = pneg %p107
        $region86: #{tpu_custom_call.1} parent=79 // pred_check_branch
          %684 = sbr.rel (%p682) target = $region88
        $region87: #{tpu_custom_call.1} parent=79 // pred_region
          %s685 = sand.u32 %s38, 1
          %s686 = scalar_lea.sflag [#allocation10], %s685
          %s687 = sand.u32 %s97, 1
          %s688 = smul.addr %s687, 256
          %s689 = scalar_lea.vmem [#allocation9], %s688
          %s690 = smul.u32 16, %s47
          %692 = vsyncadd %s686, 0
          %s693 = smul.addr %s690, 2
          %s694 = smul.addr %s45, 64
          %s695 = sadd.s32 %s693, %s694
          %s696 = smul.addr %s695, 8
          %s697 = scalar_lea.hbm %s1, %s696
          %s698 = sshll.u32 %s697, 4
          %s699 = int_to_ptr.hbm [resolvable:$true] %s698
          %s700 = sshll.u32 %s689, 4
          %s701 = int_to_ptr.vmem [resolvable:$true] %s700
          %706 = dma.hbm_to_vmem [thread:$0]  %s699, 4096, %s701, %s686, 256, 256, 16
        $region88: #{tpu_custom_call.1} parent=79 // pred_fallthru
          _
      $region80: #{tpu_custom_call.1} parent=5 // pred_fallthru
        _
      %p707 = scmp.le.s32.totalorder 1, %s38
      %p708 = scmp.lt.s32.totalorder %s38, 9
      %p709 = pnand %p707, %p708
      %p710 = pneg %p709
      // Predicated region
      $region89: #{tpu_custom_call.1} parent=5 // pred_check
        _
      $region90: #{tpu_custom_call.1} parent=5 // pred_check_branch
        %712 = sbr.rel (%p709) target = $region92
      $region91: #{tpu_custom_call.1} parent=5 // pred_region
        %s713 = ssub.s32 %s38, 1
        %s714 = sand.u32 %s72, 1
        %s715 = scalar_lea.sflag [#allocation7], %s714
        %s716 = sand.u32 %s72, 1
        %s717 = smul.addr %s716, 256
        %s718 = scalar_lea.vmem [#allocation6], %s717
        // Predicated region
        $region93: #{tpu_custom_call.1} parent=91 // pred_check
          %p719 = pneg %p85
        $region94: #{tpu_custom_call.1} parent=91 // pred_check_branch
          %721 = sbr.rel (%p719) target = $region96
        $region95: #{tpu_custom_call.1} parent=91 // pred_region
          %723 = dma.done %s715, 4096
        $region96: #{tpu_custom_call.1} parent=91 // pred_fallthru
          _
        %s724 = sand.u32 %s43, 1
        %s725 = scalar_lea.sflag [#allocation10], %s724
        %s726 = sand.u32 %s100, 1
        %s727 = smul.addr %s726, 256
        %s728 = scalar_lea.vmem [#allocation9], %s727
        // Predicated region
        $region97: #{tpu_custom_call.1} parent=91 // pred_check
          %p729 = pneg %p113
        $region98: #{tpu_custom_call.1} parent=91 // pred_check_branch
          %731 = sbr.rel (%p729) target = $region100
        $region99: #{tpu_custom_call.1} parent=91 // pred_region
          %733 = dma.done %s725, 4096
        $region100: #{tpu_custom_call.1} parent=91 // pred_fallthru
          _
        // Predicated region
        $region101: #{tpu_custom_call.1} parent=91 // pred_check
          %p734 = pneg %p134
        $region102: #{tpu_custom_call.1} parent=91 // pred_check_branch
          %736 = sbr.rel (%p734) target = $region104
        $region103: #{tpu_custom_call.1} parent=91 // pred_region
          %738 = dma.done [#allocation10], 4096
        $region104: #{tpu_custom_call.1} parent=91 // pred_fallthru
          _
        // Predicated region
        $region105: #{tpu_custom_call.1} parent=91 // pred_check
          %p739 = pneg %p155
        $region106: #{tpu_custom_call.1} parent=91 // pred_check_branch
          %741 = sbr.rel (%p739) target = $region108
        $region107: #{tpu_custom_call.1} parent=91 // pred_region
          %743 = dma.done [#allocation13], 32
        $region108: #{tpu_custom_call.1} parent=91 // pred_fallthru
          _
        // Predicated region
        $region109: #{tpu_custom_call.1} parent=91 // pred_check
          %p744 = pneg %p176
        $region110: #{tpu_custom_call.1} parent=91 // pred_check_branch
          %746 = sbr.rel (%p744) target = $region112
        $region111: #{tpu_custom_call.1} parent=91 // pred_region
          %748 = dma.done [#allocation13], 8192
        $region112: #{tpu_custom_call.1} parent=91 // pred_fallthru
          _
        // Predicated region
        $region113: #{tpu_custom_call.1} parent=91 // pred_check
          %p749 = pneg %p218
        $region114: #{tpu_custom_call.1} parent=91 // pred_check_branch
          %751 = sbr.rel (%p749) target = $region116
        $region115: #{tpu_custom_call.1} parent=91 // pred_region
          %753 = dma.done [#allocation16], 4096
        $region116: #{tpu_custom_call.1} parent=91 // pred_fallthru
          _
        // Predicated region
        $region117: #{tpu_custom_call.1} parent=91 // pred_check
          %p754 = pneg %p239
        $region118: #{tpu_custom_call.1} parent=91 // pred_check_branch
          %756 = sbr.rel (%p754) target = $region120
        $region119: #{tpu_custom_call.1} parent=91 // pred_region
          %758 = dma.done [#allocation16], 32
        $region120: #{tpu_custom_call.1} parent=91 // pred_fallthru
          _
        // Predicated region
        $region121: #{tpu_custom_call.1} parent=91 // pred_check
          %p759 = pneg %p260
        $region122: #{tpu_custom_call.1} parent=91 // pred_check_branch
          %761 = sbr.rel (%p759) target = $region124
        $region123: #{tpu_custom_call.1} parent=91 // pred_region
          %763 = dma.done [#allocation19], 32
        $region124: #{tpu_custom_call.1} parent=91 // pred_fallthru
          _
        // Predicated region
        $region125: #{tpu_custom_call.1} parent=91 // pred_check
          %p764 = pneg %p281
        $region126: #{tpu_custom_call.1} parent=91 // pred_check_branch
          %766 = sbr.rel (%p764) target = $region128
        $region127: #{tpu_custom_call.1} parent=91 // pred_region
          %768 = dma.done [#allocation19], 32
        $region128: #{tpu_custom_call.1} parent=91 // pred_fallthru
          _
        // Predicated region
        $region129: #{tpu_custom_call.1} parent=91 // pred_check
          %p769 = pneg %p302
        $region130: #{tpu_custom_call.1} parent=91 // pred_check_branch
          %771 = sbr.rel (%p769) target = $region132
        $region131: #{tpu_custom_call.1} parent=91 // pred_region
          %773 = dma.done [#allocation22], 2048
        $region132: #{tpu_custom_call.1} parent=91 // pred_fallthru
          _
        // Predicated region
        $region133: #{tpu_custom_call.1} parent=91 // pred_check
          %p774 = pneg %p323
        $region134: #{tpu_custom_call.1} parent=91 // pred_check_branch
          %776 = sbr.rel (%p774) target = $region136
        $region135: #{tpu_custom_call.1} parent=91 // pred_region
          %778 = dma.done [#allocation22], 4096
        $region136: #{tpu_custom_call.1} parent=91 // pred_fallthru
          _
        // Predicated region
        $region137: #{tpu_custom_call.1} parent=91 // pred_check
          %p779 = pneg %p365
        $region138: #{tpu_custom_call.1} parent=91 // pred_check_branch
          %781 = sbr.rel (%p779) target = $region140
        $region139: #{tpu_custom_call.1} parent=91 // pred_region
          %783 = dma.done [#allocation25], 4096
        $region140: #{tpu_custom_call.1} parent=91 // pred_fallthru
          _
        // Predicated region
        $region141: #{tpu_custom_call.1} parent=91 // pred_check
          %p784 = pneg %p386
        $region142: #{tpu_custom_call.1} parent=91 // pred_check_branch
          %786 = sbr.rel (%p784) target = $region144
        $region143: #{tpu_custom_call.1} parent=91 // pred_region
          %788 = dma.done [#allocation25], 2048
        $region144: #{tpu_custom_call.1} parent=91 // pred_fallthru
          _
        %s789 = sand.u32 %s72, 1
        %s790 = scalar_lea.sflag [#allocation7], %s789
        %s791 = sand.u32 %s72, 1
        %s792 = smul.addr %s791, 256
        %s793 = scalar_lea.vmem [#allocation6], %s792
        %p794 = pneg %p85
        %p795 = pneg %p82
        %s796 = sand.u32 %s43, 1
        %s797 = scalar_lea.sflag [#allocation10], %s796
        %s798 = sand.u32 %s100, 1
        %s799 = smul.addr %s798, 256
        %s800 = scalar_lea.vmem [#allocation9], %s799
        %p801 = pneg %p113
        %p802 = pneg %p110
        %p803 = pneg %p134
        %p804 = pneg %p131
        %p805 = pneg %p155
        %p806 = pneg %p152
        %p807 = pneg %p176
        %p808 = pneg %p173
        %p809 = pneg %p197
        %p810 = pneg %p194
        %p811 = pneg %p218
        %p812 = pneg %p215
        %p813 = pneg %p239
        %p814 = pneg %p236
        %p815 = pneg %p260
        %p816 = pneg %p257
        %p817 = pneg %p281
        %p818 = pneg %p278
        %p819 = pneg %p302
        %p820 = pneg %p299
        %p821 = pneg %p323
        %p822 = pneg %p320
        %p823 = pneg %p344
        %p824 = pneg %p341
        %p825 = pneg %p365
        %p826 = pneg %p362
        %p827 = pneg %p386
        %p828 = pneg %p383
        %p829 = pneg %p407
        %p830 = pneg %p404
        %p831 = pneg %p428
        %p832 = pneg %p425
        %p833 = pneg %p449
        %p834 = pneg %p446
        %p835 = pneg %p477
        %p836 = pneg %p474
        %s837 = sand.u32 %s464, 1
        %s838 = scalar_lea.sflag [#allocation8], %s837
        %s839 = sand.u32 %s464, 1
        %s840 = smul.addr %s839, 256
        %s841 = scalar_lea.vmem [#allocation27], %s840
        %s842 = smul.u32 16, %s49
        %s843 = smul.u32 16, %s50
        %s844 = smul.u32 16, %s49
        %p845 = scmp.eq.s32.totalorder %s50, 0
        // Predicated region
        $region145: #{tpu_custom_call.1} parent=91 // pred_check
          %p846 = pneg %p845
        $region146: #{tpu_custom_call.1} parent=91 // pred_check_branch
          %848 = sbr.rel (%p846) target = $region148
        $region147: #{tpu_custom_call.1} parent=91 // pred_region
          %v849 = vld [vmem:[%s718] sm:$0xff]
          %v850 = vld [vmem:[%s718 + $0x8] sm:$0xff]
          %v851 = vld [vmem:[%s718 + $0x10] sm:$0xff]
          %v852 = vld [vmem:[%s718 + $0x18] sm:$0xff]
          %v853 = vld [vmem:[%s718 + $0x20] sm:$0xff]
          %v854 = vld [vmem:[%s718 + $0x28] sm:$0xff]
          %v855 = vld [vmem:[%s718 + $0x30] sm:$0xff]
          %v856 = vld [vmem:[%s718 + $0x38] sm:$0xff]
          %v857 = vld [vmem:[%s718 + $0x40] sm:$0xff]
          %v858 = vld [vmem:[%s718 + $0x48] sm:$0xff]
          %v859 = vld [vmem:[%s718 + $0x50] sm:$0xff]
          %v860 = vld [vmem:[%s718 + $0x58] sm:$0xff]
          %v861 = vld [vmem:[%s718 + $0x60] sm:$0xff]
          %v862 = vld [vmem:[%s718 + $0x68] sm:$0xff]
          %v863 = vld [vmem:[%s718 + $0x70] sm:$0xff]
          %v864 = vld [vmem:[%s718 + $0x78] sm:$0xff]
          %v865 = vld [vmem:[%s718 + $0x80] sm:$0xff]
          %v866 = vld [vmem:[%s718 + $0x88] sm:$0xff]
          %v867 = vld [vmem:[%s718 + $0x90] sm:$0xff]
          %v868 = vld [vmem:[%s718 + $0x98] sm:$0xff]
          %v869 = vld [vmem:[%s718 + $0xa0] sm:$0xff]
          %v870 = vld [vmem:[%s718 + $0xa8] sm:$0xff]
          %v871 = vld [vmem:[%s718 + $0xb0] sm:$0xff]
          %v872 = vld [vmem:[%s718 + $0xb8] sm:$0xff]
          %v873 = vld [vmem:[%s718 + $0xc0] sm:$0xff]
          %v874 = vld [vmem:[%s718 + $0xc8] sm:$0xff]
          %v875 = vld [vmem:[%s718 + $0xd0] sm:$0xff]
          %v876 = vld [vmem:[%s718 + $0xd8] sm:$0xff]
          %v877 = vld [vmem:[%s718 + $0xe0] sm:$0xff]
          %v878 = vld [vmem:[%s718 + $0xe8] sm:$0xff]
          %v879 = vld [vmem:[%s718 + $0xf0] sm:$0xff]
          %v880 = vld [vmem:[%s718 + $0xf8] sm:$0xff]
          %v881 = vpack.c.bf16 %v851, %v849
          %v882 = vpack.c.bf16 %v852, %v850
          %v883 = vpack.c.bf16 %v855, %v853
          %v884 = vpack.c.bf16 %v856, %v854
          %v885 = vpack.c.bf16 %v859, %v857
          %v886 = vpack.c.bf16 %v860, %v858
          %v887 = vpack.c.bf16 %v863, %v861
          %v888 = vpack.c.bf16 %v864, %v862
          %v889 = vpack.c.bf16 %v867, %v865
          %v890 = vpack.c.bf16 %v868, %v866
          %v891 = vpack.c.bf16 %v871, %v869
          %v892 = vpack.c.bf16 %v872, %v870
          %v893 = vpack.c.bf16 %v875, %v873
          %v894 = vpack.c.bf16 %v876, %v874
          %v895 = vpack.c.bf16 %v879, %v877
          %v896 = vpack.c.bf16 %v880, %v878
          %v897 = vld [vmem:[#allocation11] sm:$0xff]
          %v898 = vld [vmem:[#allocation11 + $0x8] sm:$0xff]
          %v899 = vld [vmem:[#allocation11 + $0x10] sm:$0xff]
          %v900 = vld [vmem:[#allocation11 + $0x18] sm:$0xff]
          %v901 = vld [vmem:[#allocation11 + $0x20] sm:$0xff]
          %v902 = vld [vmem:[#allocation11 + $0x28] sm:$0xff]
          %v903 = vld [vmem:[#allocation11 + $0x30] sm:$0xff]
          %v904 = vld [vmem:[#allocation11 + $0x38] sm:$0xff]
          %v905 = vld [vmem:[#allocation11 + $0x40] sm:$0xff]
          %v906 = vld [vmem:[#allocation11 + $0x48] sm:$0xff]
          %v907 = vld [vmem:[#allocation11 + $0x50] sm:$0xff]
          %v908 = vld [vmem:[#allocation11 + $0x58] sm:$0xff]
          %v909 = vld [vmem:[#allocation11 + $0x60] sm:$0xff]
          %v910 = vld [vmem:[#allocation11 + $0x68] sm:$0xff]
          %v911 = vld [vmem:[#allocation11 + $0x70] sm:$0xff]
          %v912 = vld [vmem:[#allocation11 + $0x78] sm:$0xff]
          %v913 = vld [vmem:[#allocation11 + $0x80] sm:$0xff]
          %v914 = vld [vmem:[#allocation11 + $0x88] sm:$0xff]
          %v915 = vld [vmem:[#allocation11 + $0x90] sm:$0xff]
          %v916 = vld [vmem:[#allocation11 + $0x98] sm:$0xff]
          %v917 = vld [vmem:[#allocation11 + $0xa0] sm:$0xff]
          %v918 = vld [vmem:[#allocation11 + $0xa8] sm:$0xff]
          %v919 = vld [vmem:[#allocation11 + $0xb0] sm:$0xff]
          %v920 = vld [vmem:[#allocation11 + $0xb8] sm:$0xff]
          %v921 = vld [vmem:[#allocation11 + $0xc0] sm:$0xff]
          %v922 = vld [vmem:[#allocation11 + $0xc8] sm:$0xff]
          %v923 = vld [vmem:[#allocation11 + $0xd0] sm:$0xff]
          %v924 = vld [vmem:[#allocation11 + $0xd8] sm:$0xff]
          %v925 = vld [vmem:[#allocation11 + $0xe0] sm:$0xff]
          %v926 = vld [vmem:[#allocation11 + $0xe8] sm:$0xff]
          %v927 = vld [vmem:[#allocation11 + $0xf0] sm:$0xff]
          %v928 = vld [vmem:[#allocation11 + $0xf8] sm:$0xff]
          %v929 = vld [vmem:[#allocation12] sm:$0x3]
          %v931 = vperm.slane %v929, 0
          %v932 = vperm.slane %v929, 1
          %v967 = vunpack.c.l.b16 %v897
          %v968 = vunpack.c.h.b16 %v897
          %v969 = vunpack.c.l.b16 %v898
          %v970 = vunpack.c.h.b16 %v898
          %v971 = vunpack.c.l.b16 %v899
          %v972 = vunpack.c.h.b16 %v899
          %v973 = vunpack.c.l.b16 %v900
          %v974 = vunpack.c.h.b16 %v900
          %v975 = vunpack.c.l.b16 %v901
          %v976 = vunpack.c.h.b16 %v901
          %v977 = vunpack.c.l.b16 %v902
          %v978 = vunpack.c.h.b16 %v902
          %v979 = vunpack.c.l.b16 %v903
          %v980 = vunpack.c.h.b16 %v903
          %v981 = vunpack.c.l.b16 %v904
          %v982 = vunpack.c.h.b16 %v904
          %v983 = vunpack.c.l.b16 %v905
          %v984 = vunpack.c.h.b16 %v905
          %v985 = vunpack.c.l.b16 %v906
          %v986 = vunpack.c.h.b16 %v906
          %v987 = vunpack.c.l.b16 %v907
          %v988 = vunpack.c.h.b16 %v907
          %v989 = vunpack.c.l.b16 %v908
          %v990 = vunpack.c.h.b16 %v908
          %v991 = vunpack.c.l.b16 %v909
          %v992 = vunpack.c.h.b16 %v909
          %v993 = vunpack.c.l.b16 %v910
          %v994 = vunpack.c.h.b16 %v910
          %v995 = vunpack.c.l.b16 %v911
          %v996 = vunpack.c.h.b16 %v911
          %v997 = vunpack.c.l.b16 %v912
          %v998 = vunpack.c.h.b16 %v912
          %v999 = vunpack.c.l.b16 %v913
          %v1000 = vunpack.c.h.b16 %v913
          %v1001 = vunpack.c.l.b16 %v914
          %v1002 = vunpack.c.h.b16 %v914
          %v1003 = vunpack.c.l.b16 %v915
          %v1004 = vunpack.c.h.b16 %v915
          %v1005 = vunpack.c.l.b16 %v916
          %v1006 = vunpack.c.h.b16 %v916
          %v1007 = vunpack.c.l.b16 %v917
          %v1008 = vunpack.c.h.b16 %v917
          %v1009 = vunpack.c.l.b16 %v918
          %v1010 = vunpack.c.h.b16 %v918
          %v1011 = vunpack.c.l.b16 %v919
          %v1012 = vunpack.c.h.b16 %v919
          %v1013 = vunpack.c.l.b16 %v920
          %v1014 = vunpack.c.h.b16 %v920
          %v1015 = vunpack.c.l.b16 %v921
          %v1016 = vunpack.c.h.b16 %v921
          %v1017 = vunpack.c.l.b16 %v922
          %v1018 = vunpack.c.h.b16 %v922
          %v1019 = vunpack.c.l.b16 %v923
          %v1020 = vunpack.c.h.b16 %v923
          %v1021 = vunpack.c.l.b16 %v924
          %v1022 = vunpack.c.h.b16 %v924
          %v1023 = vunpack.c.l.b16 %v925
          %v1024 = vunpack.c.h.b16 %v925
          %v1025 = vunpack.c.l.b16 %v926
          %v1026 = vunpack.c.h.b16 %v926
          %v1027 = vunpack.c.l.b16 %v927
          %v1028 = vunpack.c.h.b16 %v927
          %v1029 = vunpack.c.l.b16 %v928
          %v1030 = vunpack.c.h.b16 %v928
          %v1031 = vpack.c.b16 %v969, %v967
          %v1032 = vpack.c.b16 %v970, %v968
          %v1033 = vpack.c.b16 %v973, %v971
          %v1034 = vpack.c.b16 %v974, %v972
          %v1035 = vpack.c.b16 %v977, %v975
          %v1036 = vpack.c.b16 %v978, %v976
          %v1037 = vpack.c.b16 %v981, %v979
          %v1038 = vpack.c.b16 %v982, %v980
          %v1039 = vpack.c.b16 %v985, %v983
          %v1040 = vpack.c.b16 %v986, %v984
          %v1041 = vpack.c.b16 %v989, %v987
          %v1042 = vpack.c.b16 %v990, %v988
          %v1043 = vpack.c.b16 %v993, %v991
          %v1044 = vpack.c.b16 %v994, %v992
          %v1045 = vpack.c.b16 %v997, %v995
          %v1046 = vpack.c.b16 %v998, %v996
          %v1047 = vpack.c.b16 %v1001, %v999
          %v1048 = vpack.c.b16 %v1002, %v1000
          %v1049 = vpack.c.b16 %v1005, %v1003
          %v1050 = vpack.c.b16 %v1006, %v1004
          %v1051 = vpack.c.b16 %v1009, %v1007
          %v1052 = vpack.c.b16 %v1010, %v1008
          %v1053 = vpack.c.b16 %v1013, %v1011
          %v1054 = vpack.c.b16 %v1014, %v1012
          %v1055 = vpack.c.b16 %v1017, %v1015
          %v1056 = vpack.c.b16 %v1018, %v1016
          %v1057 = vpack.c.b16 %v1021, %v1019
          %v1058 = vpack.c.b16 %v1022, %v1020
          %v1059 = vpack.c.b16 %v1025, %v1023
          %v1060 = vpack.c.b16 %v1026, %v1024
          %v1061 = vpack.c.b16 %v1029, %v1027
          %v1062 = vpack.c.b16 %v1030, %v1028
          %1095 = vmatpush.bf16.msra.mxu0 %v1045
          %1096 = vmatpush.bf16.msra.mxu0 %v1043
          %1097 = vmatpush.bf16.msra.mxu0 %v1041
          %1098 = vmatpush.bf16.msra.mxu0 %v1039
          %1099 = vmatpush.bf16.msra.mxu0 %v1037
          %1100 = vmatpush.bf16.msra.mxu0 %v1035
          %1101 = vmatpush.bf16.msra.mxu0 %v1033
          %1102 = vmatpush.bf16.msra.mxu0 %v1031
          %1103 = vmatmul.bf16.gmra.mxu0 %v881
          %v1104 = vpop.f32.mrf.mxu0
          %v1105 = vadd.f32 %v931, %v1104
          %v1106 = vpop.f32.mrf.mxu0
          %v1107 = vadd.f32 %v931, %v1106
          %1108 = vmatmul.bf16.gmra.mxu0 %v883
          %v1109 = vpop.f32.mrf.mxu0
          %v1110 = vadd.f32 %v931, %v1109
          %v1111 = vpop.f32.mrf.mxu0
          %v1112 = vadd.f32 %v931, %v1111
          %1113 = vmatmul.bf16.gmra.mxu0 %v885
          %v1114 = vpop.f32.mrf.mxu0
          %v1115 = vadd.f32 %v931, %v1114
          %v1116 = vpop.f32.mrf.mxu0
          %v1117 = vadd.f32 %v931, %v1116
          %1118 = vmatmul.bf16.gmra.mxu0 %v887
          %v1119 = vpop.f32.mrf.mxu0
          %v1120 = vadd.f32 %v931, %v1119
          %v1121 = vpop.f32.mrf.mxu0
          %v1122 = vadd.f32 %v931, %v1121
          %1123 = vmatmul.bf16.gmra.mxu0 %v889
          %v1124 = vpop.f32.mrf.mxu0
          %v1125 = vadd.f32 %v931, %v1124
          %v1126 = vpop.f32.mrf.mxu0
          %v1127 = vadd.f32 %v931, %v1126
          %1128 = vmatmul.bf16.gmra.mxu0 %v891
          %v1129 = vpop.f32.mrf.mxu0
          %v1130 = vadd.f32 %v931, %v1129
          %v1131 = vpop.f32.mrf.mxu0
          %v1132 = vadd.f32 %v931, %v1131
          %1133 = vmatmul.bf16.gmra.mxu0 %v893
          %v1134 = vpop.f32.mrf.mxu0
          %v1135 = vadd.f32 %v931, %v1134
          %v1136 = vpop.f32.mrf.mxu0
          %v1137 = vadd.f32 %v931, %v1136
          %1138 = vmatmul.bf16.gmra.mxu0 %v895
          %v1139 = vpop.f32.mrf.mxu0
          %v1140 = vadd.f32 %v931, %v1139
          %v1141 = vpop.f32.mrf.mxu0
          %v1142 = vadd.f32 %v931, %v1141
          %1143 = vdwg.mxu0
          %1144 = vmatpush.bf16.msra.mxu0 %v1061
          %1145 = vmatpush.bf16.msra.mxu0 %v1059
          %1146 = vmatpush.bf16.msra.mxu0 %v1057
          %1147 = vmatpush.bf16.msra.mxu0 %v1055
          %1148 = vmatpush.bf16.msra.mxu0 %v1053
          %1149 = vmatpush.bf16.msra.mxu0 %v1051
          %1150 = vmatpush.bf16.msra.mxu0 %v1049
          %1151 = vmatpush.bf16.msra.mxu0 %v1047
          %1152 = vmatmul.bf16.gmra.mxu0 %v882
          %v1153 = vpop.f32.mrf.mxu0
          %v1154 = vadd.f32 %v1105, %v1153
          %v1155 = vpop.f32.mrf.mxu0
          %v1156 = vadd.f32 %v1107, %v1155
          %1157 = vmatmul.bf16.gmra.mxu0 %v884
          %v1158 = vpop.f32.mrf.mxu0
          %v1159 = vadd.f32 %v1110, %v1158
          %v1160 = vpop.f32.mrf.mxu0
          %v1161 = vadd.f32 %v1112, %v1160
          %1162 = vmatmul.bf16.gmra.mxu0 %v886
          %v1163 = vpop.f32.mrf.mxu0
          %v1164 = vadd.f32 %v1115, %v1163
          %v1165 = vpop.f32.mrf.mxu0
          %v1166 = vadd.f32 %v1117, %v1165
          %1167 = vmatmul.bf16.gmra.mxu0 %v888
          %v1168 = vpop.f32.mrf.mxu0
          %v1169 = vadd.f32 %v1120, %v1168
          %v1170 = vpop.f32.mrf.mxu0
          %v1171 = vadd.f32 %v1122, %v1170
          %1172 = vmatmul.bf16.gmra.mxu0 %v890
          %v1173 = vpop.f32.mrf.mxu0
          %v1174 = vadd.f32 %v1125, %v1173
          %v1175 = vpop.f32.mrf.mxu0
          %v1176 = vadd.f32 %v1127, %v1175
          %1177 = vmatmul.bf16.gmra.mxu0 %v892
          %v1178 = vpop.f32.mrf.mxu0
          %v1179 = vadd.f32 %v1130, %v1178
          %v1180 = vpop.f32.mrf.mxu0
          %v1181 = vadd.f32 %v1132, %v1180
          %1182 = vmatmul.bf16.gmra.mxu0 %v894
          %v1183 = vpop.f32.mrf.mxu0
          %v1184 = vadd.f32 %v1135, %v1183
          %v1185 = vpop.f32.mrf.mxu0
          %v1186 = vadd.f32 %v1137, %v1185
          %1187 = vmatmul.bf16.gmra.mxu0 %v896
          %v1188 = vpop.f32.mrf.mxu0
          %v1189 = vadd.f32 %v1140, %v1188
          %v1190 = vpop.f32.mrf.mxu0
          %v1191 = vadd.f32 %v1142, %v1190
          %1192 = vdwg.mxu0
          %1193 = vmatpush.bf16.msra.mxu0 %v1046
          %1194 = vmatpush.bf16.msra.mxu0 %v1044
          %1195 = vmatpush.bf16.msra.mxu0 %v1042
          %1196 = vmatpush.bf16.msra.mxu0 %v1040
          %1197 = vmatpush.bf16.msra.mxu0 %v1038
          %1198 = vmatpush.bf16.msra.mxu0 %v1036
          %1199 = vmatpush.bf16.msra.mxu0 %v1034
          %1200 = vmatpush.bf16.msra.mxu0 %v1032
          %1201 = vmatmul.bf16.gmra.mxu0 %v881
          %v1202 = vpop.f32.mrf.mxu0
          %v1203 = vadd.f32 %v932, %v1202
          %v1204 = vpop.f32.mrf.mxu0
          %v1205 = vadd.f32 %v932, %v1204
          %1206 = vmatmul.bf16.gmra.mxu0 %v883
          %v1207 = vpop.f32.mrf.mxu0
          %v1208 = vadd.f32 %v932, %v1207
          %v1209 = vpop.f32.mrf.mxu0
          %v1210 = vadd.f32 %v932, %v1209
          %1211 = vmatmul.bf16.gmra.mxu0 %v885
          %v1212 = vpop.f32.mrf.mxu0
          %v1213 = vadd.f32 %v932, %v1212
          %v1214 = vpop.f32.mrf.mxu0
          %v1215 = vadd.f32 %v932, %v1214
          %1216 = vmatmul.bf16.gmra.mxu0 %v887
          %v1217 = vpop.f32.mrf.mxu0
          %v1218 = vadd.f32 %v932, %v1217
          %v1219 = vpop.f32.mrf.mxu0
          %v1220 = vadd.f32 %v932, %v1219
          %1221 = vmatmul.bf16.gmra.mxu0 %v889
          %v1222 = vpop.f32.mrf.mxu0
          %v1223 = vadd.f32 %v932, %v1222
          %v1224 = vpop.f32.mrf.mxu0
          %v1225 = vadd.f32 %v932, %v1224
          %1226 = vmatmul.bf16.gmra.mxu0 %v891
          %v1227 = vpop.f32.mrf.mxu0
          %v1228 = vadd.f32 %v932, %v1227
          %v1229 = vpop.f32.mrf.mxu0
          %v1230 = vadd.f32 %v932, %v1229
          %1231 = vmatmul.bf16.gmra.mxu0 %v893
          %v1232 = vpop.f32.mrf.mxu0
          %v1233 = vadd.f32 %v932, %v1232
          %v1234 = vpop.f32.mrf.mxu0
          %v1235 = vadd.f32 %v932, %v1234
          %1236 = vmatmul.bf16.gmra.mxu0 %v895
          %v1237 = vpop.f32.mrf.mxu0
          %v1238 = vadd.f32 %v932, %v1237
          %v1239 = vpop.f32.mrf.mxu0
          %v1240 = vadd.f32 %v932, %v1239
          %1241 = vdwg.mxu0
          %1242 = vmatpush.bf16.msra.mxu0 %v1062
          %1243 = vmatpush.bf16.msra.mxu0 %v1060
          %1244 = vmatpush.bf16.msra.mxu0 %v1058
          %1245 = vmatpush.bf16.msra.mxu0 %v1056
          %1246 = vmatpush.bf16.msra.mxu0 %v1054
          %1247 = vmatpush.bf16.msra.mxu0 %v1052
          %1248 = vmatpush.bf16.msra.mxu0 %v1050
          %1249 = vmatpush.bf16.msra.mxu0 %v1048
          %1250 = vmatmul.bf16.gmra.mxu0 %v882
          %v1251 = vpop.f32.mrf.mxu0
          %v1252 = vadd.f32 %v1203, %v1251
          %v1253 = vpop.f32.mrf.mxu0
          %v1254 = vadd.f32 %v1205, %v1253
          %1255 = vmatmul.bf16.gmra.mxu0 %v884
          %v1256 = vpop.f32.mrf.mxu0
          %v1257 = vadd.f32 %v1208, %v1256
          %v1258 = vpop.f32.mrf.mxu0
          %v1259 = vadd.f32 %v1210, %v1258
          %1260 = vmatmul.bf16.gmra.mxu0 %v886
          %v1261 = vpop.f32.mrf.mxu0
          %v1262 = vadd.f32 %v1213, %v1261
          %v1263 = vpop.f32.mrf.mxu0
          %v1264 = vadd.f32 %v1215, %v1263
          %1265 = vmatmul.bf16.gmra.mxu0 %v888
          %v1266 = vpop.f32.mrf.mxu0
          %v1267 = vadd.f32 %v1218, %v1266
          %v1268 = vpop.f32.mrf.mxu0
          %v1269 = vadd.f32 %v1220, %v1268
          %1270 = vmatmul.bf16.gmra.mxu0 %v890
          %v1271 = vpop.f32.mrf.mxu0
          %v1272 = vadd.f32 %v1223, %v1271
          %v1273 = vpop.f32.mrf.mxu0
          %v1274 = vadd.f32 %v1225, %v1273
          %1275 = vmatmul.bf16.gmra.mxu0 %v892
          %v1276 = vpop.f32.mrf.mxu0
          %v1277 = vadd.f32 %v1228, %v1276
          %v1278 = vpop.f32.mrf.mxu0
          %v1279 = vadd.f32 %v1230, %v1278
          %1280 = vmatmul.bf16.gmra.mxu0 %v894
          %v1281 = vpop.f32.mrf.mxu0
          %v1282 = vadd.f32 %v1233, %v1281
          %v1283 = vpop.f32.mrf.mxu0
          %v1284 = vadd.f32 %v1235, %v1283
          %1285 = vmatmul.bf16.gmra.mxu0 %v896
          %v1286 = vpop.f32.mrf.mxu0
          %v1287 = vadd.f32 %v1238, %v1286
          %v1288 = vpop.f32.mrf.mxu0
          %v1289 = vadd.f32 %v1240, %v1288
          %1290 = vdwg.mxu0
          %v1291 = vpack.c.bf16 %v1252, %v1154
          %v1292 = vpack.c.bf16 %v1254, %v1156
          %v1293 = vpack.c.bf16 %v1257, %v1159
          %v1294 = vpack.c.bf16 %v1259, %v1161
          %v1295 = vpack.c.bf16 %v1262, %v1164
          %v1296 = vpack.c.bf16 %v1264, %v1166
          %v1297 = vpack.c.bf16 %v1267, %v1169
          %v1298 = vpack.c.bf16 %v1269, %v1171
          %v1299 = vpack.c.bf16 %v1272, %v1174
          %v1300 = vpack.c.bf16 %v1274, %v1176
          %v1301 = vpack.c.bf16 %v1277, %v1179
          %v1302 = vpack.c.bf16 %v1279, %v1181
          %v1303 = vpack.c.bf16 %v1282, %v1184
          %v1304 = vpack.c.bf16 %v1284, %v1186
          %v1305 = vpack.c.bf16 %v1287, %v1189
          %v1306 = vpack.c.bf16 %v1289, %v1191
          %1307 = vst [vmem:[#allocation2] sm:$0xff] %v1291
          %1308 = vst [vmem:[#allocation2 + $0x8] sm:$0xff] %v1292
          %1309 = vst [vmem:[#allocation2 + $0x10] sm:$0xff] %v1293
          %1310 = vst [vmem:[#allocation2 + $0x18] sm:$0xff] %v1294
          %1311 = vst [vmem:[#allocation2 + $0x20] sm:$0xff] %v1295
          %1312 = vst [vmem:[#allocation2 + $0x28] sm:$0xff] %v1296
          %1313 = vst [vmem:[#allocation2 + $0x30] sm:$0xff] %v1297
          %1314 = vst [vmem:[#allocation2 + $0x38] sm:$0xff] %v1298
          %1315 = vst [vmem:[#allocation2 + $0x40] sm:$0xff] %v1299
          %1316 = vst [vmem:[#allocation2 + $0x48] sm:$0xff] %v1300
          %1317 = vst [vmem:[#allocation2 + $0x50] sm:$0xff] %v1301
          %1318 = vst [vmem:[#allocation2 + $0x58] sm:$0xff] %v1302
          %1319 = vst [vmem:[#allocation2 + $0x60] sm:$0xff] %v1303
          %1320 = vst [vmem:[#allocation2 + $0x68] sm:$0xff] %v1304
          %1321 = vst [vmem:[#allocation2 + $0x70] sm:$0xff] %v1305
          %1322 = vst [vmem:[#allocation2 + $0x78] sm:$0xff] %v1306
          %vm1323 = vcmask 7168
          %1324 = vst.msk [vmem:[#allocation3] sm:$0xff] %vm1323, -inf
          %1325 = vst.msk [vmem:[#allocation3 + $0x8] sm:$0xff] %vm1323, -inf
          %1326 = vst.msk [vmem:[#allocation3 + $0x10] sm:$0xff] %vm1323, -inf
          %1327 = vst.msk [vmem:[#allocation3 + $0x18] sm:$0xff] %vm1323, -inf
          %1328 = vst.msk [vmem:[#allocation3 + $0x20] sm:$0xff] %vm1323, -inf
          %1329 = vst.msk [vmem:[#allocation3 + $0x28] sm:$0xff] %vm1323, -inf
          %1330 = vst.msk [vmem:[#allocation3 + $0x30] sm:$0xff] %vm1323, -inf
          %1331 = vst.msk [vmem:[#allocation3 + $0x38] sm:$0xff] %vm1323, -inf
          %1332 = vst.msk [vmem:[#allocation3 + $0x40] sm:$0xff] %vm1323, -inf
          %1333 = vst.msk [vmem:[#allocation3 + $0x48] sm:$0xff] %vm1323, -inf
          %1334 = vst.msk [vmem:[#allocation3 + $0x50] sm:$0xff] %vm1323, -inf
          %1335 = vst.msk [vmem:[#allocation3 + $0x58] sm:$0xff] %vm1323, -inf
          %1336 = vst.msk [vmem:[#allocation3 + $0x60] sm:$0xff] %vm1323, -inf
          %1337 = vst.msk [vmem:[#allocation3 + $0x68] sm:$0xff] %vm1323, -inf
          %1338 = vst.msk [vmem:[#allocation3 + $0x70] sm:$0xff] %vm1323, -inf
          %1339 = vst.msk [vmem:[#allocation3 + $0x78] sm:$0xff] %vm1323, -inf
          %1340 = vst.msk [vmem:[#allocation3 + $0x80] sm:$0xff] %vm1323, -inf
          %1341 = vst.msk [vmem:[#allocation3 + $0x88] sm:$0xff] %vm1323, -inf
          %1342 = vst.msk [vmem:[#allocation3 + $0x90] sm:$0xff] %vm1323, -inf
          %1343 = vst.msk [vmem:[#allocation3 + $0x98] sm:$0xff] %vm1323, -inf
          %1344 = vst.msk [vmem:[#allocation3 + $0xa0] sm:$0xff] %vm1323, -inf
          %1345 = vst.msk [vmem:[#allocation3 + $0xa8] sm:$0xff] %vm1323, -inf
          %1346 = vst.msk [vmem:[#allocation3 + $0xb0] sm:$0xff] %vm1323, -inf
          %1347 = vst.msk [vmem:[#allocation3 + $0xb8] sm:$0xff] %vm1323, -inf
          %1348 = vst.msk [vmem:[#allocation3 + $0xc0] sm:$0xff] %vm1323, -inf
          %1349 = vst.msk [vmem:[#allocation3 + $0xc8] sm:$0xff] %vm1323, -inf
          %1350 = vst.msk [vmem:[#allocation3 + $0xd0] sm:$0xff] %vm1323, -inf
          %1351 = vst.msk [vmem:[#allocation3 + $0xd8] sm:$0xff] %vm1323, -inf
          %1352 = vst.msk [vmem:[#allocation3 + $0xe0] sm:$0xff] %vm1323, -inf
          %1353 = vst.msk [vmem:[#allocation3 + $0xe8] sm:$0xff] %vm1323, -inf
          %1354 = vst.msk [vmem:[#allocation3 + $0xf0] sm:$0xff] %vm1323, -inf
          %1355 = vst.msk [vmem:[#allocation3 + $0xf8] sm:$0xff] %vm1323, -inf
          %1356 = vst.msk [vmem:[#allocation4] sm:$0xff] %vm1323, 0.0
          %1357 = vst.msk [vmem:[#allocation4 + $0x8] sm:$0xff] %vm1323, 0.0
          %1358 = vst.msk [vmem:[#allocation4 + $0x10] sm:$0xff] %vm1323, 0.0
          %1359 = vst.msk [vmem:[#allocation4 + $0x18] sm:$0xff] %vm1323, 0.0
          %1360 = vst.msk [vmem:[#allocation4 + $0x20] sm:$0xff] %vm1323, 0.0
          %1361 = vst.msk [vmem:[#allocation4 + $0x28] sm:$0xff] %vm1323, 0.0
          %1362 = vst.msk [vmem:[#allocation4 + $0x30] sm:$0xff] %vm1323, 0.0
          %1363 = vst.msk [vmem:[#allocation4 + $0x38] sm:$0xff] %vm1323, 0.0
          %1364 = vst.msk [vmem:[#allocation4 + $0x40] sm:$0xff] %vm1323, 0.0
          %1365 = vst.msk [vmem:[#allocation4 + $0x48] sm:$0xff] %vm1323, 0.0
          %1366 = vst.msk [vmem:[#allocation4 + $0x50] sm:$0xff] %vm1323, 0.0
          %1367 = vst.msk [vmem:[#allocation4 + $0x58] sm:$0xff] %vm1323, 0.0
          %1368 = vst.msk [vmem:[#allocation4 + $0x60] sm:$0xff] %vm1323, 0.0
          %1369 = vst.msk [vmem:[#allocation4 + $0x68] sm:$0xff] %vm1323, 0.0
          %1370 = vst.msk [vmem:[#allocation4 + $0x70] sm:$0xff] %vm1323, 0.0
          %1371 = vst.msk [vmem:[#allocation4 + $0x78] sm:$0xff] %vm1323, 0.0
          %1372 = vst.msk [vmem:[#allocation4 + $0x80] sm:$0xff] %vm1323, 0.0
          %1373 = vst.msk [vmem:[#allocation4 + $0x88] sm:$0xff] %vm1323, 0.0
          %1374 = vst.msk [vmem:[#allocation4 + $0x90] sm:$0xff] %vm1323, 0.0
          %1375 = vst.msk [vmem:[#allocation4 + $0x98] sm:$0xff] %vm1323, 0.0
          %1376 = vst.msk [vmem:[#allocation4 + $0xa0] sm:$0xff] %vm1323, 0.0
          %1377 = vst.msk [vmem:[#allocation4 + $0xa8] sm:$0xff] %vm1323, 0.0
          %1378 = vst.msk [vmem:[#allocation4 + $0xb0] sm:$0xff] %vm1323, 0.0
          %1379 = vst.msk [vmem:[#allocation4 + $0xb8] sm:$0xff] %vm1323, 0.0
          %1380 = vst.msk [vmem:[#allocation4 + $0xc0] sm:$0xff] %vm1323, 0.0
          %1381 = vst.msk [vmem:[#allocation4 + $0xc8] sm:$0xff] %vm1323, 0.0
          %1382 = vst.msk [vmem:[#allocation4 + $0xd0] sm:$0xff] %vm1323, 0.0
          %1383 = vst.msk [vmem:[#allocation4 + $0xd8] sm:$0xff] %vm1323, 0.0
          %1384 = vst.msk [vmem:[#allocation4 + $0xe0] sm:$0xff] %vm1323, 0.0
          %1385 = vst.msk [vmem:[#allocation4 + $0xe8] sm:$0xff] %vm1323, 0.0
          %1386 = vst.msk [vmem:[#allocation4 + $0xf0] sm:$0xff] %vm1323, 0.0
          %1387 = vst.msk [vmem:[#allocation4 + $0xf8] sm:$0xff] %vm1323, 0.0
          %1388 = vst [vmem:[#allocation5] sm:$0xff] 0.0
          %1389 = vst [vmem:[#allocation5 + $0x8] sm:$0xff] 0.0
          %1390 = vst [vmem:[#allocation5 + $0x10] sm:$0xff] 0.0
          %1391 = vst [vmem:[#allocation5 + $0x18] sm:$0xff] 0.0
          %1392 = vst [vmem:[#allocation5 + $0x20] sm:$0xff] 0.0
          %1393 = vst [vmem:[#allocation5 + $0x28] sm:$0xff] 0.0
          %1394 = vst [vmem:[#allocation5 + $0x30] sm:$0xff] 0.0
          %1395 = vst [vmem:[#allocation5 + $0x38] sm:$0xff] 0.0
          %1396 = vst [vmem:[#allocation5 + $0x40] sm:$0xff] 0.0
          %1397 = vst [vmem:[#allocation5 + $0x48] sm:$0xff] 0.0
          %1398 = vst [vmem:[#allocation5 + $0x50] sm:$0xff] 0.0
          %1399 = vst [vmem:[#allocation5 + $0x58] sm:$0xff] 0.0
          %1400 = vst [vmem:[#allocation5 + $0x60] sm:$0xff] 0.0
          %1401 = vst [vmem:[#allocation5 + $0x68] sm:$0xff] 0.0
          %1402 = vst [vmem:[#allocation5 + $0x70] sm:$0xff] 0.0
          %1403 = vst [vmem:[#allocation5 + $0x78] sm:$0xff] 0.0
          %1404 = vst [vmem:[#allocation5 + $0x80] sm:$0xff] 0.0
          %1405 = vst [vmem:[#allocation5 + $0x88] sm:$0xff] 0.0
          %1406 = vst [vmem:[#allocation5 + $0x90] sm:$0xff] 0.0
          %1407 = vst [vmem:[#allocation5 + $0x98] sm:$0xff] 0.0
          %1408 = vst [vmem:[#allocation5 + $0xa0] sm:$0xff] 0.0
          %1409 = vst [vmem:[#allocation5 + $0xa8] sm:$0xff] 0.0
          %1410 = vst [vmem:[#allocation5 + $0xb0] sm:$0xff] 0.0
          %1411 = vst [vmem:[#allocation5 + $0xb8] sm:$0xff] 0.0
          %1412 = vst [vmem:[#allocation5 + $0xc0] sm:$0xff] 0.0
          %1413 = vst [vmem:[#allocation5 + $0xc8] sm:$0xff] 0.0
          %1414 = vst [vmem:[#allocation5 + $0xd0] sm:$0xff] 0.0
          %1415 = vst [vmem:[#allocation5 + $0xd8] sm:$0xff] 0.0
          %1416 = vst [vmem:[#allocation5 + $0xe0] sm:$0xff] 0.0
          %1417 = vst [vmem:[#allocation5 + $0xe8] sm:$0xff] 0.0
          %1418 = vst [vmem:[#allocation5 + $0xf0] sm:$0xff] 0.0
          %1419 = vst [vmem:[#allocation5 + $0xf8] sm:$0xff] 0.0
        $region148: #{tpu_custom_call.1} parent=91 // pred_fallthru
          _
        %v1420 = vld [vmem:[%s728] sm:$0xff]
        %v1421 = vld [vmem:[%s728 + $0x8] sm:$0xff]
        %v1422 = vld [vmem:[%s728 + $0x10] sm:$0xff]
        %v1423 = vld [vmem:[%s728 + $0x18] sm:$0xff]
        %v1424 = vld [vmem:[%s728 + $0x20] sm:$0xff]
        %v1425 = vld [vmem:[%s728 + $0x28] sm:$0xff]
        %v1426 = vld [vmem:[%s728 + $0x30] sm:$0xff]
        %v1427 = vld [vmem:[%s728 + $0x38] sm:$0xff]
        %v1428 = vld [vmem:[%s728 + $0x40] sm:$0xff]
        %v1429 = vld [vmem:[%s728 + $0x48] sm:$0xff]
        %v1430 = vld [vmem:[%s728 + $0x50] sm:$0xff]
        %v1431 = vld [vmem:[%s728 + $0x58] sm:$0xff]
        %v1432 = vld [vmem:[%s728 + $0x60] sm:$0xff]
        %v1433 = vld [vmem:[%s728 + $0x68] sm:$0xff]
        %v1434 = vld [vmem:[%s728 + $0x70] sm:$0xff]
        %v1435 = vld [vmem:[%s728 + $0x78] sm:$0xff]
        %v1436 = vld [vmem:[%s728 + $0x80] sm:$0xff]
        %v1437 = vld [vmem:[%s728 + $0x88] sm:$0xff]
        %v1438 = vld [vmem:[%s728 + $0x90] sm:$0xff]
        %v1439 = vld [vmem:[%s728 + $0x98] sm:$0xff]
        %v1440 = vld [vmem:[%s728 + $0xa0] sm:$0xff]
        %v1441 = vld [vmem:[%s728 + $0xa8] sm:$0xff]
        %v1442 = vld [vmem:[%s728 + $0xb0] sm:$0xff]
        %v1443 = vld [vmem:[%s728 + $0xb8] sm:$0xff]
        %v1444 = vld [vmem:[%s728 + $0xc0] sm:$0xff]
        %v1445 = vld [vmem:[%s728 + $0xc8] sm:$0xff]
        %v1446 = vld [vmem:[%s728 + $0xd0] sm:$0xff]
        %v1447 = vld [vmem:[%s728 + $0xd8] sm:$0xff]
        %v1448 = vld [vmem:[%s728 + $0xe0] sm:$0xff]
        %v1449 = vld [vmem:[%s728 + $0xe8] sm:$0xff]
        %v1450 = vld [vmem:[%s728 + $0xf0] sm:$0xff]
        %v1451 = vld [vmem:[%s728 + $0xf8] sm:$0xff]
        %v1452 = vpack.c.bf16 %v1422, %v1420
        %v1453 = vpack.c.bf16 %v1423, %v1421
        %v1454 = vpack.c.bf16 %v1426, %v1424
        %v1455 = vpack.c.bf16 %v1427, %v1425
        %v1456 = vpack.c.bf16 %v1430, %v1428
        %v1457 = vpack.c.bf16 %v1431, %v1429
        %v1458 = vpack.c.bf16 %v1434, %v1432
        %v1459 = vpack.c.bf16 %v1435, %v1433
        %v1460 = vpack.c.bf16 %v1438, %v1436
        %v1461 = vpack.c.bf16 %v1439, %v1437
        %v1462 = vpack.c.bf16 %v1442, %v1440
        %v1463 = vpack.c.bf16 %v1443, %v1441
        %v1464 = vpack.c.bf16 %v1446, %v1444
        %v1465 = vpack.c.bf16 %v1447, %v1445
        %v1466 = vpack.c.bf16 %v1450, %v1448
        %v1467 = vpack.c.bf16 %v1451, %v1449
        %v1468 = vld [vmem:[#allocation14] sm:$0xff]
        %v1469 = vld [vmem:[#allocation14 + $0x8] sm:$0xff]
        %v1470 = vld [vmem:[#allocation14 + $0x10] sm:$0xff]
        %v1471 = vld [vmem:[#allocation14 + $0x18] sm:$0xff]
        %v1472 = vld [vmem:[#allocation14 + $0x20] sm:$0xff]
        %v1473 = vld [vmem:[#allocation14 + $0x28] sm:$0xff]
        %v1474 = vld [vmem:[#allocation14 + $0x30] sm:$0xff]
        %v1475 = vld [vmem:[#allocation14 + $0x38] sm:$0xff]
        %v1476 = vld [vmem:[#allocation14 + $0x40] sm:$0xff]
        %v1477 = vld [vmem:[#allocation14 + $0x48] sm:$0xff]
        %v1478 = vld [vmem:[#allocation14 + $0x50] sm:$0xff]
        %v1479 = vld [vmem:[#allocation14 + $0x58] sm:$0xff]
        %v1480 = vld [vmem:[#allocation14 + $0x60] sm:$0xff]
        %v1481 = vld [vmem:[#allocation14 + $0x68] sm:$0xff]
        %v1482 = vld [vmem:[#allocation14 + $0x70] sm:$0xff]
        %v1483 = vld [vmem:[#allocation14 + $0x78] sm:$0xff]
        %v1484 = vld [vmem:[#allocation14 + $0x80] sm:$0xff]
        %v1485 = vld [vmem:[#allocation14 + $0x88] sm:$0xff]
        %v1486 = vld [vmem:[#allocation14 + $0x90] sm:$0xff]
        %v1487 = vld [vmem:[#allocation14 + $0x98] sm:$0xff]
        %v1488 = vld [vmem:[#allocation14 + $0xa0] sm:$0xff]
        %v1489 = vld [vmem:[#allocation14 + $0xa8] sm:$0xff]
        %v1490 = vld [vmem:[#allocation14 + $0xb0] sm:$0xff]
        %v1491 = vld [vmem:[#allocation14 + $0xb8] sm:$0xff]
        %v1492 = vld [vmem:[#allocation14 + $0xc0] sm:$0xff]
        %v1493 = vld [vmem:[#allocation14 + $0xc8] sm:$0xff]
        %v1494 = vld [vmem:[#allocation14 + $0xd0] sm:$0xff]
        %v1495 = vld [vmem:[#allocation14 + $0xd8] sm:$0xff]
        %v1496 = vld [vmem:[#allocation14 + $0xe0] sm:$0xff]
        %v1497 = vld [vmem:[#allocation14 + $0xe8] sm:$0xff]
        %v1498 = vld [vmem:[#allocation14 + $0xf0] sm:$0xff]
        %v1499 = vld [vmem:[#allocation14 + $0xf8] sm:$0xff]
        %v1500 = vld [vmem:[#allocation14 + $0x100] sm:$0xff]
        %v1501 = vld [vmem:[#allocation14 + $0x108] sm:$0xff]
        %v1502 = vld [vmem:[#allocation14 + $0x110] sm:$0xff]
        %v1503 = vld [vmem:[#allocation14 + $0x118] sm:$0xff]
        %v1504 = vld [vmem:[#allocation14 + $0x120] sm:$0xff]
        %v1505 = vld [vmem:[#allocation14 + $0x128] sm:$0xff]
        %v1506 = vld [vmem:[#allocation14 + $0x130] sm:$0xff]
        %v1507 = vld [vmem:[#allocation14 + $0x138] sm:$0xff]
        %v1508 = vld [vmem:[#allocation14 + $0x140] sm:$0xff]
        %v1509 = vld [vmem:[#allocation14 + $0x148] sm:$0xff]
        %v1510 = vld [vmem:[#allocation14 + $0x150] sm:$0xff]
        %v1511 = vld [vmem:[#allocation14 + $0x158] sm:$0xff]
        %v1512 = vld [vmem:[#allocation14 + $0x160] sm:$0xff]
        %v1513 = vld [vmem:[#allocation14 + $0x168] sm:$0xff]
        %v1514 = vld [vmem:[#allocation14 + $0x170] sm:$0xff]
        %v1515 = vld [vmem:[#allocation14 + $0x178] sm:$0xff]
        %v1516 = vld [vmem:[#allocation14 + $0x180] sm:$0xff]
        %v1517 = vld [vmem:[#allocation14 + $0x188] sm:$0xff]
        %v1518 = vld [vmem:[#allocation14 + $0x190] sm:$0xff]
        %v1519 = vld [vmem:[#allocation14 + $0x198] sm:$0xff]
        %v1520 = vld [vmem:[#allocation14 + $0x1a0] sm:$0xff]
        %v1521 = vld [vmem:[#allocation14 + $0x1a8] sm:$0xff]
        %v1522 = vld [vmem:[#allocation14 + $0x1b0] sm:$0xff]
        %v1523 = vld [vmem:[#allocation14 + $0x1b8] sm:$0xff]
        %v1524 = vld [vmem:[#allocation14 + $0x1c0] sm:$0xff]
        %v1525 = vld [vmem:[#allocation14 + $0x1c8] sm:$0xff]
        %v1526 = vld [vmem:[#allocation14 + $0x1d0] sm:$0xff]
        %v1527 = vld [vmem:[#allocation14 + $0x1d8] sm:$0xff]
        %v1528 = vld [vmem:[#allocation14 + $0x1e0] sm:$0xff]
        %v1529 = vld [vmem:[#allocation14 + $0x1e8] sm:$0xff]
        %v1530 = vld [vmem:[#allocation14 + $0x1f0] sm:$0xff]
        %v1531 = vld [vmem:[#allocation14 + $0x1f8] sm:$0xff]
        %v1532 = vld [vmem:[%s5] sm:$0xf]
        %v1534 = vperm.slane %v1532, 0
        %v1535 = vperm.slane %v1532, 1
        %v1536 = vperm.slane %v1532, 2
        %v1537 = vperm.slane %v1532, 3
        %v1606 = vunpack.c.l.b16 %v1468
        %v1607 = vunpack.c.h.b16 %v1468
        %v1608 = vunpack.c.l.b16 %v1469
        %v1609 = vunpack.c.h.b16 %v1469
        %v1610 = vunpack.c.l.b16 %v1470
        %v1611 = vunpack.c.h.b16 %v1470
        %v1612 = vunpack.c.l.b16 %v1471
        %v1613 = vunpack.c.h.b16 %v1471
        %v1614 = vunpack.c.l.b16 %v1472
        %v1615 = vunpack.c.h.b16 %v1472
        %v1616 = vunpack.c.l.b16 %v1473
        %v1617 = vunpack.c.h.b16 %v1473
        %v1618 = vunpack.c.l.b16 %v1474
        %v1619 = vunpack.c.h.b16 %v1474
        %v1620 = vunpack.c.l.b16 %v1475
        %v1621 = vunpack.c.h.b16 %v1475
        %v1622 = vunpack.c.l.b16 %v1476
        %v1623 = vunpack.c.h.b16 %v1476
        %v1624 = vunpack.c.l.b16 %v1477
        %v1625 = vunpack.c.h.b16 %v1477
        %v1626 = vunpack.c.l.b16 %v1478
        %v1627 = vunpack.c.h.b16 %v1478
        %v1628 = vunpack.c.l.b16 %v1479
        %v1629 = vunpack.c.h.b16 %v1479
        %v1630 = vunpack.c.l.b16 %v1480
        %v1631 = vunpack.c.h.b16 %v1480
        %v1632 = vunpack.c.l.b16 %v1481
        %v1633 = vunpack.c.h.b16 %v1481
        %v1634 = vunpack.c.l.b16 %v1482
        %v1635 = vunpack.c.h.b16 %v1482
        %v1636 = vunpack.c.l.b16 %v1483
        %v1637 = vunpack.c.h.b16 %v1483
        %v1638 = vunpack.c.l.b16 %v1484
        %v1639 = vunpack.c.h.b16 %v1484
        %v1640 = vunpack.c.l.b16 %v1485
        %v1641 = vunpack.c.h.b16 %v1485
        %v1642 = vunpack.c.l.b16 %v1486
        %v1643 = vunpack.c.h.b16 %v1486
        %v1644 = vunpack.c.l.b16 %v1487
        %v1645 = vunpack.c.h.b16 %v1487
        %v1646 = vunpack.c.l.b16 %v1488
        %v1647 = vunpack.c.h.b16 %v1488
        %v1648 = vunpack.c.l.b16 %v1489
        %v1649 = vunpack.c.h.b16 %v1489
        %v1650 = vunpack.c.l.b16 %v1490
        %v1651 = vunpack.c.h.b16 %v1490
        %v1652 = vunpack.c.l.b16 %v1491
        %v1653 = vunpack.c.h.b16 %v1491
        %v1654 = vunpack.c.l.b16 %v1492
        %v1655 = vunpack.c.h.b16 %v1492
        %v1656 = vunpack.c.l.b16 %v1493
        %v1657 = vunpack.c.h.b16 %v1493
        %v1658 = vunpack.c.l.b16 %v1494
        %v1659 = vunpack.c.h.b16 %v1494
        %v1660 = vunpack.c.l.b16 %v1495
        %v1661 = vunpack.c.h.b16 %v1495
        %v1662 = vunpack.c.l.b16 %v1496
        %v1663 = vunpack.c.h.b16 %v1496
        %v1664 = vunpack.c.l.b16 %v1497
        %v1665 = vunpack.c.h.b16 %v1497
        %v1666 = vunpack.c.l.b16 %v1498
        %v1667 = vunpack.c.h.b16 %v1498
        %v1668 = vunpack.c.l.b16 %v1499
        %v1669 = vunpack.c.h.b16 %v1499
        %v1670 = vunpack.c.l.b16 %v1500
        %v1671 = vunpack.c.h.b16 %v1500
        %v1672 = vunpack.c.l.b16 %v1501
        %v1673 = vunpack.c.h.b16 %v1501
        %v1674 = vunpack.c.l.b16 %v1502
        %v1675 = vunpack.c.h.b16 %v1502
        %v1676 = vunpack.c.l.b16 %v1503
        %v1677 = vunpack.c.h.b16 %v1503
        %v1678 = vunpack.c.l.b16 %v1504
        %v1679 = vunpack.c.h.b16 %v1504
        %v1680 = vunpack.c.l.b16 %v1505
        %v1681 = vunpack.c.h.b16 %v1505
        %v1682 = vunpack.c.l.b16 %v1506
        %v1683 = vunpack.c.h.b16 %v1506
        %v1684 = vunpack.c.l.b16 %v1507
        %v1685 = vunpack.c.h.b16 %v1507
        %v1686 = vunpack.c.l.b16 %v1508
        %v1687 = vunpack.c.h.b16 %v1508
        %v1688 = vunpack.c.l.b16 %v1509
        %v1689 = vunpack.c.h.b16 %v1509
        %v1690 = vunpack.c.l.b16 %v1510
        %v1691 = vunpack.c.h.b16 %v1510
        %v1692 = vunpack.c.l.b16 %v1511
        %v1693 = vunpack.c.h.b16 %v1511
        %v1694 = vunpack.c.l.b16 %v1512
        %v1695 = vunpack.c.h.b16 %v1512
        %v1696 = vunpack.c.l.b16 %v1513
        %v1697 = vunpack.c.h.b16 %v1513
        %v1698 = vunpack.c.l.b16 %v1514
        %v1699 = vunpack.c.h.b16 %v1514
        %v1700 = vunpack.c.l.b16 %v1515
        %v1701 = vunpack.c.h.b16 %v1515
        %v1702 = vunpack.c.l.b16 %v1516
        %v1703 = vunpack.c.h.b16 %v1516
        %v1704 = vunpack.c.l.b16 %v1517
        %v1705 = vunpack.c.h.b16 %v1517
        %v1706 = vunpack.c.l.b16 %v1518
        %v1707 = vunpack.c.h.b16 %v1518
        %v1708 = vunpack.c.l.b16 %v1519
        %v1709 = vunpack.c.h.b16 %v1519
        %v1710 = vunpack.c.l.b16 %v1520
        %v1711 = vunpack.c.h.b16 %v1520
        %v1712 = vunpack.c.l.b16 %v1521
        %v1713 = vunpack.c.h.b16 %v1521
        %v1714 = vunpack.c.l.b16 %v1522
        %v1715 = vunpack.c.h.b16 %v1522
        %v1716 = vunpack.c.l.b16 %v1523
        %v1717 = vunpack.c.h.b16 %v1523
        %v1718 = vunpack.c.l.b16 %v1524
        %v1719 = vunpack.c.h.b16 %v1524
        %v1720 = vunpack.c.l.b16 %v1525
        %v1721 = vunpack.c.h.b16 %v1525
        %v1722 = vunpack.c.l.b16 %v1526
        %v1723 = vunpack.c.h.b16 %v1526
        %v1724 = vunpack.c.l.b16 %v1527
        %v1725 = vunpack.c.h.b16 %v1527
        %v1726 = vunpack.c.l.b16 %v1528
        %v1727 = vunpack.c.h.b16 %v1528
        %v1728 = vunpack.c.l.b16 %v1529
        %v1729 = vunpack.c.h.b16 %v1529
        %v1730 = vunpack.c.l.b16 %v1530
        %v1731 = vunpack.c.h.b16 %v1530
        %v1732 = vunpack.c.l.b16 %v1531
        %v1733 = vunpack.c.h.b16 %v1531
        %v1734 = vpack.c.b16 %v1610, %v1606
        %v1735 = vpack.c.b16 %v1611, %v1607
        %v1736 = vpack.c.b16 %v1612, %v1608
        %v1737 = vpack.c.b16 %v1613, %v1609
        %v1738 = vpack.c.b16 %v1618, %v1614
        %v1739 = vpack.c.b16 %v1619, %v1615
        %v1740 = vpack.c.b16 %v1620, %v1616
        %v1741 = vpack.c.b16 %v1621, %v1617
        %v1742 = vpack.c.b16 %v1626, %v1622
        %v1743 = vpack.c.b16 %v1627, %v1623
        %v1744 = vpack.c.b16 %v1628, %v1624
        %v1745 = vpack.c.b16 %v1629, %v1625
        %v1746 = vpack.c.b16 %v1634, %v1630
        %v1747 = vpack.c.b16 %v1635, %v1631
        %v1748 = vpack.c.b16 %v1636, %v1632
        %v1749 = vpack.c.b16 %v1637, %v1633
        %v1750 = vpack.c.b16 %v1642, %v1638
        %v1751 = vpack.c.b16 %v1643, %v1639
        %v1752 = vpack.c.b16 %v1644, %v1640
        %v1753 = vpack.c.b16 %v1645, %v1641
        %v1754 = vpack.c.b16 %v1650, %v1646
        %v1755 = vpack.c.b16 %v1651, %v1647
        %v1756 = vpack.c.b16 %v1652, %v1648
        %v1757 = vpack.c.b16 %v1653, %v1649
        %v1758 = vpack.c.b16 %v1658, %v1654
        %v1759 = vpack.c.b16 %v1659, %v1655
        %v1760 = vpack.c.b16 %v1660, %v1656
        %v1761 = vpack.c.b16 %v1661, %v1657
        %v1762 = vpack.c.b16 %v1666, %v1662
        %v1763 = vpack.c.b16 %v1667, %v1663
        %v1764 = vpack.c.b16 %v1668, %v1664
        %v1765 = vpack.c.b16 %v1669, %v1665
        %v1766 = vpack.c.b16 %v1674, %v1670
        %v1767 = vpack.c.b16 %v1675, %v1671
        %v1768 = vpack.c.b16 %v1676, %v1672
        %v1769 = vpack.c.b16 %v1677, %v1673
        %v1770 = vpack.c.b16 %v1682, %v1678
        %v1771 = vpack.c.b16 %v1683, %v1679
        %v1772 = vpack.c.b16 %v1684, %v1680
        %v1773 = vpack.c.b16 %v1685, %v1681
        %v1774 = vpack.c.b16 %v1690, %v1686
        %v1775 = vpack.c.b16 %v1691, %v1687
        %v1776 = vpack.c.b16 %v1692, %v1688
        %v1777 = vpack.c.b16 %v1693, %v1689
        %v1778 = vpack.c.b16 %v1698, %v1694
        %v1779 = vpack.c.b16 %v1699, %v1695
        %v1780 = vpack.c.b16 %v1700, %v1696
        %v1781 = vpack.c.b16 %v1701, %v1697
        %v1782 = vpack.c.b16 %v1706, %v1702
        %v1783 = vpack.c.b16 %v1707, %v1703
        %v1784 = vpack.c.b16 %v1708, %v1704
        %v1785 = vpack.c.b16 %v1709, %v1705
        %v1786 = vpack.c.b16 %v1714, %v1710
        %v1787 = vpack.c.b16 %v1715, %v1711
        %v1788 = vpack.c.b16 %v1716, %v1712
        %v1789 = vpack.c.b16 %v1717, %v1713
        %v1790 = vpack.c.b16 %v1722, %v1718
        %v1791 = vpack.c.b16 %v1723, %v1719
        %v1792 = vpack.c.b16 %v1724, %v1720
        %v1793 = vpack.c.b16 %v1725, %v1721
        %v1794 = vpack.c.b16 %v1730, %v1726
        %v1795 = vpack.c.b16 %v1731, %v1727
        %v1796 = vpack.c.b16 %v1732, %v1728
        %v1797 = vpack.c.b16 %v1733, %v1729
        %1862 = vmatpush.bf16.msra.mxu0 %v1762
        %1863 = vmatpush.bf16.msra.mxu0 %v1758
        %1864 = vmatpush.bf16.msra.mxu0 %v1754
        %1865 = vmatpush.bf16.msra.mxu0 %v1750
        %1866 = vmatpush.bf16.msra.mxu0 %v1746
        %1867 = vmatpush.bf16.msra.mxu0 %v1742
        %1868 = vmatpush.bf16.msra.mxu0 %v1738
        %1869 = vmatpush.bf16.msra.mxu0 %v1734
        %1870 = vmatmul.bf16.gmra.mxu0 %v1452
        %v1871 = vpop.f32.mrf.mxu0
        %v1872 = vadd.f32 %v1534, %v1871
        %v1873 = vpop.f32.mrf.mxu0
        %v1874 = vadd.f32 %v1534, %v1873
        %1875 = vmatmul.bf16.gmra.mxu0 %v1454
        %v1876 = vpop.f32.mrf.mxu0
        %v1877 = vadd.f32 %v1534, %v1876
        %v1878 = vpop.f32.mrf.mxu0
        %v1879 = vadd.f32 %v1534, %v1878
        %1880 = vmatmul.bf16.gmra.mxu0 %v1456
        %v1881 = vpop.f32.mrf.mxu0
        %v1882 = vadd.f32 %v1534, %v1881
        %v1883 = vpop.f32.mrf.mxu0
        %v1884 = vadd.f32 %v1534, %v1883
        %1885 = vmatmul.bf16.gmra.mxu0 %v1458
        %v1886 = vpop.f32.mrf.mxu0
        %v1887 = vadd.f32 %v1534, %v1886
        %v1888 = vpop.f32.mrf.mxu0
        %v1889 = vadd.f32 %v1534, %v1888
        %1890 = vmatmul.bf16.gmra.mxu0 %v1460
        %v1891 = vpop.f32.mrf.mxu0
        %v1892 = vadd.f32 %v1534, %v1891
        %v1893 = vpop.f32.mrf.mxu0
        %v1894 = vadd.f32 %v1534, %v1893
        %1895 = vmatmul.bf16.gmra.mxu0 %v1462
        %v1896 = vpop.f32.mrf.mxu0
        %v1897 = vadd.f32 %v1534, %v1896
        %v1898 = vpop.f32.mrf.mxu0
        %v1899 = vadd.f32 %v1534, %v1898
        %1900 = vmatmul.bf16.gmra.mxu0 %v1464
        %v1901 = vpop.f32.mrf.mxu0
        %v1902 = vadd.f32 %v1534, %v1901
        %v1903 = vpop.f32.mrf.mxu0
        %v1904 = vadd.f32 %v1534, %v1903
        %1905 = vmatmul.bf16.gmra.mxu0 %v1466
        %v1906 = vpop.f32.mrf.mxu0
        %v1907 = vadd.f32 %v1534, %v1906
        %v1908 = vpop.f32.mrf.mxu0
        %v1909 = vadd.f32 %v1534, %v1908
        %1910 = vdwg.mxu0
        %1911 = vmatpush.bf16.msra.mxu0 %v1794
        %1912 = vmatpush.bf16.msra.mxu0 %v1790
        %1913 = vmatpush.bf16.msra.mxu0 %v1786
        %1914 = vmatpush.bf16.msra.mxu0 %v1782
        %1915 = vmatpush.bf16.msra.mxu0 %v1778
        %1916 = vmatpush.bf16.msra.mxu0 %v1774
        %1917 = vmatpush.bf16.msra.mxu0 %v1770
        %1918 = vmatpush.bf16.msra.mxu0 %v1766
        %1919 = vmatmul.bf16.gmra.mxu0 %v1453
        %v1920 = vpop.f32.mrf.mxu0
        %v1921 = vadd.f32 %v1872, %v1920
        %v1922 = vpop.f32.mrf.mxu0
        %v1923 = vadd.f32 %v1874, %v1922
        %1924 = vmatmul.bf16.gmra.mxu0 %v1455
        %v1925 = vpop.f32.mrf.mxu0
        %v1926 = vadd.f32 %v1877, %v1925
        %v1927 = vpop.f32.mrf.mxu0
        %v1928 = vadd.f32 %v1879, %v1927
        %1929 = vmatmul.bf16.gmra.mxu0 %v1457
        %v1930 = vpop.f32.mrf.mxu0
        %v1931 = vadd.f32 %v1882, %v1930
        %v1932 = vpop.f32.mrf.mxu0
        %v1933 = vadd.f32 %v1884, %v1932
        %1934 = vmatmul.bf16.gmra.mxu0 %v1459
        %v1935 = vpop.f32.mrf.mxu0
        %v1936 = vadd.f32 %v1887, %v1935
        %v1937 = vpop.f32.mrf.mxu0
        %v1938 = vadd.f32 %v1889, %v1937
        %1939 = vmatmul.bf16.gmra.mxu0 %v1461
        %v1940 = vpop.f32.mrf.mxu0
        %v1941 = vadd.f32 %v1892, %v1940
        %v1942 = vpop.f32.mrf.mxu0
        %v1943 = vadd.f32 %v1894, %v1942
        %1944 = vmatmul.bf16.gmra.mxu0 %v1463
        %v1945 = vpop.f32.mrf.mxu0
        %v1946 = vadd.f32 %v1897, %v1945
        %v1947 = vpop.f32.mrf.mxu0
        %v1948 = vadd.f32 %v1899, %v1947
        %1949 = vmatmul.bf16.gmra.mxu0 %v1465
        %v1950 = vpop.f32.mrf.mxu0
        %v1951 = vadd.f32 %v1902, %v1950
        %v1952 = vpop.f32.mrf.mxu0
        %v1953 = vadd.f32 %v1904, %v1952
        %1954 = vmatmul.bf16.gmra.mxu0 %v1467
        %v1955 = vpop.f32.mrf.mxu0
        %v1956 = vadd.f32 %v1907, %v1955
        %v1957 = vpop.f32.mrf.mxu0
        %v1958 = vadd.f32 %v1909, %v1957
        %1959 = vdwg.mxu0
        %1960 = vmatpush.bf16.msra.mxu0 %v1763
        %1961 = vmatpush.bf16.msra.mxu0 %v1759
        %1962 = vmatpush.bf16.msra.mxu0 %v1755
        %1963 = vmatpush.bf16.msra.mxu0 %v1751
        %1964 = vmatpush.bf16.msra.mxu0 %v1747
        %1965 = vmatpush.bf16.msra.mxu0 %v1743
        %1966 = vmatpush.bf16.msra.mxu0 %v1739
        %1967 = vmatpush.bf16.msra.mxu0 %v1735
        %1968 = vmatmul.bf16.gmra.mxu0 %v1452
        %v1969 = vpop.f32.mrf.mxu0
        %v1970 = vadd.f32 %v1535, %v1969
        %v1971 = vpop.f32.mrf.mxu0
        %v1972 = vadd.f32 %v1535, %v1971
        %1973 = vmatmul.bf16.gmra.mxu0 %v1454
        %v1974 = vpop.f32.mrf.mxu0
        %v1975 = vadd.f32 %v1535, %v1974
        %v1976 = vpop.f32.mrf.mxu0
        %v1977 = vadd.f32 %v1535, %v1976
        %1978 = vmatmul.bf16.gmra.mxu0 %v1456
        %v1979 = vpop.f32.mrf.mxu0
        %v1980 = vadd.f32 %v1535, %v1979
        %v1981 = vpop.f32.mrf.mxu0
        %v1982 = vadd.f32 %v1535, %v1981
        %1983 = vmatmul.bf16.gmra.mxu0 %v1458
        %v1984 = vpop.f32.mrf.mxu0
        %v1985 = vadd.f32 %v1535, %v1984
        %v1986 = vpop.f32.mrf.mxu0
        %v1987 = vadd.f32 %v1535, %v1986
        %1988 = vmatmul.bf16.gmra.mxu0 %v1460
        %v1989 = vpop.f32.mrf.mxu0
        %v1990 = vadd.f32 %v1535, %v1989
        %v1991 = vpop.f32.mrf.mxu0
        %v1992 = vadd.f32 %v1535, %v1991
        %1993 = vmatmul.bf16.gmra.mxu0 %v1462
        %v1994 = vpop.f32.mrf.mxu0
        %v1995 = vadd.f32 %v1535, %v1994
        %v1996 = vpop.f32.mrf.mxu0
        %v1997 = vadd.f32 %v1535, %v1996
        %1998 = vmatmul.bf16.gmra.mxu0 %v1464
        %v1999 = vpop.f32.mrf.mxu0
        %v2000 = vadd.f32 %v1535, %v1999
        %v2001 = vpop.f32.mrf.mxu0
        %v2002 = vadd.f32 %v1535, %v2001
        %2003 = vmatmul.bf16.gmra.mxu0 %v1466
        %v2004 = vpop.f32.mrf.mxu0
        %v2005 = vadd.f32 %v1535, %v2004
        %v2006 = vpop.f32.mrf.mxu0
        %v2007 = vadd.f32 %v1535, %v2006
        %2008 = vdwg.mxu0
        %2009 = vmatpush.bf16.msra.mxu0 %v1795
        %2010 = vmatpush.bf16.msra.mxu0 %v1791
        %2011 = vmatpush.bf16.msra.mxu0 %v1787
        %2012 = vmatpush.bf16.msra.mxu0 %v1783
        %2013 = vmatpush.bf16.msra.mxu0 %v1779
        %2014 = vmatpush.bf16.msra.mxu0 %v1775
        %2015 = vmatpush.bf16.msra.mxu0 %v1771
        %2016 = vmatpush.bf16.msra.mxu0 %v1767
        %2017 = vmatmul.bf16.gmra.mxu0 %v1453
        %v2018 = vpop.f32.mrf.mxu0
        %v2019 = vadd.f32 %v1970, %v2018
        %v2020 = vpop.f32.mrf.mxu0
        %v2021 = vadd.f32 %v1972, %v2020
        %2022 = vmatmul.bf16.gmra.mxu0 %v1455
        %v2023 = vpop.f32.mrf.mxu0
        %v2024 = vadd.f32 %v1975, %v2023
        %v2025 = vpop.f32.mrf.mxu0
        %v2026 = vadd.f32 %v1977, %v2025
        %2027 = vmatmul.bf16.gmra.mxu0 %v1457
        %v2028 = vpop.f32.mrf.mxu0
        %v2029 = vadd.f32 %v1980, %v2028
        %v2030 = vpop.f32.mrf.mxu0
        %v2031 = vadd.f32 %v1982, %v2030
        %2032 = vmatmul.bf16.gmra.mxu0 %v1459
        %v2033 = vpop.f32.mrf.mxu0
        %v2034 = vadd.f32 %v1985, %v2033
        %v2035 = vpop.f32.mrf.mxu0
        %v2036 = vadd.f32 %v1987, %v2035
        %2037 = vmatmul.bf16.gmra.mxu0 %v1461
        %v2038 = vpop.f32.mrf.mxu0
        %v2039 = vadd.f32 %v1990, %v2038
        %v2040 = vpop.f32.mrf.mxu0
        %v2041 = vadd.f32 %v1992, %v2040
        %2042 = vmatmul.bf16.gmra.mxu0 %v1463
        %v2043 = vpop.f32.mrf.mxu0
        %v2044 = vadd.f32 %v1995, %v2043
        %v2045 = vpop.f32.mrf.mxu0
        %v2046 = vadd.f32 %v1997, %v2045
        %2047 = vmatmul.bf16.gmra.mxu0 %v1465
        %v2048 = vpop.f32.mrf.mxu0
        %v2049 = vadd.f32 %v2000, %v2048
        %v2050 = vpop.f32.mrf.mxu0
        %v2051 = vadd.f32 %v2002, %v2050
        %2052 = vmatmul.bf16.gmra.mxu0 %v1467
        %v2053 = vpop.f32.mrf.mxu0
        %v2054 = vadd.f32 %v2005, %v2053
        %v2055 = vpop.f32.mrf.mxu0
        %v2056 = vadd.f32 %v2007, %v2055
        %2057 = vdwg.mxu0
        %2058 = vmatpush.bf16.msra.mxu0 %v1764
        %2059 = vmatpush.bf16.msra.mxu0 %v1760
        %2060 = vmatpush.bf16.msra.mxu0 %v1756
        %2061 = vmatpush.bf16.msra.mxu0 %v1752
        %2062 = vmatpush.bf16.msra.mxu0 %v1748
        %2063 = vmatpush.bf16.msra.mxu0 %v1744
        %2064 = vmatpush.bf16.msra.mxu0 %v1740
        %2065 = vmatpush.bf16.msra.mxu0 %v1736
        %2066 = vmatmul.bf16.gmra.mxu0 %v1452
        %v2067 = vpop.f32.mrf.mxu0
        %v2068 = vadd.f32 %v1536, %v2067
        %v2069 = vpop.f32.mrf.mxu0
        %v2070 = vadd.f32 %v1536, %v2069
        %2071 = vmatmul.bf16.gmra.mxu0 %v1454
        %v2072 = vpop.f32.mrf.mxu0
        %v2073 = vadd.f32 %v1536, %v2072
        %v2074 = vpop.f32.mrf.mxu0
        %v2075 = vadd.f32 %v1536, %v2074
        %2076 = vmatmul.bf16.gmra.mxu0 %v1456
        %v2077 = vpop.f32.mrf.mxu0
        %v2078 = vadd.f32 %v1536, %v2077
        %v2079 = vpop.f32.mrf.mxu0
        %v2080 = vadd.f32 %v1536, %v2079
        %2081 = vmatmul.bf16.gmra.mxu0 %v1458
        %v2082 = vpop.f32.mrf.mxu0
        %v2083 = vadd.f32 %v1536, %v2082
        %v2084 = vpop.f32.mrf.mxu0
        %v2085 = vadd.f32 %v1536, %v2084
        %2086 = vmatmul.bf16.gmra.mxu0 %v1460
        %v2087 = vpop.f32.mrf.mxu0
        %v2088 = vadd.f32 %v1536, %v2087
        %v2089 = vpop.f32.mrf.mxu0
        %v2090 = vadd.f32 %v1536, %v2089
        %2091 = vmatmul.bf16.gmra.mxu0 %v1462
        %v2092 = vpop.f32.mrf.mxu0
        %v2093 = vadd.f32 %v1536, %v2092
        %v2094 = vpop.f32.mrf.mxu0
        %v2095 = vadd.f32 %v1536, %v2094
        %2096 = vmatmul.bf16.gmra.mxu0 %v1464
        %v2097 = vpop.f32.mrf.mxu0
        %v2098 = vadd.f32 %v1536, %v2097
        %v2099 = vpop.f32.mrf.mxu0
        %v2100 = vadd.f32 %v1536, %v2099
        %2101 = vmatmul.bf16.gmra.mxu0 %v1466
        %v2102 = vpop.f32.mrf.mxu0
        %v2103 = vadd.f32 %v1536, %v2102
        %v2104 = vpop.f32.mrf.mxu0
        %v2105 = vadd.f32 %v1536, %v2104
        %2106 = vdwg.mxu0
        %2107 = vmatpush.bf16.msra.mxu0 %v1796
        %2108 = vmatpush.bf16.msra.mxu0 %v1792
        %2109 = vmatpush.bf16.msra.mxu0 %v1788
        %2110 = vmatpush.bf16.msra.mxu0 %v1784
        %2111 = vmatpush.bf16.msra.mxu0 %v1780
        %2112 = vmatpush.bf16.msra.mxu0 %v1776
        %2113 = vmatpush.bf16.msra.mxu0 %v1772
        %2114 = vmatpush.bf16.msra.mxu0 %v1768
        %2115 = vmatmul.bf16.gmra.mxu0 %v1453
        %v2116 = vpop.f32.mrf.mxu0
        %v2117 = vadd.f32 %v2068, %v2116
        %v2118 = vpop.f32.mrf.mxu0
        %v2119 = vadd.f32 %v2070, %v2118
        %2120 = vmatmul.bf16.gmra.mxu0 %v1455
        %v2121 = vpop.f32.mrf.mxu0
        %v2122 = vadd.f32 %v2073, %v2121
        %v2123 = vpop.f32.mrf.mxu0
        %v2124 = vadd.f32 %v2075, %v2123
        %2125 = vmatmul.bf16.gmra.mxu0 %v1457
        %v2126 = vpop.f32.mrf.mxu0
        %v2127 = vadd.f32 %v2078, %v2126
        %v2128 = vpop.f32.mrf.mxu0
        %v2129 = vadd.f32 %v2080, %v2128
        %2130 = vmatmul.bf16.gmra.mxu0 %v1459
        %v2131 = vpop.f32.mrf.mxu0
        %v2132 = vadd.f32 %v2083, %v2131
        %v2133 = vpop.f32.mrf.mxu0
        %v2134 = vadd.f32 %v2085, %v2133
        %2135 = vmatmul.bf16.gmra.mxu0 %v1461
        %v2136 = vpop.f32.mrf.mxu0
        %v2137 = vadd.f32 %v2088, %v2136
        %v2138 = vpop.f32.mrf.mxu0
        %v2139 = vadd.f32 %v2090, %v2138
        %2140 = vmatmul.bf16.gmra.mxu0 %v1463
        %v2141 = vpop.f32.mrf.mxu0
        %v2142 = vadd.f32 %v2093, %v2141
        %v2143 = vpop.f32.mrf.mxu0
        %v2144 = vadd.f32 %v2095, %v2143
        %2145 = vmatmul.bf16.gmra.mxu0 %v1465
        %v2146 = vpop.f32.mrf.mxu0
        %v2147 = vadd.f32 %v2098, %v2146
        %v2148 = vpop.f32.mrf.mxu0
        %v2149 = vadd.f32 %v2100, %v2148
        %2150 = vmatmul.bf16.gmra.mxu0 %v1467
        %v2151 = vpop.f32.mrf.mxu0
        %v2152 = vadd.f32 %v2103, %v2151
        %v2153 = vpop.f32.mrf.mxu0
        %v2154 = vadd.f32 %v2105, %v2153
        %2155 = vdwg.mxu0
        %2156 = vmatpush.bf16.msra.mxu0 %v1765
        %2157 = vmatpush.bf16.msra.mxu0 %v1761
        %2158 = vmatpush.bf16.msra.mxu0 %v1757
        %2159 = vmatpush.bf16.msra.mxu0 %v1753
        %2160 = vmatpush.bf16.msra.mxu0 %v1749
        %2161 = vmatpush.bf16.msra.mxu0 %v1745
        %2162 = vmatpush.bf16.msra.mxu0 %v1741
        %2163 = vmatpush.bf16.msra.mxu0 %v1737
        %2164 = vmatmul.bf16.gmra.mxu0 %v1452
        %v2165 = vpop.f32.mrf.mxu0
        %v2166 = vadd.f32 %v1537, %v2165
        %v2167 = vpop.f32.mrf.mxu0
        %v2168 = vadd.f32 %v1537, %v2167
        %2169 = vmatmul.bf16.gmra.mxu0 %v1454
        %v2170 = vpop.f32.mrf.mxu0
        %v2171 = vadd.f32 %v1537, %v2170
        %v2172 = vpop.f32.mrf.mxu0
        %v2173 = vadd.f32 %v1537, %v2172
        %2174 = vmatmul.bf16.gmra.mxu0 %v1456
        %v2175 = vpop.f32.mrf.mxu0
        %v2176 = vadd.f32 %v1537, %v2175
        %v2177 = vpop.f32.mrf.mxu0
        %v2178 = vadd.f32 %v1537, %v2177
        %2179 = vmatmul.bf16.gmra.mxu0 %v1458
        %v2180 = vpop.f32.mrf.mxu0
        %v2181 = vadd.f32 %v1537, %v2180
        %v2182 = vpop.f32.mrf.mxu0
        %v2183 = vadd.f32 %v1537, %v2182
        %2184 = vmatmul.bf16.gmra.mxu0 %v1460
        %v2185 = vpop.f32.mrf.mxu0
        %v2186 = vadd.f32 %v1537, %v2185
        %v2187 = vpop.f32.mrf.mxu0
        %v2188 = vadd.f32 %v1537, %v2187
        %2189 = vmatmul.bf16.gmra.mxu0 %v1462
        %v2190 = vpop.f32.mrf.mxu0
        %v2191 = vadd.f32 %v1537, %v2190
        %v2192 = vpop.f32.mrf.mxu0
        %v2193 = vadd.f32 %v1537, %v2192
        %2194 = vmatmul.bf16.gmra.mxu0 %v1464
        %v2195 = vpop.f32.mrf.mxu0
        %v2196 = vadd.f32 %v1537, %v2195
        %v2197 = vpop.f32.mrf.mxu0
        %v2198 = vadd.f32 %v1537, %v2197
        %2199 = vmatmul.bf16.gmra.mxu0 %v1466
        %v2200 = vpop.f32.mrf.mxu0
        %v2201 = vadd.f32 %v1537, %v2200
        %v2202 = vpop.f32.mrf.mxu0
        %v2203 = vadd.f32 %v1537, %v2202
        %2204 = vdwg.mxu0
        %2205 = vmatpush.bf16.msra.mxu0 %v1797
        %2206 = vmatpush.bf16.msra.mxu0 %v1793
        %2207 = vmatpush.bf16.msra.mxu0 %v1789
        %2208 = vmatpush.bf16.msra.mxu0 %v1785
        %2209 = vmatpush.bf16.msra.mxu0 %v1781
        %2210 = vmatpush.bf16.msra.mxu0 %v1777
        %2211 = vmatpush.bf16.msra.mxu0 %v1773
        %2212 = vmatpush.bf16.msra.mxu0 %v1769
        %2213 = vmatmul.bf16.gmra.mxu0 %v1453
        %v2214 = vpop.f32.mrf.mxu0
        %v2215 = vadd.f32 %v2166, %v2214
        %v2216 = vpop.f32.mrf.mxu0
        %v2217 = vadd.f32 %v2168, %v2216
        %2218 = vmatmul.bf16.gmra.mxu0 %v1455
        %v2219 = vpop.f32.mrf.mxu0
        %v2220 = vadd.f32 %v2171, %v2219
        %v2221 = vpop.f32.mrf.mxu0
        %v2222 = vadd.f32 %v2173, %v2221
        %2223 = vmatmul.bf16.gmra.mxu0 %v1457
        %v2224 = vpop.f32.mrf.mxu0
        %v2225 = vadd.f32 %v2176, %v2224
        %v2226 = vpop.f32.mrf.mxu0
        %v2227 = vadd.f32 %v2178, %v2226
        %2228 = vmatmul.bf16.gmra.mxu0 %v1459
        %v2229 = vpop.f32.mrf.mxu0
        %v2230 = vadd.f32 %v2181, %v2229
        %v2231 = vpop.f32.mrf.mxu0
        %v2232 = vadd.f32 %v2183, %v2231
        %2233 = vmatmul.bf16.gmra.mxu0 %v1461
        %v2234 = vpop.f32.mrf.mxu0
        %v2235 = vadd.f32 %v2186, %v2234
        %v2236 = vpop.f32.mrf.mxu0
        %v2237 = vadd.f32 %v2188, %v2236
        %2238 = vmatmul.bf16.gmra.mxu0 %v1463
        %v2239 = vpop.f32.mrf.mxu0
        %v2240 = vadd.f32 %v2191, %v2239
        %v2241 = vpop.f32.mrf.mxu0
        %v2242 = vadd.f32 %v2193, %v2241
        %2243 = vmatmul.bf16.gmra.mxu0 %v1465
        %v2244 = vpop.f32.mrf.mxu0
        %v2245 = vadd.f32 %v2196, %v2244
        %v2246 = vpop.f32.mrf.mxu0
        %v2247 = vadd.f32 %v2198, %v2246
        %2248 = vmatmul.bf16.gmra.mxu0 %v1467
        %v2249 = vpop.f32.mrf.mxu0
        %v2250 = vadd.f32 %v2201, %v2249
        %v2251 = vpop.f32.mrf.mxu0
        %v2252 = vadd.f32 %v2203, %v2251
        %2253 = vdwg.mxu0
        %v2254 = vpack.c.bf16 %v2019, %v1921
        %v2255 = vpack.c.bf16 %v2215, %v2117
        %v2256 = vpack.c.bf16 %v2021, %v1923
        %v2257 = vpack.c.bf16 %v2217, %v2119
        %v2258 = vpack.c.bf16 %v2024, %v1926
        %v2259 = vpack.c.bf16 %v2220, %v2122
        %v2260 = vpack.c.bf16 %v2026, %v1928
        %v2261 = vpack.c.bf16 %v2222, %v2124
        %v2262 = vpack.c.bf16 %v2029, %v1931
        %v2263 = vpack.c.bf16 %v2225, %v2127
        %v2264 = vpack.c.bf16 %v2031, %v1933
        %v2265 = vpack.c.bf16 %v2227, %v2129
        %v2266 = vpack.c.bf16 %v2034, %v1936
        %v2267 = vpack.c.bf16 %v2230, %v2132
        %v2268 = vpack.c.bf16 %v2036, %v1938
        %v2269 = vpack.c.bf16 %v2232, %v2134
        %v2270 = vpack.c.bf16 %v2039, %v1941
        %v2271 = vpack.c.bf16 %v2235, %v2137
        %v2272 = vpack.c.bf16 %v2041, %v1943
        %v2273 = vpack.c.bf16 %v2237, %v2139
        %v2274 = vpack.c.bf16 %v2044, %v1946
        %v2275 = vpack.c.bf16 %v2240, %v2142
        %v2276 = vpack.c.bf16 %v2046, %v1948
        %v2277 = vpack.c.bf16 %v2242, %v2144
        %v2278 = vpack.c.bf16 %v2049, %v1951
        %v2279 = vpack.c.bf16 %v2245, %v2147
        %v2280 = vpack.c.bf16 %v2051, %v1953
        %v2281 = vpack.c.bf16 %v2247, %v2149
        %v2282 = vpack.c.bf16 %v2054, %v1956
        %v2283 = vpack.c.bf16 %v2250, %v2152
        %v2284 = vpack.c.bf16 %v2056, %v1958
        %v2285 = vpack.c.bf16 %v2252, %v2154
        %v2286 = vld [vmem:[#allocation2] sm:$0xf]
        %v2287 = vld [vmem:[#allocation2 + $0x8] sm:$0xf]
        %v2288 = vld [vmem:[#allocation2 + $0x10] sm:$0xf]
        %v2289 = vld [vmem:[#allocation2 + $0x18] sm:$0xf]
        %v2290 = vld [vmem:[#allocation2 + $0x20] sm:$0xf]
        %v2291 = vld [vmem:[#allocation2 + $0x28] sm:$0xf]
        %v2292 = vld [vmem:[#allocation2 + $0x30] sm:$0xf]
        %v2293 = vld [vmem:[#allocation2 + $0x38] sm:$0xf]
        %v2294 = vld [vmem:[#allocation2 + $0x40] sm:$0xf]
        %v2295 = vld [vmem:[#allocation2 + $0x48] sm:$0xf]
        %v2296 = vld [vmem:[#allocation2 + $0x50] sm:$0xf]
        %v2297 = vld [vmem:[#allocation2 + $0x58] sm:$0xf]
        %v2298 = vld [vmem:[#allocation2 + $0x60] sm:$0xf]
        %v2299 = vld [vmem:[#allocation2 + $0x68] sm:$0xf]
        %v2300 = vld [vmem:[#allocation2 + $0x70] sm:$0xf]
        %v2301 = vld [vmem:[#allocation2 + $0x78] sm:$0xf]
        %v2318 = vunpack.c.l.b16 %v2286
        %v2319 = vunpack.c.l.b16 %v2287
        %v2320 = vunpack.c.l.b16 %v2288
        %v2321 = vunpack.c.l.b16 %v2289
        %v2322 = vunpack.c.l.b16 %v2290
        %v2323 = vunpack.c.l.b16 %v2291
        %v2324 = vunpack.c.l.b16 %v2292
        %v2325 = vunpack.c.l.b16 %v2293
        %v2326 = vunpack.c.l.b16 %v2294
        %v2327 = vunpack.c.l.b16 %v2295
        %v2328 = vunpack.c.l.b16 %v2296
        %v2329 = vunpack.c.l.b16 %v2297
        %v2330 = vunpack.c.l.b16 %v2298
        %v2331 = vunpack.c.l.b16 %v2299
        %v2332 = vunpack.c.l.b16 %v2300
        %v2333 = vunpack.c.l.b16 %v2301
        %v2334 = vpack.c.b16 %v2319, %v2318
        %v2335 = vpack.c.b16 %v2321, %v2320
        %v2336 = vpack.c.b16 %v2323, %v2322
        %v2337 = vpack.c.b16 %v2325, %v2324
        %v2338 = vpack.c.b16 %v2327, %v2326
        %v2339 = vpack.c.b16 %v2329, %v2328
        %v2340 = vpack.c.b16 %v2331, %v2330
        %v2341 = vpack.c.b16 %v2333, %v2332
        %v2366 = vunpack.c.l.b16 %v2254
        %v2367 = vunpack.c.l.b16 %v2256
        %v2368 = vunpack.c.l.b16 %v2258
        %v2369 = vunpack.c.l.b16 %v2260
        %v2370 = vunpack.c.l.b16 %v2262
        %v2371 = vunpack.c.l.b16 %v2264
        %v2372 = vunpack.c.l.b16 %v2266
        %v2373 = vunpack.c.l.b16 %v2268
        %v2374 = vunpack.c.l.b16 %v2270
        %v2375 = vunpack.c.l.b16 %v2272
        %v2376 = vunpack.c.l.b16 %v2274
        %v2377 = vunpack.c.l.b16 %v2276
        %v2378 = vunpack.c.l.b16 %v2278
        %v2379 = vunpack.c.l.b16 %v2280
        %v2380 = vunpack.c.l.b16 %v2282
        %v2381 = vunpack.c.l.b16 %v2284
        %v2382 = vpack.c.b16 %v2367, %v2366
        %v2383 = vpack.c.b16 %v2369, %v2368
        %v2384 = vpack.c.b16 %v2371, %v2370
        %v2385 = vpack.c.b16 %v2373, %v2372
        %v2386 = vpack.c.b16 %v2375, %v2374
        %v2387 = vpack.c.b16 %v2377, %v2376
        %v2388 = vpack.c.b16 %v2379, %v2378
        %v2389 = vpack.c.b16 %v2381, %v2380
        %2398 = vmatpush.bf16.xpose.msra.mxu0 %v2389
        %2399 = vmatpush.bf16.xpose.msra.mxu0 %v2388
        %2400 = vmatpush.bf16.xpose.msra.mxu0 %v2387
        %2401 = vmatpush.bf16.xpose.msra.mxu0 %v2386
        %2402 = vmatpush.bf16.xpose.msra.mxu0 %v2385
        %2403 = vmatpush.bf16.xpose.msra.mxu0 %v2384
        %2404 = vmatpush.bf16.xpose.msra.mxu0 %v2383
        %2405 = vmatpush.bf16.xpose.msra.mxu0 %v2382
        %2406 = vmatmul.bf16.gmra.mxu0 %v2334
        %v2407 = vpop.f32.mrf.mxu0
        %v2408 = vadd.f32 0.0, %v2407
        %v2409 = vpop.f32.mrf.mxu0
        %v2410 = vadd.f32 0.0, %v2409
        %2411 = vmatmul.bf16.gmra.mxu0 %v2335
        %v2412 = vpop.f32.mrf.mxu0
        %v2413 = vadd.f32 0.0, %v2412
        %v2414 = vpop.f32.mrf.mxu0
        %v2415 = vadd.f32 0.0, %v2414
        %2416 = vmatmul.bf16.gmra.mxu0 %v2336
        %v2417 = vpop.f32.mrf.mxu0
        %v2418 = vadd.f32 0.0, %v2417
        %v2419 = vpop.f32.mrf.mxu0
        %v2420 = vadd.f32 0.0, %v2419
        %2421 = vmatmul.bf16.gmra.mxu0 %v2337
        %v2422 = vpop.f32.mrf.mxu0
        %v2423 = vadd.f32 0.0, %v2422
        %v2424 = vpop.f32.mrf.mxu0
        %v2425 = vadd.f32 0.0, %v2424
        %2426 = vmatmul.bf16.gmra.mxu0 %v2338
        %v2427 = vpop.f32.mrf.mxu0
        %v2428 = vadd.f32 0.0, %v2427
        %v2429 = vpop.f32.mrf.mxu0
        %v2430 = vadd.f32 0.0, %v2429
        %2431 = vmatmul.bf16.gmra.mxu0 %v2339
        %v2432 = vpop.f32.mrf.mxu0
        %v2433 = vadd.f32 0.0, %v2432
        %v2434 = vpop.f32.mrf.mxu0
        %v2435 = vadd.f32 0.0, %v2434
        %2436 = vmatmul.bf16.gmra.mxu0 %v2340
        %v2437 = vpop.f32.mrf.mxu0
        %v2438 = vadd.f32 0.0, %v2437
        %v2439 = vpop.f32.mrf.mxu0
        %v2440 = vadd.f32 0.0, %v2439
        %2441 = vmatmul.bf16.gmra.mxu0 %v2341
        %v2442 = vpop.f32.mrf.mxu0
        %v2443 = vadd.f32 0.0, %v2442
        %v2444 = vpop.f32.mrf.mxu0
        %v2445 = vadd.f32 0.0, %v2444
        %2446 = vdwg.mxu0
        %v2447 = vld [vmem:[#allocation3] sm:$0xff]
        %v2448 = vld [vmem:[#allocation3 + $0x8] sm:$0xff]
        %v2449 = vld [vmem:[#allocation3 + $0x10] sm:$0xff]
        %v2450 = vld [vmem:[#allocation3 + $0x18] sm:$0xff]
        %v2451 = vld [vmem:[#allocation3 + $0x20] sm:$0xff]
        %v2452 = vld [vmem:[#allocation3 + $0x28] sm:$0xff]
        %v2453 = vld [vmem:[#allocation3 + $0x30] sm:$0xff]
        %v2454 = vld [vmem:[#allocation3 + $0x38] sm:$0xff]
        %v2455 = vld [vmem:[#allocation3 + $0x40] sm:$0xff]
        %v2456 = vld [vmem:[#allocation3 + $0x48] sm:$0xff]
        %v2457 = vld [vmem:[#allocation3 + $0x50] sm:$0xff]
        %v2458 = vld [vmem:[#allocation3 + $0x58] sm:$0xff]
        %v2459 = vld [vmem:[#allocation3 + $0x60] sm:$0xff]
        %v2460 = vld [vmem:[#allocation3 + $0x68] sm:$0xff]
        %v2461 = vld [vmem:[#allocation3 + $0x70] sm:$0xff]
        %v2462 = vld [vmem:[#allocation3 + $0x78] sm:$0xff]
        %2463 = vmax.xlane.f32.xlu0 %v2408
        %v2464 = vpop.xlane.xlu0 %2463
        %2465 = vmax.xlane.f32.xlu0 %v2410
        %v2466 = vpop.xlane.xlu0 %2465
        %2467 = vmax.xlane.f32.xlu0 %v2413
        %v2468 = vpop.xlane.xlu0 %2467
        %2469 = vmax.xlane.f32.xlu0 %v2415
        %v2470 = vpop.xlane.xlu0 %2469
        %2471 = vmax.xlane.f32.xlu0 %v2418
        %v2472 = vpop.xlane.xlu0 %2471
        %2473 = vmax.xlane.f32.xlu0 %v2420
        %v2474 = vpop.xlane.xlu0 %2473
        %2475 = vmax.xlane.f32.xlu0 %v2423
        %v2476 = vpop.xlane.xlu0 %2475
        %2477 = vmax.xlane.f32.xlu0 %v2425
        %v2478 = vpop.xlane.xlu0 %2477
        %2479 = vmax.xlane.f32.xlu0 %v2428
        %v2480 = vpop.xlane.xlu0 %2479
        %2481 = vmax.xlane.f32.xlu0 %v2430
        %v2482 = vpop.xlane.xlu0 %2481
        %2483 = vmax.xlane.f32.xlu0 %v2433
        %v2484 = vpop.xlane.xlu0 %2483
        %2485 = vmax.xlane.f32.xlu0 %v2435
        %v2486 = vpop.xlane.xlu0 %2485
        %2487 = vmax.xlane.f32.xlu0 %v2438
        %v2488 = vpop.xlane.xlu0 %2487
        %2489 = vmax.xlane.f32.xlu0 %v2440
        %v2490 = vpop.xlane.xlu0 %2489
        %2491 = vmax.xlane.f32.xlu0 %v2443
        %v2492 = vpop.xlane.xlu0 %2491
        %2493 = vmax.xlane.f32.xlu0 %v2445
        %v2494 = vpop.xlane.xlu0 %2493
        %v2495 = vmax.f32 %v2447, %v2464
        %v2496 = vmax.f32 %v2448, %v2466
        %v2497 = vmax.f32 %v2449, %v2468
        %v2498 = vmax.f32 %v2450, %v2470
        %v2499 = vmax.f32 %v2451, %v2472
        %v2500 = vmax.f32 %v2452, %v2474
        %v2501 = vmax.f32 %v2453, %v2476
        %v2502 = vmax.f32 %v2454, %v2478
        %v2503 = vmax.f32 %v2455, %v2480
        %v2504 = vmax.f32 %v2456, %v2482
        %v2505 = vmax.f32 %v2457, %v2484
        %v2506 = vmax.f32 %v2458, %v2486
        %v2507 = vmax.f32 %v2459, %v2488
        %v2508 = vmax.f32 %v2460, %v2490
        %v2509 = vmax.f32 %v2461, %v2492
        %v2510 = vmax.f32 %v2462, %v2494
        %v2511 = vsub.f32 %v2447, %v2495
        %v2512 = vsub.f32 %v2448, %v2496
        %v2513 = vsub.f32 %v2449, %v2497
        %v2514 = vsub.f32 %v2450, %v2498
        %v2515 = vsub.f32 %v2451, %v2499
        %v2516 = vsub.f32 %v2452, %v2500
        %v2517 = vsub.f32 %v2453, %v2501
        %v2518 = vsub.f32 %v2454, %v2502
        %v2519 = vsub.f32 %v2455, %v2503
        %v2520 = vsub.f32 %v2456, %v2504
        %v2521 = vsub.f32 %v2457, %v2505
        %v2522 = vsub.f32 %v2458, %v2506
        %v2523 = vsub.f32 %v2459, %v2507
        %v2524 = vsub.f32 %v2460, %v2508
        %v2525 = vsub.f32 %v2461, %v2509
        %v2526 = vsub.f32 %v2462, %v2510
        %v2527 = vmul.f32 %v2511, 1.442695
        %v2528 = vpow.pop %v2527
        %v2529 = vmul.f32 %v2512, 1.442695
        %v2530 = vpow.pop %v2529
        %v2531 = vmul.f32 %v2513, 1.442695
        %v2532 = vpow.pop %v2531
        %v2533 = vmul.f32 %v2514, 1.442695
        %v2534 = vpow.pop %v2533
        %v2535 = vmul.f32 %v2515, 1.442695
        %v2536 = vpow.pop %v2535
        %v2537 = vmul.f32 %v2516, 1.442695
        %v2538 = vpow.pop %v2537
        %v2539 = vmul.f32 %v2517, 1.442695
        %v2540 = vpow.pop %v2539
        %v2541 = vmul.f32 %v2518, 1.442695
        %v2542 = vpow.pop %v2541
        %v2543 = vmul.f32 %v2519, 1.442695
        %v2544 = vpow.pop %v2543
        %v2545 = vmul.f32 %v2520, 1.442695
        %v2546 = vpow.pop %v2545
        %v2547 = vmul.f32 %v2521, 1.442695
        %v2548 = vpow.pop %v2547
        %v2549 = vmul.f32 %v2522, 1.442695
        %v2550 = vpow.pop %v2549
        %v2551 = vmul.f32 %v2523, 1.442695
        %v2552 = vpow.pop %v2551
        %v2553 = vmul.f32 %v2524, 1.442695
        %v2554 = vpow.pop %v2553
        %v2555 = vmul.f32 %v2525, 1.442695
        %v2556 = vpow.pop %v2555
        %v2557 = vmul.f32 %v2526, 1.442695
        %v2558 = vpow.pop %v2557
        %2560 = vset.pattern.permute.xlu0 0
        %2561 = vperm.xlu0 %2560, %v2495
        %v2562 = vpop.permute.xlu0 %2561
        %2565 = vset.pattern.permute.xlu0 0
        %2566 = vperm.xlu0 %2565, %v2496
        %v2567 = vpop.permute.xlu0 %2566
        %2570 = vset.pattern.permute.xlu0 0
        %2571 = vperm.xlu0 %2570, %v2497
        %v2572 = vpop.permute.xlu0 %2571
        %2575 = vset.pattern.permute.xlu0 0
        %2576 = vperm.xlu0 %2575, %v2498
        %v2577 = vpop.permute.xlu0 %2576
        %2580 = vset.pattern.permute.xlu0 0
        %2581 = vperm.xlu0 %2580, %v2499
        %v2582 = vpop.permute.xlu0 %2581
        %2585 = vset.pattern.permute.xlu0 0
        %2586 = vperm.xlu0 %2585, %v2500
        %v2587 = vpop.permute.xlu0 %2586
        %2590 = vset.pattern.permute.xlu0 0
        %2591 = vperm.xlu0 %2590, %v2501
        %v2592 = vpop.permute.xlu0 %2591
        %2595 = vset.pattern.permute.xlu0 0
        %2596 = vperm.xlu0 %2595, %v2502
        %v2597 = vpop.permute.xlu0 %2596
        %2600 = vset.pattern.permute.xlu0 0
        %2601 = vperm.xlu0 %2600, %v2503
        %v2602 = vpop.permute.xlu0 %2601
        %2605 = vset.pattern.permute.xlu0 0
        %2606 = vperm.xlu0 %2605, %v2504
        %v2607 = vpop.permute.xlu0 %2606
        %2610 = vset.pattern.permute.xlu0 0
        %2611 = vperm.xlu0 %2610, %v2505
        %v2612 = vpop.permute.xlu0 %2611
        %2615 = vset.pattern.permute.xlu0 0
        %2616 = vperm.xlu0 %2615, %v2506
        %v2617 = vpop.permute.xlu0 %2616
        %2620 = vset.pattern.permute.xlu0 0
        %2621 = vperm.xlu0 %2620, %v2507
        %v2622 = vpop.permute.xlu0 %2621
        %2625 = vset.pattern.permute.xlu0 0
        %2626 = vperm.xlu0 %2625, %v2508
        %v2627 = vpop.permute.xlu0 %2626
        %2630 = vset.pattern.permute.xlu0 0
        %2631 = vperm.xlu0 %2630, %v2509
        %v2632 = vpop.permute.xlu0 %2631
        %2635 = vset.pattern.permute.xlu0 0
        %2636 = vperm.xlu0 %2635, %v2510
        %v2637 = vpop.permute.xlu0 %2636
        %v2639 = vsub.f32 %v2408, %v2562
        %v2640 = vsub.f32 %v2410, %v2567
        %v2641 = vsub.f32 %v2413, %v2572
        %v2642 = vsub.f32 %v2415, %v2577
        %v2643 = vsub.f32 %v2418, %v2582
        %v2644 = vsub.f32 %v2420, %v2587
        %v2645 = vsub.f32 %v2423, %v2592
        %v2646 = vsub.f32 %v2425, %v2597
        %v2647 = vsub.f32 %v2428, %v2602
        %v2648 = vsub.f32 %v2430, %v2607
        %v2649 = vsub.f32 %v2433, %v2612
        %v2650 = vsub.f32 %v2435, %v2617
        %v2651 = vsub.f32 %v2438, %v2622
        %v2652 = vsub.f32 %v2440, %v2627
        %v2653 = vsub.f32 %v2443, %v2632
        %v2654 = vsub.f32 %v2445, %v2637
        %v2655 = vmul.f32 %v2639, 1.442695
        %v2656 = vpow.pop %v2655
        %v2657 = vmul.f32 %v2640, 1.442695
        %v2658 = vpow.pop %v2657
        %v2659 = vmul.f32 %v2641, 1.442695
        %v2660 = vpow.pop %v2659
        %v2661 = vmul.f32 %v2642, 1.442695
        %v2662 = vpow.pop %v2661
        %v2663 = vmul.f32 %v2643, 1.442695
        %v2664 = vpow.pop %v2663
        %v2665 = vmul.f32 %v2644, 1.442695
        %v2666 = vpow.pop %v2665
        %v2667 = vmul.f32 %v2645, 1.442695
        %v2668 = vpow.pop %v2667
        %v2669 = vmul.f32 %v2646, 1.442695
        %v2670 = vpow.pop %v2669
        %v2671 = vmul.f32 %v2647, 1.442695
        %v2672 = vpow.pop %v2671
        %v2673 = vmul.f32 %v2648, 1.442695
        %v2674 = vpow.pop %v2673
        %v2675 = vmul.f32 %v2649, 1.442695
        %v2676 = vpow.pop %v2675
        %v2677 = vmul.f32 %v2650, 1.442695
        %v2678 = vpow.pop %v2677
        %v2679 = vmul.f32 %v2651, 1.442695
        %v2680 = vpow.pop %v2679
        %v2681 = vmul.f32 %v2652, 1.442695
        %v2682 = vpow.pop %v2681
        %v2683 = vmul.f32 %v2653, 1.442695
        %v2684 = vpow.pop %v2683
        %v2685 = vmul.f32 %v2654, 1.442695
        %v2686 = vpow.pop %v2685
        %v2687 = vld [vmem:[#allocation4] sm:$0xff]
        %v2688 = vld [vmem:[#allocation4 + $0x8] sm:$0xff]
        %v2689 = vld [vmem:[#allocation4 + $0x10] sm:$0xff]
        %v2690 = vld [vmem:[#allocation4 + $0x18] sm:$0xff]
        %v2691 = vld [vmem:[#allocation4 + $0x20] sm:$0xff]
        %v2692 = vld [vmem:[#allocation4 + $0x28] sm:$0xff]
        %v2693 = vld [vmem:[#allocation4 + $0x30] sm:$0xff]
        %v2694 = vld [vmem:[#allocation4 + $0x38] sm:$0xff]
        %v2695 = vld [vmem:[#allocation4 + $0x40] sm:$0xff]
        %v2696 = vld [vmem:[#allocation4 + $0x48] sm:$0xff]
        %v2697 = vld [vmem:[#allocation4 + $0x50] sm:$0xff]
        %v2698 = vld [vmem:[#allocation4 + $0x58] sm:$0xff]
        %v2699 = vld [vmem:[#allocation4 + $0x60] sm:$0xff]
        %v2700 = vld [vmem:[#allocation4 + $0x68] sm:$0xff]
        %v2701 = vld [vmem:[#allocation4 + $0x70] sm:$0xff]
        %v2702 = vld [vmem:[#allocation4 + $0x78] sm:$0xff]
        %v2703 = vmul.f32 %v2528, %v2687
        %v2704 = vmul.f32 %v2530, %v2688
        %v2705 = vmul.f32 %v2532, %v2689
        %v2706 = vmul.f32 %v2534, %v2690
        %v2707 = vmul.f32 %v2536, %v2691
        %v2708 = vmul.f32 %v2538, %v2692
        %v2709 = vmul.f32 %v2540, %v2693
        %v2710 = vmul.f32 %v2542, %v2694
        %v2711 = vmul.f32 %v2544, %v2695
        %v2712 = vmul.f32 %v2546, %v2696
        %v2713 = vmul.f32 %v2548, %v2697
        %v2714 = vmul.f32 %v2550, %v2698
        %v2715 = vmul.f32 %v2552, %v2699
        %v2716 = vmul.f32 %v2554, %v2700
        %v2717 = vmul.f32 %v2556, %v2701
        %v2718 = vmul.f32 %v2558, %v2702
        %2719 = vadd.xlane.f32.xlu0 %v2656
        %v2720 = vpop.xlane.xlu0 %2719
        %2721 = vadd.xlane.f32.xlu0 %v2658
        %v2722 = vpop.xlane.xlu0 %2721
        %2723 = vadd.xlane.f32.xlu0 %v2660
        %v2724 = vpop.xlane.xlu0 %2723
        %2725 = vadd.xlane.f32.xlu0 %v2662
        %v2726 = vpop.xlane.xlu0 %2725
        %2727 = vadd.xlane.f32.xlu0 %v2664
        %v2728 = vpop.xlane.xlu0 %2727
        %2729 = vadd.xlane.f32.xlu0 %v2666
        %v2730 = vpop.xlane.xlu0 %2729
        %2731 = vadd.xlane.f32.xlu0 %v2668
        %v2732 = vpop.xlane.xlu0 %2731
        %2733 = vadd.xlane.f32.xlu0 %v2670
        %v2734 = vpop.xlane.xlu0 %2733
        %2735 = vadd.xlane.f32.xlu0 %v2672
        %v2736 = vpop.xlane.xlu0 %2735
        %2737 = vadd.xlane.f32.xlu0 %v2674
        %v2738 = vpop.xlane.xlu0 %2737
        %2739 = vadd.xlane.f32.xlu0 %v2676
        %v2740 = vpop.xlane.xlu0 %2739
        %2741 = vadd.xlane.f32.xlu0 %v2678
        %v2742 = vpop.xlane.xlu0 %2741
        %2743 = vadd.xlane.f32.xlu0 %v2680
        %v2744 = vpop.xlane.xlu0 %2743
        %2745 = vadd.xlane.f32.xlu0 %v2682
        %v2746 = vpop.xlane.xlu0 %2745
        %2747 = vadd.xlane.f32.xlu0 %v2684
        %v2748 = vpop.xlane.xlu0 %2747
        %2749 = vadd.xlane.f32.xlu0 %v2686
        %v2750 = vpop.xlane.xlu0 %2749
        %v2751 = vadd.f32 %v2703, %v2720
        %v2752 = vadd.f32 %v2704, %v2722
        %v2753 = vadd.f32 %v2705, %v2724
        %v2754 = vadd.f32 %v2706, %v2726
        %v2755 = vadd.f32 %v2707, %v2728
        %v2756 = vadd.f32 %v2708, %v2730
        %v2757 = vadd.f32 %v2709, %v2732
        %v2758 = vadd.f32 %v2710, %v2734
        %v2759 = vadd.f32 %v2711, %v2736
        %v2760 = vadd.f32 %v2712, %v2738
        %v2761 = vadd.f32 %v2713, %v2740
        %v2762 = vadd.f32 %v2714, %v2742
        %v2763 = vadd.f32 %v2715, %v2744
        %v2764 = vadd.f32 %v2716, %v2746
        %v2765 = vadd.f32 %v2717, %v2748
        %v2766 = vadd.f32 %v2718, %v2750
        %vm2767 = vcmask 7168
        %2768 = vst.msk [vmem:[#allocation4] sm:$0xff] %vm2767, %v2751
        %2769 = vst.msk [vmem:[#allocation4 + $0x8] sm:$0xff] %vm2767, %v2752
        %2770 = vst.msk [vmem:[#allocation4 + $0x10] sm:$0xff] %vm2767, %v2753
        %2771 = vst.msk [vmem:[#allocation4 + $0x18] sm:$0xff] %vm2767, %v2754
        %2772 = vst.msk [vmem:[#allocation4 + $0x20] sm:$0xff] %vm2767, %v2755
        %2773 = vst.msk [vmem:[#allocation4 + $0x28] sm:$0xff] %vm2767, %v2756
        %2774 = vst.msk [vmem:[#allocation4 + $0x30] sm:$0xff] %vm2767, %v2757
        %2775 = vst.msk [vmem:[#allocation4 + $0x38] sm:$0xff] %vm2767, %v2758
        %2776 = vst.msk [vmem:[#allocation4 + $0x40] sm:$0xff] %vm2767, %v2759
        %2777 = vst.msk [vmem:[#allocation4 + $0x48] sm:$0xff] %vm2767, %v2760
        %2778 = vst.msk [vmem:[#allocation4 + $0x50] sm:$0xff] %vm2767, %v2761
        %2779 = vst.msk [vmem:[#allocation4 + $0x58] sm:$0xff] %vm2767, %v2762
        %2780 = vst.msk [vmem:[#allocation4 + $0x60] sm:$0xff] %vm2767, %v2763
        %2781 = vst.msk [vmem:[#allocation4 + $0x68] sm:$0xff] %vm2767, %v2764
        %2782 = vst.msk [vmem:[#allocation4 + $0x70] sm:$0xff] %vm2767, %v2765
        %2783 = vst.msk [vmem:[#allocation4 + $0x78] sm:$0xff] %vm2767, %v2766
        %v2784 = vpack.c.bf16 %v2658, %v2656
        %v2785 = vpack.c.bf16 %v2662, %v2660
        %v2786 = vpack.c.bf16 %v2666, %v2664
        %v2787 = vpack.c.bf16 %v2670, %v2668
        %v2788 = vpack.c.bf16 %v2674, %v2672
        %v2789 = vpack.c.bf16 %v2678, %v2676
        %v2790 = vpack.c.bf16 %v2682, %v2680
        %v2791 = vpack.c.bf16 %v2686, %v2684
        %v2808 = vunpack.c.l.b16 %v2255
        %v2809 = vunpack.c.l.b16 %v2257
        %v2810 = vunpack.c.l.b16 %v2259
        %v2811 = vunpack.c.l.b16 %v2261
        %v2812 = vunpack.c.l.b16 %v2263
        %v2813 = vunpack.c.l.b16 %v2265
        %v2814 = vunpack.c.l.b16 %v2267
        %v2815 = vunpack.c.l.b16 %v2269
        %v2816 = vunpack.c.l.b16 %v2271
        %v2817 = vunpack.c.l.b16 %v2273
        %v2818 = vunpack.c.l.b16 %v2275
        %v2819 = vunpack.c.l.b16 %v2277
        %v2820 = vunpack.c.l.b16 %v2279
        %v2821 = vunpack.c.l.b16 %v2281
        %v2822 = vunpack.c.l.b16 %v2283
        %v2823 = vunpack.c.l.b16 %v2285
        %v2824 = vpack.c.b16 %v2809, %v2808
        %v2825 = vpack.c.b16 %v2811, %v2810
        %v2826 = vpack.c.b16 %v2813, %v2812
        %v2827 = vpack.c.b16 %v2815, %v2814
        %v2828 = vpack.c.b16 %v2817, %v2816
        %v2829 = vpack.c.b16 %v2819, %v2818
        %v2830 = vpack.c.b16 %v2821, %v2820
        %v2831 = vpack.c.b16 %v2823, %v2822
        %2840 = vmatpush.bf16.msra.mxu0 %v2831
        %2841 = vmatpush.bf16.msra.mxu0 %v2830
        %2842 = vmatpush.bf16.msra.mxu0 %v2829
        %2843 = vmatpush.bf16.msra.mxu0 %v2828
        %2844 = vmatpush.bf16.msra.mxu0 %v2827
        %2845 = vmatpush.bf16.msra.mxu0 %v2826
        %2846 = vmatpush.bf16.msra.mxu0 %v2825
        %2847 = vmatpush.bf16.msra.mxu0 %v2824
        %2848 = vmatmul.bf16.gmra.mxu0 %v2784
        %v2849 = vpop.f32.mrf.mxu0
        %v2850 = vadd.f32 0.0, %v2849
        %v2851 = vpop.f32.mrf.mxu0
        %v2852 = vadd.f32 0.0, %v2851
        %2853 = vmatmul.bf16.gmra.mxu0 %v2785
        %v2854 = vpop.f32.mrf.mxu0
        %v2855 = vadd.f32 0.0, %v2854
        %v2856 = vpop.f32.mrf.mxu0
        %v2857 = vadd.f32 0.0, %v2856
        %2858 = vmatmul.bf16.gmra.mxu0 %v2786
        %v2859 = vpop.f32.mrf.mxu0
        %v2860 = vadd.f32 0.0, %v2859
        %v2861 = vpop.f32.mrf.mxu0
        %v2862 = vadd.f32 0.0, %v2861
        %2863 = vmatmul.bf16.gmra.mxu0 %v2787
        %v2864 = vpop.f32.mrf.mxu0
        %v2865 = vadd.f32 0.0, %v2864
        %v2866 = vpop.f32.mrf.mxu0
        %v2867 = vadd.f32 0.0, %v2866
        %2868 = vmatmul.bf16.gmra.mxu0 %v2788
        %v2869 = vpop.f32.mrf.mxu0
        %v2870 = vadd.f32 0.0, %v2869
        %v2871 = vpop.f32.mrf.mxu0
        %v2872 = vadd.f32 0.0, %v2871
        %2873 = vmatmul.bf16.gmra.mxu0 %v2789
        %v2874 = vpop.f32.mrf.mxu0
        %v2875 = vadd.f32 0.0, %v2874
        %v2876 = vpop.f32.mrf.mxu0
        %v2877 = vadd.f32 0.0, %v2876
        %2878 = vmatmul.bf16.gmra.mxu0 %v2790
        %v2879 = vpop.f32.mrf.mxu0
        %v2880 = vadd.f32 0.0, %v2879
        %v2881 = vpop.f32.mrf.mxu0
        %v2882 = vadd.f32 0.0, %v2881
        %2883 = vmatmul.bf16.gmra.mxu0 %v2791
        %v2884 = vpop.f32.mrf.mxu0
        %v2885 = vadd.f32 0.0, %v2884
        %v2886 = vpop.f32.mrf.mxu0
        %v2887 = vadd.f32 0.0, %v2886
        %2888 = vdwg.mxu0
        %v2889 = vld [vmem:[#allocation5] sm:$0xff]
        %v2890 = vld [vmem:[#allocation5 + $0x10] sm:$0xff]
        %v2891 = vld [vmem:[#allocation5 + $0x20] sm:$0xff]
        %v2892 = vld [vmem:[#allocation5 + $0x30] sm:$0xff]
        %v2893 = vld [vmem:[#allocation5 + $0x40] sm:$0xff]
        %v2894 = vld [vmem:[#allocation5 + $0x50] sm:$0xff]
        %v2895 = vld [vmem:[#allocation5 + $0x60] sm:$0xff]
        %v2896 = vld [vmem:[#allocation5 + $0x70] sm:$0xff]
        %v2897 = vld [vmem:[#allocation5 + $0x80] sm:$0xff]
        %v2898 = vld [vmem:[#allocation5 + $0x90] sm:$0xff]
        %v2899 = vld [vmem:[#allocation5 + $0xa0] sm:$0xff]
        %v2900 = vld [vmem:[#allocation5 + $0xb0] sm:$0xff]
        %v2901 = vld [vmem:[#allocation5 + $0xc0] sm:$0xff]
        %v2902 = vld [vmem:[#allocation5 + $0xd0] sm:$0xff]
        %v2903 = vld [vmem:[#allocation5 + $0xe0] sm:$0xff]
        %v2904 = vld [vmem:[#allocation5 + $0xf0] sm:$0xff]
        %2906 = vset.pattern.permute.xlu0 0
        %2907 = vperm.xlu0 %2906, %v2528
        %v2908 = vpop.permute.xlu0 %2907
        %2911 = vset.pattern.permute.xlu0 0
        %2912 = vperm.xlu0 %2911, %v2530
        %v2913 = vpop.permute.xlu0 %2912
        %2916 = vset.pattern.permute.xlu0 0
        %2917 = vperm.xlu0 %2916, %v2532
        %v2918 = vpop.permute.xlu0 %2917
        %2921 = vset.pattern.permute.xlu0 0
        %2922 = vperm.xlu0 %2921, %v2534
        %v2923 = vpop.permute.xlu0 %2922
        %2926 = vset.pattern.permute.xlu0 0
        %2927 = vperm.xlu0 %2926, %v2536
        %v2928 = vpop.permute.xlu0 %2927
        %2931 = vset.pattern.permute.xlu0 0
        %2932 = vperm.xlu0 %2931, %v2538
        %v2933 = vpop.permute.xlu0 %2932
        %2936 = vset.pattern.permute.xlu0 0
        %2937 = vperm.xlu0 %2936, %v2540
        %v2938 = vpop.permute.xlu0 %2937
        %2941 = vset.pattern.permute.xlu0 0
        %2942 = vperm.xlu0 %2941, %v2542
        %v2943 = vpop.permute.xlu0 %2942
        %2946 = vset.pattern.permute.xlu0 0
        %2947 = vperm.xlu0 %2946, %v2544
        %v2948 = vpop.permute.xlu0 %2947
        %2951 = vset.pattern.permute.xlu0 0
        %2952 = vperm.xlu0 %2951, %v2546
        %v2953 = vpop.permute.xlu0 %2952
        %2956 = vset.pattern.permute.xlu0 0
        %2957 = vperm.xlu0 %2956, %v2548
        %v2958 = vpop.permute.xlu0 %2957
        %2961 = vset.pattern.permute.xlu0 0
        %2962 = vperm.xlu0 %2961, %v2550
        %v2963 = vpop.permute.xlu0 %2962
        %2966 = vset.pattern.permute.xlu0 0
        %2967 = vperm.xlu0 %2966, %v2552
        %v2968 = vpop.permute.xlu0 %2967
        %2971 = vset.pattern.permute.xlu0 0
        %2972 = vperm.xlu0 %2971, %v2554
        %v2973 = vpop.permute.xlu0 %2972
        %2976 = vset.pattern.permute.xlu0 0
        %2977 = vperm.xlu0 %2976, %v2556
        %v2978 = vpop.permute.xlu0 %2977
        %2981 = vset.pattern.permute.xlu0 0
        %2982 = vperm.xlu0 %2981, %v2558
        %v2983 = vpop.permute.xlu0 %2982
        %v2985 = vmul.f32 %v2908, %v2889
        %v2986 = vmul.f32 %v2913, %v2890
        %v2987 = vmul.f32 %v2918, %v2891
        %v2988 = vmul.f32 %v2923, %v2892
        %v2989 = vmul.f32 %v2928, %v2893
        %v2990 = vmul.f32 %v2933, %v2894
        %v2991 = vmul.f32 %v2938, %v2895
        %v2992 = vmul.f32 %v2943, %v2896
        %v2993 = vmul.f32 %v2948, %v2897
        %v2994 = vmul.f32 %v2953, %v2898
        %v2995 = vmul.f32 %v2958, %v2899
        %v2996 = vmul.f32 %v2963, %v2900
        %v2997 = vmul.f32 %v2968, %v2901
        %v2998 = vmul.f32 %v2973, %v2902
        %v2999 = vmul.f32 %v2978, %v2903
        %v3000 = vmul.f32 %v2983, %v2904
        %v3001 = vadd.f32 %v2985, %v2850
        %v3002 = vadd.f32 %v2986, %v2852
        %v3003 = vadd.f32 %v2987, %v2855
        %v3004 = vadd.f32 %v2988, %v2857
        %v3005 = vadd.f32 %v2989, %v2860
        %v3006 = vadd.f32 %v2990, %v2862
        %v3007 = vadd.f32 %v2991, %v2865
        %v3008 = vadd.f32 %v2992, %v2867
        %v3009 = vadd.f32 %v2993, %v2870
        %v3010 = vadd.f32 %v2994, %v2872
        %v3011 = vadd.f32 %v2995, %v2875
        %v3012 = vadd.f32 %v2996, %v2877
        %v3013 = vadd.f32 %v2997, %v2880
        %v3014 = vadd.f32 %v2998, %v2882
        %v3015 = vadd.f32 %v2999, %v2885
        %v3016 = vadd.f32 %v3000, %v2887
        %3017 = vst [vmem:[#allocation5] sm:$0xff] %v3001
        %3018 = vst [vmem:[#allocation5 + $0x10] sm:$0xff] %v3002
        %3019 = vst [vmem:[#allocation5 + $0x20] sm:$0xff] %v3003
        %3020 = vst [vmem:[#allocation5 + $0x30] sm:$0xff] %v3004
        %3021 = vst [vmem:[#allocation5 + $0x40] sm:$0xff] %v3005
        %3022 = vst [vmem:[#allocation5 + $0x50] sm:$0xff] %v3006
        %3023 = vst [vmem:[#allocation5 + $0x60] sm:$0xff] %v3007
        %3024 = vst [vmem:[#allocation5 + $0x70] sm:$0xff] %v3008
        %3025 = vst [vmem:[#allocation5 + $0x80] sm:$0xff] %v3009
        %3026 = vst [vmem:[#allocation5 + $0x90] sm:$0xff] %v3010
        %3027 = vst [vmem:[#allocation5 + $0xa0] sm:$0xff] %v3011
        %3028 = vst [vmem:[#allocation5 + $0xb0] sm:$0xff] %v3012
        %3029 = vst [vmem:[#allocation5 + $0xc0] sm:$0xff] %v3013
        %3030 = vst [vmem:[#allocation5 + $0xd0] sm:$0xff] %v3014
        %3031 = vst [vmem:[#allocation5 + $0xe0] sm:$0xff] %v3015
        %3032 = vst [vmem:[#allocation5 + $0xf0] sm:$0xff] %v3016
        %3033 = vst.msk [vmem:[#allocation3] sm:$0xff] %vm2767, %v2495
        %3034 = vst.msk [vmem:[#allocation3 + $0x8] sm:$0xff] %vm2767, %v2496
        %3035 = vst.msk [vmem:[#allocation3 + $0x10] sm:$0xff] %vm2767, %v2497
        %3036 = vst.msk [vmem:[#allocation3 + $0x18] sm:$0xff] %vm2767, %v2498
        %3037 = vst.msk [vmem:[#allocation3 + $0x20] sm:$0xff] %vm2767, %v2499
        %3038 = vst.msk [vmem:[#allocation3 + $0x28] sm:$0xff] %vm2767, %v2500
        %3039 = vst.msk [vmem:[#allocation3 + $0x30] sm:$0xff] %vm2767, %v2501
        %3040 = vst.msk [vmem:[#allocation3 + $0x38] sm:$0xff] %vm2767, %v2502
        %3041 = vst.msk [vmem:[#allocation3 + $0x40] sm:$0xff] %vm2767, %v2503
        %3042 = vst.msk [vmem:[#allocation3 + $0x48] sm:$0xff] %vm2767, %v2504
        %3043 = vst.msk [vmem:[#allocation3 + $0x50] sm:$0xff] %vm2767, %v2505
        %3044 = vst.msk [vmem:[#allocation3 + $0x58] sm:$0xff] %vm2767, %v2506
        %3045 = vst.msk [vmem:[#allocation3 + $0x60] sm:$0xff] %vm2767, %v2507
        %3046 = vst.msk [vmem:[#allocation3 + $0x68] sm:$0xff] %vm2767, %v2508
        %3047 = vst.msk [vmem:[#allocation3 + $0x70] sm:$0xff] %vm2767, %v2509
        %3048 = vst.msk [vmem:[#allocation3 + $0x78] sm:$0xff] %vm2767, %v2510
        %v3049 = vld [vmem:[#allocation2 + $0x4] sm:$0xf]
        %v3050 = vld [vmem:[#allocation2 + $0xc] sm:$0xf]
        %v3051 = vld [vmem:[#allocation2 + $0x14] sm:$0xf]
        %v3052 = vld [vmem:[#allocation2 + $0x1c] sm:$0xf]
        %v3053 = vld [vmem:[#allocation2 + $0x24] sm:$0xf]
        %v3054 = vld [vmem:[#allocation2 + $0x2c] sm:$0xf]
        %v3055 = vld [vmem:[#allocation2 + $0x34] sm:$0xf]
        %v3056 = vld [vmem:[#allocation2 + $0x3c] sm:$0xf]
        %v3057 = vld [vmem:[#allocation2 + $0x44] sm:$0xf]
        %v3058 = vld [vmem:[#allocation2 + $0x4c] sm:$0xf]
        %v3059 = vld [vmem:[#allocation2 + $0x54] sm:$0xf]
        %v3060 = vld [vmem:[#allocation2 + $0x5c] sm:$0xf]
        %v3061 = vld [vmem:[#allocation2 + $0x64] sm:$0xf]
        %v3062 = vld [vmem:[#allocation2 + $0x6c] sm:$0xf]
        %v3063 = vld [vmem:[#allocation2 + $0x74] sm:$0xf]
        %v3064 = vld [vmem:[#allocation2 + $0x7c] sm:$0xf]
        %v3081 = vunpack.c.l.b16 %v3049
        %v3082 = vunpack.c.l.b16 %v3050
        %v3083 = vunpack.c.l.b16 %v3051
        %v3084 = vunpack.c.l.b16 %v3052
        %v3085 = vunpack.c.l.b16 %v3053
        %v3086 = vunpack.c.l.b16 %v3054
        %v3087 = vunpack.c.l.b16 %v3055
        %v3088 = vunpack.c.l.b16 %v3056
        %v3089 = vunpack.c.l.b16 %v3057
        %v3090 = vunpack.c.l.b16 %v3058
        %v3091 = vunpack.c.l.b16 %v3059
        %v3092 = vunpack.c.l.b16 %v3060
        %v3093 = vunpack.c.l.b16 %v3061
        %v3094 = vunpack.c.l.b16 %v3062
        %v3095 = vunpack.c.l.b16 %v3063
        %v3096 = vunpack.c.l.b16 %v3064
        %v3097 = vpack.c.b16 %v3082, %v3081
        %v3098 = vpack.c.b16 %v3084, %v3083
        %v3099 = vpack.c.b16 %v3086, %v3085
        %v3100 = vpack.c.b16 %v3088, %v3087
        %v3101 = vpack.c.b16 %v3090, %v3089
        %v3102 = vpack.c.b16 %v3092, %v3091
        %v3103 = vpack.c.b16 %v3094, %v3093
        %v3104 = vpack.c.b16 %v3096, %v3095
        %v3113 = vunpack.c.h.b16 %v2254
        %v3114 = vunpack.c.h.b16 %v2256
        %v3115 = vunpack.c.h.b16 %v2258
        %v3116 = vunpack.c.h.b16 %v2260
        %v3117 = vunpack.c.h.b16 %v2262
        %v3118 = vunpack.c.h.b16 %v2264
        %v3119 = vunpack.c.h.b16 %v2266
        %v3120 = vunpack.c.h.b16 %v2268
        %v3121 = vunpack.c.h.b16 %v2270
        %v3122 = vunpack.c.h.b16 %v2272
        %v3123 = vunpack.c.h.b16 %v2274
        %v3124 = vunpack.c.h.b16 %v2276
        %v3125 = vunpack.c.h.b16 %v2278
        %v3126 = vunpack.c.h.b16 %v2280
        %v3127 = vunpack.c.h.b16 %v2282
        %v3128 = vunpack.c.h.b16 %v2284
        %v3129 = vpack.c.b16 %v3114, %v3113
        %v3130 = vpack.c.b16 %v3116, %v3115
        %v3131 = vpack.c.b16 %v3118, %v3117
        %v3132 = vpack.c.b16 %v3120, %v3119
        %v3133 = vpack.c.b16 %v3122, %v3121
        %v3134 = vpack.c.b16 %v3124, %v3123
        %v3135 = vpack.c.b16 %v3126, %v3125
        %v3136 = vpack.c.b16 %v3128, %v3127
        %3145 = vmatpush.bf16.xpose.msra.mxu0 %v3136
        %3146 = vmatpush.bf16.xpose.msra.mxu0 %v3135
        %3147 = vmatpush.bf16.xpose.msra.mxu0 %v3134
        %3148 = vmatpush.bf16.xpose.msra.mxu0 %v3133
        %3149 = vmatpush.bf16.xpose.msra.mxu0 %v3132
        %3150 = vmatpush.bf16.xpose.msra.mxu0 %v3131
        %3151 = vmatpush.bf16.xpose.msra.mxu0 %v3130
        %3152 = vmatpush.bf16.xpose.msra.mxu0 %v3129
        %3153 = vmatmul.bf16.gmra.mxu0 %v3097
        %v3154 = vpop.f32.mrf.mxu0
        %v3155 = vadd.f32 0.0, %v3154
        %v3156 = vpop.f32.mrf.mxu0
        %v3157 = vadd.f32 0.0, %v3156
        %3158 = vmatmul.bf16.gmra.mxu0 %v3098
        %v3159 = vpop.f32.mrf.mxu0
        %v3160 = vadd.f32 0.0, %v3159
        %v3161 = vpop.f32.mrf.mxu0
        %v3162 = vadd.f32 0.0, %v3161
        %3163 = vmatmul.bf16.gmra.mxu0 %v3099
        %v3164 = vpop.f32.mrf.mxu0
        %v3165 = vadd.f32 0.0, %v3164
        %v3166 = vpop.f32.mrf.mxu0
        %v3167 = vadd.f32 0.0, %v3166
        %3168 = vmatmul.bf16.gmra.mxu0 %v3100
        %v3169 = vpop.f32.mrf.mxu0
        %v3170 = vadd.f32 0.0, %v3169
        %v3171 = vpop.f32.mrf.mxu0
        %v3172 = vadd.f32 0.0, %v3171
        %3173 = vmatmul.bf16.gmra.mxu0 %v3101
        %v3174 = vpop.f32.mrf.mxu0
        %v3175 = vadd.f32 0.0, %v3174
        %v3176 = vpop.f32.mrf.mxu0
        %v3177 = vadd.f32 0.0, %v3176
        %3178 = vmatmul.bf16.gmra.mxu0 %v3102
        %v3179 = vpop.f32.mrf.mxu0
        %v3180 = vadd.f32 0.0, %v3179
        %v3181 = vpop.f32.mrf.mxu0
        %v3182 = vadd.f32 0.0, %v3181
        %3183 = vmatmul.bf16.gmra.mxu0 %v3103
        %v3184 = vpop.f32.mrf.mxu0
        %v3185 = vadd.f32 0.0, %v3184
        %v3186 = vpop.f32.mrf.mxu0
        %v3187 = vadd.f32 0.0, %v3186
        %3188 = vmatmul.bf16.gmra.mxu0 %v3104
        %v3189 = vpop.f32.mrf.mxu0
        %v3190 = vadd.f32 0.0, %v3189
        %v3191 = vpop.f32.mrf.mxu0
        %v3192 = vadd.f32 0.0, %v3191
        %3193 = vdwg.mxu0
        %s3194 = scalar_lea.vmem [#allocation3], 128
        %v3195 = vld [vmem:[%s3194] sm:$0xff]
        %v3196 = vld [vmem:[%s3194 + $0x8] sm:$0xff]
        %v3197 = vld [vmem:[%s3194 + $0x10] sm:$0xff]
        %v3198 = vld [vmem:[%s3194 + $0x18] sm:$0xff]
        %v3199 = vld [vmem:[%s3194 + $0x20] sm:$0xff]
        %v3200 = vld [vmem:[%s3194 + $0x28] sm:$0xff]
        %v3201 = vld [vmem:[%s3194 + $0x30] sm:$0xff]
        %v3202 = vld [vmem:[%s3194 + $0x38] sm:$0xff]
        %v3203 = vld [vmem:[%s3194 + $0x40] sm:$0xff]
        %v3204 = vld [vmem:[%s3194 + $0x48] sm:$0xff]
        %v3205 = vld [vmem:[%s3194 + $0x50] sm:$0xff]
        %v3206 = vld [vmem:[%s3194 + $0x58] sm:$0xff]
        %v3207 = vld [vmem:[%s3194 + $0x60] sm:$0xff]
        %v3208 = vld [vmem:[%s3194 + $0x68] sm:$0xff]
        %v3209 = vld [vmem:[%s3194 + $0x70] sm:$0xff]
        %v3210 = vld [vmem:[%s3194 + $0x78] sm:$0xff]
        %3211 = vmax.xlane.f32.xlu0 %v3155
        %v3212 = vpop.xlane.xlu0 %3211
        %3213 = vmax.xlane.f32.xlu0 %v3157
        %v3214 = vpop.xlane.xlu0 %3213
        %3215 = vmax.xlane.f32.xlu0 %v3160
        %v3216 = vpop.xlane.xlu0 %3215
        %3217 = vmax.xlane.f32.xlu0 %v3162
        %v3218 = vpop.xlane.xlu0 %3217
        %3219 = vmax.xlane.f32.xlu0 %v3165
        %v3220 = vpop.xlane.xlu0 %3219
        %3221 = vmax.xlane.f32.xlu0 %v3167
        %v3222 = vpop.xlane.xlu0 %3221
        %3223 = vmax.xlane.f32.xlu0 %v3170
        %v3224 = vpop.xlane.xlu0 %3223
        %3225 = vmax.xlane.f32.xlu0 %v3172
        %v3226 = vpop.xlane.xlu0 %3225
        %3227 = vmax.xlane.f32.xlu0 %v3175
        %v3228 = vpop.xlane.xlu0 %3227
        %3229 = vmax.xlane.f32.xlu0 %v3177
        %v3230 = vpop.xlane.xlu0 %3229
        %3231 = vmax.xlane.f32.xlu0 %v3180
        %v3232 = vpop.xlane.xlu0 %3231
        %3233 = vmax.xlane.f32.xlu0 %v3182
        %v3234 = vpop.xlane.xlu0 %3233
        %3235 = vmax.xlane.f32.xlu0 %v3185
        %v3236 = vpop.xlane.xlu0 %3235
        %3237 = vmax.xlane.f32.xlu0 %v3187
        %v3238 = vpop.xlane.xlu0 %3237
        %3239 = vmax.xlane.f32.xlu0 %v3190
        %v3240 = vpop.xlane.xlu0 %3239
        %3241 = vmax.xlane.f32.xlu0 %v3192
        %v3242 = vpop.xlane.xlu0 %3241
        %v3243 = vmax.f32 %v3195, %v3212
        %v3244 = vmax.f32 %v3196, %v3214
        %v3245 = vmax.f32 %v3197, %v3216
        %v3246 = vmax.f32 %v3198, %v3218
        %v3247 = vmax.f32 %v3199, %v3220
        %v3248 = vmax.f32 %v3200, %v3222
        %v3249 = vmax.f32 %v3201, %v3224
        %v3250 = vmax.f32 %v3202, %v3226
        %v3251 = vmax.f32 %v3203, %v3228
        %v3252 = vmax.f32 %v3204, %v3230
        %v3253 = vmax.f32 %v3205, %v3232
        %v3254 = vmax.f32 %v3206, %v3234
        %v3255 = vmax.f32 %v3207, %v3236
        %v3256 = vmax.f32 %v3208, %v3238
        %v3257 = vmax.f32 %v3209, %v3240
        %v3258 = vmax.f32 %v3210, %v3242
        %v3259 = vsub.f32 %v3195, %v3243
        %v3260 = vsub.f32 %v3196, %v3244
        %v3261 = vsub.f32 %v3197, %v3245
        %v3262 = vsub.f32 %v3198, %v3246
        %v3263 = vsub.f32 %v3199, %v3247
        %v3264 = vsub.f32 %v3200, %v3248
        %v3265 = vsub.f32 %v3201, %v3249
        %v3266 = vsub.f32 %v3202, %v3250
        %v3267 = vsub.f32 %v3203, %v3251
        %v3268 = vsub.f32 %v3204, %v3252
        %v3269 = vsub.f32 %v3205, %v3253
        %v3270 = vsub.f32 %v3206, %v3254
        %v3271 = vsub.f32 %v3207, %v3255
        %v3272 = vsub.f32 %v3208, %v3256
        %v3273 = vsub.f32 %v3209, %v3257
        %v3274 = vsub.f32 %v3210, %v3258
        %v3275 = vmul.f32 %v3259, 1.442695
        %v3276 = vpow.pop %v3275
        %v3277 = vmul.f32 %v3260, 1.442695
        %v3278 = vpow.pop %v3277
        %v3279 = vmul.f32 %v3261, 1.442695
        %v3280 = vpow.pop %v3279
        %v3281 = vmul.f32 %v3262, 1.442695
        %v3282 = vpow.pop %v3281
        %v3283 = vmul.f32 %v3263, 1.442695
        %v3284 = vpow.pop %v3283
        %v3285 = vmul.f32 %v3264, 1.442695
        %v3286 = vpow.pop %v3285
        %v3287 = vmul.f32 %v3265, 1.442695
        %v3288 = vpow.pop %v3287
        %v3289 = vmul.f32 %v3266, 1.442695
        %v3290 = vpow.pop %v3289
        %v3291 = vmul.f32 %v3267, 1.442695
        %v3292 = vpow.pop %v3291
        %v3293 = vmul.f32 %v3268, 1.442695
        %v3294 = vpow.pop %v3293
        %v3295 = vmul.f32 %v3269, 1.442695
        %v3296 = vpow.pop %v3295
        %v3297 = vmul.f32 %v3270, 1.442695
        %v3298 = vpow.pop %v3297
        %v3299 = vmul.f32 %v3271, 1.442695
        %v3300 = vpow.pop %v3299
        %v3301 = vmul.f32 %v3272, 1.442695
        %v3302 = vpow.pop %v3301
        %v3303 = vmul.f32 %v3273, 1.442695
        %v3304 = vpow.pop %v3303
        %v3305 = vmul.f32 %v3274, 1.442695
        %v3306 = vpow.pop %v3305
        %3308 = vset.pattern.permute.xlu0 0
        %3309 = vperm.xlu0 %3308, %v3243
        %v3310 = vpop.permute.xlu0 %3309
        %3313 = vset.pattern.permute.xlu0 0
        %3314 = vperm.xlu0 %3313, %v3244
        %v3315 = vpop.permute.xlu0 %3314
        %3318 = vset.pattern.permute.xlu0 0
        %3319 = vperm.xlu0 %3318, %v3245
        %v3320 = vpop.permute.xlu0 %3319
        %3323 = vset.pattern.permute.xlu0 0
        %3324 = vperm.xlu0 %3323, %v3246
        %v3325 = vpop.permute.xlu0 %3324
        %3328 = vset.pattern.permute.xlu0 0
        %3329 = vperm.xlu0 %3328, %v3247
        %v3330 = vpop.permute.xlu0 %3329
        %3333 = vset.pattern.permute.xlu0 0
        %3334 = vperm.xlu0 %3333, %v3248
        %v3335 = vpop.permute.xlu0 %3334
        %3338 = vset.pattern.permute.xlu0 0
        %3339 = vperm.xlu0 %3338, %v3249
        %v3340 = vpop.permute.xlu0 %3339
        %3343 = vset.pattern.permute.xlu0 0
        %3344 = vperm.xlu0 %3343, %v3250
        %v3345 = vpop.permute.xlu0 %3344
        %3348 = vset.pattern.permute.xlu0 0
        %3349 = vperm.xlu0 %3348, %v3251
        %v3350 = vpop.permute.xlu0 %3349
        %3353 = vset.pattern.permute.xlu0 0
        %3354 = vperm.xlu0 %3353, %v3252
        %v3355 = vpop.permute.xlu0 %3354
        %3358 = vset.pattern.permute.xlu0 0
        %3359 = vperm.xlu0 %3358, %v3253
        %v3360 = vpop.permute.xlu0 %3359
        %3363 = vset.pattern.permute.xlu0 0
        %3364 = vperm.xlu0 %3363, %v3254
        %v3365 = vpop.permute.xlu0 %3364
        %3368 = vset.pattern.permute.xlu0 0
        %3369 = vperm.xlu0 %3368, %v3255
        %v3370 = vpop.permute.xlu0 %3369
        %3373 = vset.pattern.permute.xlu0 0
        %3374 = vperm.xlu0 %3373, %v3256
        %v3375 = vpop.permute.xlu0 %3374
        %3378 = vset.pattern.permute.xlu0 0
        %3379 = vperm.xlu0 %3378, %v3257
        %v3380 = vpop.permute.xlu0 %3379
        %3383 = vset.pattern.permute.xlu0 0
        %3384 = vperm.xlu0 %3383, %v3258
        %v3385 = vpop.permute.xlu0 %3384
        %v3387 = vsub.f32 %v3155, %v3310
        %v3388 = vsub.f32 %v3157, %v3315
        %v3389 = vsub.f32 %v3160, %v3320
        %v3390 = vsub.f32 %v3162, %v3325
        %v3391 = vsub.f32 %v3165, %v3330
        %v3392 = vsub.f32 %v3167, %v3335
        %v3393 = vsub.f32 %v3170, %v3340
        %v3394 = vsub.f32 %v3172, %v3345
        %v3395 = vsub.f32 %v3175, %v3350
        %v3396 = vsub.f32 %v3177, %v3355
        %v3397 = vsub.f32 %v3180, %v3360
        %v3398 = vsub.f32 %v3182, %v3365
        %v3399 = vsub.f32 %v3185, %v3370
        %v3400 = vsub.f32 %v3187, %v3375
        %v3401 = vsub.f32 %v3190, %v3380
        %v3402 = vsub.f32 %v3192, %v3385
        %v3403 = vmul.f32 %v3387, 1.442695
        %v3404 = vpow.pop %v3403
        %v3405 = vmul.f32 %v3388, 1.442695
        %v3406 = vpow.pop %v3405
        %v3407 = vmul.f32 %v3389, 1.442695
        %v3408 = vpow.pop %v3407
        %v3409 = vmul.f32 %v3390, 1.442695
        %v3410 = vpow.pop %v3409
        %v3411 = vmul.f32 %v3391, 1.442695
        %v3412 = vpow.pop %v3411
        %v3413 = vmul.f32 %v3392, 1.442695
        %v3414 = vpow.pop %v3413
        %v3415 = vmul.f32 %v3393, 1.442695
        %v3416 = vpow.pop %v3415
        %v3417 = vmul.f32 %v3394, 1.442695
        %v3418 = vpow.pop %v3417
        %v3419 = vmul.f32 %v3395, 1.442695
        %v3420 = vpow.pop %v3419
        %v3421 = vmul.f32 %v3396, 1.442695
        %v3422 = vpow.pop %v3421
        %v3423 = vmul.f32 %v3397, 1.442695
        %v3424 = vpow.pop %v3423
        %v3425 = vmul.f32 %v3398, 1.442695
        %v3426 = vpow.pop %v3425
        %v3427 = vmul.f32 %v3399, 1.442695
        %v3428 = vpow.pop %v3427
        %v3429 = vmul.f32 %v3400, 1.442695
        %v3430 = vpow.pop %v3429
        %v3431 = vmul.f32 %v3401, 1.442695
        %v3432 = vpow.pop %v3431
        %v3433 = vmul.f32 %v3402, 1.442695
        %v3434 = vpow.pop %v3433
        %s3435 = scalar_lea.vmem [#allocation4], 128
        %v3436 = vld [vmem:[%s3435] sm:$0xff]
        %v3437 = vld [vmem:[%s3435 + $0x8] sm:$0xff]
        %v3438 = vld [vmem:[%s3435 + $0x10] sm:$0xff]
        %v3439 = vld [vmem:[%s3435 + $0x18] sm:$0xff]
        %v3440 = vld [vmem:[%s3435 + $0x20] sm:$0xff]
        %v3441 = vld [vmem:[%s3435 + $0x28] sm:$0xff]
        %v3442 = vld [vmem:[%s3435 + $0x30] sm:$0xff]
        %v3443 = vld [vmem:[%s3435 + $0x38] sm:$0xff]
        %v3444 = vld [vmem:[%s3435 + $0x40] sm:$0xff]
        %v3445 = vld [vmem:[%s3435 + $0x48] sm:$0xff]
        %v3446 = vld [vmem:[%s3435 + $0x50] sm:$0xff]
        %v3447 = vld [vmem:[%s3435 + $0x58] sm:$0xff]
        %v3448 = vld [vmem:[%s3435 + $0x60] sm:$0xff]
        %v3449 = vld [vmem:[%s3435 + $0x68] sm:$0xff]
        %v3450 = vld [vmem:[%s3435 + $0x70] sm:$0xff]
        %v3451 = vld [vmem:[%s3435 + $0x78] sm:$0xff]
        %v3452 = vmul.f32 %v3276, %v3436
        %v3453 = vmul.f32 %v3278, %v3437
        %v3454 = vmul.f32 %v3280, %v3438
        %v3455 = vmul.f32 %v3282, %v3439
        %v3456 = vmul.f32 %v3284, %v3440
        %v3457 = vmul.f32 %v3286, %v3441
        %v3458 = vmul.f32 %v3288, %v3442
        %v3459 = vmul.f32 %v3290, %v3443
        %v3460 = vmul.f32 %v3292, %v3444
        %v3461 = vmul.f32 %v3294, %v3445
        %v3462 = vmul.f32 %v3296, %v3446
        %v3463 = vmul.f32 %v3298, %v3447
        %v3464 = vmul.f32 %v3300, %v3448
        %v3465 = vmul.f32 %v3302, %v3449
        %v3466 = vmul.f32 %v3304, %v3450
        %v3467 = vmul.f32 %v3306, %v3451
        %3468 = vadd.xlane.f32.xlu0 %v3404
        %v3469 = vpop.xlane.xlu0 %3468
        %3470 = vadd.xlane.f32.xlu0 %v3406
        %v3471 = vpop.xlane.xlu0 %3470
        %3472 = vadd.xlane.f32.xlu0 %v3408
        %v3473 = vpop.xlane.xlu0 %3472
        %3474 = vadd.xlane.f32.xlu0 %v3410
        %v3475 = vpop.xlane.xlu0 %3474
        %3476 = vadd.xlane.f32.xlu0 %v3412
        %v3477 = vpop.xlane.xlu0 %3476
        %3478 = vadd.xlane.f32.xlu0 %v3414
        %v3479 = vpop.xlane.xlu0 %3478
        %3480 = vadd.xlane.f32.xlu0 %v3416
        %v3481 = vpop.xlane.xlu0 %3480
        %3482 = vadd.xlane.f32.xlu0 %v3418
        %v3483 = vpop.xlane.xlu0 %3482
        %3484 = vadd.xlane.f32.xlu0 %v3420
        %v3485 = vpop.xlane.xlu0 %3484
        %3486 = vadd.xlane.f32.xlu0 %v3422
        %v3487 = vpop.xlane.xlu0 %3486
        %3488 = vadd.xlane.f32.xlu0 %v3424
        %v3489 = vpop.xlane.xlu0 %3488
        %3490 = vadd.xlane.f32.xlu0 %v3426
        %v3491 = vpop.xlane.xlu0 %3490
        %3492 = vadd.xlane.f32.xlu0 %v3428
        %v3493 = vpop.xlane.xlu0 %3492
        %3494 = vadd.xlane.f32.xlu0 %v3430
        %v3495 = vpop.xlane.xlu0 %3494
        %3496 = vadd.xlane.f32.xlu0 %v3432
        %v3497 = vpop.xlane.xlu0 %3496
        %3498 = vadd.xlane.f32.xlu0 %v3434
        %v3499 = vpop.xlane.xlu0 %3498
        %v3500 = vadd.f32 %v3452, %v3469
        %v3501 = vadd.f32 %v3453, %v3471
        %v3502 = vadd.f32 %v3454, %v3473
        %v3503 = vadd.f32 %v3455, %v3475
        %v3504 = vadd.f32 %v3456, %v3477
        %v3505 = vadd.f32 %v3457, %v3479
        %v3506 = vadd.f32 %v3458, %v3481
        %v3507 = vadd.f32 %v3459, %v3483
        %v3508 = vadd.f32 %v3460, %v3485
        %v3509 = vadd.f32 %v3461, %v3487
        %v3510 = vadd.f32 %v3462, %v3489
        %v3511 = vadd.f32 %v3463, %v3491
        %v3512 = vadd.f32 %v3464, %v3493
        %v3513 = vadd.f32 %v3465, %v3495
        %v3514 = vadd.f32 %v3466, %v3497
        %v3515 = vadd.f32 %v3467, %v3499
        %3516 = vst.msk [vmem:[%s3435] sm:$0xff] %vm2767, %v3500
        %3517 = vst.msk [vmem:[%s3435 + $0x8] sm:$0xff] %vm2767, %v3501
        %3518 = vst.msk [vmem:[%s3435 + $0x10] sm:$0xff] %vm2767, %v3502
        %3519 = vst.msk [vmem:[%s3435 + $0x18] sm:$0xff] %vm2767, %v3503
        %3520 = vst.msk [vmem:[%s3435 + $0x20] sm:$0xff] %vm2767, %v3504
        %3521 = vst.msk [vmem:[%s3435 + $0x28] sm:$0xff] %vm2767, %v3505
        %3522 = vst.msk [vmem:[%s3435 + $0x30] sm:$0xff] %vm2767, %v3506
        %3523 = vst.msk [vmem:[%s3435 + $0x38] sm:$0xff] %vm2767, %v3507
        %3524 = vst.msk [vmem:[%s3435 + $0x40] sm:$0xff] %vm2767, %v3508
        %3525 = vst.msk [vmem:[%s3435 + $0x48] sm:$0xff] %vm2767, %v3509
        %3526 = vst.msk [vmem:[%s3435 + $0x50] sm:$0xff] %vm2767, %v3510
        %3527 = vst.msk [vmem:[%s3435 + $0x58] sm:$0xff] %vm2767, %v3511
        %3528 = vst.msk [vmem:[%s3435 + $0x60] sm:$0xff] %vm2767, %v3512
        %3529 = vst.msk [vmem:[%s3435 + $0x68] sm:$0xff] %vm2767, %v3513
        %3530 = vst.msk [vmem:[%s3435 + $0x70] sm:$0xff] %vm2767, %v3514
        %3531 = vst.msk [vmem:[%s3435 + $0x78] sm:$0xff] %vm2767, %v3515
        %v3532 = vpack.c.bf16 %v3406, %v3404
        %v3533 = vpack.c.bf16 %v3410, %v3408
        %v3534 = vpack.c.bf16 %v3414, %v3412
        %v3535 = vpack.c.bf16 %v3418, %v3416
        %v3536 = vpack.c.bf16 %v3422, %v3420
        %v3537 = vpack.c.bf16 %v3426, %v3424
        %v3538 = vpack.c.bf16 %v3430, %v3428
        %v3539 = vpack.c.bf16 %v3434, %v3432
        %v3540 = vunpack.c.h.b16 %v2255
        %v3541 = vunpack.c.h.b16 %v2257
        %v3542 = vunpack.c.h.b16 %v2259
        %v3543 = vunpack.c.h.b16 %v2261
        %v3544 = vunpack.c.h.b16 %v2263
        %v3545 = vunpack.c.h.b16 %v2265
        %v3546 = vunpack.c.h.b16 %v2267
        %v3547 = vunpack.c.h.b16 %v2269
        %v3548 = vunpack.c.h.b16 %v2271
        %v3549 = vunpack.c.h.b16 %v2273
        %v3550 = vunpack.c.h.b16 %v2275
        %v3551 = vunpack.c.h.b16 %v2277
        %v3552 = vunpack.c.h.b16 %v2279
        %v3553 = vunpack.c.h.b16 %v2281
        %v3554 = vunpack.c.h.b16 %v2283
        %v3555 = vunpack.c.h.b16 %v2285
        %v3556 = vpack.c.b16 %v3541, %v3540
        %v3557 = vpack.c.b16 %v3543, %v3542
        %v3558 = vpack.c.b16 %v3545, %v3544
        %v3559 = vpack.c.b16 %v3547, %v3546
        %v3560 = vpack.c.b16 %v3549, %v3548
        %v3561 = vpack.c.b16 %v3551, %v3550
        %v3562 = vpack.c.b16 %v3553, %v3552
        %v3563 = vpack.c.b16 %v3555, %v3554
        %3572 = vmatpush.bf16.msra.mxu0 %v3563
        %3573 = vmatpush.bf16.msra.mxu0 %v3562
        %3574 = vmatpush.bf16.msra.mxu0 %v3561
        %3575 = vmatpush.bf16.msra.mxu0 %v3560
        %3576 = vmatpush.bf16.msra.mxu0 %v3559
        %3577 = vmatpush.bf16.msra.mxu0 %v3558
        %3578 = vmatpush.bf16.msra.mxu0 %v3557
        %3579 = vmatpush.bf16.msra.mxu0 %v3556
        %3580 = vmatmul.bf16.gmra.mxu0 %v3532
        %v3581 = vpop.f32.mrf.mxu0
        %v3582 = vadd.f32 0.0, %v3581
        %v3583 = vpop.f32.mrf.mxu0
        %v3584 = vadd.f32 0.0, %v3583
        %3585 = vmatmul.bf16.gmra.mxu0 %v3533
        %v3586 = vpop.f32.mrf.mxu0
        %v3587 = vadd.f32 0.0, %v3586
        %v3588 = vpop.f32.mrf.mxu0
        %v3589 = vadd.f32 0.0, %v3588
        %3590 = vmatmul.bf16.gmra.mxu0 %v3534
        %v3591 = vpop.f32.mrf.mxu0
        %v3592 = vadd.f32 0.0, %v3591
        %v3593 = vpop.f32.mrf.mxu0
        %v3594 = vadd.f32 0.0, %v3593
        %3595 = vmatmul.bf16.gmra.mxu0 %v3535
        %v3596 = vpop.f32.mrf.mxu0
        %v3597 = vadd.f32 0.0, %v3596
        %v3598 = vpop.f32.mrf.mxu0
        %v3599 = vadd.f32 0.0, %v3598
        %3600 = vmatmul.bf16.gmra.mxu0 %v3536
        %v3601 = vpop.f32.mrf.mxu0
        %v3602 = vadd.f32 0.0, %v3601
        %v3603 = vpop.f32.mrf.mxu0
        %v3604 = vadd.f32 0.0, %v3603
        %3605 = vmatmul.bf16.gmra.mxu0 %v3537
        %v3606 = vpop.f32.mrf.mxu0
        %v3607 = vadd.f32 0.0, %v3606
        %v3608 = vpop.f32.mrf.mxu0
        %v3609 = vadd.f32 0.0, %v3608
        %3610 = vmatmul.bf16.gmra.mxu0 %v3538
        %v3611 = vpop.f32.mrf.mxu0
        %v3612 = vadd.f32 0.0, %v3611
        %v3613 = vpop.f32.mrf.mxu0
        %v3614 = vadd.f32 0.0, %v3613
        %3615 = vmatmul.bf16.gmra.mxu0 %v3539
        %v3616 = vpop.f32.mrf.mxu0
        %v3617 = vadd.f32 0.0, %v3616
        %v3618 = vpop.f32.mrf.mxu0
        %v3619 = vadd.f32 0.0, %v3618
        %3620 = vdwg.mxu0
        %v3621 = vld [vmem:[#allocation5 + $0x8] sm:$0xff]
        %v3622 = vld [vmem:[#allocation5 + $0x18] sm:$0xff]
        %v3623 = vld [vmem:[#allocation5 + $0x28] sm:$0xff]
        %v3624 = vld [vmem:[#allocation5 + $0x38] sm:$0xff]
        %v3625 = vld [vmem:[#allocation5 + $0x48] sm:$0xff]
        %v3626 = vld [vmem:[#allocation5 + $0x58] sm:$0xff]
        %v3627 = vld [vmem:[#allocation5 + $0x68] sm:$0xff]
        %v3628 = vld [vmem:[#allocation5 + $0x78] sm:$0xff]
        %v3629 = vld [vmem:[#allocation5 + $0x88] sm:$0xff]
        %v3630 = vld [vmem:[#allocation5 + $0x98] sm:$0xff]
        %v3631 = vld [vmem:[#allocation5 + $0xa8] sm:$0xff]
        %v3632 = vld [vmem:[#allocation5 + $0xb8] sm:$0xff]
        %v3633 = vld [vmem:[#allocation5 + $0xc8] sm:$0xff]
        %v3634 = vld [vmem:[#allocation5 + $0xd8] sm:$0xff]
        %v3635 = vld [vmem:[#allocation5 + $0xe8] sm:$0xff]
        %v3636 = vld [vmem:[#allocation5 + $0xf8] sm:$0xff]
        %3638 = vset.pattern.permute.xlu0 0
        %3639 = vperm.xlu0 %3638, %v3276
        %v3640 = vpop.permute.xlu0 %3639
        %3643 = vset.pattern.permute.xlu0 0
        %3644 = vperm.xlu0 %3643, %v3278
        %v3645 = vpop.permute.xlu0 %3644
        %3648 = vset.pattern.permute.xlu0 0
        %3649 = vperm.xlu0 %3648, %v3280
        %v3650 = vpop.permute.xlu0 %3649
        %3653 = vset.pattern.permute.xlu0 0
        %3654 = vperm.xlu0 %3653, %v3282
        %v3655 = vpop.permute.xlu0 %3654
        %3658 = vset.pattern.permute.xlu0 0
        %3659 = vperm.xlu0 %3658, %v3284
        %v3660 = vpop.permute.xlu0 %3659
        %3663 = vset.pattern.permute.xlu0 0
        %3664 = vperm.xlu0 %3663, %v3286
        %v3665 = vpop.permute.xlu0 %3664
        %3668 = vset.pattern.permute.xlu0 0
        %3669 = vperm.xlu0 %3668, %v3288
        %v3670 = vpop.permute.xlu0 %3669
        %3673 = vset.pattern.permute.xlu0 0
        %3674 = vperm.xlu0 %3673, %v3290
        %v3675 = vpop.permute.xlu0 %3674
        %3678 = vset.pattern.permute.xlu0 0
        %3679 = vperm.xlu0 %3678, %v3292
        %v3680 = vpop.permute.xlu0 %3679
        %3683 = vset.pattern.permute.xlu0 0
        %3684 = vperm.xlu0 %3683, %v3294
        %v3685 = vpop.permute.xlu0 %3684
        %3688 = vset.pattern.permute.xlu0 0
        %3689 = vperm.xlu0 %3688, %v3296
        %v3690 = vpop.permute.xlu0 %3689
        %3693 = vset.pattern.permute.xlu0 0
        %3694 = vperm.xlu0 %3693, %v3298
        %v3695 = vpop.permute.xlu0 %3694
        %3698 = vset.pattern.permute.xlu0 0
        %3699 = vperm.xlu0 %3698, %v3300
        %v3700 = vpop.permute.xlu0 %3699
        %3703 = vset.pattern.permute.xlu0 0
        %3704 = vperm.xlu0 %3703, %v3302
        %v3705 = vpop.permute.xlu0 %3704
        %3708 = vset.pattern.permute.xlu0 0
        %3709 = vperm.xlu0 %3708, %v3304
        %v3710 = vpop.permute.xlu0 %3709
        %3713 = vset.pattern.permute.xlu0 0
        %3714 = vperm.xlu0 %3713, %v3306
        %v3715 = vpop.permute.xlu0 %3714
        %v3717 = vmul.f32 %v3640, %v3621
        %v3718 = vmul.f32 %v3645, %v3622
        %v3719 = vmul.f32 %v3650, %v3623
        %v3720 = vmul.f32 %v3655, %v3624
        %v3721 = vmul.f32 %v3660, %v3625
        %v3722 = vmul.f32 %v3665, %v3626
        %v3723 = vmul.f32 %v3670, %v3627
        %v3724 = vmul.f32 %v3675, %v3628
        %v3725 = vmul.f32 %v3680, %v3629
        %v3726 = vmul.f32 %v3685, %v3630
        %v3727 = vmul.f32 %v3690, %v3631
        %v3728 = vmul.f32 %v3695, %v3632
        %v3729 = vmul.f32 %v3700, %v3633
        %v3730 = vmul.f32 %v3705, %v3634
        %v3731 = vmul.f32 %v3710, %v3635
        %v3732 = vmul.f32 %v3715, %v3636
        %v3733 = vadd.f32 %v3717, %v3582
        %v3734 = vadd.f32 %v3718, %v3584
        %v3735 = vadd.f32 %v3719, %v3587
        %v3736 = vadd.f32 %v3720, %v3589
        %v3737 = vadd.f32 %v3721, %v3592
        %v3738 = vadd.f32 %v3722, %v3594
        %v3739 = vadd.f32 %v3723, %v3597
        %v3740 = vadd.f32 %v3724, %v3599
        %v3741 = vadd.f32 %v3725, %v3602
        %v3742 = vadd.f32 %v3726, %v3604
        %v3743 = vadd.f32 %v3727, %v3607
        %v3744 = vadd.f32 %v3728, %v3609
        %v3745 = vadd.f32 %v3729, %v3612
        %v3746 = vadd.f32 %v3730, %v3614
        %v3747 = vadd.f32 %v3731, %v3617
        %v3748 = vadd.f32 %v3732, %v3619
        %3749 = vst [vmem:[#allocation5 + $0x8] sm:$0xff] %v3733
        %3750 = vst [vmem:[#allocation5 + $0x18] sm:$0xff] %v3734
        %3751 = vst [vmem:[#allocation5 + $0x28] sm:$0xff] %v3735
        %3752 = vst [vmem:[#allocation5 + $0x38] sm:$0xff] %v3736
        %3753 = vst [vmem:[#allocation5 + $0x48] sm:$0xff] %v3737
        %3754 = vst [vmem:[#allocation5 + $0x58] sm:$0xff] %v3738
        %3755 = vst [vmem:[#allocation5 + $0x68] sm:$0xff] %v3739
        %3756 = vst [vmem:[#allocation5 + $0x78] sm:$0xff] %v3740
        %3757 = vst [vmem:[#allocation5 + $0x88] sm:$0xff] %v3741
        %3758 = vst [vmem:[#allocation5 + $0x98] sm:$0xff] %v3742
        %3759 = vst [vmem:[#allocation5 + $0xa8] sm:$0xff] %v3743
        %3760 = vst [vmem:[#allocation5 + $0xb8] sm:$0xff] %v3744
        %3761 = vst [vmem:[#allocation5 + $0xc8] sm:$0xff] %v3745
        %3762 = vst [vmem:[#allocation5 + $0xd8] sm:$0xff] %v3746
        %3763 = vst [vmem:[#allocation5 + $0xe8] sm:$0xff] %v3747
        %3764 = vst [vmem:[#allocation5 + $0xf8] sm:$0xff] %v3748
        %3765 = vst.msk [vmem:[%s3194] sm:$0xff] %vm2767, %v3243
        %3766 = vst.msk [vmem:[%s3194 + $0x8] sm:$0xff] %vm2767, %v3244
        %3767 = vst.msk [vmem:[%s3194 + $0x10] sm:$0xff] %vm2767, %v3245
        %3768 = vst.msk [vmem:[%s3194 + $0x18] sm:$0xff] %vm2767, %v3246
        %3769 = vst.msk [vmem:[%s3194 + $0x20] sm:$0xff] %vm2767, %v3247
        %3770 = vst.msk [vmem:[%s3194 + $0x28] sm:$0xff] %vm2767, %v3248
        %3771 = vst.msk [vmem:[%s3194 + $0x30] sm:$0xff] %vm2767, %v3249
        %3772 = vst.msk [vmem:[%s3194 + $0x38] sm:$0xff] %vm2767, %v3250
        %3773 = vst.msk [vmem:[%s3194 + $0x40] sm:$0xff] %vm2767, %v3251
        %3774 = vst.msk [vmem:[%s3194 + $0x48] sm:$0xff] %vm2767, %v3252
        %3775 = vst.msk [vmem:[%s3194 + $0x50] sm:$0xff] %vm2767, %v3253
        %3776 = vst.msk [vmem:[%s3194 + $0x58] sm:$0xff] %vm2767, %v3254
        %3777 = vst.msk [vmem:[%s3194 + $0x60] sm:$0xff] %vm2767, %v3255
        %3778 = vst.msk [vmem:[%s3194 + $0x68] sm:$0xff] %vm2767, %v3256
        %3779 = vst.msk [vmem:[%s3194 + $0x70] sm:$0xff] %vm2767, %v3257
        %3780 = vst.msk [vmem:[%s3194 + $0x78] sm:$0xff] %vm2767, %v3258
        %p3781 = scmp.eq.s32.totalorder %s50, 1
        // Predicated region
        $region149: #{tpu_custom_call.1} parent=91 // pred_check
          %p3782 = pneg %p3781
        $region150: #{tpu_custom_call.1} parent=91 // pred_check_branch
          %3784 = sbr.rel (%p3782) target = $region152
        $region151: #{tpu_custom_call.1} parent=91 // pred_region
          %v3785 = vld [vmem:[#allocation4] sm:$0xff]
          %v3786 = vld [vmem:[#allocation4 + $0x8] sm:$0xff]
          %v3787 = vld [vmem:[#allocation4 + $0x10] sm:$0xff]
          %v3788 = vld [vmem:[#allocation4 + $0x18] sm:$0xff]
          %v3789 = vld [vmem:[#allocation4 + $0x20] sm:$0xff]
          %v3790 = vld [vmem:[#allocation4 + $0x28] sm:$0xff]
          %v3791 = vld [vmem:[#allocation4 + $0x30] sm:$0xff]
          %v3792 = vld [vmem:[#allocation4 + $0x38] sm:$0xff]
          %v3793 = vld [vmem:[#allocation4 + $0x40] sm:$0xff]
          %v3794 = vld [vmem:[#allocation4 + $0x48] sm:$0xff]
          %v3795 = vld [vmem:[#allocation4 + $0x50] sm:$0xff]
          %v3796 = vld [vmem:[#allocation4 + $0x58] sm:$0xff]
          %v3797 = vld [vmem:[#allocation4 + $0x60] sm:$0xff]
          %v3798 = vld [vmem:[#allocation4 + $0x68] sm:$0xff]
          %v3799 = vld [vmem:[#allocation4 + $0x70] sm:$0xff]
          %v3800 = vld [vmem:[#allocation4 + $0x78] sm:$0xff]
          %v3801 = vrcp.pop %v3785
          %v3802 = vrcp.pop %v3786
          %v3803 = vrcp.pop %v3787
          %v3804 = vrcp.pop %v3788
          %v3805 = vrcp.pop %v3789
          %v3806 = vrcp.pop %v3790
          %v3807 = vrcp.pop %v3791
          %v3808 = vrcp.pop %v3792
          %v3809 = vrcp.pop %v3793
          %v3810 = vrcp.pop %v3794
          %v3811 = vrcp.pop %v3795
          %v3812 = vrcp.pop %v3796
          %v3813 = vrcp.pop %v3797
          %v3814 = vrcp.pop %v3798
          %v3815 = vrcp.pop %v3799
          %v3816 = vrcp.pop %v3800
          %v3817 = vld [vmem:[#allocation5] sm:$0xff]
          %v3818 = vld [vmem:[#allocation5 + $0x10] sm:$0xff]
          %v3819 = vld [vmem:[#allocation5 + $0x20] sm:$0xff]
          %v3820 = vld [vmem:[#allocation5 + $0x30] sm:$0xff]
          %v3821 = vld [vmem:[#allocation5 + $0x40] sm:$0xff]
          %v3822 = vld [vmem:[#allocation5 + $0x50] sm:$0xff]
          %v3823 = vld [vmem:[#allocation5 + $0x60] sm:$0xff]
          %v3824 = vld [vmem:[#allocation5 + $0x70] sm:$0xff]
          %v3825 = vld [vmem:[#allocation5 + $0x80] sm:$0xff]
          %v3826 = vld [vmem:[#allocation5 + $0x90] sm:$0xff]
          %v3827 = vld [vmem:[#allocation5 + $0xa0] sm:$0xff]
          %v3828 = vld [vmem:[#allocation5 + $0xb0] sm:$0xff]
          %v3829 = vld [vmem:[#allocation5 + $0xc0] sm:$0xff]
          %v3830 = vld [vmem:[#allocation5 + $0xd0] sm:$0xff]
          %v3831 = vld [vmem:[#allocation5 + $0xe0] sm:$0xff]
          %v3832 = vld [vmem:[#allocation5 + $0xf0] sm:$0xff]
          %3834 = vset.pattern.permute.xlu0 0
          %3835 = vperm.xlu0 %3834, %v3801
          %v3836 = vpop.permute.xlu0 %3835
          %3839 = vset.pattern.permute.xlu0 0
          %3840 = vperm.xlu0 %3839, %v3802
          %v3841 = vpop.permute.xlu0 %3840
          %3844 = vset.pattern.permute.xlu0 0
          %3845 = vperm.xlu0 %3844, %v3803
          %v3846 = vpop.permute.xlu0 %3845
          %3849 = vset.pattern.permute.xlu0 0
          %3850 = vperm.xlu0 %3849, %v3804
          %v3851 = vpop.permute.xlu0 %3850
          %3854 = vset.pattern.permute.xlu0 0
          %3855 = vperm.xlu0 %3854, %v3805
          %v3856 = vpop.permute.xlu0 %3855
          %3859 = vset.pattern.permute.xlu0 0
          %3860 = vperm.xlu0 %3859, %v3806
          %v3861 = vpop.permute.xlu0 %3860
          %3864 = vset.pattern.permute.xlu0 0
          %3865 = vperm.xlu0 %3864, %v3807
          %v3866 = vpop.permute.xlu0 %3865
          %3869 = vset.pattern.permute.xlu0 0
          %3870 = vperm.xlu0 %3869, %v3808
          %v3871 = vpop.permute.xlu0 %3870
          %3874 = vset.pattern.permute.xlu0 0
          %3875 = vperm.xlu0 %3874, %v3809
          %v3876 = vpop.permute.xlu0 %3875
          %3879 = vset.pattern.permute.xlu0 0
          %3880 = vperm.xlu0 %3879, %v3810
          %v3881 = vpop.permute.xlu0 %3880
          %3884 = vset.pattern.permute.xlu0 0
          %3885 = vperm.xlu0 %3884, %v3811
          %v3886 = vpop.permute.xlu0 %3885
          %3889 = vset.pattern.permute.xlu0 0
          %3890 = vperm.xlu0 %3889, %v3812
          %v3891 = vpop.permute.xlu0 %3890
          %3894 = vset.pattern.permute.xlu0 0
          %3895 = vperm.xlu0 %3894, %v3813
          %v3896 = vpop.permute.xlu0 %3895
          %3899 = vset.pattern.permute.xlu0 0
          %3900 = vperm.xlu0 %3899, %v3814
          %v3901 = vpop.permute.xlu0 %3900
          %3904 = vset.pattern.permute.xlu0 0
          %3905 = vperm.xlu0 %3904, %v3815
          %v3906 = vpop.permute.xlu0 %3905
          %3909 = vset.pattern.permute.xlu0 0
          %3910 = vperm.xlu0 %3909, %v3816
          %v3911 = vpop.permute.xlu0 %3910
          %v3913 = vmul.f32 %v3817, %v3836
          %v3914 = vmul.f32 %v3818, %v3841
          %v3915 = vmul.f32 %v3819, %v3846
          %v3916 = vmul.f32 %v3820, %v3851
          %v3917 = vmul.f32 %v3821, %v3856
          %v3918 = vmul.f32 %v3822, %v3861
          %v3919 = vmul.f32 %v3823, %v3866
          %v3920 = vmul.f32 %v3824, %v3871
          %v3921 = vmul.f32 %v3825, %v3876
          %v3922 = vmul.f32 %v3826, %v3881
          %v3923 = vmul.f32 %v3827, %v3886
          %v3924 = vmul.f32 %v3828, %v3891
          %v3925 = vmul.f32 %v3829, %v3896
          %v3926 = vmul.f32 %v3830, %v3901
          %v3927 = vmul.f32 %v3831, %v3906
          %v3928 = vmul.f32 %v3832, %v3911
          %3929 = vst [vmem:[#allocation5] sm:$0xff] %v3913
          %3930 = vst [vmem:[#allocation5 + $0x10] sm:$0xff] %v3914
          %3931 = vst [vmem:[#allocation5 + $0x20] sm:$0xff] %v3915
          %3932 = vst [vmem:[#allocation5 + $0x30] sm:$0xff] %v3916
          %3933 = vst [vmem:[#allocation5 + $0x40] sm:$0xff] %v3917
          %3934 = vst [vmem:[#allocation5 + $0x50] sm:$0xff] %v3918
          %3935 = vst [vmem:[#allocation5 + $0x60] sm:$0xff] %v3919
          %3936 = vst [vmem:[#allocation5 + $0x70] sm:$0xff] %v3920
          %3937 = vst [vmem:[#allocation5 + $0x80] sm:$0xff] %v3921
          %3938 = vst [vmem:[#allocation5 + $0x90] sm:$0xff] %v3922
          %3939 = vst [vmem:[#allocation5 + $0xa0] sm:$0xff] %v3923
          %3940 = vst [vmem:[#allocation5 + $0xb0] sm:$0xff] %v3924
          %3941 = vst [vmem:[#allocation5 + $0xc0] sm:$0xff] %v3925
          %3942 = vst [vmem:[#allocation5 + $0xd0] sm:$0xff] %v3926
          %3943 = vst [vmem:[#allocation5 + $0xe0] sm:$0xff] %v3927
          %3944 = vst [vmem:[#allocation5 + $0xf0] sm:$0xff] %v3928
          %v3945 = vld [vmem:[%s3435] sm:$0xff]
          %v3946 = vld [vmem:[%s3435 + $0x8] sm:$0xff]
          %v3947 = vld [vmem:[%s3435 + $0x10] sm:$0xff]
          %v3948 = vld [vmem:[%s3435 + $0x18] sm:$0xff]
          %v3949 = vld [vmem:[%s3435 + $0x20] sm:$0xff]
          %v3950 = vld [vmem:[%s3435 + $0x28] sm:$0xff]
          %v3951 = vld [vmem:[%s3435 + $0x30] sm:$0xff]
          %v3952 = vld [vmem:[%s3435 + $0x38] sm:$0xff]
          %v3953 = vld [vmem:[%s3435 + $0x40] sm:$0xff]
          %v3954 = vld [vmem:[%s3435 + $0x48] sm:$0xff]
          %v3955 = vld [vmem:[%s3435 + $0x50] sm:$0xff]
          %v3956 = vld [vmem:[%s3435 + $0x58] sm:$0xff]
          %v3957 = vld [vmem:[%s3435 + $0x60] sm:$0xff]
          %v3958 = vld [vmem:[%s3435 + $0x68] sm:$0xff]
          %v3959 = vld [vmem:[%s3435 + $0x70] sm:$0xff]
          %v3960 = vld [vmem:[%s3435 + $0x78] sm:$0xff]
          %v3961 = vrcp.pop %v3945
          %v3962 = vrcp.pop %v3946
          %v3963 = vrcp.pop %v3947
          %v3964 = vrcp.pop %v3948
          %v3965 = vrcp.pop %v3949
          %v3966 = vrcp.pop %v3950
          %v3967 = vrcp.pop %v3951
          %v3968 = vrcp.pop %v3952
          %v3969 = vrcp.pop %v3953
          %v3970 = vrcp.pop %v3954
          %v3971 = vrcp.pop %v3955
          %v3972 = vrcp.pop %v3956
          %v3973 = vrcp.pop %v3957
          %v3974 = vrcp.pop %v3958
          %v3975 = vrcp.pop %v3959
          %v3976 = vrcp.pop %v3960
          %v3977 = vld [vmem:[#allocation5 + $0x8] sm:$0xff]
          %v3978 = vld [vmem:[#allocation5 + $0x18] sm:$0xff]
          %v3979 = vld [vmem:[#allocation5 + $0x28] sm:$0xff]
          %v3980 = vld [vmem:[#allocation5 + $0x38] sm:$0xff]
          %v3981 = vld [vmem:[#allocation5 + $0x48] sm:$0xff]
          %v3982 = vld [vmem:[#allocation5 + $0x58] sm:$0xff]
          %v3983 = vld [vmem:[#allocation5 + $0x68] sm:$0xff]
          %v3984 = vld [vmem:[#allocation5 + $0x78] sm:$0xff]
          %v3985 = vld [vmem:[#allocation5 + $0x88] sm:$0xff]
          %v3986 = vld [vmem:[#allocation5 + $0x98] sm:$0xff]
          %v3987 = vld [vmem:[#allocation5 + $0xa8] sm:$0xff]
          %v3988 = vld [vmem:[#allocation5 + $0xb8] sm:$0xff]
          %v3989 = vld [vmem:[#allocation5 + $0xc8] sm:$0xff]
          %v3990 = vld [vmem:[#allocation5 + $0xd8] sm:$0xff]
          %v3991 = vld [vmem:[#allocation5 + $0xe8] sm:$0xff]
          %v3992 = vld [vmem:[#allocation5 + $0xf8] sm:$0xff]
          %3994 = vset.pattern.permute.xlu0 0
          %3995 = vperm.xlu0 %3994, %v3961
          %v3996 = vpop.permute.xlu0 %3995
          %3999 = vset.pattern.permute.xlu0 0
          %4000 = vperm.xlu0 %3999, %v3962
          %v4001 = vpop.permute.xlu0 %4000
          %4004 = vset.pattern.permute.xlu0 0
          %4005 = vperm.xlu0 %4004, %v3963
          %v4006 = vpop.permute.xlu0 %4005
          %4009 = vset.pattern.permute.xlu0 0
          %4010 = vperm.xlu0 %4009, %v3964
          %v4011 = vpop.permute.xlu0 %4010
          %4014 = vset.pattern.permute.xlu0 0
          %4015 = vperm.xlu0 %4014, %v3965
          %v4016 = vpop.permute.xlu0 %4015
          %4019 = vset.pattern.permute.xlu0 0
          %4020 = vperm.xlu0 %4019, %v3966
          %v4021 = vpop.permute.xlu0 %4020
          %4024 = vset.pattern.permute.xlu0 0
          %4025 = vperm.xlu0 %4024, %v3967
          %v4026 = vpop.permute.xlu0 %4025
          %4029 = vset.pattern.permute.xlu0 0
          %4030 = vperm.xlu0 %4029, %v3968
          %v4031 = vpop.permute.xlu0 %4030
          %4034 = vset.pattern.permute.xlu0 0
          %4035 = vperm.xlu0 %4034, %v3969
          %v4036 = vpop.permute.xlu0 %4035
          %4039 = vset.pattern.permute.xlu0 0
          %4040 = vperm.xlu0 %4039, %v3970
          %v4041 = vpop.permute.xlu0 %4040
          %4044 = vset.pattern.permute.xlu0 0
          %4045 = vperm.xlu0 %4044, %v3971
          %v4046 = vpop.permute.xlu0 %4045
          %4049 = vset.pattern.permute.xlu0 0
          %4050 = vperm.xlu0 %4049, %v3972
          %v4051 = vpop.permute.xlu0 %4050
          %4054 = vset.pattern.permute.xlu0 0
          %4055 = vperm.xlu0 %4054, %v3973
          %v4056 = vpop.permute.xlu0 %4055
          %4059 = vset.pattern.permute.xlu0 0
          %4060 = vperm.xlu0 %4059, %v3974
          %v4061 = vpop.permute.xlu0 %4060
          %4064 = vset.pattern.permute.xlu0 0
          %4065 = vperm.xlu0 %4064, %v3975
          %v4066 = vpop.permute.xlu0 %4065
          %4069 = vset.pattern.permute.xlu0 0
          %4070 = vperm.xlu0 %4069, %v3976
          %v4071 = vpop.permute.xlu0 %4070
          %v4073 = vmul.f32 %v3977, %v3996
          %v4074 = vmul.f32 %v3978, %v4001
          %v4075 = vmul.f32 %v3979, %v4006
          %v4076 = vmul.f32 %v3980, %v4011
          %v4077 = vmul.f32 %v3981, %v4016
          %v4078 = vmul.f32 %v3982, %v4021
          %v4079 = vmul.f32 %v3983, %v4026
          %v4080 = vmul.f32 %v3984, %v4031
          %v4081 = vmul.f32 %v3985, %v4036
          %v4082 = vmul.f32 %v3986, %v4041
          %v4083 = vmul.f32 %v3987, %v4046
          %v4084 = vmul.f32 %v3988, %v4051
          %v4085 = vmul.f32 %v3989, %v4056
          %v4086 = vmul.f32 %v3990, %v4061
          %v4087 = vmul.f32 %v3991, %v4066
          %v4088 = vmul.f32 %v3992, %v4071
          %4089 = vst [vmem:[#allocation5 + $0x8] sm:$0xff] %v4073
          %4090 = vst [vmem:[#allocation5 + $0x18] sm:$0xff] %v4074
          %4091 = vst [vmem:[#allocation5 + $0x28] sm:$0xff] %v4075
          %4092 = vst [vmem:[#allocation5 + $0x38] sm:$0xff] %v4076
          %4093 = vst [vmem:[#allocation5 + $0x48] sm:$0xff] %v4077
          %4094 = vst [vmem:[#allocation5 + $0x58] sm:$0xff] %v4078
          %4095 = vst [vmem:[#allocation5 + $0x68] sm:$0xff] %v4079
          %4096 = vst [vmem:[#allocation5 + $0x78] sm:$0xff] %v4080
          %4097 = vst [vmem:[#allocation5 + $0x88] sm:$0xff] %v4081
          %4098 = vst [vmem:[#allocation5 + $0x98] sm:$0xff] %v4082
          %4099 = vst [vmem:[#allocation5 + $0xa8] sm:$0xff] %v4083
          %4100 = vst [vmem:[#allocation5 + $0xb8] sm:$0xff] %v4084
          %4101 = vst [vmem:[#allocation5 + $0xc8] sm:$0xff] %v4085
          %4102 = vst [vmem:[#allocation5 + $0xd8] sm:$0xff] %v4086
          %4103 = vst [vmem:[#allocation5 + $0xe8] sm:$0xff] %v4087
          %4104 = vst [vmem:[#allocation5 + $0xf8] sm:$0xff] %v4088
          %v4105 = vld [vmem:[#allocation5] sm:$0xff]
          %v4106 = vld [vmem:[#allocation5 + $0x8] sm:$0xff]
          %v4107 = vld [vmem:[#allocation5 + $0x10] sm:$0xff]
          %v4108 = vld [vmem:[#allocation5 + $0x18] sm:$0xff]
          %v4109 = vld [vmem:[#allocation5 + $0x20] sm:$0xff]
          %v4110 = vld [vmem:[#allocation5 + $0x28] sm:$0xff]
          %v4111 = vld [vmem:[#allocation5 + $0x30] sm:$0xff]
          %v4112 = vld [vmem:[#allocation5 + $0x38] sm:$0xff]
          %v4113 = vld [vmem:[#allocation5 + $0x40] sm:$0xff]
          %v4114 = vld [vmem:[#allocation5 + $0x48] sm:$0xff]
          %v4115 = vld [vmem:[#allocation5 + $0x50] sm:$0xff]
          %v4116 = vld [vmem:[#allocation5 + $0x58] sm:$0xff]
          %v4117 = vld [vmem:[#allocation5 + $0x60] sm:$0xff]
          %v4118 = vld [vmem:[#allocation5 + $0x68] sm:$0xff]
          %v4119 = vld [vmem:[#allocation5 + $0x70] sm:$0xff]
          %v4120 = vld [vmem:[#allocation5 + $0x78] sm:$0xff]
          %v4121 = vld [vmem:[#allocation5 + $0x80] sm:$0xff]
          %v4122 = vld [vmem:[#allocation5 + $0x88] sm:$0xff]
          %v4123 = vld [vmem:[#allocation5 + $0x90] sm:$0xff]
          %v4124 = vld [vmem:[#allocation5 + $0x98] sm:$0xff]
          %v4125 = vld [vmem:[#allocation5 + $0xa0] sm:$0xff]
          %v4126 = vld [vmem:[#allocation5 + $0xa8] sm:$0xff]
          %v4127 = vld [vmem:[#allocation5 + $0xb0] sm:$0xff]
          %v4128 = vld [vmem:[#allocation5 + $0xb8] sm:$0xff]
          %v4129 = vld [vmem:[#allocation5 + $0xc0] sm:$0xff]
          %v4130 = vld [vmem:[#allocation5 + $0xc8] sm:$0xff]
          %v4131 = vld [vmem:[#allocation5 + $0xd0] sm:$0xff]
          %v4132 = vld [vmem:[#allocation5 + $0xd8] sm:$0xff]
          %v4133 = vld [vmem:[#allocation5 + $0xe0] sm:$0xff]
          %v4134 = vld [vmem:[#allocation5 + $0xe8] sm:$0xff]
          %v4135 = vld [vmem:[#allocation5 + $0xf0] sm:$0xff]
          %v4136 = vld [vmem:[#allocation5 + $0xf8] sm:$0xff]
          %v4137 = vpack.c.bf16 %v4107, %v4105
          %v4138 = vpack.c.bf16 %v4108, %v4106
          %v4139 = vpack.c.bf16 %v4111, %v4109
          %v4140 = vpack.c.bf16 %v4112, %v4110
          %v4141 = vpack.c.bf16 %v4115, %v4113
          %v4142 = vpack.c.bf16 %v4116, %v4114
          %v4143 = vpack.c.bf16 %v4119, %v4117
          %v4144 = vpack.c.bf16 %v4120, %v4118
          %v4145 = vpack.c.bf16 %v4123, %v4121
          %v4146 = vpack.c.bf16 %v4124, %v4122
          %v4147 = vpack.c.bf16 %v4127, %v4125
          %v4148 = vpack.c.bf16 %v4128, %v4126
          %v4149 = vpack.c.bf16 %v4131, %v4129
          %v4150 = vpack.c.bf16 %v4132, %v4130
          %v4151 = vpack.c.bf16 %v4135, %v4133
          %v4152 = vpack.c.bf16 %v4136, %v4134
          %v4153 = vld [vmem:[#allocation15] sm:$0xff]
          %v4154 = vld [vmem:[#allocation15 + $0x8] sm:$0xff]
          %v4155 = vld [vmem:[#allocation15 + $0x10] sm:$0xff]
          %v4156 = vld [vmem:[#allocation15 + $0x18] sm:$0xff]
          %v4157 = vld [vmem:[#allocation15 + $0x20] sm:$0xff]
          %v4158 = vld [vmem:[#allocation15 + $0x28] sm:$0xff]
          %v4159 = vld [vmem:[#allocation15 + $0x30] sm:$0xff]
          %v4160 = vld [vmem:[#allocation15 + $0x38] sm:$0xff]
          %v4161 = vld [vmem:[#allocation15 + $0x40] sm:$0xff]
          %v4162 = vld [vmem:[#allocation15 + $0x48] sm:$0xff]
          %v4163 = vld [vmem:[#allocation15 + $0x50] sm:$0xff]
          %v4164 = vld [vmem:[#allocation15 + $0x58] sm:$0xff]
          %v4165 = vld [vmem:[#allocation15 + $0x60] sm:$0xff]
          %v4166 = vld [vmem:[#allocation15 + $0x68] sm:$0xff]
          %v4167 = vld [vmem:[#allocation15 + $0x70] sm:$0xff]
          %v4168 = vld [vmem:[#allocation15 + $0x78] sm:$0xff]
          %v4169 = vld [vmem:[#allocation15 + $0x80] sm:$0xff]
          %v4170 = vld [vmem:[#allocation15 + $0x88] sm:$0xff]
          %v4171 = vld [vmem:[#allocation15 + $0x90] sm:$0xff]
          %v4172 = vld [vmem:[#allocation15 + $0x98] sm:$0xff]
          %v4173 = vld [vmem:[#allocation15 + $0xa0] sm:$0xff]
          %v4174 = vld [vmem:[#allocation15 + $0xa8] sm:$0xff]
          %v4175 = vld [vmem:[#allocation15 + $0xb0] sm:$0xff]
          %v4176 = vld [vmem:[#allocation15 + $0xb8] sm:$0xff]
          %v4177 = vld [vmem:[#allocation15 + $0xc0] sm:$0xff]
          %v4178 = vld [vmem:[#allocation15 + $0xc8] sm:$0xff]
          %v4179 = vld [vmem:[#allocation15 + $0xd0] sm:$0xff]
          %v4180 = vld [vmem:[#allocation15 + $0xd8] sm:$0xff]
          %v4181 = vld [vmem:[#allocation15 + $0xe0] sm:$0xff]
          %v4182 = vld [vmem:[#allocation15 + $0xe8] sm:$0xff]
          %v4183 = vld [vmem:[#allocation15 + $0xf0] sm:$0xff]
          %v4184 = vld [vmem:[#allocation15 + $0xf8] sm:$0xff]
          %v4185 = vld [vmem:[#allocation17] sm:$0x3]
          %v4187 = vperm.slane %v4185, 0
          %v4188 = vperm.slane %v4185, 1
          %v4223 = vunpack.c.l.b16 %v4153
          %v4224 = vunpack.c.h.b16 %v4153
          %v4225 = vunpack.c.l.b16 %v4154
          %v4226 = vunpack.c.h.b16 %v4154
          %v4227 = vunpack.c.l.b16 %v4155
          %v4228 = vunpack.c.h.b16 %v4155
          %v4229 = vunpack.c.l.b16 %v4156
          %v4230 = vunpack.c.h.b16 %v4156
          %v4231 = vunpack.c.l.b16 %v4157
          %v4232 = vunpack.c.h.b16 %v4157
          %v4233 = vunpack.c.l.b16 %v4158
          %v4234 = vunpack.c.h.b16 %v4158
          %v4235 = vunpack.c.l.b16 %v4159
          %v4236 = vunpack.c.h.b16 %v4159
          %v4237 = vunpack.c.l.b16 %v4160
          %v4238 = vunpack.c.h.b16 %v4160
          %v4239 = vunpack.c.l.b16 %v4161
          %v4240 = vunpack.c.h.b16 %v4161
          %v4241 = vunpack.c.l.b16 %v4162
          %v4242 = vunpack.c.h.b16 %v4162
          %v4243 = vunpack.c.l.b16 %v4163
          %v4244 = vunpack.c.h.b16 %v4163
          %v4245 = vunpack.c.l.b16 %v4164
          %v4246 = vunpack.c.h.b16 %v4164
          %v4247 = vunpack.c.l.b16 %v4165
          %v4248 = vunpack.c.h.b16 %v4165
          %v4249 = vunpack.c.l.b16 %v4166
          %v4250 = vunpack.c.h.b16 %v4166
          %v4251 = vunpack.c.l.b16 %v4167
          %v4252 = vunpack.c.h.b16 %v4167
          %v4253 = vunpack.c.l.b16 %v4168
          %v4254 = vunpack.c.h.b16 %v4168
          %v4255 = vunpack.c.l.b16 %v4169
          %v4256 = vunpack.c.h.b16 %v4169
          %v4257 = vunpack.c.l.b16 %v4170
          %v4258 = vunpack.c.h.b16 %v4170
          %v4259 = vunpack.c.l.b16 %v4171
          %v4260 = vunpack.c.h.b16 %v4171
          %v4261 = vunpack.c.l.b16 %v4172
          %v4262 = vunpack.c.h.b16 %v4172
          %v4263 = vunpack.c.l.b16 %v4173
          %v4264 = vunpack.c.h.b16 %v4173
          %v4265 = vunpack.c.l.b16 %v4174
          %v4266 = vunpack.c.h.b16 %v4174
          %v4267 = vunpack.c.l.b16 %v4175
          %v4268 = vunpack.c.h.b16 %v4175
          %v4269 = vunpack.c.l.b16 %v4176
          %v4270 = vunpack.c.h.b16 %v4176
          %v4271 = vunpack.c.l.b16 %v4177
          %v4272 = vunpack.c.h.b16 %v4177
          %v4273 = vunpack.c.l.b16 %v4178
          %v4274 = vunpack.c.h.b16 %v4178
          %v4275 = vunpack.c.l.b16 %v4179
          %v4276 = vunpack.c.h.b16 %v4179
          %v4277 = vunpack.c.l.b16 %v4180
          %v4278 = vunpack.c.h.b16 %v4180
          %v4279 = vunpack.c.l.b16 %v4181
          %v4280 = vunpack.c.h.b16 %v4181
          %v4281 = vunpack.c.l.b16 %v4182
          %v4282 = vunpack.c.h.b16 %v4182
          %v4283 = vunpack.c.l.b16 %v4183
          %v4284 = vunpack.c.h.b16 %v4183
          %v4285 = vunpack.c.l.b16 %v4184
          %v4286 = vunpack.c.h.b16 %v4184
          %v4287 = vpack.c.b16 %v4225, %v4223
          %v4288 = vpack.c.b16 %v4226, %v4224
          %v4289 = vpack.c.b16 %v4229, %v4227
          %v4290 = vpack.c.b16 %v4230, %v4228
          %v4291 = vpack.c.b16 %v4233, %v4231
          %v4292 = vpack.c.b16 %v4234, %v4232
          %v4293 = vpack.c.b16 %v4237, %v4235
          %v4294 = vpack.c.b16 %v4238, %v4236
          %v4295 = vpack.c.b16 %v4241, %v4239
          %v4296 = vpack.c.b16 %v4242, %v4240
          %v4297 = vpack.c.b16 %v4245, %v4243
          %v4298 = vpack.c.b16 %v4246, %v4244
          %v4299 = vpack.c.b16 %v4249, %v4247
          %v4300 = vpack.c.b16 %v4250, %v4248
          %v4301 = vpack.c.b16 %v4253, %v4251
          %v4302 = vpack.c.b16 %v4254, %v4252
          %v4303 = vpack.c.b16 %v4257, %v4255
          %v4304 = vpack.c.b16 %v4258, %v4256
          %v4305 = vpack.c.b16 %v4261, %v4259
          %v4306 = vpack.c.b16 %v4262, %v4260
          %v4307 = vpack.c.b16 %v4265, %v4263
          %v4308 = vpack.c.b16 %v4266, %v4264
          %v4309 = vpack.c.b16 %v4269, %v4267
          %v4310 = vpack.c.b16 %v4270, %v4268
          %v4311 = vpack.c.b16 %v4273, %v4271
          %v4312 = vpack.c.b16 %v4274, %v4272
          %v4313 = vpack.c.b16 %v4277, %v4275
          %v4314 = vpack.c.b16 %v4278, %v4276
          %v4315 = vpack.c.b16 %v4281, %v4279
          %v4316 = vpack.c.b16 %v4282, %v4280
          %v4317 = vpack.c.b16 %v4285, %v4283
          %v4318 = vpack.c.b16 %v4286, %v4284
          %4351 = vmatpush.bf16.msra.mxu0 %v4301
          %4352 = vmatpush.bf16.msra.mxu0 %v4299
          %4353 = vmatpush.bf16.msra.mxu0 %v4297
          %4354 = vmatpush.bf16.msra.mxu0 %v4295
          %4355 = vmatpush.bf16.msra.mxu0 %v4293
          %4356 = vmatpush.bf16.msra.mxu0 %v4291
          %4357 = vmatpush.bf16.msra.mxu0 %v4289
          %4358 = vmatpush.bf16.msra.mxu0 %v4287
          %4359 = vmatmul.bf16.gmra.mxu0 %v4137
          %v4360 = vpop.f32.mrf.mxu0
          %v4361 = vadd.f32 %v4187, %v4360
          %v4362 = vpop.f32.mrf.mxu0
          %v4363 = vadd.f32 %v4187, %v4362
          %4364 = vmatmul.bf16.gmra.mxu0 %v4139
          %v4365 = vpop.f32.mrf.mxu0
          %v4366 = vadd.f32 %v4187, %v4365
          %v4367 = vpop.f32.mrf.mxu0
          %v4368 = vadd.f32 %v4187, %v4367
          %4369 = vmatmul.bf16.gmra.mxu0 %v4141
          %v4370 = vpop.f32.mrf.mxu0
          %v4371 = vadd.f32 %v4187, %v4370
          %v4372 = vpop.f32.mrf.mxu0
          %v4373 = vadd.f32 %v4187, %v4372
          %4374 = vmatmul.bf16.gmra.mxu0 %v4143
          %v4375 = vpop.f32.mrf.mxu0
          %v4376 = vadd.f32 %v4187, %v4375
          %v4377 = vpop.f32.mrf.mxu0
          %v4378 = vadd.f32 %v4187, %v4377
          %4379 = vmatmul.bf16.gmra.mxu0 %v4145
          %v4380 = vpop.f32.mrf.mxu0
          %v4381 = vadd.f32 %v4187, %v4380
          %v4382 = vpop.f32.mrf.mxu0
          %v4383 = vadd.f32 %v4187, %v4382
          %4384 = vmatmul.bf16.gmra.mxu0 %v4147
          %v4385 = vpop.f32.mrf.mxu0
          %v4386 = vadd.f32 %v4187, %v4385
          %v4387 = vpop.f32.mrf.mxu0
          %v4388 = vadd.f32 %v4187, %v4387
          %4389 = vmatmul.bf16.gmra.mxu0 %v4149
          %v4390 = vpop.f32.mrf.mxu0
          %v4391 = vadd.f32 %v4187, %v4390
          %v4392 = vpop.f32.mrf.mxu0
          %v4393 = vadd.f32 %v4187, %v4392
          %4394 = vmatmul.bf16.gmra.mxu0 %v4151
          %v4395 = vpop.f32.mrf.mxu0
          %v4396 = vadd.f32 %v4187, %v4395
          %v4397 = vpop.f32.mrf.mxu0
          %v4398 = vadd.f32 %v4187, %v4397
          %4399 = vdwg.mxu0
          %4400 = vmatpush.bf16.msra.mxu0 %v4317
          %4401 = vmatpush.bf16.msra.mxu0 %v4315
          %4402 = vmatpush.bf16.msra.mxu0 %v4313
          %4403 = vmatpush.bf16.msra.mxu0 %v4311
          %4404 = vmatpush.bf16.msra.mxu0 %v4309
          %4405 = vmatpush.bf16.msra.mxu0 %v4307
          %4406 = vmatpush.bf16.msra.mxu0 %v4305
          %4407 = vmatpush.bf16.msra.mxu0 %v4303
          %4408 = vmatmul.bf16.gmra.mxu0 %v4138
          %v4409 = vpop.f32.mrf.mxu0
          %v4410 = vadd.f32 %v4361, %v4409
          %v4411 = vpop.f32.mrf.mxu0
          %v4412 = vadd.f32 %v4363, %v4411
          %4413 = vmatmul.bf16.gmra.mxu0 %v4140
          %v4414 = vpop.f32.mrf.mxu0
          %v4415 = vadd.f32 %v4366, %v4414
          %v4416 = vpop.f32.mrf.mxu0
          %v4417 = vadd.f32 %v4368, %v4416
          %4418 = vmatmul.bf16.gmra.mxu0 %v4142
          %v4419 = vpop.f32.mrf.mxu0
          %v4420 = vadd.f32 %v4371, %v4419
          %v4421 = vpop.f32.mrf.mxu0
          %v4422 = vadd.f32 %v4373, %v4421
          %4423 = vmatmul.bf16.gmra.mxu0 %v4144
          %v4424 = vpop.f32.mrf.mxu0
          %v4425 = vadd.f32 %v4376, %v4424
          %v4426 = vpop.f32.mrf.mxu0
          %v4427 = vadd.f32 %v4378, %v4426
          %4428 = vmatmul.bf16.gmra.mxu0 %v4146
          %v4429 = vpop.f32.mrf.mxu0
          %v4430 = vadd.f32 %v4381, %v4429
          %v4431 = vpop.f32.mrf.mxu0
          %v4432 = vadd.f32 %v4383, %v4431
          %4433 = vmatmul.bf16.gmra.mxu0 %v4148
          %v4434 = vpop.f32.mrf.mxu0
          %v4435 = vadd.f32 %v4386, %v4434
          %v4436 = vpop.f32.mrf.mxu0
          %v4437 = vadd.f32 %v4388, %v4436
          %4438 = vmatmul.bf16.gmra.mxu0 %v4150
          %v4439 = vpop.f32.mrf.mxu0
          %v4440 = vadd.f32 %v4391, %v4439
          %v4441 = vpop.f32.mrf.mxu0
          %v4442 = vadd.f32 %v4393, %v4441
          %4443 = vmatmul.bf16.gmra.mxu0 %v4152
          %v4444 = vpop.f32.mrf.mxu0
          %v4445 = vadd.f32 %v4396, %v4444
          %v4446 = vpop.f32.mrf.mxu0
          %v4447 = vadd.f32 %v4398, %v4446
          %4448 = vdwg.mxu0
          %4449 = vmatpush.bf16.msra.mxu0 %v4302
          %4450 = vmatpush.bf16.msra.mxu0 %v4300
          %4451 = vmatpush.bf16.msra.mxu0 %v4298
          %4452 = vmatpush.bf16.msra.mxu0 %v4296
          %4453 = vmatpush.bf16.msra.mxu0 %v4294
          %4454 = vmatpush.bf16.msra.mxu0 %v4292
          %4455 = vmatpush.bf16.msra.mxu0 %v4290
          %4456 = vmatpush.bf16.msra.mxu0 %v4288
          %4457 = vmatmul.bf16.gmra.mxu0 %v4137
          %v4458 = vpop.f32.mrf.mxu0
          %v4459 = vadd.f32 %v4188, %v4458
          %v4460 = vpop.f32.mrf.mxu0
          %v4461 = vadd.f32 %v4188, %v4460
          %4462 = vmatmul.bf16.gmra.mxu0 %v4139
          %v4463 = vpop.f32.mrf.mxu0
          %v4464 = vadd.f32 %v4188, %v4463
          %v4465 = vpop.f32.mrf.mxu0
          %v4466 = vadd.f32 %v4188, %v4465
          %4467 = vmatmul.bf16.gmra.mxu0 %v4141
          %v4468 = vpop.f32.mrf.mxu0
          %v4469 = vadd.f32 %v4188, %v4468
          %v4470 = vpop.f32.mrf.mxu0
          %v4471 = vadd.f32 %v4188, %v4470
          %4472 = vmatmul.bf16.gmra.mxu0 %v4143
          %v4473 = vpop.f32.mrf.mxu0
          %v4474 = vadd.f32 %v4188, %v4473
          %v4475 = vpop.f32.mrf.mxu0
          %v4476 = vadd.f32 %v4188, %v4475
          %4477 = vmatmul.bf16.gmra.mxu0 %v4145
          %v4478 = vpop.f32.mrf.mxu0
          %v4479 = vadd.f32 %v4188, %v4478
          %v4480 = vpop.f32.mrf.mxu0
          %v4481 = vadd.f32 %v4188, %v4480
          %4482 = vmatmul.bf16.gmra.mxu0 %v4147
          %v4483 = vpop.f32.mrf.mxu0
          %v4484 = vadd.f32 %v4188, %v4483
          %v4485 = vpop.f32.mrf.mxu0
          %v4486 = vadd.f32 %v4188, %v4485
          %4487 = vmatmul.bf16.gmra.mxu0 %v4149
          %v4488 = vpop.f32.mrf.mxu0
          %v4489 = vadd.f32 %v4188, %v4488
          %v4490 = vpop.f32.mrf.mxu0
          %v4491 = vadd.f32 %v4188, %v4490
          %4492 = vmatmul.bf16.gmra.mxu0 %v4151
          %v4493 = vpop.f32.mrf.mxu0
          %v4494 = vadd.f32 %v4188, %v4493
          %v4495 = vpop.f32.mrf.mxu0
          %v4496 = vadd.f32 %v4188, %v4495
          %4497 = vdwg.mxu0
          %4498 = vmatpush.bf16.msra.mxu0 %v4318
          %4499 = vmatpush.bf16.msra.mxu0 %v4316
          %4500 = vmatpush.bf16.msra.mxu0 %v4314
          %4501 = vmatpush.bf16.msra.mxu0 %v4312
          %4502 = vmatpush.bf16.msra.mxu0 %v4310
          %4503 = vmatpush.bf16.msra.mxu0 %v4308
          %4504 = vmatpush.bf16.msra.mxu0 %v4306
          %4505 = vmatpush.bf16.msra.mxu0 %v4304
          %4506 = vmatmul.bf16.gmra.mxu0 %v4138
          %v4507 = vpop.f32.mrf.mxu0
          %v4508 = vadd.f32 %v4459, %v4507
          %v4509 = vpop.f32.mrf.mxu0
          %v4510 = vadd.f32 %v4461, %v4509
          %4511 = vmatmul.bf16.gmra.mxu0 %v4140
          %v4512 = vpop.f32.mrf.mxu0
          %v4513 = vadd.f32 %v4464, %v4512
          %v4514 = vpop.f32.mrf.mxu0
          %v4515 = vadd.f32 %v4466, %v4514
          %4516 = vmatmul.bf16.gmra.mxu0 %v4142
          %v4517 = vpop.f32.mrf.mxu0
          %v4518 = vadd.f32 %v4469, %v4517
          %v4519 = vpop.f32.mrf.mxu0
          %v4520 = vadd.f32 %v4471, %v4519
          %4521 = vmatmul.bf16.gmra.mxu0 %v4144
          %v4522 = vpop.f32.mrf.mxu0
          %v4523 = vadd.f32 %v4474, %v4522
          %v4524 = vpop.f32.mrf.mxu0
          %v4525 = vadd.f32 %v4476, %v4524
          %4526 = vmatmul.bf16.gmra.mxu0 %v4146
          %v4527 = vpop.f32.mrf.mxu0
          %v4528 = vadd.f32 %v4479, %v4527
          %v4529 = vpop.f32.mrf.mxu0
          %v4530 = vadd.f32 %v4481, %v4529
          %4531 = vmatmul.bf16.gmra.mxu0 %v4148
          %v4532 = vpop.f32.mrf.mxu0
          %v4533 = vadd.f32 %v4484, %v4532
          %v4534 = vpop.f32.mrf.mxu0
          %v4535 = vadd.f32 %v4486, %v4534
          %4536 = vmatmul.bf16.gmra.mxu0 %v4150
          %v4537 = vpop.f32.mrf.mxu0
          %v4538 = vadd.f32 %v4489, %v4537
          %v4539 = vpop.f32.mrf.mxu0
          %v4540 = vadd.f32 %v4491, %v4539
          %4541 = vmatmul.bf16.gmra.mxu0 %v4152
          %v4542 = vpop.f32.mrf.mxu0
          %v4543 = vadd.f32 %v4494, %v4542
          %v4544 = vpop.f32.mrf.mxu0
          %v4545 = vadd.f32 %v4496, %v4544
          %4546 = vdwg.mxu0
          %v4547 = vld [vmem:[%s718] sm:$0xff]
          %v4548 = vld [vmem:[%s718 + $0x8] sm:$0xff]
          %v4549 = vld [vmem:[%s718 + $0x10] sm:$0xff]
          %v4550 = vld [vmem:[%s718 + $0x18] sm:$0xff]
          %v4551 = vld [vmem:[%s718 + $0x20] sm:$0xff]
          %v4552 = vld [vmem:[%s718 + $0x28] sm:$0xff]
          %v4553 = vld [vmem:[%s718 + $0x30] sm:$0xff]
          %v4554 = vld [vmem:[%s718 + $0x38] sm:$0xff]
          %v4555 = vld [vmem:[%s718 + $0x40] sm:$0xff]
          %v4556 = vld [vmem:[%s718 + $0x48] sm:$0xff]
          %v4557 = vld [vmem:[%s718 + $0x50] sm:$0xff]
          %v4558 = vld [vmem:[%s718 + $0x58] sm:$0xff]
          %v4559 = vld [vmem:[%s718 + $0x60] sm:$0xff]
          %v4560 = vld [vmem:[%s718 + $0x68] sm:$0xff]
          %v4561 = vld [vmem:[%s718 + $0x70] sm:$0xff]
          %v4562 = vld [vmem:[%s718 + $0x78] sm:$0xff]
          %v4563 = vld [vmem:[%s718 + $0x80] sm:$0xff]
          %v4564 = vld [vmem:[%s718 + $0x88] sm:$0xff]
          %v4565 = vld [vmem:[%s718 + $0x90] sm:$0xff]
          %v4566 = vld [vmem:[%s718 + $0x98] sm:$0xff]
          %v4567 = vld [vmem:[%s718 + $0xa0] sm:$0xff]
          %v4568 = vld [vmem:[%s718 + $0xa8] sm:$0xff]
          %v4569 = vld [vmem:[%s718 + $0xb0] sm:$0xff]
          %v4570 = vld [vmem:[%s718 + $0xb8] sm:$0xff]
          %v4571 = vld [vmem:[%s718 + $0xc0] sm:$0xff]
          %v4572 = vld [vmem:[%s718 + $0xc8] sm:$0xff]
          %v4573 = vld [vmem:[%s718 + $0xd0] sm:$0xff]
          %v4574 = vld [vmem:[%s718 + $0xd8] sm:$0xff]
          %v4575 = vld [vmem:[%s718 + $0xe0] sm:$0xff]
          %v4576 = vld [vmem:[%s718 + $0xe8] sm:$0xff]
          %v4577 = vld [vmem:[%s718 + $0xf0] sm:$0xff]
          %v4578 = vld [vmem:[%s718 + $0xf8] sm:$0xff]
          %v4579 = vadd.f32 %v4547, %v4410
          %v4580 = vadd.f32 %v4548, %v4508
          %v4581 = vadd.f32 %v4549, %v4412
          %v4582 = vadd.f32 %v4550, %v4510
          %v4583 = vadd.f32 %v4551, %v4415
          %v4584 = vadd.f32 %v4552, %v4513
          %v4585 = vadd.f32 %v4553, %v4417
          %v4586 = vadd.f32 %v4554, %v4515
          %v4587 = vadd.f32 %v4555, %v4420
          %v4588 = vadd.f32 %v4556, %v4518
          %v4589 = vadd.f32 %v4557, %v4422
          %v4590 = vadd.f32 %v4558, %v4520
          %v4591 = vadd.f32 %v4559, %v4425
          %v4592 = vadd.f32 %v4560, %v4523
          %v4593 = vadd.f32 %v4561, %v4427
          %v4594 = vadd.f32 %v4562, %v4525
          %v4595 = vadd.f32 %v4563, %v4430
          %v4596 = vadd.f32 %v4564, %v4528
          %v4597 = vadd.f32 %v4565, %v4432
          %v4598 = vadd.f32 %v4566, %v4530
          %v4599 = vadd.f32 %v4567, %v4435
          %v4600 = vadd.f32 %v4568, %v4533
          %v4601 = vadd.f32 %v4569, %v4437
          %v4602 = vadd.f32 %v4570, %v4535
          %v4603 = vadd.f32 %v4571, %v4440
          %v4604 = vadd.f32 %v4572, %v4538
          %v4605 = vadd.f32 %v4573, %v4442
          %v4606 = vadd.f32 %v4574, %v4540
          %v4607 = vadd.f32 %v4575, %v4445
          %v4608 = vadd.f32 %v4576, %v4543
          %v4609 = vadd.f32 %v4577, %v4447
          %v4610 = vadd.f32 %v4578, %v4545
          %v4611 = vld [vmem:[#allocation18] sm:$0x3]
          %v4612 = vld [vmem:[#allocation20] sm:$0x3]
          %v4613 = vadd.f32 %v4579, %v4580
          %4614 = vadd.xlane.f32.xlu0 %v4613
          %v4615 = vpop.xlane.xlu0 %4614
          %v4616 = vadd.f32 %v4581, %v4582
          %4617 = vadd.xlane.f32.xlu0 %v4616
          %v4618 = vpop.xlane.xlu0 %4617
          %v4619 = vadd.f32 %v4583, %v4584
          %4620 = vadd.xlane.f32.xlu0 %v4619
          %v4621 = vpop.xlane.xlu0 %4620
          %v4622 = vadd.f32 %v4585, %v4586
          %4623 = vadd.xlane.f32.xlu0 %v4622
          %v4624 = vpop.xlane.xlu0 %4623
          %v4625 = vadd.f32 %v4587, %v4588
          %4626 = vadd.xlane.f32.xlu0 %v4625
          %v4627 = vpop.xlane.xlu0 %4626
          %v4628 = vadd.f32 %v4589, %v4590
          %4629 = vadd.xlane.f32.xlu0 %v4628
          %v4630 = vpop.xlane.xlu0 %4629
          %v4631 = vadd.f32 %v4591, %v4592
          %4632 = vadd.xlane.f32.xlu0 %v4631
          %v4633 = vpop.xlane.xlu0 %4632
          %v4634 = vadd.f32 %v4593, %v4594
          %4635 = vadd.xlane.f32.xlu0 %v4634
          %v4636 = vpop.xlane.xlu0 %4635
          %v4637 = vadd.f32 %v4595, %v4596
          %4638 = vadd.xlane.f32.xlu0 %v4637
          %v4639 = vpop.xlane.xlu0 %4638
          %v4640 = vadd.f32 %v4597, %v4598
          %4641 = vadd.xlane.f32.xlu0 %v4640
          %v4642 = vpop.xlane.xlu0 %4641
          %v4643 = vadd.f32 %v4599, %v4600
          %4644 = vadd.xlane.f32.xlu0 %v4643
          %v4645 = vpop.xlane.xlu0 %4644
          %v4646 = vadd.f32 %v4601, %v4602
          %4647 = vadd.xlane.f32.xlu0 %v4646
          %v4648 = vpop.xlane.xlu0 %4647
          %v4649 = vadd.f32 %v4603, %v4604
          %4650 = vadd.xlane.f32.xlu0 %v4649
          %v4651 = vpop.xlane.xlu0 %4650
          %v4652 = vadd.f32 %v4605, %v4606
          %4653 = vadd.xlane.f32.xlu0 %v4652
          %v4654 = vpop.xlane.xlu0 %4653
          %v4655 = vadd.f32 %v4607, %v4608
          %4656 = vadd.xlane.f32.xlu0 %v4655
          %v4657 = vpop.xlane.xlu0 %4656
          %v4658 = vadd.f32 %v4609, %v4610
          %4659 = vadd.xlane.f32.xlu0 %v4658
          %v4660 = vpop.xlane.xlu0 %4659
          %v4661 = vrcp.pop 256.0
          %v4662 = vmul.f32 256.0, %v4661
          %v4663 = vsub.f32 1.0, %v4662
          %v4664 = vmul.f32 %v4661, %v4663
          %v4665 = vadd.f32 %v4661, %v4664
          %vm4666 = vweird.f32 %v4661
          %v4667 = vsel %vm4666, %v4661, %v4665
          %v4668 = vmul.f32 %v4615, %v4667
          %v4669 = vmul.f32 %v4618, %v4667
          %v4670 = vmul.f32 %v4621, %v4667
          %v4671 = vmul.f32 %v4624, %v4667
          %v4672 = vmul.f32 %v4627, %v4667
          %v4673 = vmul.f32 %v4630, %v4667
          %v4674 = vmul.f32 %v4633, %v4667
          %v4675 = vmul.f32 %v4636, %v4667
          %v4676 = vmul.f32 %v4639, %v4667
          %v4677 = vmul.f32 %v4642, %v4667
          %v4678 = vmul.f32 %v4645, %v4667
          %v4679 = vmul.f32 %v4648, %v4667
          %v4680 = vmul.f32 %v4651, %v4667
          %v4681 = vmul.f32 %v4654, %v4667
          %v4682 = vmul.f32 %v4657, %v4667
          %v4683 = vmul.f32 %v4660, %v4667
          %v4684 = vsub.f32 %v4579, %v4668
          %v4685 = vsub.f32 %v4580, %v4668
          %v4686 = vsub.f32 %v4581, %v4669
          %v4687 = vsub.f32 %v4582, %v4669
          %v4688 = vsub.f32 %v4583, %v4670
          %v4689 = vsub.f32 %v4584, %v4670
          %v4690 = vsub.f32 %v4585, %v4671
          %v4691 = vsub.f32 %v4586, %v4671
          %v4692 = vsub.f32 %v4587, %v4672
          %v4693 = vsub.f32 %v4588, %v4672
          %v4694 = vsub.f32 %v4589, %v4673
          %v4695 = vsub.f32 %v4590, %v4673
          %v4696 = vsub.f32 %v4591, %v4674
          %v4697 = vsub.f32 %v4592, %v4674
          %v4698 = vsub.f32 %v4593, %v4675
          %v4699 = vsub.f32 %v4594, %v4675
          %v4700 = vsub.f32 %v4595, %v4676
          %v4701 = vsub.f32 %v4596, %v4676
          %v4702 = vsub.f32 %v4597, %v4677
          %v4703 = vsub.f32 %v4598, %v4677
          %v4704 = vsub.f32 %v4599, %v4678
          %v4705 = vsub.f32 %v4600, %v4678
          %v4706 = vsub.f32 %v4601, %v4679
          %v4707 = vsub.f32 %v4602, %v4679
          %v4708 = vsub.f32 %v4603, %v4680
          %v4709 = vsub.f32 %v4604, %v4680
          %v4710 = vsub.f32 %v4605, %v4681
          %v4711 = vsub.f32 %v4606, %v4681
          %v4712 = vsub.f32 %v4607, %v4682
          %v4713 = vsub.f32 %v4608, %v4682
          %v4714 = vsub.f32 %v4609, %v4683
          %v4715 = vsub.f32 %v4610, %v4683
          %v4716 = vmul.f32 %v4684, %v4684
          %v4717 = vmul.f32 %v4685, %v4685
          %v4718 = vmul.f32 %v4686, %v4686
          %v4719 = vmul.f32 %v4687, %v4687
          %v4720 = vmul.f32 %v4688, %v4688
          %v4721 = vmul.f32 %v4689, %v4689
          %v4722 = vmul.f32 %v4690, %v4690
          %v4723 = vmul.f32 %v4691, %v4691
          %v4724 = vmul.f32 %v4692, %v4692
          %v4725 = vmul.f32 %v4693, %v4693
          %v4726 = vmul.f32 %v4694, %v4694
          %v4727 = vmul.f32 %v4695, %v4695
          %v4728 = vmul.f32 %v4696, %v4696
          %v4729 = vmul.f32 %v4697, %v4697
          %v4730 = vmul.f32 %v4698, %v4698
          %v4731 = vmul.f32 %v4699, %v4699
          %v4732 = vmul.f32 %v4700, %v4700
          %v4733 = vmul.f32 %v4701, %v4701
          %v4734 = vmul.f32 %v4702, %v4702
          %v4735 = vmul.f32 %v4703, %v4703
          %v4736 = vmul.f32 %v4704, %v4704
          %v4737 = vmul.f32 %v4705, %v4705
          %v4738 = vmul.f32 %v4706, %v4706
          %v4739 = vmul.f32 %v4707, %v4707
          %v4740 = vmul.f32 %v4708, %v4708
          %v4741 = vmul.f32 %v4709, %v4709
          %v4742 = vmul.f32 %v4710, %v4710
          %v4743 = vmul.f32 %v4711, %v4711
          %v4744 = vmul.f32 %v4712, %v4712
          %v4745 = vmul.f32 %v4713, %v4713
          %v4746 = vmul.f32 %v4714, %v4714
          %v4747 = vmul.f32 %v4715, %v4715
          %v4748 = vadd.f32 %v4716, %v4717
          %4749 = vadd.xlane.f32.xlu0 %v4748
          %v4750 = vpop.xlane.xlu0 %4749
          %v4751 = vadd.f32 %v4718, %v4719
          %4752 = vadd.xlane.f32.xlu0 %v4751
          %v4753 = vpop.xlane.xlu0 %4752
          %v4754 = vadd.f32 %v4720, %v4721
          %4755 = vadd.xlane.f32.xlu0 %v4754
          %v4756 = vpop.xlane.xlu0 %4755
          %v4757 = vadd.f32 %v4722, %v4723
          %4758 = vadd.xlane.f32.xlu0 %v4757
          %v4759 = vpop.xlane.xlu0 %4758
          %v4760 = vadd.f32 %v4724, %v4725
          %4761 = vadd.xlane.f32.xlu0 %v4760
          %v4762 = vpop.xlane.xlu0 %4761
          %v4763 = vadd.f32 %v4726, %v4727
          %4764 = vadd.xlane.f32.xlu0 %v4763
          %v4765 = vpop.xlane.xlu0 %4764
          %v4766 = vadd.f32 %v4728, %v4729
          %4767 = vadd.xlane.f32.xlu0 %v4766
          %v4768 = vpop.xlane.xlu0 %4767
          %v4769 = vadd.f32 %v4730, %v4731
          %4770 = vadd.xlane.f32.xlu0 %v4769
          %v4771 = vpop.xlane.xlu0 %4770
          %v4772 = vadd.f32 %v4732, %v4733
          %4773 = vadd.xlane.f32.xlu0 %v4772
          %v4774 = vpop.xlane.xlu0 %4773
          %v4775 = vadd.f32 %v4734, %v4735
          %4776 = vadd.xlane.f32.xlu0 %v4775
          %v4777 = vpop.xlane.xlu0 %4776
          %v4778 = vadd.f32 %v4736, %v4737
          %4779 = vadd.xlane.f32.xlu0 %v4778
          %v4780 = vpop.xlane.xlu0 %4779
          %v4781 = vadd.f32 %v4738, %v4739
          %4782 = vadd.xlane.f32.xlu0 %v4781
          %v4783 = vpop.xlane.xlu0 %4782
          %v4784 = vadd.f32 %v4740, %v4741
          %4785 = vadd.xlane.f32.xlu0 %v4784
          %v4786 = vpop.xlane.xlu0 %4785
          %v4787 = vadd.f32 %v4742, %v4743
          %4788 = vadd.xlane.f32.xlu0 %v4787
          %v4789 = vpop.xlane.xlu0 %4788
          %v4790 = vadd.f32 %v4744, %v4745
          %4791 = vadd.xlane.f32.xlu0 %v4790
          %v4792 = vpop.xlane.xlu0 %4791
          %v4793 = vadd.f32 %v4746, %v4747
          %4794 = vadd.xlane.f32.xlu0 %v4793
          %v4795 = vpop.xlane.xlu0 %4794
          %v4796 = vmul.f32 %v4750, %v4667
          %v4797 = vmul.f32 %v4753, %v4667
          %v4798 = vmul.f32 %v4756, %v4667
          %v4799 = vmul.f32 %v4759, %v4667
          %v4800 = vmul.f32 %v4762, %v4667
          %v4801 = vmul.f32 %v4765, %v4667
          %v4802 = vmul.f32 %v4768, %v4667
          %v4803 = vmul.f32 %v4771, %v4667
          %v4804 = vmul.f32 %v4774, %v4667
          %v4805 = vmul.f32 %v4777, %v4667
          %v4806 = vmul.f32 %v4780, %v4667
          %v4807 = vmul.f32 %v4783, %v4667
          %v4808 = vmul.f32 %v4786, %v4667
          %v4809 = vmul.f32 %v4789, %v4667
          %v4810 = vmul.f32 %v4792, %v4667
          %v4811 = vmul.f32 %v4795, %v4667
          %v4812 = vadd.f32 %v4796, 1e-05
          %v4813 = vadd.f32 %v4797, 1e-05
          %v4814 = vadd.f32 %v4798, 1e-05
          %v4815 = vadd.f32 %v4799, 1e-05
          %v4816 = vadd.f32 %v4800, 1e-05
          %v4817 = vadd.f32 %v4801, 1e-05
          %v4818 = vadd.f32 %v4802, 1e-05
          %v4819 = vadd.f32 %v4803, 1e-05
          %v4820 = vadd.f32 %v4804, 1e-05
          %v4821 = vadd.f32 %v4805, 1e-05
          %v4822 = vadd.f32 %v4806, 1e-05
          %v4823 = vadd.f32 %v4807, 1e-05
          %v4824 = vadd.f32 %v4808, 1e-05
          %v4825 = vadd.f32 %v4809, 1e-05
          %v4826 = vadd.f32 %v4810, 1e-05
          %v4827 = vadd.f32 %v4811, 1e-05
          %v4828 = vrsqrt.pop %v4812
          %v4829 = vmul.f32 %v4828, %v4812
          %v4830 = vmul.f32 %v4829, %v4828
          %v4831 = vmul.f32 0.5, %v4830
          %v4832 = vsub.f32 1.5, %v4831
          %v4833 = vmul.f32 %v4828, %v4832
          %vm4834 = vweird.f32 %v4812
          %vm4835 = vweird.f32 %v4828
          %vm4836 = vmor %vm4834, %vm4835
          %v4837 = vsel %vm4836, %v4828, %v4833
          %v4838 = vrsqrt.pop %v4813
          %v4839 = vmul.f32 %v4838, %v4813
          %v4840 = vmul.f32 %v4839, %v4838
          %v4841 = vmul.f32 0.5, %v4840
          %v4842 = vsub.f32 1.5, %v4841
          %v4843 = vmul.f32 %v4838, %v4842
          %vm4844 = vweird.f32 %v4813
          %vm4845 = vweird.f32 %v4838
          %vm4846 = vmor %vm4844, %vm4845
          %v4847 = vsel %vm4846, %v4838, %v4843
          %v4848 = vrsqrt.pop %v4814
          %v4849 = vmul.f32 %v4848, %v4814
          %v4850 = vmul.f32 %v4849, %v4848
          %v4851 = vmul.f32 0.5, %v4850
          %v4852 = vsub.f32 1.5, %v4851
          %v4853 = vmul.f32 %v4848, %v4852
          %vm4854 = vweird.f32 %v4814
          %vm4855 = vweird.f32 %v4848
          %vm4856 = vmor %vm4854, %vm4855
          %v4857 = vsel %vm4856, %v4848, %v4853
          %v4858 = vrsqrt.pop %v4815
          %v4859 = vmul.f32 %v4858, %v4815
          %v4860 = vmul.f32 %v4859, %v4858
          %v4861 = vmul.f32 0.5, %v4860
          %v4862 = vsub.f32 1.5, %v4861
          %v4863 = vmul.f32 %v4858, %v4862
          %vm4864 = vweird.f32 %v4815
          %vm4865 = vweird.f32 %v4858
          %vm4866 = vmor %vm4864, %vm4865
          %v4867 = vsel %vm4866, %v4858, %v4863
          %v4868 = vrsqrt.pop %v4816
          %v4869 = vmul.f32 %v4868, %v4816
          %v4870 = vmul.f32 %v4869, %v4868
          %v4871 = vmul.f32 0.5, %v4870
          %v4872 = vsub.f32 1.5, %v4871
          %v4873 = vmul.f32 %v4868, %v4872
          %vm4874 = vweird.f32 %v4816
          %vm4875 = vweird.f32 %v4868
          %vm4876 = vmor %vm4874, %vm4875
          %v4877 = vsel %vm4876, %v4868, %v4873
          %v4878 = vrsqrt.pop %v4817
          %v4879 = vmul.f32 %v4878, %v4817
          %v4880 = vmul.f32 %v4879, %v4878
          %v4881 = vmul.f32 0.5, %v4880
          %v4882 = vsub.f32 1.5, %v4881
          %v4883 = vmul.f32 %v4878, %v4882
          %vm4884 = vweird.f32 %v4817
          %vm4885 = vweird.f32 %v4878
          %vm4886 = vmor %vm4884, %vm4885
          %v4887 = vsel %vm4886, %v4878, %v4883
          %v4888 = vrsqrt.pop %v4818
          %v4889 = vmul.f32 %v4888, %v4818
          %v4890 = vmul.f32 %v4889, %v4888
          %v4891 = vmul.f32 0.5, %v4890
          %v4892 = vsub.f32 1.5, %v4891
          %v4893 = vmul.f32 %v4888, %v4892
          %vm4894 = vweird.f32 %v4818
          %vm4895 = vweird.f32 %v4888
          %vm4896 = vmor %vm4894, %vm4895
          %v4897 = vsel %vm4896, %v4888, %v4893
          %v4898 = vrsqrt.pop %v4819
          %v4899 = vmul.f32 %v4898, %v4819
          %v4900 = vmul.f32 %v4899, %v4898
          %v4901 = vmul.f32 0.5, %v4900
          %v4902 = vsub.f32 1.5, %v4901
          %v4903 = vmul.f32 %v4898, %v4902
          %vm4904 = vweird.f32 %v4819
          %vm4905 = vweird.f32 %v4898
          %vm4906 = vmor %vm4904, %vm4905
          %v4907 = vsel %vm4906, %v4898, %v4903
          %v4908 = vrsqrt.pop %v4820
          %v4909 = vmul.f32 %v4908, %v4820
          %v4910 = vmul.f32 %v4909, %v4908
          %v4911 = vmul.f32 0.5, %v4910
          %v4912 = vsub.f32 1.5, %v4911
          %v4913 = vmul.f32 %v4908, %v4912
          %vm4914 = vweird.f32 %v4820
          %vm4915 = vweird.f32 %v4908
          %vm4916 = vmor %vm4914, %vm4915
          %v4917 = vsel %vm4916, %v4908, %v4913
          %v4918 = vrsqrt.pop %v4821
          %v4919 = vmul.f32 %v4918, %v4821
          %v4920 = vmul.f32 %v4919, %v4918
          %v4921 = vmul.f32 0.5, %v4920
          %v4922 = vsub.f32 1.5, %v4921
          %v4923 = vmul.f32 %v4918, %v4922
          %vm4924 = vweird.f32 %v4821
          %vm4925 = vweird.f32 %v4918
          %vm4926 = vmor %vm4924, %vm4925
          %v4927 = vsel %vm4926, %v4918, %v4923
          %v4928 = vrsqrt.pop %v4822
          %v4929 = vmul.f32 %v4928, %v4822
          %v4930 = vmul.f32 %v4929, %v4928
          %v4931 = vmul.f32 0.5, %v4930
          %v4932 = vsub.f32 1.5, %v4931
          %v4933 = vmul.f32 %v4928, %v4932
          %vm4934 = vweird.f32 %v4822
          %vm4935 = vweird.f32 %v4928
          %vm4936 = vmor %vm4934, %vm4935
          %v4937 = vsel %vm4936, %v4928, %v4933
          %v4938 = vrsqrt.pop %v4823
          %v4939 = vmul.f32 %v4938, %v4823
          %v4940 = vmul.f32 %v4939, %v4938
          %v4941 = vmul.f32 0.5, %v4940
          %v4942 = vsub.f32 1.5, %v4941
          %v4943 = vmul.f32 %v4938, %v4942
          %vm4944 = vweird.f32 %v4823
          %vm4945 = vweird.f32 %v4938
          %vm4946 = vmor %vm4944, %vm4945
          %v4947 = vsel %vm4946, %v4938, %v4943
          %v4948 = vrsqrt.pop %v4824
          %v4949 = vmul.f32 %v4948, %v4824
          %v4950 = vmul.f32 %v4949, %v4948
          %v4951 = vmul.f32 0.5, %v4950
          %v4952 = vsub.f32 1.5, %v4951
          %v4953 = vmul.f32 %v4948, %v4952
          %vm4954 = vweird.f32 %v4824
          %vm4955 = vweird.f32 %v4948
          %vm4956 = vmor %vm4954, %vm4955
          %v4957 = vsel %vm4956, %v4948, %v4953
          %v4958 = vrsqrt.pop %v4825
          %v4959 = vmul.f32 %v4958, %v4825
          %v4960 = vmul.f32 %v4959, %v4958
          %v4961 = vmul.f32 0.5, %v4960
          %v4962 = vsub.f32 1.5, %v4961
          %v4963 = vmul.f32 %v4958, %v4962
          %vm4964 = vweird.f32 %v4825
          %vm4965 = vweird.f32 %v4958
          %vm4966 = vmor %vm4964, %vm4965
          %v4967 = vsel %vm4966, %v4958, %v4963
          %v4968 = vrsqrt.pop %v4826
          %v4969 = vmul.f32 %v4968, %v4826
          %v4970 = vmul.f32 %v4969, %v4968
          %v4971 = vmul.f32 0.5, %v4970
          %v4972 = vsub.f32 1.5, %v4971
          %v4973 = vmul.f32 %v4968, %v4972
          %vm4974 = vweird.f32 %v4826
          %vm4975 = vweird.f32 %v4968
          %vm4976 = vmor %vm4974, %vm4975
          %v4977 = vsel %vm4976, %v4968, %v4973
          %v4978 = vrsqrt.pop %v4827
          %v4979 = vmul.f32 %v4978, %v4827
          %v4980 = vmul.f32 %v4979, %v4978
          %v4981 = vmul.f32 0.5, %v4980
          %v4982 = vsub.f32 1.5, %v4981
          %v4983 = vmul.f32 %v4978, %v4982
          %vm4984 = vweird.f32 %v4827
          %vm4985 = vweird.f32 %v4978
          %vm4986 = vmor %vm4984, %vm4985
          %v4987 = vsel %vm4986, %v4978, %v4983
          %v4988 = vmul.f32 %v4684, %v4837
          %v4989 = vmul.f32 %v4685, %v4837
          %v4990 = vmul.f32 %v4686, %v4847
          %v4991 = vmul.f32 %v4687, %v4847
          %v4992 = vmul.f32 %v4688, %v4857
          %v4993 = vmul.f32 %v4689, %v4857
          %v4994 = vmul.f32 %v4690, %v4867
          %v4995 = vmul.f32 %v4691, %v4867
          %v4996 = vmul.f32 %v4692, %v4877
          %v4997 = vmul.f32 %v4693, %v4877
          %v4998 = vmul.f32 %v4694, %v4887
          %v4999 = vmul.f32 %v4695, %v4887
          %v5000 = vmul.f32 %v4696, %v4897
          %v5001 = vmul.f32 %v4697, %v4897
          %v5002 = vmul.f32 %v4698, %v4907
          %v5003 = vmul.f32 %v4699, %v4907
          %v5004 = vmul.f32 %v4700, %v4917
          %v5005 = vmul.f32 %v4701, %v4917
          %v5006 = vmul.f32 %v4702, %v4927
          %v5007 = vmul.f32 %v4703, %v4927
          %v5008 = vmul.f32 %v4704, %v4937
          %v5009 = vmul.f32 %v4705, %v4937
          %v5010 = vmul.f32 %v4706, %v4947
          %v5011 = vmul.f32 %v4707, %v4947
          %v5012 = vmul.f32 %v4708, %v4957
          %v5013 = vmul.f32 %v4709, %v4957
          %v5014 = vmul.f32 %v4710, %v4967
          %v5015 = vmul.f32 %v4711, %v4967
          %v5016 = vmul.f32 %v4712, %v4977
          %v5017 = vmul.f32 %v4713, %v4977
          %v5018 = vmul.f32 %v4714, %v4987
          %v5019 = vmul.f32 %v4715, %v4987
          %v5021 = vperm.slane %v4611, 0
          %v5022 = vperm.slane %v4611, 1
          %v5025 = vmul.f32 %v4988, %v5021
          %v5026 = vmul.f32 %v4989, %v5022
          %v5027 = vmul.f32 %v4990, %v5021
          %v5028 = vmul.f32 %v4991, %v5022
          %v5029 = vmul.f32 %v4992, %v5021
          %v5030 = vmul.f32 %v4993, %v5022
          %v5031 = vmul.f32 %v4994, %v5021
          %v5032 = vmul.f32 %v4995, %v5022
          %v5033 = vmul.f32 %v4996, %v5021
          %v5034 = vmul.f32 %v4997, %v5022
          %v5035 = vmul.f32 %v4998, %v5021
          %v5036 = vmul.f32 %v4999, %v5022
          %v5037 = vmul.f32 %v5000, %v5021
          %v5038 = vmul.f32 %v5001, %v5022
          %v5039 = vmul.f32 %v5002, %v5021
          %v5040 = vmul.f32 %v5003, %v5022
          %v5041 = vmul.f32 %v5004, %v5021
          %v5042 = vmul.f32 %v5005, %v5022
          %v5043 = vmul.f32 %v5006, %v5021
          %v5044 = vmul.f32 %v5007, %v5022
          %v5045 = vmul.f32 %v5008, %v5021
          %v5046 = vmul.f32 %v5009, %v5022
          %v5047 = vmul.f32 %v5010, %v5021
          %v5048 = vmul.f32 %v5011, %v5022
          %v5049 = vmul.f32 %v5012, %v5021
          %v5050 = vmul.f32 %v5013, %v5022
          %v5051 = vmul.f32 %v5014, %v5021
          %v5052 = vmul.f32 %v5015, %v5022
          %v5053 = vmul.f32 %v5016, %v5021
          %v5054 = vmul.f32 %v5017, %v5022
          %v5055 = vmul.f32 %v5018, %v5021
          %v5056 = vmul.f32 %v5019, %v5022
          %v5058 = vperm.slane %v4612, 0
          %v5059 = vperm.slane %v4612, 1
          %v5062 = vadd.f32 %v5025, %v5058
          %v5063 = vadd.f32 %v5026, %v5059
          %v5064 = vadd.f32 %v5027, %v5058
          %v5065 = vadd.f32 %v5028, %v5059
          %v5066 = vadd.f32 %v5029, %v5058
          %v5067 = vadd.f32 %v5030, %v5059
          %v5068 = vadd.f32 %v5031, %v5058
          %v5069 = vadd.f32 %v5032, %v5059
          %v5070 = vadd.f32 %v5033, %v5058
          %v5071 = vadd.f32 %v5034, %v5059
          %v5072 = vadd.f32 %v5035, %v5058
          %v5073 = vadd.f32 %v5036, %v5059
          %v5074 = vadd.f32 %v5037, %v5058
          %v5075 = vadd.f32 %v5038, %v5059
          %v5076 = vadd.f32 %v5039, %v5058
          %v5077 = vadd.f32 %v5040, %v5059
          %v5078 = vadd.f32 %v5041, %v5058
          %v5079 = vadd.f32 %v5042, %v5059
          %v5080 = vadd.f32 %v5043, %v5058
          %v5081 = vadd.f32 %v5044, %v5059
          %v5082 = vadd.f32 %v5045, %v5058
          %v5083 = vadd.f32 %v5046, %v5059
          %v5084 = vadd.f32 %v5047, %v5058
          %v5085 = vadd.f32 %v5048, %v5059
          %v5086 = vadd.f32 %v5049, %v5058
          %v5087 = vadd.f32 %v5050, %v5059
          %v5088 = vadd.f32 %v5051, %v5058
          %v5089 = vadd.f32 %v5052, %v5059
          %v5090 = vadd.f32 %v5053, %v5058
          %v5091 = vadd.f32 %v5054, %v5059
          %v5092 = vadd.f32 %v5055, %v5058
          %v5093 = vadd.f32 %v5056, %v5059
          %v5094 = vpack.c.bf16 %v5064, %v5062
          %v5095 = vpack.c.bf16 %v5065, %v5063
          %v5096 = vpack.c.bf16 %v5068, %v5066
          %v5097 = vpack.c.bf16 %v5069, %v5067
          %v5098 = vpack.c.bf16 %v5072, %v5070
          %v5099 = vpack.c.bf16 %v5073, %v5071
          %v5100 = vpack.c.bf16 %v5076, %v5074
          %v5101 = vpack.c.bf16 %v5077, %v5075
          %v5102 = vpack.c.bf16 %v5080, %v5078
          %v5103 = vpack.c.bf16 %v5081, %v5079
          %v5104 = vpack.c.bf16 %v5084, %v5082
          %v5105 = vpack.c.bf16 %v5085, %v5083
          %v5106 = vpack.c.bf16 %v5088, %v5086
          %v5107 = vpack.c.bf16 %v5089, %v5087
          %v5108 = vpack.c.bf16 %v5092, %v5090
          %v5109 = vpack.c.bf16 %v5093, %v5091
          %v5110 = vld [vmem:[#allocation21] sm:$0xf]
          %v5111 = vld [vmem:[#allocation21 + $0x4] sm:$0xf]
          %v5112 = vld [vmem:[#allocation21 + $0x8] sm:$0xf]
          %v5113 = vld [vmem:[#allocation21 + $0xc] sm:$0xf]
          %v5114 = vld [vmem:[#allocation21 + $0x10] sm:$0xf]
          %v5115 = vld [vmem:[#allocation21 + $0x14] sm:$0xf]
          %v5116 = vld [vmem:[#allocation21 + $0x18] sm:$0xf]
          %v5117 = vld [vmem:[#allocation21 + $0x1c] sm:$0xf]
          %v5118 = vld [vmem:[#allocation21 + $0x20] sm:$0xf]
          %v5119 = vld [vmem:[#allocation21 + $0x24] sm:$0xf]
          %v5120 = vld [vmem:[#allocation21 + $0x28] sm:$0xf]
          %v5121 = vld [vmem:[#allocation21 + $0x2c] sm:$0xf]
          %v5122 = vld [vmem:[#allocation21 + $0x30] sm:$0xf]
          %v5123 = vld [vmem:[#allocation21 + $0x34] sm:$0xf]
          %v5124 = vld [vmem:[#allocation21 + $0x38] sm:$0xf]
          %v5125 = vld [vmem:[#allocation21 + $0x3c] sm:$0xf]
          %v5126 = vld [vmem:[#allocation21 + $0x40] sm:$0xf]
          %v5127 = vld [vmem:[#allocation21 + $0x44] sm:$0xf]
          %v5128 = vld [vmem:[#allocation21 + $0x48] sm:$0xf]
          %v5129 = vld [vmem:[#allocation21 + $0x4c] sm:$0xf]
          %v5130 = vld [vmem:[#allocation21 + $0x50] sm:$0xf]
          %v5131 = vld [vmem:[#allocation21 + $0x54] sm:$0xf]
          %v5132 = vld [vmem:[#allocation21 + $0x58] sm:$0xf]
          %v5133 = vld [vmem:[#allocation21 + $0x5c] sm:$0xf]
          %v5134 = vld [vmem:[#allocation21 + $0x60] sm:$0xf]
          %v5135 = vld [vmem:[#allocation21 + $0x64] sm:$0xf]
          %v5136 = vld [vmem:[#allocation21 + $0x68] sm:$0xf]
          %v5137 = vld [vmem:[#allocation21 + $0x6c] sm:$0xf]
          %v5138 = vld [vmem:[#allocation21 + $0x70] sm:$0xf]
          %v5139 = vld [vmem:[#allocation21 + $0x74] sm:$0xf]
          %v5140 = vld [vmem:[#allocation21 + $0x78] sm:$0xf]
          %v5141 = vld [vmem:[#allocation21 + $0x7c] sm:$0xf]
          %v5174 = vunpack.c.l.b16 %v5110
          %v5175 = vunpack.c.l.b16 %v5111
          %v5176 = vunpack.c.l.b16 %v5112
          %v5177 = vunpack.c.l.b16 %v5113
          %v5178 = vunpack.c.l.b16 %v5114
          %v5179 = vunpack.c.l.b16 %v5115
          %v5180 = vunpack.c.l.b16 %v5116
          %v5181 = vunpack.c.l.b16 %v5117
          %v5182 = vunpack.c.l.b16 %v5118
          %v5183 = vunpack.c.l.b16 %v5119
          %v5184 = vunpack.c.l.b16 %v5120
          %v5185 = vunpack.c.l.b16 %v5121
          %v5186 = vunpack.c.l.b16 %v5122
          %v5187 = vunpack.c.l.b16 %v5123
          %v5188 = vunpack.c.l.b16 %v5124
          %v5189 = vunpack.c.l.b16 %v5125
          %v5190 = vunpack.c.l.b16 %v5126
          %v5191 = vunpack.c.l.b16 %v5127
          %v5192 = vunpack.c.l.b16 %v5128
          %v5193 = vunpack.c.l.b16 %v5129
          %v5194 = vunpack.c.l.b16 %v5130
          %v5195 = vunpack.c.l.b16 %v5131
          %v5196 = vunpack.c.l.b16 %v5132
          %v5197 = vunpack.c.l.b16 %v5133
          %v5198 = vunpack.c.l.b16 %v5134
          %v5199 = vunpack.c.l.b16 %v5135
          %v5200 = vunpack.c.l.b16 %v5136
          %v5201 = vunpack.c.l.b16 %v5137
          %v5202 = vunpack.c.l.b16 %v5138
          %v5203 = vunpack.c.l.b16 %v5139
          %v5204 = vunpack.c.l.b16 %v5140
          %v5205 = vunpack.c.l.b16 %v5141
          %v5206 = vpack.c.b16 %v5175, %v5174
          %v5207 = vpack.c.b16 %v5177, %v5176
          %v5208 = vpack.c.b16 %v5179, %v5178
          %v5209 = vpack.c.b16 %v5181, %v5180
          %v5210 = vpack.c.b16 %v5183, %v5182
          %v5211 = vpack.c.b16 %v5185, %v5184
          %v5212 = vpack.c.b16 %v5187, %v5186
          %v5213 = vpack.c.b16 %v5189, %v5188
          %v5214 = vpack.c.b16 %v5191, %v5190
          %v5215 = vpack.c.b16 %v5193, %v5192
          %v5216 = vpack.c.b16 %v5195, %v5194
          %v5217 = vpack.c.b16 %v5197, %v5196
          %v5218 = vpack.c.b16 %v5199, %v5198
          %v5219 = vpack.c.b16 %v5201, %v5200
          %v5220 = vpack.c.b16 %v5203, %v5202
          %v5221 = vpack.c.b16 %v5205, %v5204
          %5238 = vmatpush.bf16.msra.mxu0 %v5213
          %5239 = vmatpush.bf16.msra.mxu0 %v5212
          %5240 = vmatpush.bf16.msra.mxu0 %v5211
          %5241 = vmatpush.bf16.msra.mxu0 %v5210
          %5242 = vmatpush.bf16.msra.mxu0 %v5209
          %5243 = vmatpush.bf16.msra.mxu0 %v5208
          %5244 = vmatpush.bf16.msra.mxu0 %v5207
          %5245 = vmatpush.bf16.msra.mxu0 %v5206
          %5246 = vmatmul.bf16.gmra.mxu0 %v5094
          %v5247 = vpop.f32.mrf.mxu0
          %v5248 = vadd.f32 0.0, %v5247
          %v5249 = vpop.f32.mrf.mxu0
          %v5250 = vadd.f32 0.0, %v5249
          %5251 = vmatmul.bf16.gmra.mxu0 %v5096
          %v5252 = vpop.f32.mrf.mxu0
          %v5253 = vadd.f32 0.0, %v5252
          %v5254 = vpop.f32.mrf.mxu0
          %v5255 = vadd.f32 0.0, %v5254
          %5256 = vmatmul.bf16.gmra.mxu0 %v5098
          %v5257 = vpop.f32.mrf.mxu0
          %v5258 = vadd.f32 0.0, %v5257
          %v5259 = vpop.f32.mrf.mxu0
          %v5260 = vadd.f32 0.0, %v5259
          %5261 = vmatmul.bf16.gmra.mxu0 %v5100
          %v5262 = vpop.f32.mrf.mxu0
          %v5263 = vadd.f32 0.0, %v5262
          %v5264 = vpop.f32.mrf.mxu0
          %v5265 = vadd.f32 0.0, %v5264
          %5266 = vmatmul.bf16.gmra.mxu0 %v5102
          %v5267 = vpop.f32.mrf.mxu0
          %v5268 = vadd.f32 0.0, %v5267
          %v5269 = vpop.f32.mrf.mxu0
          %v5270 = vadd.f32 0.0, %v5269
          %5271 = vmatmul.bf16.gmra.mxu0 %v5104
          %v5272 = vpop.f32.mrf.mxu0
          %v5273 = vadd.f32 0.0, %v5272
          %v5274 = vpop.f32.mrf.mxu0
          %v5275 = vadd.f32 0.0, %v5274
          %5276 = vmatmul.bf16.gmra.mxu0 %v5106
          %v5277 = vpop.f32.mrf.mxu0
          %v5278 = vadd.f32 0.0, %v5277
          %v5279 = vpop.f32.mrf.mxu0
          %v5280 = vadd.f32 0.0, %v5279
          %5281 = vmatmul.bf16.gmra.mxu0 %v5108
          %v5282 = vpop.f32.mrf.mxu0
          %v5283 = vadd.f32 0.0, %v5282
          %v5284 = vpop.f32.mrf.mxu0
          %v5285 = vadd.f32 0.0, %v5284
          %5286 = vdwg.mxu0
          %5287 = vmatpush.bf16.msra.mxu0 %v5221
          %5288 = vmatpush.bf16.msra.mxu0 %v5220
          %5289 = vmatpush.bf16.msra.mxu0 %v5219
          %5290 = vmatpush.bf16.msra.mxu0 %v5218
          %5291 = vmatpush.bf16.msra.mxu0 %v5217
          %5292 = vmatpush.bf16.msra.mxu0 %v5216
          %5293 = vmatpush.bf16.msra.mxu0 %v5215
          %5294 = vmatpush.bf16.msra.mxu0 %v5214
          %5295 = vmatmul.bf16.gmra.mxu0 %v5095
          %v5296 = vpop.f32.mrf.mxu0
          %v5297 = vadd.f32 %v5248, %v5296
          %v5298 = vpop.f32.mrf.mxu0
          %v5299 = vadd.f32 %v5250, %v5298
          %5300 = vmatmul.bf16.gmra.mxu0 %v5097
          %v5301 = vpop.f32.mrf.mxu0
          %v5302 = vadd.f32 %v5253, %v5301
          %v5303 = vpop.f32.mrf.mxu0
          %v5304 = vadd.f32 %v5255, %v5303
          %5305 = vmatmul.bf16.gmra.mxu0 %v5099
          %v5306 = vpop.f32.mrf.mxu0
          %v5307 = vadd.f32 %v5258, %v5306
          %v5308 = vpop.f32.mrf.mxu0
          %v5309 = vadd.f32 %v5260, %v5308
          %5310 = vmatmul.bf16.gmra.mxu0 %v5101
          %v5311 = vpop.f32.mrf.mxu0
          %v5312 = vadd.f32 %v5263, %v5311
          %v5313 = vpop.f32.mrf.mxu0
          %v5314 = vadd.f32 %v5265, %v5313
          %5315 = vmatmul.bf16.gmra.mxu0 %v5103
          %v5316 = vpop.f32.mrf.mxu0
          %v5317 = vadd.f32 %v5268, %v5316
          %v5318 = vpop.f32.mrf.mxu0
          %v5319 = vadd.f32 %v5270, %v5318
          %5320 = vmatmul.bf16.gmra.mxu0 %v5105
          %v5321 = vpop.f32.mrf.mxu0
          %v5322 = vadd.f32 %v5273, %v5321
          %v5323 = vpop.f32.mrf.mxu0
          %v5324 = vadd.f32 %v5275, %v5323
          %5325 = vmatmul.bf16.gmra.mxu0 %v5107
          %v5326 = vpop.f32.mrf.mxu0
          %v5327 = vadd.f32 %v5278, %v5326
          %v5328 = vpop.f32.mrf.mxu0
          %v5329 = vadd.f32 %v5280, %v5328
          %5330 = vmatmul.bf16.gmra.mxu0 %v5109
          %v5331 = vpop.f32.mrf.mxu0
          %v5332 = vadd.f32 %v5283, %v5331
          %v5333 = vpop.f32.mrf.mxu0
          %v5334 = vadd.f32 %v5285, %v5333
          %5335 = vdwg.mxu0
          %v5336 = vpack.c.bf16 %v5299, %v5297
          %v5337 = vpack.c.bf16 %v5304, %v5302
          %v5338 = vpack.c.bf16 %v5309, %v5307
          %v5339 = vpack.c.bf16 %v5314, %v5312
          %v5340 = vpack.c.bf16 %v5319, %v5317
          %v5341 = vpack.c.bf16 %v5324, %v5322
          %v5342 = vpack.c.bf16 %v5329, %v5327
          %v5343 = vpack.c.bf16 %v5334, %v5332
          %v5344 = vld [vmem:[#allocation23] sm:$0xff]
          %v5345 = vld [vmem:[#allocation23 + $0x8] sm:$0xff]
          %v5346 = vld [vmem:[#allocation23 + $0x10] sm:$0xff]
          %v5347 = vld [vmem:[#allocation23 + $0x18] sm:$0xff]
          %v5348 = vld [vmem:[#allocation23 + $0x20] sm:$0xff]
          %v5349 = vld [vmem:[#allocation23 + $0x28] sm:$0xff]
          %v5350 = vld [vmem:[#allocation23 + $0x30] sm:$0xff]
          %v5351 = vld [vmem:[#allocation23 + $0x38] sm:$0xff]
          %v5352 = vld [vmem:[#allocation23 + $0x40] sm:$0xff]
          %v5353 = vld [vmem:[#allocation23 + $0x48] sm:$0xff]
          %v5354 = vld [vmem:[#allocation23 + $0x50] sm:$0xff]
          %v5355 = vld [vmem:[#allocation23 + $0x58] sm:$0xff]
          %v5356 = vld [vmem:[#allocation23 + $0x60] sm:$0xff]
          %v5357 = vld [vmem:[#allocation23 + $0x68] sm:$0xff]
          %v5358 = vld [vmem:[#allocation23 + $0x70] sm:$0xff]
          %v5359 = vld [vmem:[#allocation23 + $0x78] sm:$0xff]
          %v5360 = vld [vmem:[#allocation23 + $0x80] sm:$0xff]
          %v5361 = vld [vmem:[#allocation23 + $0x88] sm:$0xff]
          %v5362 = vld [vmem:[#allocation23 + $0x90] sm:$0xff]
          %v5363 = vld [vmem:[#allocation23 + $0x98] sm:$0xff]
          %v5364 = vld [vmem:[#allocation23 + $0xa0] sm:$0xff]
          %v5365 = vld [vmem:[#allocation23 + $0xa8] sm:$0xff]
          %v5366 = vld [vmem:[#allocation23 + $0xb0] sm:$0xff]
          %v5367 = vld [vmem:[#allocation23 + $0xb8] sm:$0xff]
          %v5368 = vld [vmem:[#allocation23 + $0xc0] sm:$0xff]
          %v5369 = vld [vmem:[#allocation23 + $0xc8] sm:$0xff]
          %v5370 = vld [vmem:[#allocation23 + $0xd0] sm:$0xff]
          %v5371 = vld [vmem:[#allocation23 + $0xd8] sm:$0xff]
          %v5372 = vld [vmem:[#allocation23 + $0xe0] sm:$0xff]
          %v5373 = vld [vmem:[#allocation23 + $0xe8] sm:$0xff]
          %v5374 = vld [vmem:[#allocation23 + $0xf0] sm:$0xff]
          %v5375 = vld [vmem:[#allocation23 + $0xf8] sm:$0xff]
          %v5376 = vld [vmem:[%s12] sm:$0xf]
          %v5378 = vperm.slane %v5376, 0
          %v5379 = vperm.slane %v5376, 1
          %v5380 = vperm.slane %v5376, 2
          %v5381 = vperm.slane %v5376, 3
          %v5418 = vunpack.c.l.b16 %v5344
          %v5419 = vunpack.c.h.b16 %v5344
          %v5420 = vunpack.c.l.b16 %v5345
          %v5421 = vunpack.c.h.b16 %v5345
          %v5422 = vunpack.c.l.b16 %v5346
          %v5423 = vunpack.c.h.b16 %v5346
          %v5424 = vunpack.c.l.b16 %v5347
          %v5425 = vunpack.c.h.b16 %v5347
          %v5426 = vunpack.c.l.b16 %v5348
          %v5427 = vunpack.c.h.b16 %v5348
          %v5428 = vunpack.c.l.b16 %v5349
          %v5429 = vunpack.c.h.b16 %v5349
          %v5430 = vunpack.c.l.b16 %v5350
          %v5431 = vunpack.c.h.b16 %v5350
          %v5432 = vunpack.c.l.b16 %v5351
          %v5433 = vunpack.c.h.b16 %v5351
          %v5434 = vunpack.c.l.b16 %v5352
          %v5435 = vunpack.c.h.b16 %v5352
          %v5436 = vunpack.c.l.b16 %v5353
          %v5437 = vunpack.c.h.b16 %v5353
          %v5438 = vunpack.c.l.b16 %v5354
          %v5439 = vunpack.c.h.b16 %v5354
          %v5440 = vunpack.c.l.b16 %v5355
          %v5441 = vunpack.c.h.b16 %v5355
          %v5442 = vunpack.c.l.b16 %v5356
          %v5443 = vunpack.c.h.b16 %v5356
          %v5444 = vunpack.c.l.b16 %v5357
          %v5445 = vunpack.c.h.b16 %v5357
          %v5446 = vunpack.c.l.b16 %v5358
          %v5447 = vunpack.c.h.b16 %v5358
          %v5448 = vunpack.c.l.b16 %v5359
          %v5449 = vunpack.c.h.b16 %v5359
          %v5450 = vunpack.c.l.b16 %v5360
          %v5451 = vunpack.c.h.b16 %v5360
          %v5452 = vunpack.c.l.b16 %v5361
          %v5453 = vunpack.c.h.b16 %v5361
          %v5454 = vunpack.c.l.b16 %v5362
          %v5455 = vunpack.c.h.b16 %v5362
          %v5456 = vunpack.c.l.b16 %v5363
          %v5457 = vunpack.c.h.b16 %v5363
          %v5458 = vunpack.c.l.b16 %v5364
          %v5459 = vunpack.c.h.b16 %v5364
          %v5460 = vunpack.c.l.b16 %v5365
          %v5461 = vunpack.c.h.b16 %v5365
          %v5462 = vunpack.c.l.b16 %v5366
          %v5463 = vunpack.c.h.b16 %v5366
          %v5464 = vunpack.c.l.b16 %v5367
          %v5465 = vunpack.c.h.b16 %v5367
          %v5466 = vunpack.c.l.b16 %v5368
          %v5467 = vunpack.c.h.b16 %v5368
          %v5468 = vunpack.c.l.b16 %v5369
          %v5469 = vunpack.c.h.b16 %v5369
          %v5470 = vunpack.c.l.b16 %v5370
          %v5471 = vunpack.c.h.b16 %v5370
          %v5472 = vunpack.c.l.b16 %v5371
          %v5473 = vunpack.c.h.b16 %v5371
          %v5474 = vunpack.c.l.b16 %v5372
          %v5475 = vunpack.c.h.b16 %v5372
          %v5476 = vunpack.c.l.b16 %v5373
          %v5477 = vunpack.c.h.b16 %v5373
          %v5478 = vunpack.c.l.b16 %v5374
          %v5479 = vunpack.c.h.b16 %v5374
          %v5480 = vunpack.c.l.b16 %v5375
          %v5481 = vunpack.c.h.b16 %v5375
          %v5482 = vpack.c.b16 %v5422, %v5418
          %v5483 = vpack.c.b16 %v5423, %v5419
          %v5484 = vpack.c.b16 %v5424, %v5420
          %v5485 = vpack.c.b16 %v5425, %v5421
          %v5486 = vpack.c.b16 %v5430, %v5426
          %v5487 = vpack.c.b16 %v5431, %v5427
          %v5488 = vpack.c.b16 %v5432, %v5428
          %v5489 = vpack.c.b16 %v5433, %v5429
          %v5490 = vpack.c.b16 %v5438, %v5434
          %v5491 = vpack.c.b16 %v5439, %v5435
          %v5492 = vpack.c.b16 %v5440, %v5436
          %v5493 = vpack.c.b16 %v5441, %v5437
          %v5494 = vpack.c.b16 %v5446, %v5442
          %v5495 = vpack.c.b16 %v5447, %v5443
          %v5496 = vpack.c.b16 %v5448, %v5444
          %v5497 = vpack.c.b16 %v5449, %v5445
          %v5498 = vpack.c.b16 %v5454, %v5450
          %v5499 = vpack.c.b16 %v5455, %v5451
          %v5500 = vpack.c.b16 %v5456, %v5452
          %v5501 = vpack.c.b16 %v5457, %v5453
          %v5502 = vpack.c.b16 %v5462, %v5458
          %v5503 = vpack.c.b16 %v5463, %v5459
          %v5504 = vpack.c.b16 %v5464, %v5460
          %v5505 = vpack.c.b16 %v5465, %v5461
          %v5506 = vpack.c.b16 %v5470, %v5466
          %v5507 = vpack.c.b16 %v5471, %v5467
          %v5508 = vpack.c.b16 %v5472, %v5468
          %v5509 = vpack.c.b16 %v5473, %v5469
          %v5510 = vpack.c.b16 %v5478, %v5474
          %v5511 = vpack.c.b16 %v5479, %v5475
          %v5512 = vpack.c.b16 %v5480, %v5476
          %v5513 = vpack.c.b16 %v5481, %v5477
          %5546 = vmatpush.bf16.msra.mxu0 %v5510
          %5547 = vmatpush.bf16.msra.mxu0 %v5506
          %5548 = vmatpush.bf16.msra.mxu0 %v5502
          %5549 = vmatpush.bf16.msra.mxu0 %v5498
          %5550 = vmatpush.bf16.msra.mxu0 %v5494
          %5551 = vmatpush.bf16.msra.mxu0 %v5490
          %5552 = vmatpush.bf16.msra.mxu0 %v5486
          %5553 = vmatpush.bf16.msra.mxu0 %v5482
          %5554 = vmatmul.bf16.gmra.mxu0 %v5336
          %v5555 = vpop.f32.mrf.mxu0
          %v5556 = vadd.f32 %v5378, %v5555
          %v5557 = vpop.f32.mrf.mxu0
          %v5558 = vadd.f32 %v5378, %v5557
          %5559 = vmatmul.bf16.gmra.mxu0 %v5337
          %v5560 = vpop.f32.mrf.mxu0
          %v5561 = vadd.f32 %v5378, %v5560
          %v5562 = vpop.f32.mrf.mxu0
          %v5563 = vadd.f32 %v5378, %v5562
          %5564 = vmatmul.bf16.gmra.mxu0 %v5338
          %v5565 = vpop.f32.mrf.mxu0
          %v5566 = vadd.f32 %v5378, %v5565
          %v5567 = vpop.f32.mrf.mxu0
          %v5568 = vadd.f32 %v5378, %v5567
          %5569 = vmatmul.bf16.gmra.mxu0 %v5339
          %v5570 = vpop.f32.mrf.mxu0
          %v5571 = vadd.f32 %v5378, %v5570
          %v5572 = vpop.f32.mrf.mxu0
          %v5573 = vadd.f32 %v5378, %v5572
          %5574 = vmatmul.bf16.gmra.mxu0 %v5340
          %v5575 = vpop.f32.mrf.mxu0
          %v5576 = vadd.f32 %v5378, %v5575
          %v5577 = vpop.f32.mrf.mxu0
          %v5578 = vadd.f32 %v5378, %v5577
          %5579 = vmatmul.bf16.gmra.mxu0 %v5341
          %v5580 = vpop.f32.mrf.mxu0
          %v5581 = vadd.f32 %v5378, %v5580
          %v5582 = vpop.f32.mrf.mxu0
          %v5583 = vadd.f32 %v5378, %v5582
          %5584 = vmatmul.bf16.gmra.mxu0 %v5342
          %v5585 = vpop.f32.mrf.mxu0
          %v5586 = vadd.f32 %v5378, %v5585
          %v5587 = vpop.f32.mrf.mxu0
          %v5588 = vadd.f32 %v5378, %v5587
          %5589 = vmatmul.bf16.gmra.mxu0 %v5343
          %v5590 = vpop.f32.mrf.mxu0
          %v5591 = vadd.f32 %v5378, %v5590
          %v5592 = vpop.f32.mrf.mxu0
          %v5593 = vadd.f32 %v5378, %v5592
          %5594 = vdwg.mxu0
          %5595 = vmatpush.bf16.msra.mxu0 %v5511
          %5596 = vmatpush.bf16.msra.mxu0 %v5507
          %5597 = vmatpush.bf16.msra.mxu0 %v5503
          %5598 = vmatpush.bf16.msra.mxu0 %v5499
          %5599 = vmatpush.bf16.msra.mxu0 %v5495
          %5600 = vmatpush.bf16.msra.mxu0 %v5491
          %5601 = vmatpush.bf16.msra.mxu0 %v5487
          %5602 = vmatpush.bf16.msra.mxu0 %v5483
          %5603 = vmatmul.bf16.gmra.mxu0 %v5336
          %v5604 = vpop.f32.mrf.mxu0
          %v5605 = vadd.f32 %v5379, %v5604
          %v5606 = vpop.f32.mrf.mxu0
          %v5607 = vadd.f32 %v5379, %v5606
          %5608 = vmatmul.bf16.gmra.mxu0 %v5337
          %v5609 = vpop.f32.mrf.mxu0
          %v5610 = vadd.f32 %v5379, %v5609
          %v5611 = vpop.f32.mrf.mxu0
          %v5612 = vadd.f32 %v5379, %v5611
          %5613 = vmatmul.bf16.gmra.mxu0 %v5338
          %v5614 = vpop.f32.mrf.mxu0
          %v5615 = vadd.f32 %v5379, %v5614
          %v5616 = vpop.f32.mrf.mxu0
          %v5617 = vadd.f32 %v5379, %v5616
          %5618 = vmatmul.bf16.gmra.mxu0 %v5339
          %v5619 = vpop.f32.mrf.mxu0
          %v5620 = vadd.f32 %v5379, %v5619
          %v5621 = vpop.f32.mrf.mxu0
          %v5622 = vadd.f32 %v5379, %v5621
          %5623 = vmatmul.bf16.gmra.mxu0 %v5340
          %v5624 = vpop.f32.mrf.mxu0
          %v5625 = vadd.f32 %v5379, %v5624
          %v5626 = vpop.f32.mrf.mxu0
          %v5627 = vadd.f32 %v5379, %v5626
          %5628 = vmatmul.bf16.gmra.mxu0 %v5341
          %v5629 = vpop.f32.mrf.mxu0
          %v5630 = vadd.f32 %v5379, %v5629
          %v5631 = vpop.f32.mrf.mxu0
          %v5632 = vadd.f32 %v5379, %v5631
          %5633 = vmatmul.bf16.gmra.mxu0 %v5342
          %v5634 = vpop.f32.mrf.mxu0
          %v5635 = vadd.f32 %v5379, %v5634
          %v5636 = vpop.f32.mrf.mxu0
          %v5637 = vadd.f32 %v5379, %v5636
          %5638 = vmatmul.bf16.gmra.mxu0 %v5343
          %v5639 = vpop.f32.mrf.mxu0
          %v5640 = vadd.f32 %v5379, %v5639
          %v5641 = vpop.f32.mrf.mxu0
          %v5642 = vadd.f32 %v5379, %v5641
          %5643 = vdwg.mxu0
          %5644 = vmatpush.bf16.msra.mxu0 %v5512
          %5645 = vmatpush.bf16.msra.mxu0 %v5508
          %5646 = vmatpush.bf16.msra.mxu0 %v5504
          %5647 = vmatpush.bf16.msra.mxu0 %v5500
          %5648 = vmatpush.bf16.msra.mxu0 %v5496
          %5649 = vmatpush.bf16.msra.mxu0 %v5492
          %5650 = vmatpush.bf16.msra.mxu0 %v5488
          %5651 = vmatpush.bf16.msra.mxu0 %v5484
          %5652 = vmatmul.bf16.gmra.mxu0 %v5336
          %v5653 = vpop.f32.mrf.mxu0
          %v5654 = vadd.f32 %v5380, %v5653
          %v5655 = vpop.f32.mrf.mxu0
          %v5656 = vadd.f32 %v5380, %v5655
          %5657 = vmatmul.bf16.gmra.mxu0 %v5337
          %v5658 = vpop.f32.mrf.mxu0
          %v5659 = vadd.f32 %v5380, %v5658
          %v5660 = vpop.f32.mrf.mxu0
          %v5661 = vadd.f32 %v5380, %v5660
          %5662 = vmatmul.bf16.gmra.mxu0 %v5338
          %v5663 = vpop.f32.mrf.mxu0
          %v5664 = vadd.f32 %v5380, %v5663
          %v5665 = vpop.f32.mrf.mxu0
          %v5666 = vadd.f32 %v5380, %v5665
          %5667 = vmatmul.bf16.gmra.mxu0 %v5339
          %v5668 = vpop.f32.mrf.mxu0
          %v5669 = vadd.f32 %v5380, %v5668
          %v5670 = vpop.f32.mrf.mxu0
          %v5671 = vadd.f32 %v5380, %v5670
          %5672 = vmatmul.bf16.gmra.mxu0 %v5340
          %v5673 = vpop.f32.mrf.mxu0
          %v5674 = vadd.f32 %v5380, %v5673
          %v5675 = vpop.f32.mrf.mxu0
          %v5676 = vadd.f32 %v5380, %v5675
          %5677 = vmatmul.bf16.gmra.mxu0 %v5341
          %v5678 = vpop.f32.mrf.mxu0
          %v5679 = vadd.f32 %v5380, %v5678
          %v5680 = vpop.f32.mrf.mxu0
          %v5681 = vadd.f32 %v5380, %v5680
          %5682 = vmatmul.bf16.gmra.mxu0 %v5342
          %v5683 = vpop.f32.mrf.mxu0
          %v5684 = vadd.f32 %v5380, %v5683
          %v5685 = vpop.f32.mrf.mxu0
          %v5686 = vadd.f32 %v5380, %v5685
          %5687 = vmatmul.bf16.gmra.mxu0 %v5343
          %v5688 = vpop.f32.mrf.mxu0
          %v5689 = vadd.f32 %v5380, %v5688
          %v5690 = vpop.f32.mrf.mxu0
          %v5691 = vadd.f32 %v5380, %v5690
          %5692 = vdwg.mxu0
          %5693 = vmatpush.bf16.msra.mxu0 %v5513
          %5694 = vmatpush.bf16.msra.mxu0 %v5509
          %5695 = vmatpush.bf16.msra.mxu0 %v5505
          %5696 = vmatpush.bf16.msra.mxu0 %v5501
          %5697 = vmatpush.bf16.msra.mxu0 %v5497
          %5698 = vmatpush.bf16.msra.mxu0 %v5493
          %5699 = vmatpush.bf16.msra.mxu0 %v5489
          %5700 = vmatpush.bf16.msra.mxu0 %v5485
          %5701 = vmatmul.bf16.gmra.mxu0 %v5336
          %v5702 = vpop.f32.mrf.mxu0
          %v5703 = vadd.f32 %v5381, %v5702
          %v5704 = vpop.f32.mrf.mxu0
          %v5705 = vadd.f32 %v5381, %v5704
          %5706 = vmatmul.bf16.gmra.mxu0 %v5337
          %v5707 = vpop.f32.mrf.mxu0
          %v5708 = vadd.f32 %v5381, %v5707
          %v5709 = vpop.f32.mrf.mxu0
          %v5710 = vadd.f32 %v5381, %v5709
          %5711 = vmatmul.bf16.gmra.mxu0 %v5338
          %v5712 = vpop.f32.mrf.mxu0
          %v5713 = vadd.f32 %v5381, %v5712
          %v5714 = vpop.f32.mrf.mxu0
          %v5715 = vadd.f32 %v5381, %v5714
          %5716 = vmatmul.bf16.gmra.mxu0 %v5339
          %v5717 = vpop.f32.mrf.mxu0
          %v5718 = vadd.f32 %v5381, %v5717
          %v5719 = vpop.f32.mrf.mxu0
          %v5720 = vadd.f32 %v5381, %v5719
          %5721 = vmatmul.bf16.gmra.mxu0 %v5340
          %v5722 = vpop.f32.mrf.mxu0
          %v5723 = vadd.f32 %v5381, %v5722
          %v5724 = vpop.f32.mrf.mxu0
          %v5725 = vadd.f32 %v5381, %v5724
          %5726 = vmatmul.bf16.gmra.mxu0 %v5341
          %v5727 = vpop.f32.mrf.mxu0
          %v5728 = vadd.f32 %v5381, %v5727
          %v5729 = vpop.f32.mrf.mxu0
          %v5730 = vadd.f32 %v5381, %v5729
          %5731 = vmatmul.bf16.gmra.mxu0 %v5342
          %v5732 = vpop.f32.mrf.mxu0
          %v5733 = vadd.f32 %v5381, %v5732
          %v5734 = vpop.f32.mrf.mxu0
          %v5735 = vadd.f32 %v5381, %v5734
          %5736 = vmatmul.bf16.gmra.mxu0 %v5343
          %v5737 = vpop.f32.mrf.mxu0
          %v5738 = vadd.f32 %v5381, %v5737
          %v5739 = vpop.f32.mrf.mxu0
          %v5740 = vadd.f32 %v5381, %v5739
          %5741 = vdwg.mxu0
          %v5742 = vmax.f32 %v5556, 0.0
          %v5743 = vmax.f32 %v5605, 0.0
          %v5744 = vmax.f32 %v5654, 0.0
          %v5745 = vmax.f32 %v5703, 0.0
          %v5746 = vmax.f32 %v5558, 0.0
          %v5747 = vmax.f32 %v5607, 0.0
          %v5748 = vmax.f32 %v5656, 0.0
          %v5749 = vmax.f32 %v5705, 0.0
          %v5750 = vmax.f32 %v5561, 0.0
          %v5751 = vmax.f32 %v5610, 0.0
          %v5752 = vmax.f32 %v5659, 0.0
          %v5753 = vmax.f32 %v5708, 0.0
          %v5754 = vmax.f32 %v5563, 0.0
          %v5755 = vmax.f32 %v5612, 0.0
          %v5756 = vmax.f32 %v5661, 0.0
          %v5757 = vmax.f32 %v5710, 0.0
          %v5758 = vmax.f32 %v5566, 0.0
          %v5759 = vmax.f32 %v5615, 0.0
          %v5760 = vmax.f32 %v5664, 0.0
          %v5761 = vmax.f32 %v5713, 0.0
          %v5762 = vmax.f32 %v5568, 0.0
          %v5763 = vmax.f32 %v5617, 0.0
          %v5764 = vmax.f32 %v5666, 0.0
          %v5765 = vmax.f32 %v5715, 0.0
          %v5766 = vmax.f32 %v5571, 0.0
          %v5767 = vmax.f32 %v5620, 0.0
          %v5768 = vmax.f32 %v5669, 0.0
          %v5769 = vmax.f32 %v5718, 0.0
          %v5770 = vmax.f32 %v5573, 0.0
          %v5771 = vmax.f32 %v5622, 0.0
          %v5772 = vmax.f32 %v5671, 0.0
          %v5773 = vmax.f32 %v5720, 0.0
          %v5774 = vmax.f32 %v5576, 0.0
          %v5775 = vmax.f32 %v5625, 0.0
          %v5776 = vmax.f32 %v5674, 0.0
          %v5777 = vmax.f32 %v5723, 0.0
          %v5778 = vmax.f32 %v5578, 0.0
          %v5779 = vmax.f32 %v5627, 0.0
          %v5780 = vmax.f32 %v5676, 0.0
          %v5781 = vmax.f32 %v5725, 0.0
          %v5782 = vmax.f32 %v5581, 0.0
          %v5783 = vmax.f32 %v5630, 0.0
          %v5784 = vmax.f32 %v5679, 0.0
          %v5785 = vmax.f32 %v5728, 0.0
          %v5786 = vmax.f32 %v5583, 0.0
          %v5787 = vmax.f32 %v5632, 0.0
          %v5788 = vmax.f32 %v5681, 0.0
          %v5789 = vmax.f32 %v5730, 0.0
          %v5790 = vmax.f32 %v5586, 0.0
          %v5791 = vmax.f32 %v5635, 0.0
          %v5792 = vmax.f32 %v5684, 0.0
          %v5793 = vmax.f32 %v5733, 0.0
          %v5794 = vmax.f32 %v5588, 0.0
          %v5795 = vmax.f32 %v5637, 0.0
          %v5796 = vmax.f32 %v5686, 0.0
          %v5797 = vmax.f32 %v5735, 0.0
          %v5798 = vmax.f32 %v5591, 0.0
          %v5799 = vmax.f32 %v5640, 0.0
          %v5800 = vmax.f32 %v5689, 0.0
          %v5801 = vmax.f32 %v5738, 0.0
          %v5802 = vmax.f32 %v5593, 0.0
          %v5803 = vmax.f32 %v5642, 0.0
          %v5804 = vmax.f32 %v5691, 0.0
          %v5805 = vmax.f32 %v5740, 0.0
          %v5806 = vpack.c.bf16 %v5746, %v5742
          %v5807 = vpack.c.bf16 %v5747, %v5743
          %v5808 = vpack.c.bf16 %v5748, %v5744
          %v5809 = vpack.c.bf16 %v5749, %v5745
          %v5810 = vpack.c.bf16 %v5754, %v5750
          %v5811 = vpack.c.bf16 %v5755, %v5751
          %v5812 = vpack.c.bf16 %v5756, %v5752
          %v5813 = vpack.c.bf16 %v5757, %v5753
          %v5814 = vpack.c.bf16 %v5762, %v5758
          %v5815 = vpack.c.bf16 %v5763, %v5759
          %v5816 = vpack.c.bf16 %v5764, %v5760
          %v5817 = vpack.c.bf16 %v5765, %v5761
          %v5818 = vpack.c.bf16 %v5770, %v5766
          %v5819 = vpack.c.bf16 %v5771, %v5767
          %v5820 = vpack.c.bf16 %v5772, %v5768
          %v5821 = vpack.c.bf16 %v5773, %v5769
          %v5822 = vpack.c.bf16 %v5778, %v5774
          %v5823 = vpack.c.bf16 %v5779, %v5775
          %v5824 = vpack.c.bf16 %v5780, %v5776
          %v5825 = vpack.c.bf16 %v5781, %v5777
          %v5826 = vpack.c.bf16 %v5786, %v5782
          %v5827 = vpack.c.bf16 %v5787, %v5783
          %v5828 = vpack.c.bf16 %v5788, %v5784
          %v5829 = vpack.c.bf16 %v5789, %v5785
          %v5830 = vpack.c.bf16 %v5794, %v5790
          %v5831 = vpack.c.bf16 %v5795, %v5791
          %v5832 = vpack.c.bf16 %v5796, %v5792
          %v5833 = vpack.c.bf16 %v5797, %v5793
          %v5834 = vpack.c.bf16 %v5802, %v5798
          %v5835 = vpack.c.bf16 %v5803, %v5799
          %v5836 = vpack.c.bf16 %v5804, %v5800
          %v5837 = vpack.c.bf16 %v5805, %v5801
          %v5838 = vld [vmem:[#allocation24] sm:$0xf]
          %v5839 = vld [vmem:[#allocation24 + $0x4] sm:$0xf]
          %v5840 = vld [vmem:[#allocation24 + $0x8] sm:$0xf]
          %v5841 = vld [vmem:[#allocation24 + $0xc] sm:$0xf]
          %v5842 = vld [vmem:[#allocation24 + $0x10] sm:$0xf]
          %v5843 = vld [vmem:[#allocation24 + $0x14] sm:$0xf]
          %v5844 = vld [vmem:[#allocation24 + $0x18] sm:$0xf]
          %v5845 = vld [vmem:[#allocation24 + $0x1c] sm:$0xf]
          %v5846 = vld [vmem:[#allocation24 + $0x20] sm:$0xf]
          %v5847 = vld [vmem:[#allocation24 + $0x24] sm:$0xf]
          %v5848 = vld [vmem:[#allocation24 + $0x28] sm:$0xf]
          %v5849 = vld [vmem:[#allocation24 + $0x2c] sm:$0xf]
          %v5850 = vld [vmem:[#allocation24 + $0x30] sm:$0xf]
          %v5851 = vld [vmem:[#allocation24 + $0x34] sm:$0xf]
          %v5852 = vld [vmem:[#allocation24 + $0x38] sm:$0xf]
          %v5853 = vld [vmem:[#allocation24 + $0x3c] sm:$0xf]
          %v5854 = vld [vmem:[#allocation24 + $0x40] sm:$0xf]
          %v5855 = vld [vmem:[#allocation24 + $0x44] sm:$0xf]
          %v5856 = vld [vmem:[#allocation24 + $0x48] sm:$0xf]
          %v5857 = vld [vmem:[#allocation24 + $0x4c] sm:$0xf]
          %v5858 = vld [vmem:[#allocation24 + $0x50] sm:$0xf]
          %v5859 = vld [vmem:[#allocation24 + $0x54] sm:$0xf]
          %v5860 = vld [vmem:[#allocation24 + $0x58] sm:$0xf]
          %v5861 = vld [vmem:[#allocation24 + $0x5c] sm:$0xf]
          %v5862 = vld [vmem:[#allocation24 + $0x60] sm:$0xf]
          %v5863 = vld [vmem:[#allocation24 + $0x64] sm:$0xf]
          %v5864 = vld [vmem:[#allocation24 + $0x68] sm:$0xf]
          %v5865 = vld [vmem:[#allocation24 + $0x6c] sm:$0xf]
          %v5866 = vld [vmem:[#allocation24 + $0x70] sm:$0xf]
          %v5867 = vld [vmem:[#allocation24 + $0x74] sm:$0xf]
          %v5868 = vld [vmem:[#allocation24 + $0x78] sm:$0xf]
          %v5869 = vld [vmem:[#allocation24 + $0x7c] sm:$0xf]
          %v5870 = vld [vmem:[#allocation24 + $0x80] sm:$0xf]
          %v5871 = vld [vmem:[#allocation24 + $0x84] sm:$0xf]
          %v5872 = vld [vmem:[#allocation24 + $0x88] sm:$0xf]
          %v5873 = vld [vmem:[#allocation24 + $0x8c] sm:$0xf]
          %v5874 = vld [vmem:[#allocation24 + $0x90] sm:$0xf]
          %v5875 = vld [vmem:[#allocation24 + $0x94] sm:$0xf]
          %v5876 = vld [vmem:[#allocation24 + $0x98] sm:$0xf]
          %v5877 = vld [vmem:[#allocation24 + $0x9c] sm:$0xf]
          %v5878 = vld [vmem:[#allocation24 + $0xa0] sm:$0xf]
          %v5879 = vld [vmem:[#allocation24 + $0xa4] sm:$0xf]
          %v5880 = vld [vmem:[#allocation24 + $0xa8] sm:$0xf]
          %v5881 = vld [vmem:[#allocation24 + $0xac] sm:$0xf]
          %v5882 = vld [vmem:[#allocation24 + $0xb0] sm:$0xf]
          %v5883 = vld [vmem:[#allocation24 + $0xb4] sm:$0xf]
          %v5884 = vld [vmem:[#allocation24 + $0xb8] sm:$0xf]
          %v5885 = vld [vmem:[#allocation24 + $0xbc] sm:$0xf]
          %v5886 = vld [vmem:[#allocation24 + $0xc0] sm:$0xf]
          %v5887 = vld [vmem:[#allocation24 + $0xc4] sm:$0xf]
          %v5888 = vld [vmem:[#allocation24 + $0xc8] sm:$0xf]
          %v5889 = vld [vmem:[#allocation24 + $0xcc] sm:$0xf]
          %v5890 = vld [vmem:[#allocation24 + $0xd0] sm:$0xf]
          %v5891 = vld [vmem:[#allocation24 + $0xd4] sm:$0xf]
          %v5892 = vld [vmem:[#allocation24 + $0xd8] sm:$0xf]
          %v5893 = vld [vmem:[#allocation24 + $0xdc] sm:$0xf]
          %v5894 = vld [vmem:[#allocation24 + $0xe0] sm:$0xf]
          %v5895 = vld [vmem:[#allocation24 + $0xe4] sm:$0xf]
          %v5896 = vld [vmem:[#allocation24 + $0xe8] sm:$0xf]
          %v5897 = vld [vmem:[#allocation24 + $0xec] sm:$0xf]
          %v5898 = vld [vmem:[#allocation24 + $0xf0] sm:$0xf]
          %v5899 = vld [vmem:[#allocation24 + $0xf4] sm:$0xf]
          %v5900 = vld [vmem:[#allocation24 + $0xf8] sm:$0xf]
          %v5901 = vld [vmem:[#allocation24 + $0xfc] sm:$0xf]
          %v5966 = vunpack.c.l.b16 %v5838
          %v5967 = vunpack.c.l.b16 %v5839
          %v5968 = vunpack.c.l.b16 %v5840
          %v5969 = vunpack.c.l.b16 %v5841
          %v5970 = vunpack.c.l.b16 %v5842
          %v5971 = vunpack.c.l.b16 %v5843
          %v5972 = vunpack.c.l.b16 %v5844
          %v5973 = vunpack.c.l.b16 %v5845
          %v5974 = vunpack.c.l.b16 %v5846
          %v5975 = vunpack.c.l.b16 %v5847
          %v5976 = vunpack.c.l.b16 %v5848
          %v5977 = vunpack.c.l.b16 %v5849
          %v5978 = vunpack.c.l.b16 %v5850
          %v5979 = vunpack.c.l.b16 %v5851
          %v5980 = vunpack.c.l.b16 %v5852
          %v5981 = vunpack.c.l.b16 %v5853
          %v5982 = vunpack.c.l.b16 %v5854
          %v5983 = vunpack.c.l.b16 %v5855
          %v5984 = vunpack.c.l.b16 %v5856
          %v5985 = vunpack.c.l.b16 %v5857
          %v5986 = vunpack.c.l.b16 %v5858
          %v5987 = vunpack.c.l.b16 %v5859
          %v5988 = vunpack.c.l.b16 %v5860
          %v5989 = vunpack.c.l.b16 %v5861
          %v5990 = vunpack.c.l.b16 %v5862
          %v5991 = vunpack.c.l.b16 %v5863
          %v5992 = vunpack.c.l.b16 %v5864
          %v5993 = vunpack.c.l.b16 %v5865
          %v5994 = vunpack.c.l.b16 %v5866
          %v5995 = vunpack.c.l.b16 %v5867
          %v5996 = vunpack.c.l.b16 %v5868
          %v5997 = vunpack.c.l.b16 %v5869
          %v5998 = vunpack.c.l.b16 %v5870
          %v5999 = vunpack.c.l.b16 %v5871
          %v6000 = vunpack.c.l.b16 %v5872
          %v6001 = vunpack.c.l.b16 %v5873
          %v6002 = vunpack.c.l.b16 %v5874
          %v6003 = vunpack.c.l.b16 %v5875
          %v6004 = vunpack.c.l.b16 %v5876
          %v6005 = vunpack.c.l.b16 %v5877
          %v6006 = vunpack.c.l.b16 %v5878
          %v6007 = vunpack.c.l.b16 %v5879
          %v6008 = vunpack.c.l.b16 %v5880
          %v6009 = vunpack.c.l.b16 %v5881
          %v6010 = vunpack.c.l.b16 %v5882
          %v6011 = vunpack.c.l.b16 %v5883
          %v6012 = vunpack.c.l.b16 %v5884
          %v6013 = vunpack.c.l.b16 %v5885
          %v6014 = vunpack.c.l.b16 %v5886
          %v6015 = vunpack.c.l.b16 %v5887
          %v6016 = vunpack.c.l.b16 %v5888
          %v6017 = vunpack.c.l.b16 %v5889
          %v6018 = vunpack.c.l.b16 %v5890
          %v6019 = vunpack.c.l.b16 %v5891
          %v6020 = vunpack.c.l.b16 %v5892
          %v6021 = vunpack.c.l.b16 %v5893
          %v6022 = vunpack.c.l.b16 %v5894
          %v6023 = vunpack.c.l.b16 %v5895
          %v6024 = vunpack.c.l.b16 %v5896
          %v6025 = vunpack.c.l.b16 %v5897
          %v6026 = vunpack.c.l.b16 %v5898
          %v6027 = vunpack.c.l.b16 %v5899
          %v6028 = vunpack.c.l.b16 %v5900
          %v6029 = vunpack.c.l.b16 %v5901
          %v6030 = vpack.c.b16 %v5967, %v5966
          %v6031 = vpack.c.b16 %v5969, %v5968
          %v6032 = vpack.c.b16 %v5971, %v5970
          %v6033 = vpack.c.b16 %v5973, %v5972
          %v6034 = vpack.c.b16 %v5975, %v5974
          %v6035 = vpack.c.b16 %v5977, %v5976
          %v6036 = vpack.c.b16 %v5979, %v5978
          %v6037 = vpack.c.b16 %v5981, %v5980
          %v6038 = vpack.c.b16 %v5983, %v5982
          %v6039 = vpack.c.b16 %v5985, %v5984
          %v6040 = vpack.c.b16 %v5987, %v5986
          %v6041 = vpack.c.b16 %v5989, %v5988
          %v6042 = vpack.c.b16 %v5991, %v5990
          %v6043 = vpack.c.b16 %v5993, %v5992
          %v6044 = vpack.c.b16 %v5995, %v5994
          %v6045 = vpack.c.b16 %v5997, %v5996
          %v6046 = vpack.c.b16 %v5999, %v5998
          %v6047 = vpack.c.b16 %v6001, %v6000
          %v6048 = vpack.c.b16 %v6003, %v6002
          %v6049 = vpack.c.b16 %v6005, %v6004
          %v6050 = vpack.c.b16 %v6007, %v6006
          %v6051 = vpack.c.b16 %v6009, %v6008
          %v6052 = vpack.c.b16 %v6011, %v6010
          %v6053 = vpack.c.b16 %v6013, %v6012
          %v6054 = vpack.c.b16 %v6015, %v6014
          %v6055 = vpack.c.b16 %v6017, %v6016
          %v6056 = vpack.c.b16 %v6019, %v6018
          %v6057 = vpack.c.b16 %v6021, %v6020
          %v6058 = vpack.c.b16 %v6023, %v6022
          %v6059 = vpack.c.b16 %v6025, %v6024
          %v6060 = vpack.c.b16 %v6027, %v6026
          %v6061 = vpack.c.b16 %v6029, %v6028
          %6094 = vmatpush.bf16.msra.mxu0 %v6037
          %6095 = vmatpush.bf16.msra.mxu0 %v6036
          %6096 = vmatpush.bf16.msra.mxu0 %v6035
          %6097 = vmatpush.bf16.msra.mxu0 %v6034
          %6098 = vmatpush.bf16.msra.mxu0 %v6033
          %6099 = vmatpush.bf16.msra.mxu0 %v6032
          %6100 = vmatpush.bf16.msra.mxu0 %v6031
          %6101 = vmatpush.bf16.msra.mxu0 %v6030
          %6102 = vmatmul.bf16.gmra.mxu0 %v5806
          %v6103 = vpop.f32.mrf.mxu0
          %v6104 = vadd.f32 0.0, %v6103
          %v6105 = vpop.f32.mrf.mxu0
          %v6106 = vadd.f32 0.0, %v6105
          %6107 = vmatmul.bf16.gmra.mxu0 %v5810
          %v6108 = vpop.f32.mrf.mxu0
          %v6109 = vadd.f32 0.0, %v6108
          %v6110 = vpop.f32.mrf.mxu0
          %v6111 = vadd.f32 0.0, %v6110
          %6112 = vmatmul.bf16.gmra.mxu0 %v5814
          %v6113 = vpop.f32.mrf.mxu0
          %v6114 = vadd.f32 0.0, %v6113
          %v6115 = vpop.f32.mrf.mxu0
          %v6116 = vadd.f32 0.0, %v6115
          %6117 = vmatmul.bf16.gmra.mxu0 %v5818
          %v6118 = vpop.f32.mrf.mxu0
          %v6119 = vadd.f32 0.0, %v6118
          %v6120 = vpop.f32.mrf.mxu0
          %v6121 = vadd.f32 0.0, %v6120
          %6122 = vmatmul.bf16.gmra.mxu0 %v5822
          %v6123 = vpop.f32.mrf.mxu0
          %v6124 = vadd.f32 0.0, %v6123
          %v6125 = vpop.f32.mrf.mxu0
          %v6126 = vadd.f32 0.0, %v6125
          %6127 = vmatmul.bf16.gmra.mxu0 %v5826
          %v6128 = vpop.f32.mrf.mxu0
          %v6129 = vadd.f32 0.0, %v6128
          %v6130 = vpop.f32.mrf.mxu0
          %v6131 = vadd.f32 0.0, %v6130
          %6132 = vmatmul.bf16.gmra.mxu0 %v5830
          %v6133 = vpop.f32.mrf.mxu0
          %v6134 = vadd.f32 0.0, %v6133
          %v6135 = vpop.f32.mrf.mxu0
          %v6136 = vadd.f32 0.0, %v6135
          %6137 = vmatmul.bf16.gmra.mxu0 %v5834
          %v6138 = vpop.f32.mrf.mxu0
          %v6139 = vadd.f32 0.0, %v6138
          %v6140 = vpop.f32.mrf.mxu0
          %v6141 = vadd.f32 0.0, %v6140
          %6142 = vdwg.mxu0
          %6143 = vmatpush.bf16.msra.mxu0 %v6045
          %6144 = vmatpush.bf16.msra.mxu0 %v6044
          %6145 = vmatpush.bf16.msra.mxu0 %v6043
          %6146 = vmatpush.bf16.msra.mxu0 %v6042
          %6147 = vmatpush.bf16.msra.mxu0 %v6041
          %6148 = vmatpush.bf16.msra.mxu0 %v6040
          %6149 = vmatpush.bf16.msra.mxu0 %v6039
          %6150 = vmatpush.bf16.msra.mxu0 %v6038
          %6151 = vmatmul.bf16.gmra.mxu0 %v5807
          %v6152 = vpop.f32.mrf.mxu0
          %v6153 = vadd.f32 %v6104, %v6152
          %v6154 = vpop.f32.mrf.mxu0
          %v6155 = vadd.f32 %v6106, %v6154
          %6156 = vmatmul.bf16.gmra.mxu0 %v5811
          %v6157 = vpop.f32.mrf.mxu0
          %v6158 = vadd.f32 %v6109, %v6157
          %v6159 = vpop.f32.mrf.mxu0
          %v6160 = vadd.f32 %v6111, %v6159
          %6161 = vmatmul.bf16.gmra.mxu0 %v5815
          %v6162 = vpop.f32.mrf.mxu0
          %v6163 = vadd.f32 %v6114, %v6162
          %v6164 = vpop.f32.mrf.mxu0
          %v6165 = vadd.f32 %v6116, %v6164
          %6166 = vmatmul.bf16.gmra.mxu0 %v5819
          %v6167 = vpop.f32.mrf.mxu0
          %v6168 = vadd.f32 %v6119, %v6167
          %v6169 = vpop.f32.mrf.mxu0
          %v6170 = vadd.f32 %v6121, %v6169
          %6171 = vmatmul.bf16.gmra.mxu0 %v5823
          %v6172 = vpop.f32.mrf.mxu0
          %v6173 = vadd.f32 %v6124, %v6172
          %v6174 = vpop.f32.mrf.mxu0
          %v6175 = vadd.f32 %v6126, %v6174
          %6176 = vmatmul.bf16.gmra.mxu0 %v5827
          %v6177 = vpop.f32.mrf.mxu0
          %v6178 = vadd.f32 %v6129, %v6177
          %v6179 = vpop.f32.mrf.mxu0
          %v6180 = vadd.f32 %v6131, %v6179
          %6181 = vmatmul.bf16.gmra.mxu0 %v5831
          %v6182 = vpop.f32.mrf.mxu0
          %v6183 = vadd.f32 %v6134, %v6182
          %v6184 = vpop.f32.mrf.mxu0
          %v6185 = vadd.f32 %v6136, %v6184
          %6186 = vmatmul.bf16.gmra.mxu0 %v5835
          %v6187 = vpop.f32.mrf.mxu0
          %v6188 = vadd.f32 %v6139, %v6187
          %v6189 = vpop.f32.mrf.mxu0
          %v6190 = vadd.f32 %v6141, %v6189
          %6191 = vdwg.mxu0
          %6192 = vmatpush.bf16.msra.mxu0 %v6053
          %6193 = vmatpush.bf16.msra.mxu0 %v6052
          %6194 = vmatpush.bf16.msra.mxu0 %v6051
          %6195 = vmatpush.bf16.msra.mxu0 %v6050
          %6196 = vmatpush.bf16.msra.mxu0 %v6049
          %6197 = vmatpush.bf16.msra.mxu0 %v6048
          %6198 = vmatpush.bf16.msra.mxu0 %v6047
          %6199 = vmatpush.bf16.msra.mxu0 %v6046
          %6200 = vmatmul.bf16.gmra.mxu0 %v5808
          %v6201 = vpop.f32.mrf.mxu0
          %v6202 = vadd.f32 %v6153, %v6201
          %v6203 = vpop.f32.mrf.mxu0
          %v6204 = vadd.f32 %v6155, %v6203
          %6205 = vmatmul.bf16.gmra.mxu0 %v5812
          %v6206 = vpop.f32.mrf.mxu0
          %v6207 = vadd.f32 %v6158, %v6206
          %v6208 = vpop.f32.mrf.mxu0
          %v6209 = vadd.f32 %v6160, %v6208
          %6210 = vmatmul.bf16.gmra.mxu0 %v5816
          %v6211 = vpop.f32.mrf.mxu0
          %v6212 = vadd.f32 %v6163, %v6211
          %v6213 = vpop.f32.mrf.mxu0
          %v6214 = vadd.f32 %v6165, %v6213
          %6215 = vmatmul.bf16.gmra.mxu0 %v5820
          %v6216 = vpop.f32.mrf.mxu0
          %v6217 = vadd.f32 %v6168, %v6216
          %v6218 = vpop.f32.mrf.mxu0
          %v6219 = vadd.f32 %v6170, %v6218
          %6220 = vmatmul.bf16.gmra.mxu0 %v5824
          %v6221 = vpop.f32.mrf.mxu0
          %v6222 = vadd.f32 %v6173, %v6221
          %v6223 = vpop.f32.mrf.mxu0
          %v6224 = vadd.f32 %v6175, %v6223
          %6225 = vmatmul.bf16.gmra.mxu0 %v5828
          %v6226 = vpop.f32.mrf.mxu0
          %v6227 = vadd.f32 %v6178, %v6226
          %v6228 = vpop.f32.mrf.mxu0
          %v6229 = vadd.f32 %v6180, %v6228
          %6230 = vmatmul.bf16.gmra.mxu0 %v5832
          %v6231 = vpop.f32.mrf.mxu0
          %v6232 = vadd.f32 %v6183, %v6231
          %v6233 = vpop.f32.mrf.mxu0
          %v6234 = vadd.f32 %v6185, %v6233
          %6235 = vmatmul.bf16.gmra.mxu0 %v5836
          %v6236 = vpop.f32.mrf.mxu0
          %v6237 = vadd.f32 %v6188, %v6236
          %v6238 = vpop.f32.mrf.mxu0
          %v6239 = vadd.f32 %v6190, %v6238
          %6240 = vdwg.mxu0
          %6241 = vmatpush.bf16.msra.mxu0 %v6061
          %6242 = vmatpush.bf16.msra.mxu0 %v6060
          %6243 = vmatpush.bf16.msra.mxu0 %v6059
          %6244 = vmatpush.bf16.msra.mxu0 %v6058
          %6245 = vmatpush.bf16.msra.mxu0 %v6057
          %6246 = vmatpush.bf16.msra.mxu0 %v6056
          %6247 = vmatpush.bf16.msra.mxu0 %v6055
          %6248 = vmatpush.bf16.msra.mxu0 %v6054
          %6249 = vmatmul.bf16.gmra.mxu0 %v5809
          %v6250 = vpop.f32.mrf.mxu0
          %v6251 = vadd.f32 %v6202, %v6250
          %v6252 = vpop.f32.mrf.mxu0
          %v6253 = vadd.f32 %v6204, %v6252
          %6254 = vmatmul.bf16.gmra.mxu0 %v5813
          %v6255 = vpop.f32.mrf.mxu0
          %v6256 = vadd.f32 %v6207, %v6255
          %v6257 = vpop.f32.mrf.mxu0
          %v6258 = vadd.f32 %v6209, %v6257
          %6259 = vmatmul.bf16.gmra.mxu0 %v5817
          %v6260 = vpop.f32.mrf.mxu0
          %v6261 = vadd.f32 %v6212, %v6260
          %v6262 = vpop.f32.mrf.mxu0
          %v6263 = vadd.f32 %v6214, %v6262
          %6264 = vmatmul.bf16.gmra.mxu0 %v5821
          %v6265 = vpop.f32.mrf.mxu0
          %v6266 = vadd.f32 %v6217, %v6265
          %v6267 = vpop.f32.mrf.mxu0
          %v6268 = vadd.f32 %v6219, %v6267
          %6269 = vmatmul.bf16.gmra.mxu0 %v5825
          %v6270 = vpop.f32.mrf.mxu0
          %v6271 = vadd.f32 %v6222, %v6270
          %v6272 = vpop.f32.mrf.mxu0
          %v6273 = vadd.f32 %v6224, %v6272
          %6274 = vmatmul.bf16.gmra.mxu0 %v5829
          %v6275 = vpop.f32.mrf.mxu0
          %v6276 = vadd.f32 %v6227, %v6275
          %v6277 = vpop.f32.mrf.mxu0
          %v6278 = vadd.f32 %v6229, %v6277
          %6279 = vmatmul.bf16.gmra.mxu0 %v5833
          %v6280 = vpop.f32.mrf.mxu0
          %v6281 = vadd.f32 %v6232, %v6280
          %v6282 = vpop.f32.mrf.mxu0
          %v6283 = vadd.f32 %v6234, %v6282
          %6284 = vmatmul.bf16.gmra.mxu0 %v5837
          %v6285 = vpop.f32.mrf.mxu0
          %v6286 = vadd.f32 %v6237, %v6285
          %v6287 = vpop.f32.mrf.mxu0
          %v6288 = vadd.f32 %v6239, %v6287
          %6289 = vdwg.mxu0
          %v6290 = vpack.c.bf16 %v6253, %v6251
          %v6291 = vpack.c.bf16 %v6258, %v6256
          %v6292 = vpack.c.bf16 %v6263, %v6261
          %v6293 = vpack.c.bf16 %v6268, %v6266
          %v6294 = vpack.c.bf16 %v6273, %v6271
          %v6295 = vpack.c.bf16 %v6278, %v6276
          %v6296 = vpack.c.bf16 %v6283, %v6281
          %v6297 = vpack.c.bf16 %v6288, %v6286
          %v6298 = vld [vmem:[#allocation26] sm:$0xff]
          %v6299 = vld [vmem:[#allocation26 + $0x8] sm:$0xff]
          %v6300 = vld [vmem:[#allocation26 + $0x10] sm:$0xff]
          %v6301 = vld [vmem:[#allocation26 + $0x18] sm:$0xff]
          %v6302 = vld [vmem:[#allocation26 + $0x20] sm:$0xff]
          %v6303 = vld [vmem:[#allocation26 + $0x28] sm:$0xff]
          %v6304 = vld [vmem:[#allocation26 + $0x30] sm:$0xff]
          %v6305 = vld [vmem:[#allocation26 + $0x38] sm:$0xff]
          %v6306 = vld [vmem:[#allocation26 + $0x40] sm:$0xff]
          %v6307 = vld [vmem:[#allocation26 + $0x48] sm:$0xff]
          %v6308 = vld [vmem:[#allocation26 + $0x50] sm:$0xff]
          %v6309 = vld [vmem:[#allocation26 + $0x58] sm:$0xff]
          %v6310 = vld [vmem:[#allocation26 + $0x60] sm:$0xff]
          %v6311 = vld [vmem:[#allocation26 + $0x68] sm:$0xff]
          %v6312 = vld [vmem:[#allocation26 + $0x70] sm:$0xff]
          %v6313 = vld [vmem:[#allocation26 + $0x78] sm:$0xff]
          %v6314 = vld [vmem:[%s15] sm:$0x3]
          %v6316 = vperm.slane %v6314, 0
          %v6317 = vperm.slane %v6314, 1
          %v6336 = vunpack.c.l.b16 %v6298
          %v6337 = vunpack.c.h.b16 %v6298
          %v6338 = vunpack.c.l.b16 %v6299
          %v6339 = vunpack.c.h.b16 %v6299
          %v6340 = vunpack.c.l.b16 %v6300
          %v6341 = vunpack.c.h.b16 %v6300
          %v6342 = vunpack.c.l.b16 %v6301
          %v6343 = vunpack.c.h.b16 %v6301
          %v6344 = vunpack.c.l.b16 %v6302
          %v6345 = vunpack.c.h.b16 %v6302
          %v6346 = vunpack.c.l.b16 %v6303
          %v6347 = vunpack.c.h.b16 %v6303
          %v6348 = vunpack.c.l.b16 %v6304
          %v6349 = vunpack.c.h.b16 %v6304
          %v6350 = vunpack.c.l.b16 %v6305
          %v6351 = vunpack.c.h.b16 %v6305
          %v6352 = vunpack.c.l.b16 %v6306
          %v6353 = vunpack.c.h.b16 %v6306
          %v6354 = vunpack.c.l.b16 %v6307
          %v6355 = vunpack.c.h.b16 %v6307
          %v6356 = vunpack.c.l.b16 %v6308
          %v6357 = vunpack.c.h.b16 %v6308
          %v6358 = vunpack.c.l.b16 %v6309
          %v6359 = vunpack.c.h.b16 %v6309
          %v6360 = vunpack.c.l.b16 %v6310
          %v6361 = vunpack.c.h.b16 %v6310
          %v6362 = vunpack.c.l.b16 %v6311
          %v6363 = vunpack.c.h.b16 %v6311
          %v6364 = vunpack.c.l.b16 %v6312
          %v6365 = vunpack.c.h.b16 %v6312
          %v6366 = vunpack.c.l.b16 %v6313
          %v6367 = vunpack.c.h.b16 %v6313
          %v6368 = vpack.c.b16 %v6338, %v6336
          %v6369 = vpack.c.b16 %v6339, %v6337
          %v6370 = vpack.c.b16 %v6342, %v6340
          %v6371 = vpack.c.b16 %v6343, %v6341
          %v6372 = vpack.c.b16 %v6346, %v6344
          %v6373 = vpack.c.b16 %v6347, %v6345
          %v6374 = vpack.c.b16 %v6350, %v6348
          %v6375 = vpack.c.b16 %v6351, %v6349
          %v6376 = vpack.c.b16 %v6354, %v6352
          %v6377 = vpack.c.b16 %v6355, %v6353
          %v6378 = vpack.c.b16 %v6358, %v6356
          %v6379 = vpack.c.b16 %v6359, %v6357
          %v6380 = vpack.c.b16 %v6362, %v6360
          %v6381 = vpack.c.b16 %v6363, %v6361
          %v6382 = vpack.c.b16 %v6366, %v6364
          %v6383 = vpack.c.b16 %v6367, %v6365
          %6400 = vmatpush.bf16.msra.mxu0 %v6382
          %6401 = vmatpush.bf16.msra.mxu0 %v6380
          %6402 = vmatpush.bf16.msra.mxu0 %v6378
          %6403 = vmatpush.bf16.msra.mxu0 %v6376
          %6404 = vmatpush.bf16.msra.mxu0 %v6374
          %6405 = vmatpush.bf16.msra.mxu0 %v6372
          %6406 = vmatpush.bf16.msra.mxu0 %v6370
          %6407 = vmatpush.bf16.msra.mxu0 %v6368
          %6408 = vmatmul.bf16.gmra.mxu0 %v6290
          %v6409 = vpop.f32.mrf.mxu0
          %v6410 = vadd.f32 %v6316, %v6409
          %v6411 = vpop.f32.mrf.mxu0
          %v6412 = vadd.f32 %v6316, %v6411
          %6413 = vmatmul.bf16.gmra.mxu0 %v6291
          %v6414 = vpop.f32.mrf.mxu0
          %v6415 = vadd.f32 %v6316, %v6414
          %v6416 = vpop.f32.mrf.mxu0
          %v6417 = vadd.f32 %v6316, %v6416
          %6418 = vmatmul.bf16.gmra.mxu0 %v6292
          %v6419 = vpop.f32.mrf.mxu0
          %v6420 = vadd.f32 %v6316, %v6419
          %v6421 = vpop.f32.mrf.mxu0
          %v6422 = vadd.f32 %v6316, %v6421
          %6423 = vmatmul.bf16.gmra.mxu0 %v6293
          %v6424 = vpop.f32.mrf.mxu0
          %v6425 = vadd.f32 %v6316, %v6424
          %v6426 = vpop.f32.mrf.mxu0
          %v6427 = vadd.f32 %v6316, %v6426
          %6428 = vmatmul.bf16.gmra.mxu0 %v6294
          %v6429 = vpop.f32.mrf.mxu0
          %v6430 = vadd.f32 %v6316, %v6429
          %v6431 = vpop.f32.mrf.mxu0
          %v6432 = vadd.f32 %v6316, %v6431
          %6433 = vmatmul.bf16.gmra.mxu0 %v6295
          %v6434 = vpop.f32.mrf.mxu0
          %v6435 = vadd.f32 %v6316, %v6434
          %v6436 = vpop.f32.mrf.mxu0
          %v6437 = vadd.f32 %v6316, %v6436
          %6438 = vmatmul.bf16.gmra.mxu0 %v6296
          %v6439 = vpop.f32.mrf.mxu0
          %v6440 = vadd.f32 %v6316, %v6439
          %v6441 = vpop.f32.mrf.mxu0
          %v6442 = vadd.f32 %v6316, %v6441
          %6443 = vmatmul.bf16.gmra.mxu0 %v6297
          %v6444 = vpop.f32.mrf.mxu0
          %v6445 = vadd.f32 %v6316, %v6444
          %v6446 = vpop.f32.mrf.mxu0
          %v6447 = vadd.f32 %v6316, %v6446
          %6448 = vdwg.mxu0
          %6449 = vmatpush.bf16.msra.mxu0 %v6383
          %6450 = vmatpush.bf16.msra.mxu0 %v6381
          %6451 = vmatpush.bf16.msra.mxu0 %v6379
          %6452 = vmatpush.bf16.msra.mxu0 %v6377
          %6453 = vmatpush.bf16.msra.mxu0 %v6375
          %6454 = vmatpush.bf16.msra.mxu0 %v6373
          %6455 = vmatpush.bf16.msra.mxu0 %v6371
          %6456 = vmatpush.bf16.msra.mxu0 %v6369
          %6457 = vmatmul.bf16.gmra.mxu0 %v6290
          %v6458 = vpop.f32.mrf.mxu0
          %v6459 = vadd.f32 %v6317, %v6458
          %v6460 = vpop.f32.mrf.mxu0
          %v6461 = vadd.f32 %v6317, %v6460
          %6462 = vmatmul.bf16.gmra.mxu0 %v6291
          %v6463 = vpop.f32.mrf.mxu0
          %v6464 = vadd.f32 %v6317, %v6463
          %v6465 = vpop.f32.mrf.mxu0
          %v6466 = vadd.f32 %v6317, %v6465
          %6467 = vmatmul.bf16.gmra.mxu0 %v6292
          %v6468 = vpop.f32.mrf.mxu0
          %v6469 = vadd.f32 %v6317, %v6468
          %v6470 = vpop.f32.mrf.mxu0
          %v6471 = vadd.f32 %v6317, %v6470
          %6472 = vmatmul.bf16.gmra.mxu0 %v6293
          %v6473 = vpop.f32.mrf.mxu0
          %v6474 = vadd.f32 %v6317, %v6473
          %v6475 = vpop.f32.mrf.mxu0
          %v6476 = vadd.f32 %v6317, %v6475
          %6477 = vmatmul.bf16.gmra.mxu0 %v6294
          %v6478 = vpop.f32.mrf.mxu0
          %v6479 = vadd.f32 %v6317, %v6478
          %v6480 = vpop.f32.mrf.mxu0
          %v6481 = vadd.f32 %v6317, %v6480
          %6482 = vmatmul.bf16.gmra.mxu0 %v6295
          %v6483 = vpop.f32.mrf.mxu0
          %v6484 = vadd.f32 %v6317, %v6483
          %v6485 = vpop.f32.mrf.mxu0
          %v6486 = vadd.f32 %v6317, %v6485
          %6487 = vmatmul.bf16.gmra.mxu0 %v6296
          %v6488 = vpop.f32.mrf.mxu0
          %v6489 = vadd.f32 %v6317, %v6488
          %v6490 = vpop.f32.mrf.mxu0
          %v6491 = vadd.f32 %v6317, %v6490
          %6492 = vmatmul.bf16.gmra.mxu0 %v6297
          %v6493 = vpop.f32.mrf.mxu0
          %v6494 = vadd.f32 %v6317, %v6493
          %v6495 = vpop.f32.mrf.mxu0
          %v6496 = vadd.f32 %v6317, %v6495
          %6497 = vdwg.mxu0
          %v6498 = vadd.f32 %v5062, %v6410
          %v6499 = vadd.f32 %v5063, %v6459
          %v6500 = vadd.f32 %v5064, %v6412
          %v6501 = vadd.f32 %v5065, %v6461
          %v6502 = vadd.f32 %v5066, %v6415
          %v6503 = vadd.f32 %v5067, %v6464
          %v6504 = vadd.f32 %v5068, %v6417
          %v6505 = vadd.f32 %v5069, %v6466
          %v6506 = vadd.f32 %v5070, %v6420
          %v6507 = vadd.f32 %v5071, %v6469
          %v6508 = vadd.f32 %v5072, %v6422
          %v6509 = vadd.f32 %v5073, %v6471
          %v6510 = vadd.f32 %v5074, %v6425
          %v6511 = vadd.f32 %v5075, %v6474
          %v6512 = vadd.f32 %v5076, %v6427
          %v6513 = vadd.f32 %v5077, %v6476
          %v6514 = vadd.f32 %v5078, %v6430
          %v6515 = vadd.f32 %v5079, %v6479
          %v6516 = vadd.f32 %v5080, %v6432
          %v6517 = vadd.f32 %v5081, %v6481
          %v6518 = vadd.f32 %v5082, %v6435
          %v6519 = vadd.f32 %v5083, %v6484
          %v6520 = vadd.f32 %v5084, %v6437
          %v6521 = vadd.f32 %v5085, %v6486
          %v6522 = vadd.f32 %v5086, %v6440
          %v6523 = vadd.f32 %v5087, %v6489
          %v6524 = vadd.f32 %v5088, %v6442
          %v6525 = vadd.f32 %v5089, %v6491
          %v6526 = vadd.f32 %v5090, %v6445
          %v6527 = vadd.f32 %v5091, %v6494
          %v6528 = vadd.f32 %v5092, %v6447
          %v6529 = vadd.f32 %v5093, %v6496
          %v6530 = vld [vmem:[%s16] sm:$0x3]
          %v6531 = vld [vmem:[%s17] sm:$0x3]
          %v6532 = vadd.f32 %v6498, %v6499
          %6533 = vadd.xlane.f32.xlu0 %v6532
          %v6534 = vpop.xlane.xlu0 %6533
          %v6535 = vadd.f32 %v6500, %v6501
          %6536 = vadd.xlane.f32.xlu0 %v6535
          %v6537 = vpop.xlane.xlu0 %6536
          %v6538 = vadd.f32 %v6502, %v6503
          %6539 = vadd.xlane.f32.xlu0 %v6538
          %v6540 = vpop.xlane.xlu0 %6539
          %v6541 = vadd.f32 %v6504, %v6505
          %6542 = vadd.xlane.f32.xlu0 %v6541
          %v6543 = vpop.xlane.xlu0 %6542
          %v6544 = vadd.f32 %v6506, %v6507
          %6545 = vadd.xlane.f32.xlu0 %v6544
          %v6546 = vpop.xlane.xlu0 %6545
          %v6547 = vadd.f32 %v6508, %v6509
          %6548 = vadd.xlane.f32.xlu0 %v6547
          %v6549 = vpop.xlane.xlu0 %6548
          %v6550 = vadd.f32 %v6510, %v6511
          %6551 = vadd.xlane.f32.xlu0 %v6550
          %v6552 = vpop.xlane.xlu0 %6551
          %v6553 = vadd.f32 %v6512, %v6513
          %6554 = vadd.xlane.f32.xlu0 %v6553
          %v6555 = vpop.xlane.xlu0 %6554
          %v6556 = vadd.f32 %v6514, %v6515
          %6557 = vadd.xlane.f32.xlu0 %v6556
          %v6558 = vpop.xlane.xlu0 %6557
          %v6559 = vadd.f32 %v6516, %v6517
          %6560 = vadd.xlane.f32.xlu0 %v6559
          %v6561 = vpop.xlane.xlu0 %6560
          %v6562 = vadd.f32 %v6518, %v6519
          %6563 = vadd.xlane.f32.xlu0 %v6562
          %v6564 = vpop.xlane.xlu0 %6563
          %v6565 = vadd.f32 %v6520, %v6521
          %6566 = vadd.xlane.f32.xlu0 %v6565
          %v6567 = vpop.xlane.xlu0 %6566
          %v6568 = vadd.f32 %v6522, %v6523
          %6569 = vadd.xlane.f32.xlu0 %v6568
          %v6570 = vpop.xlane.xlu0 %6569
          %v6571 = vadd.f32 %v6524, %v6525
          %6572 = vadd.xlane.f32.xlu0 %v6571
          %v6573 = vpop.xlane.xlu0 %6572
          %v6574 = vadd.f32 %v6526, %v6527
          %6575 = vadd.xlane.f32.xlu0 %v6574
          %v6576 = vpop.xlane.xlu0 %6575
          %v6577 = vadd.f32 %v6528, %v6529
          %6578 = vadd.xlane.f32.xlu0 %v6577
          %v6579 = vpop.xlane.xlu0 %6578
          %v6580 = vmul.f32 %v6534, %v4667
          %v6581 = vmul.f32 %v6537, %v4667
          %v6582 = vmul.f32 %v6540, %v4667
          %v6583 = vmul.f32 %v6543, %v4667
          %v6584 = vmul.f32 %v6546, %v4667
          %v6585 = vmul.f32 %v6549, %v4667
          %v6586 = vmul.f32 %v6552, %v4667
          %v6587 = vmul.f32 %v6555, %v4667
          %v6588 = vmul.f32 %v6558, %v4667
          %v6589 = vmul.f32 %v6561, %v4667
          %v6590 = vmul.f32 %v6564, %v4667
          %v6591 = vmul.f32 %v6567, %v4667
          %v6592 = vmul.f32 %v6570, %v4667
          %v6593 = vmul.f32 %v6573, %v4667
          %v6594 = vmul.f32 %v6576, %v4667
          %v6595 = vmul.f32 %v6579, %v4667
          %v6596 = vsub.f32 %v6498, %v6580
          %v6597 = vsub.f32 %v6499, %v6580
          %v6598 = vsub.f32 %v6500, %v6581
          %v6599 = vsub.f32 %v6501, %v6581
          %v6600 = vsub.f32 %v6502, %v6582
          %v6601 = vsub.f32 %v6503, %v6582
          %v6602 = vsub.f32 %v6504, %v6583
          %v6603 = vsub.f32 %v6505, %v6583
          %v6604 = vsub.f32 %v6506, %v6584
          %v6605 = vsub.f32 %v6507, %v6584
          %v6606 = vsub.f32 %v6508, %v6585
          %v6607 = vsub.f32 %v6509, %v6585
          %v6608 = vsub.f32 %v6510, %v6586
          %v6609 = vsub.f32 %v6511, %v6586
          %v6610 = vsub.f32 %v6512, %v6587
          %v6611 = vsub.f32 %v6513, %v6587
          %v6612 = vsub.f32 %v6514, %v6588
          %v6613 = vsub.f32 %v6515, %v6588
          %v6614 = vsub.f32 %v6516, %v6589
          %v6615 = vsub.f32 %v6517, %v6589
          %v6616 = vsub.f32 %v6518, %v6590
          %v6617 = vsub.f32 %v6519, %v6590
          %v6618 = vsub.f32 %v6520, %v6591
          %v6619 = vsub.f32 %v6521, %v6591
          %v6620 = vsub.f32 %v6522, %v6592
          %v6621 = vsub.f32 %v6523, %v6592
          %v6622 = vsub.f32 %v6524, %v6593
          %v6623 = vsub.f32 %v6525, %v6593
          %v6624 = vsub.f32 %v6526, %v6594
          %v6625 = vsub.f32 %v6527, %v6594
          %v6626 = vsub.f32 %v6528, %v6595
          %v6627 = vsub.f32 %v6529, %v6595
          %v6628 = vmul.f32 %v6596, %v6596
          %v6629 = vmul.f32 %v6597, %v6597
          %v6630 = vmul.f32 %v6598, %v6598
          %v6631 = vmul.f32 %v6599, %v6599
          %v6632 = vmul.f32 %v6600, %v6600
          %v6633 = vmul.f32 %v6601, %v6601
          %v6634 = vmul.f32 %v6602, %v6602
          %v6635 = vmul.f32 %v6603, %v6603
          %v6636 = vmul.f32 %v6604, %v6604
          %v6637 = vmul.f32 %v6605, %v6605
          %v6638 = vmul.f32 %v6606, %v6606
          %v6639 = vmul.f32 %v6607, %v6607
          %v6640 = vmul.f32 %v6608, %v6608
          %v6641 = vmul.f32 %v6609, %v6609
          %v6642 = vmul.f32 %v6610, %v6610
          %v6643 = vmul.f32 %v6611, %v6611
          %v6644 = vmul.f32 %v6612, %v6612
          %v6645 = vmul.f32 %v6613, %v6613
          %v6646 = vmul.f32 %v6614, %v6614
          %v6647 = vmul.f32 %v6615, %v6615
          %v6648 = vmul.f32 %v6616, %v6616
          %v6649 = vmul.f32 %v6617, %v6617
          %v6650 = vmul.f32 %v6618, %v6618
          %v6651 = vmul.f32 %v6619, %v6619
          %v6652 = vmul.f32 %v6620, %v6620
          %v6653 = vmul.f32 %v6621, %v6621
          %v6654 = vmul.f32 %v6622, %v6622
          %v6655 = vmul.f32 %v6623, %v6623
          %v6656 = vmul.f32 %v6624, %v6624
          %v6657 = vmul.f32 %v6625, %v6625
          %v6658 = vmul.f32 %v6626, %v6626
          %v6659 = vmul.f32 %v6627, %v6627
          %v6660 = vadd.f32 %v6628, %v6629
          %6661 = vadd.xlane.f32.xlu0 %v6660
          %v6662 = vpop.xlane.xlu0 %6661
          %v6663 = vadd.f32 %v6630, %v6631
          %6664 = vadd.xlane.f32.xlu0 %v6663
          %v6665 = vpop.xlane.xlu0 %6664
          %v6666 = vadd.f32 %v6632, %v6633
          %6667 = vadd.xlane.f32.xlu0 %v6666
          %v6668 = vpop.xlane.xlu0 %6667
          %v6669 = vadd.f32 %v6634, %v6635
          %6670 = vadd.xlane.f32.xlu0 %v6669
          %v6671 = vpop.xlane.xlu0 %6670
          %v6672 = vadd.f32 %v6636, %v6637
          %6673 = vadd.xlane.f32.xlu0 %v6672
          %v6674 = vpop.xlane.xlu0 %6673
          %v6675 = vadd.f32 %v6638, %v6639
          %6676 = vadd.xlane.f32.xlu0 %v6675
          %v6677 = vpop.xlane.xlu0 %6676
          %v6678 = vadd.f32 %v6640, %v6641
          %6679 = vadd.xlane.f32.xlu0 %v6678
          %v6680 = vpop.xlane.xlu0 %6679
          %v6681 = vadd.f32 %v6642, %v6643
          %6682 = vadd.xlane.f32.xlu0 %v6681
          %v6683 = vpop.xlane.xlu0 %6682
          %v6684 = vadd.f32 %v6644, %v6645
          %6685 = vadd.xlane.f32.xlu0 %v6684
          %v6686 = vpop.xlane.xlu0 %6685
          %v6687 = vadd.f32 %v6646, %v6647
          %6688 = vadd.xlane.f32.xlu0 %v6687
          %v6689 = vpop.xlane.xlu0 %6688
          %v6690 = vadd.f32 %v6648, %v6649
          %6691 = vadd.xlane.f32.xlu0 %v6690
          %v6692 = vpop.xlane.xlu0 %6691
          %v6693 = vadd.f32 %v6650, %v6651
          %6694 = vadd.xlane.f32.xlu0 %v6693
          %v6695 = vpop.xlane.xlu0 %6694
          %v6696 = vadd.f32 %v6652, %v6653
          %6697 = vadd.xlane.f32.xlu0 %v6696
          %v6698 = vpop.xlane.xlu0 %6697
          %v6699 = vadd.f32 %v6654, %v6655
          %6700 = vadd.xlane.f32.xlu0 %v6699
          %v6701 = vpop.xlane.xlu0 %6700
          %v6702 = vadd.f32 %v6656, %v6657
          %6703 = vadd.xlane.f32.xlu0 %v6702
          %v6704 = vpop.xlane.xlu0 %6703
          %v6705 = vadd.f32 %v6658, %v6659
          %6706 = vadd.xlane.f32.xlu0 %v6705
          %v6707 = vpop.xlane.xlu0 %6706
          %v6708 = vmul.f32 %v6662, %v4667
          %v6709 = vmul.f32 %v6665, %v4667
          %v6710 = vmul.f32 %v6668, %v4667
          %v6711 = vmul.f32 %v6671, %v4667
          %v6712 = vmul.f32 %v6674, %v4667
          %v6713 = vmul.f32 %v6677, %v4667
          %v6714 = vmul.f32 %v6680, %v4667
          %v6715 = vmul.f32 %v6683, %v4667
          %v6716 = vmul.f32 %v6686, %v4667
          %v6717 = vmul.f32 %v6689, %v4667
          %v6718 = vmul.f32 %v6692, %v4667
          %v6719 = vmul.f32 %v6695, %v4667
          %v6720 = vmul.f32 %v6698, %v4667
          %v6721 = vmul.f32 %v6701, %v4667
          %v6722 = vmul.f32 %v6704, %v4667
          %v6723 = vmul.f32 %v6707, %v4667
          %v6724 = vadd.f32 %v6708, 1e-05
          %v6725 = vadd.f32 %v6709, 1e-05
          %v6726 = vadd.f32 %v6710, 1e-05
          %v6727 = vadd.f32 %v6711, 1e-05
          %v6728 = vadd.f32 %v6712, 1e-05
          %v6729 = vadd.f32 %v6713, 1e-05
          %v6730 = vadd.f32 %v6714, 1e-05
          %v6731 = vadd.f32 %v6715, 1e-05
          %v6732 = vadd.f32 %v6716, 1e-05
          %v6733 = vadd.f32 %v6717, 1e-05
          %v6734 = vadd.f32 %v6718, 1e-05
          %v6735 = vadd.f32 %v6719, 1e-05
          %v6736 = vadd.f32 %v6720, 1e-05
          %v6737 = vadd.f32 %v6721, 1e-05
          %v6738 = vadd.f32 %v6722, 1e-05
          %v6739 = vadd.f32 %v6723, 1e-05
          %v6740 = vrsqrt.pop %v6724
          %v6741 = vmul.f32 %v6740, %v6724
          %v6742 = vmul.f32 %v6741, %v6740
          %v6743 = vmul.f32 0.5, %v6742
          %v6744 = vsub.f32 1.5, %v6743
          %v6745 = vmul.f32 %v6740, %v6744
          %vm6746 = vweird.f32 %v6724
          %vm6747 = vweird.f32 %v6740
          %vm6748 = vmor %vm6746, %vm6747
          %v6749 = vsel %vm6748, %v6740, %v6745
          %v6750 = vrsqrt.pop %v6725
          %v6751 = vmul.f32 %v6750, %v6725
          %v6752 = vmul.f32 %v6751, %v6750
          %v6753 = vmul.f32 0.5, %v6752
          %v6754 = vsub.f32 1.5, %v6753
          %v6755 = vmul.f32 %v6750, %v6754
          %vm6756 = vweird.f32 %v6725
          %vm6757 = vweird.f32 %v6750
          %vm6758 = vmor %vm6756, %vm6757
          %v6759 = vsel %vm6758, %v6750, %v6755
          %v6760 = vrsqrt.pop %v6726
          %v6761 = vmul.f32 %v6760, %v6726
          %v6762 = vmul.f32 %v6761, %v6760
          %v6763 = vmul.f32 0.5, %v6762
          %v6764 = vsub.f32 1.5, %v6763
          %v6765 = vmul.f32 %v6760, %v6764
          %vm6766 = vweird.f32 %v6726
          %vm6767 = vweird.f32 %v6760
          %vm6768 = vmor %vm6766, %vm6767
          %v6769 = vsel %vm6768, %v6760, %v6765
          %v6770 = vrsqrt.pop %v6727
          %v6771 = vmul.f32 %v6770, %v6727
          %v6772 = vmul.f32 %v6771, %v6770
          %v6773 = vmul.f32 0.5, %v6772
          %v6774 = vsub.f32 1.5, %v6773
          %v6775 = vmul.f32 %v6770, %v6774
          %vm6776 = vweird.f32 %v6727
          %vm6777 = vweird.f32 %v6770
          %vm6778 = vmor %vm6776, %vm6777
          %v6779 = vsel %vm6778, %v6770, %v6775
          %v6780 = vrsqrt.pop %v6728
          %v6781 = vmul.f32 %v6780, %v6728
          %v6782 = vmul.f32 %v6781, %v6780
          %v6783 = vmul.f32 0.5, %v6782
          %v6784 = vsub.f32 1.5, %v6783
          %v6785 = vmul.f32 %v6780, %v6784
          %vm6786 = vweird.f32 %v6728
          %vm6787 = vweird.f32 %v6780
          %vm6788 = vmor %vm6786, %vm6787
          %v6789 = vsel %vm6788, %v6780, %v6785
          %v6790 = vrsqrt.pop %v6729
          %v6791 = vmul.f32 %v6790, %v6729
          %v6792 = vmul.f32 %v6791, %v6790
          %v6793 = vmul.f32 0.5, %v6792
          %v6794 = vsub.f32 1.5, %v6793
          %v6795 = vmul.f32 %v6790, %v6794
          %vm6796 = vweird.f32 %v6729
          %vm6797 = vweird.f32 %v6790
          %vm6798 = vmor %vm6796, %vm6797
          %v6799 = vsel %vm6798, %v6790, %v6795
          %v6800 = vrsqrt.pop %v6730
          %v6801 = vmul.f32 %v6800, %v6730
          %v6802 = vmul.f32 %v6801, %v6800
          %v6803 = vmul.f32 0.5, %v6802
          %v6804 = vsub.f32 1.5, %v6803
          %v6805 = vmul.f32 %v6800, %v6804
          %vm6806 = vweird.f32 %v6730
          %vm6807 = vweird.f32 %v6800
          %vm6808 = vmor %vm6806, %vm6807
          %v6809 = vsel %vm6808, %v6800, %v6805
          %v6810 = vrsqrt.pop %v6731
          %v6811 = vmul.f32 %v6810, %v6731
          %v6812 = vmul.f32 %v6811, %v6810
          %v6813 = vmul.f32 0.5, %v6812
          %v6814 = vsub.f32 1.5, %v6813
          %v6815 = vmul.f32 %v6810, %v6814
          %vm6816 = vweird.f32 %v6731
          %vm6817 = vweird.f32 %v6810
          %vm6818 = vmor %vm6816, %vm6817
          %v6819 = vsel %vm6818, %v6810, %v6815
          %v6820 = vrsqrt.pop %v6732
          %v6821 = vmul.f32 %v6820, %v6732
          %v6822 = vmul.f32 %v6821, %v6820
          %v6823 = vmul.f32 0.5, %v6822
          %v6824 = vsub.f32 1.5, %v6823
          %v6825 = vmul.f32 %v6820, %v6824
          %vm6826 = vweird.f32 %v6732
          %vm6827 = vweird.f32 %v6820
          %vm6828 = vmor %vm6826, %vm6827
          %v6829 = vsel %vm6828, %v6820, %v6825
          %v6830 = vrsqrt.pop %v6733
          %v6831 = vmul.f32 %v6830, %v6733
          %v6832 = vmul.f32 %v6831, %v6830
          %v6833 = vmul.f32 0.5, %v6832
          %v6834 = vsub.f32 1.5, %v6833
          %v6835 = vmul.f32 %v6830, %v6834
          %vm6836 = vweird.f32 %v6733
          %vm6837 = vweird.f32 %v6830
          %vm6838 = vmor %vm6836, %vm6837
          %v6839 = vsel %vm6838, %v6830, %v6835
          %v6840 = vrsqrt.pop %v6734
          %v6841 = vmul.f32 %v6840, %v6734
          %v6842 = vmul.f32 %v6841, %v6840
          %v6843 = vmul.f32 0.5, %v6842
          %v6844 = vsub.f32 1.5, %v6843
          %v6845 = vmul.f32 %v6840, %v6844
          %vm6846 = vweird.f32 %v6734
          %vm6847 = vweird.f32 %v6840
          %vm6848 = vmor %vm6846, %vm6847
          %v6849 = vsel %vm6848, %v6840, %v6845
          %v6850 = vrsqrt.pop %v6735
          %v6851 = vmul.f32 %v6850, %v6735
          %v6852 = vmul.f32 %v6851, %v6850
          %v6853 = vmul.f32 0.5, %v6852
          %v6854 = vsub.f32 1.5, %v6853
          %v6855 = vmul.f32 %v6850, %v6854
          %vm6856 = vweird.f32 %v6735
          %vm6857 = vweird.f32 %v6850
          %vm6858 = vmor %vm6856, %vm6857
          %v6859 = vsel %vm6858, %v6850, %v6855
          %v6860 = vrsqrt.pop %v6736
          %v6861 = vmul.f32 %v6860, %v6736
          %v6862 = vmul.f32 %v6861, %v6860
          %v6863 = vmul.f32 0.5, %v6862
          %v6864 = vsub.f32 1.5, %v6863
          %v6865 = vmul.f32 %v6860, %v6864
          %vm6866 = vweird.f32 %v6736
          %vm6867 = vweird.f32 %v6860
          %vm6868 = vmor %vm6866, %vm6867
          %v6869 = vsel %vm6868, %v6860, %v6865
          %v6870 = vrsqrt.pop %v6737
          %v6871 = vmul.f32 %v6870, %v6737
          %v6872 = vmul.f32 %v6871, %v6870
          %v6873 = vmul.f32 0.5, %v6872
          %v6874 = vsub.f32 1.5, %v6873
          %v6875 = vmul.f32 %v6870, %v6874
          %vm6876 = vweird.f32 %v6737
          %vm6877 = vweird.f32 %v6870
          %vm6878 = vmor %vm6876, %vm6877
          %v6879 = vsel %vm6878, %v6870, %v6875
          %v6880 = vrsqrt.pop %v6738
          %v6881 = vmul.f32 %v6880, %v6738
          %v6882 = vmul.f32 %v6881, %v6880
          %v6883 = vmul.f32 0.5, %v6882
          %v6884 = vsub.f32 1.5, %v6883
          %v6885 = vmul.f32 %v6880, %v6884
          %vm6886 = vweird.f32 %v6738
          %vm6887 = vweird.f32 %v6880
          %vm6888 = vmor %vm6886, %vm6887
          %v6889 = vsel %vm6888, %v6880, %v6885
          %v6890 = vrsqrt.pop %v6739
          %v6891 = vmul.f32 %v6890, %v6739
          %v6892 = vmul.f32 %v6891, %v6890
          %v6893 = vmul.f32 0.5, %v6892
          %v6894 = vsub.f32 1.5, %v6893
          %v6895 = vmul.f32 %v6890, %v6894
          %vm6896 = vweird.f32 %v6739
          %vm6897 = vweird.f32 %v6890
          %vm6898 = vmor %vm6896, %vm6897
          %v6899 = vsel %vm6898, %v6890, %v6895
          %v6900 = vmul.f32 %v6596, %v6749
          %v6901 = vmul.f32 %v6597, %v6749
          %v6902 = vmul.f32 %v6598, %v6759
          %v6903 = vmul.f32 %v6599, %v6759
          %v6904 = vmul.f32 %v6600, %v6769
          %v6905 = vmul.f32 %v6601, %v6769
          %v6906 = vmul.f32 %v6602, %v6779
          %v6907 = vmul.f32 %v6603, %v6779
          %v6908 = vmul.f32 %v6604, %v6789
          %v6909 = vmul.f32 %v6605, %v6789
          %v6910 = vmul.f32 %v6606, %v6799
          %v6911 = vmul.f32 %v6607, %v6799
          %v6912 = vmul.f32 %v6608, %v6809
          %v6913 = vmul.f32 %v6609, %v6809
          %v6914 = vmul.f32 %v6610, %v6819
          %v6915 = vmul.f32 %v6611, %v6819
          %v6916 = vmul.f32 %v6612, %v6829
          %v6917 = vmul.f32 %v6613, %v6829
          %v6918 = vmul.f32 %v6614, %v6839
          %v6919 = vmul.f32 %v6615, %v6839
          %v6920 = vmul.f32 %v6616, %v6849
          %v6921 = vmul.f32 %v6617, %v6849
          %v6922 = vmul.f32 %v6618, %v6859
          %v6923 = vmul.f32 %v6619, %v6859
          %v6924 = vmul.f32 %v6620, %v6869
          %v6925 = vmul.f32 %v6621, %v6869
          %v6926 = vmul.f32 %v6622, %v6879
          %v6927 = vmul.f32 %v6623, %v6879
          %v6928 = vmul.f32 %v6624, %v6889
          %v6929 = vmul.f32 %v6625, %v6889
          %v6930 = vmul.f32 %v6626, %v6899
          %v6931 = vmul.f32 %v6627, %v6899
          %v6933 = vperm.slane %v6530, 0
          %v6934 = vperm.slane %v6530, 1
          %v6937 = vmul.f32 %v6900, %v6933
          %v6938 = vmul.f32 %v6901, %v6934
          %v6939 = vmul.f32 %v6902, %v6933
          %v6940 = vmul.f32 %v6903, %v6934
          %v6941 = vmul.f32 %v6904, %v6933
          %v6942 = vmul.f32 %v6905, %v6934
          %v6943 = vmul.f32 %v6906, %v6933
          %v6944 = vmul.f32 %v6907, %v6934
          %v6945 = vmul.f32 %v6908, %v6933
          %v6946 = vmul.f32 %v6909, %v6934
          %v6947 = vmul.f32 %v6910, %v6933
          %v6948 = vmul.f32 %v6911, %v6934
          %v6949 = vmul.f32 %v6912, %v6933
          %v6950 = vmul.f32 %v6913, %v6934
          %v6951 = vmul.f32 %v6914, %v6933
          %v6952 = vmul.f32 %v6915, %v6934
          %v6953 = vmul.f32 %v6916, %v6933
          %v6954 = vmul.f32 %v6917, %v6934
          %v6955 = vmul.f32 %v6918, %v6933
          %v6956 = vmul.f32 %v6919, %v6934
          %v6957 = vmul.f32 %v6920, %v6933
          %v6958 = vmul.f32 %v6921, %v6934
          %v6959 = vmul.f32 %v6922, %v6933
          %v6960 = vmul.f32 %v6923, %v6934
          %v6961 = vmul.f32 %v6924, %v6933
          %v6962 = vmul.f32 %v6925, %v6934
          %v6963 = vmul.f32 %v6926, %v6933
          %v6964 = vmul.f32 %v6927, %v6934
          %v6965 = vmul.f32 %v6928, %v6933
          %v6966 = vmul.f32 %v6929, %v6934
          %v6967 = vmul.f32 %v6930, %v6933
          %v6968 = vmul.f32 %v6931, %v6934
          %v6970 = vperm.slane %v6531, 0
          %v6971 = vperm.slane %v6531, 1
          %v6974 = vadd.f32 %v6937, %v6970
          %v6975 = vadd.f32 %v6938, %v6971
          %v6976 = vadd.f32 %v6939, %v6970
          %v6977 = vadd.f32 %v6940, %v6971
          %v6978 = vadd.f32 %v6941, %v6970
          %v6979 = vadd.f32 %v6942, %v6971
          %v6980 = vadd.f32 %v6943, %v6970
          %v6981 = vadd.f32 %v6944, %v6971
          %v6982 = vadd.f32 %v6945, %v6970
          %v6983 = vadd.f32 %v6946, %v6971
          %v6984 = vadd.f32 %v6947, %v6970
          %v6985 = vadd.f32 %v6948, %v6971
          %v6986 = vadd.f32 %v6949, %v6970
          %v6987 = vadd.f32 %v6950, %v6971
          %v6988 = vadd.f32 %v6951, %v6970
          %v6989 = vadd.f32 %v6952, %v6971
          %v6990 = vadd.f32 %v6953, %v6970
          %v6991 = vadd.f32 %v6954, %v6971
          %v6992 = vadd.f32 %v6955, %v6970
          %v6993 = vadd.f32 %v6956, %v6971
          %v6994 = vadd.f32 %v6957, %v6970
          %v6995 = vadd.f32 %v6958, %v6971
          %v6996 = vadd.f32 %v6959, %v6970
          %v6997 = vadd.f32 %v6960, %v6971
          %v6998 = vadd.f32 %v6961, %v6970
          %v6999 = vadd.f32 %v6962, %v6971
          %v7000 = vadd.f32 %v6963, %v6970
          %v7001 = vadd.f32 %v6964, %v6971
          %v7002 = vadd.f32 %v6965, %v6970
          %v7003 = vadd.f32 %v6966, %v6971
          %v7004 = vadd.f32 %v6967, %v6970
          %v7005 = vadd.f32 %v6968, %v6971
          %7006 = vst [vmem:[%s841] sm:$0xff] %v6974
          %7007 = vst [vmem:[%s841 + $0x8] sm:$0xff] %v6975
          %7008 = vst [vmem:[%s841 + $0x10] sm:$0xff] %v6976
          %7009 = vst [vmem:[%s841 + $0x18] sm:$0xff] %v6977
          %7010 = vst [vmem:[%s841 + $0x20] sm:$0xff] %v6978
          %7011 = vst [vmem:[%s841 + $0x28] sm:$0xff] %v6979
          %7012 = vst [vmem:[%s841 + $0x30] sm:$0xff] %v6980
          %7013 = vst [vmem:[%s841 + $0x38] sm:$0xff] %v6981
          %7014 = vst [vmem:[%s841 + $0x40] sm:$0xff] %v6982
          %7015 = vst [vmem:[%s841 + $0x48] sm:$0xff] %v6983
          %7016 = vst [vmem:[%s841 + $0x50] sm:$0xff] %v6984
          %7017 = vst [vmem:[%s841 + $0x58] sm:$0xff] %v6985
          %7018 = vst [vmem:[%s841 + $0x60] sm:$0xff] %v6986
          %7019 = vst [vmem:[%s841 + $0x68] sm:$0xff] %v6987
          %7020 = vst [vmem:[%s841 + $0x70] sm:$0xff] %v6988
          %7021 = vst [vmem:[%s841 + $0x78] sm:$0xff] %v6989
          %7022 = vst [vmem:[%s841 + $0x80] sm:$0xff] %v6990
          %7023 = vst [vmem:[%s841 + $0x88] sm:$0xff] %v6991
          %7024 = vst [vmem:[%s841 + $0x90] sm:$0xff] %v6992
          %7025 = vst [vmem:[%s841 + $0x98] sm:$0xff] %v6993
          %7026 = vst [vmem:[%s841 + $0xa0] sm:$0xff] %v6994
          %7027 = vst [vmem:[%s841 + $0xa8] sm:$0xff] %v6995
          %7028 = vst [vmem:[%s841 + $0xb0] sm:$0xff] %v6996
          %7029 = vst [vmem:[%s841 + $0xb8] sm:$0xff] %v6997
          %7030 = vst [vmem:[%s841 + $0xc0] sm:$0xff] %v6998
          %7031 = vst [vmem:[%s841 + $0xc8] sm:$0xff] %v6999
          %7032 = vst [vmem:[%s841 + $0xd0] sm:$0xff] %v7000
          %7033 = vst [vmem:[%s841 + $0xd8] sm:$0xff] %v7001
          %7034 = vst [vmem:[%s841 + $0xe0] sm:$0xff] %v7002
          %7035 = vst [vmem:[%s841 + $0xe8] sm:$0xff] %v7003
          %7036 = vst [vmem:[%s841 + $0xf0] sm:$0xff] %v7004
          %7037 = vst [vmem:[%s841 + $0xf8] sm:$0xff] %v7005
        $region152: #{tpu_custom_call.1} parent=91 // pred_fallthru
          _
        %s7038 = sand.u32 %s464, 1
        %s7039 = scalar_lea.sflag [#allocation8], %s7038
        %s7040 = sand.u32 %s464, 1
        %s7041 = smul.addr %s7040, 256
        %s7042 = scalar_lea.vmem [#allocation27], %s7041
        // Predicated region
        $region153: #{tpu_custom_call.1} parent=91 // pred_check
          %p7043 = pneg %p474
        $region154: #{tpu_custom_call.1} parent=91 // pred_check_branch
          %7045 = sbr.rel (%p7043) target = $region156
        $region155: #{tpu_custom_call.1} parent=91 // pred_region
          %s7046 = smul.u32 16, %s49
          %7048 = vsyncadd %s7039, 0
          %s7049 = smul.addr %s7046, 2
          %s7050 = smul.addr %s48, 64
          %s7051 = sadd.s32 %s7049, %s7050
          %s7052 = smul.addr %s7051, 8
          %s7053 = scalar_lea.hbm %s18, %s7052
          %s7054 = sshll.u32 %s7042, 4
          %s7055 = int_to_ptr.vmem [resolvable:$true] %s7054
          %s7056 = sshll.u32 %s7053, 4
          %s7057 = int_to_ptr.hbm [resolvable:$true] %s7056
          %7062 = dma.vmem_to_hbm [thread:$0]  %s7055, 4096, %s7057, %s7039, 256, 256, 16
        $region156: #{tpu_custom_call.1} parent=91 // pred_fallthru
          _
      $region92: #{tpu_custom_call.1} parent=5 // pred_fallthru
        _
      %p7063 = scmp.le.s32.totalorder 2, %s38
      // Predicated region
      $region157: #{tpu_custom_call.1} parent=5 // pred_check
        %p7064 = pneg %p7063
      $region158: #{tpu_custom_call.1} parent=5 // pred_check_branch
        %7066 = sbr.rel (%p7064) target = $region160
      $region159: #{tpu_custom_call.1} parent=5 // pred_region
        %s7067 = ssub.s32 %s38, 2
        // Predicated region
        $region161: #{tpu_custom_call.1} parent=159 // pred_check
          %p7068 = pneg %p480
        $region162: #{tpu_custom_call.1} parent=159 // pred_check_branch
          %7070 = sbr.rel (%p7068) target = $region164
        $region163: #{tpu_custom_call.1} parent=159 // pred_region
          %s7071 = sand.u32 %s465, 1
          %s7072 = scalar_lea.sflag [#allocation8], %s7071
          %s7073 = sand.u32 %s465, 1
          %s7074 = smul.addr %s7073, 256
          %s7075 = scalar_lea.vmem [#allocation27], %s7074
          %7077 = dma.done %s7072, 4096
        $region164: #{tpu_custom_call.1} parent=159 // pred_fallthru
          _
      $region160: #{tpu_custom_call.1} parent=5 // pred_fallthru
        _
    $region6: #{tpu_custom_call.1} parent=1 // loop_footer
      %s42 = sadd.s32 1, %s38
    $region7: #{tpu_custom_call.1} parent=1 // loop_footer_branch
      %37 = sbr.rel target = $region3
    $region8: #{tpu_custom_call.1} parent=1 // loop_exit
      _
    %7078 = vsyncpa [#allocation7], 1
    %s7079 = scalar_lea.sflag [#allocation7], 1
    %7080 = vsyncpa %s7079, 1
    %7081 = vsyncpa [#allocation10], 1
    %s7082 = scalar_lea.sflag [#allocation10], 1
    %7083 = vsyncpa %s7082, 1
    %7084 = vsyncpa [#allocation13], 1
    %7085 = vsyncpa [#allocation16], 1
    %7086 = vsyncpa [#allocation19], 1
    %7087 = vsyncpa [#allocation22], 1
    %7088 = vsyncpa [#allocation25], 1
    %7089 = vsyncpa [#allocation8], 1
    %s7090 = scalar_lea.sflag [#allocation8], 1
    %7091 = vsyncpa %s7090, 1

</llo_original>
